<compile_context>
chip_gen: v5e
topology: v5e:2x2
jax: 0.10.0
libtpu: 0.0.40
codegen_flags: <defaults>
</compile_context>

<pallas_src>
import functools
import numpy as np

import jax
import jax.numpy as jnp
from jax.experimental import pallas as pl
from jax.experimental.pallas import tpu as pltpu

# ----------------------------- configuration (module-consistent, small) ------
DIM = 32                   # c
NUM_HEADS = 4
HEAD_DIM = DIM // NUM_HEADS
WIN = 4                    # window_size
WW = WIN * WIN             # tokens per window
SHIFT = 0                  # shift_size (0 -> no cyclic shift / no shift mask)
H, W = 8, 8                # input_resolution == x_size
B = 2
N = H * W
MLP_HIDDEN = int(DIM * 4.0)
SCALE = HEAD_DIM ** (-0.5)
NW = (H // WIN) * (W // WIN)     # windows per stream per image (4)
NWIN2 = 2 * NW                   # left + right stream windows per image (8)
R = NWIN2 * WW                   # dense-attention rows per image (128)
HALF = NW * WW                   # offset of the right-stream block (64)
BT = B * R                       # tokens processed per call (256)
RELAX_PIXELS = 2
EPS = 1e-5
NEG_INF = -1e9


# ----------------------------- in-kernel helpers ------------------------------
def _layer_norm(x, g, b):
    mu = jnp.mean(x, axis=-1, keepdims=True)
    var = jnp.mean(jnp.square(x - mu), axis=-1, keepdims=True)
    return (x - mu) * jax.lax.rsqrt(var + EPS) * g + b


def _erf_f32(x):
    # Abramowitz & Stegun 7.1.26 (max abs err ~1.5e-7).
    # TODO(synk): replaces lax.erf (Mosaic lowering for erf_p not guaranteed);
    # matches torch.nn.GELU() exact-erf semantics to float32 precision.
    a1, a2, a3, a4, a5 = 0.254829592, -0.284496736, 1.421413741, -1.453152027, 1.061405429
    p = 0.3275911
    ax = jnp.abs(x)
    t = 1.0 / (1.0 + p * ax)
    poly = ((((a5 * t + a4) * t + a3) * t + a2) * t + a1) * t
    y = 1.0 - poly * jnp.exp(-(ax * ax))
    return jnp.where(x >= 0.0, y, -y)


def _gelu_exact(x):
    return 0.5 * x * (1.0 + _erf_f32(x * 0.7071067811865476))


# ----------------------------- the fused kernel --------------------------------
def _coswin_kernel(x_ref, ln1g_ref, ln1b_ref, wq_ref, bq_ref, wkv_ref, bkv_ref,
                   wp_ref, bp_ref, bias_ref, ln2g_ref, ln2b_ref,
                   w1_ref, b1_ref, w2_ref, b2_ref, out_ref):
    # ---- norm1 on [own ; selected] tokens in a single pass -------------------
    x_all = x_ref[...]                                   # (2*BT, DIM) f32
    xn_all = _layer_norm(x_all, ln1g_ref[...], ln1b_ref[...])
    x_own = x_all[:BT]                                   # raw shortcut tokens
    xo_n = xn_all[:BT]                                   # norm1(own): queries / blend
    xs_n = xn_all[BT:]                                   # norm1(selected): keys / values

    # ---- q / kv projections: bf16 operands, f32 accumulation ----------------
    q = jnp.dot(xo_n.astype(jnp.bfloat16), wq_ref[...],
                preferred_element_type=jnp.float32) + bq_ref[...]
    kv = jnp.dot(xs_n.astype(jnp.bfloat16), wkv_ref[...],
                 preferred_element_type=jnp.float32) + bkv_ref[...]
    k = kv[:, :DIM]
    v = kv[:, DIM:]
    q = q * SCALE

    # head-major batched layout: (NUM_HEADS*B, R, HEAD_DIM)
    def split_heads(t):
        hs = [t[:, h * HEAD_DIM:(h + 1) * HEAD_DIM] for h in range(NUM_HEADS)]
        return jnp.stack(hs, axis=0).reshape(NUM_HEADS * B, R, HEAD_DIM)

    qh = split_heads(q)
    kh = split_heads(k)
    vh = split_heads(v)

    # ---- dense per-image attention (window mask folded into the bias) -------
    logits = jnp.einsum('bqd,bkd->bqk', qh, kh,
                        preferred_element_type=jnp.float32)          # (H*B, R, R)
    logits = (logits.reshape(NUM_HEADS, B, R, R) + bias_ref[...][:, None]
              ).reshape(NUM_HEADS * B, R, R)
    logits = logits - jnp.max(logits, axis=-1, keepdims=True)
    e = jnp.exp(logits)
    attn = e * pl.reciprocal(jnp.sum(e, axis=-1, keepdims=True), approx=True)

    # ---- attention output: concat heads along channels, ONE proj matmul -----
    out_h = jnp.einsum('bqk,bkd->bqd', attn, vh,
                       preferred_element_type=jnp.float32)           # (H*B, R, HD)
    out_c = jnp.concatenate(
        [out_h[h * B:(h + 1) * B] for h in range(NUM_HEADS)], axis=-1
    ).reshape(BT, DIM)
    xT = jnp.dot(out_c.astype(jnp.bfloat16), wp_ref[...],
                 preferred_element_type=jnp.float32) + bp_ref[...]

    # ---- M_Relax occlusion weights -------------------------------------------
    # swap the L/R stream halves of the dense attention (both q and k indices);
    # cross-window entries of attn are exactly 0, so the dense band reduce below
    # is identical to the reference per-window band relaxation.
    attn_sw = pltpu.roll(attn, shift=HALF, axis=2)                   # lane-axis half swap
    attn_sw = jnp.concatenate([attn_sw[:, HALF:, :], attn_sw[:, :HALF, :]], axis=1)
    cab = jnp.einsum('bqk,bkp->bqp', attn, attn_sw,
                     preferred_element_type=jnp.float32)             # (H*B, R, R)
    rows = jax.lax.broadcasted_iota(jnp.int32, (R, R), 0)
    cols = jax.lax.broadcasted_iota(jnp.int32, (R, R), 1)
    band = (jnp.abs(rows - cols) <= RELAX_PIXELS).astype(jnp.float32)
    m = jnp.tanh(5.0 * jnp.sum(band[None] * cab, axis=1))            # (H*B, R)

    # expand per-head weights to their channel blocks once: (BT, DIM)
    mfull = jnp.concatenate(
        [jnp.broadcast_to(m[h * B:(h + 1) * B][..., None], (B, R, HEAD_DIM))
         for h in range(NUM_HEADS)], axis=-1).reshape(BT, DIM)

    # blend norm1(x)*(1-m) + xT*m, then residual with the RAW shortcut
    x_res = x_own + xo_n + (xT - xo_n) * mfull

    # ---- norm2 + MLP (fc1 -> exact-erf GELU -> fc2) + residual ---------------
    xn2 = _layer_norm(x_res, ln2g_ref[...], ln2b_ref[...])
    h1 = jnp.dot(xn2.astype(jnp.bfloat16), w1_ref[...],
                 preferred_element_type=jnp.float32) + b1_ref[...]
    h1 = _gelu_exact(h1)
    y = jnp.dot(h1.astype(jnp.bfloat16), w2_ref[...],
                preferred_element_type=jnp.float32) + b2_ref[...]
    out_ref[...] = x_res + y


def coswin_fused(x_own, x_sel, params):
    """x_own/x_sel: (B, NWIN2, WW, DIM) raw window tokens. Returns (BT, DIM)."""
    x_in = jnp.concatenate([x_own.reshape(BT, DIM), x_sel.reshape(BT, DIM)], axis=0)

    def rep(shape):
        nd = len(shape)
        return pl.BlockSpec(shape, lambda i, nd=nd: (0,) * nd)

    bf = jnp.bfloat16
    args = [
        x_in,
        params['ln1_g'], params['ln1_b'],
        params['wq'].astype(bf), params['bq'],
        params['wkv'].astype(bf), params['bkv'],
        params['wproj'].astype(bf), params['bproj'],
        params['dense_bias'],
        params['ln2_g'], params['ln2_b'],
        params['w1'].astype(bf), params['b1'],
        params['w2'].astype(bf), params['b2'],
    ]
    in_specs = [rep(tuple(a.shape)) for a in args]

    return pl.pallas_call(
        _coswin_kernel,
        out_shape=jax.ShapeDtypeStruct((BT, DIM), jnp.float32),
        grid=(1,),
        in_specs=in_specs,
        out_specs=rep((BT, DIM)),
        compiler_params=pltpu.CompilerParams(
            dimension_semantics=("arbitrary",)),
    )(*args)


# ----------------------------- glue helpers (plain JAX / numpy) ---------------
def window_partition_jax(x, ws):
    # (b, h, w, c) -> (b, num_windows, ws*ws, c)
    b, h, w, c = x.shape
    x = x.reshape(b, h // ws, ws, w // ws, ws, c)
    return x.transpose(0, 1, 3, 2, 4, 5).reshape(b, (h // ws) * (w // ws), ws * ws, c)


def window_reverse_jax(wins, ws, h, w):
    # (b, num_windows, ws*ws, c) -> (b, h, w, c)
    b = wins.shape[0]
    c = wins.shape[-1]
    x = wins.reshape(b, h // ws, w // ws, ws, ws, c)
    return x.transpose(0, 1, 3, 2, 4, 5).reshape(b, h, w, c)


def relative_position_index(ws):
    coords = np.stack(np.meshgrid(np.arange(ws), np.arange(ws), indexing='ij'))
    cf = coords.reshape(2, -1)
    rel = (cf[:, :, None] - cf[:, None, :]).transpose(1, 2, 0).astype(np.int64)
    rel[..., 0] += ws - 1
    rel[..., 1] += ws - 1
    rel[..., 0] *= 2 * ws - 1
    return rel.sum(-1)                       # (ws*ws, ws*ws)


def calculate_mask(h, w, ws, shift):
    img = np.zeros((1, h, w, 1), np.float32)
    slices = (slice(0, -ws), slice(-ws, -shift), slice(-shift, None))
    cnt = 0
    for hs in slices:
        for wsl in slices:
            img[:, hs, wsl, :] = cnt
            cnt += 1
    mw = img.reshape(1, h // ws, ws, w // ws, ws, 1)
    mw = mw.transpose(0, 1, 3, 2, 4, 5).reshape(-1, ws * ws)
    diff = mw[:, None, :] - mw[:, :, None]
    return np.where(diff != 0, -100.0, 0.0).astype(np.float32)


def build_dense_bias(rel_bias, attn_mask=None):
    """(NUM_HEADS, R, R): rel-pos bias on the window block-diagonal, -1e9 elsewhere,
    shift mask (if any) folded in.  The [L | R] window order matches the kernel."""
    bias = jnp.full((NUM_HEADS, R, R), NEG_INF, dtype=jnp.float32)
    for w in range(NWIN2):
        blk = rel_bias                                      # (H, WW, WW)
        if attn_mask is not None:
            blk = blk + attn_mask[w % NW][None]
        bias = jax.lax.dynamic_update_slice(bias, blk, (0, w * WW, w * WW))
    return bias


# ----------------------------- full forward -----------------------------------
def coswin_forward(params, x_left, x_right, d_left, d_right, x_size):
    hh, wn = x_size
    b, n, c = x_left.shape
    xl_img = x_left.reshape(b, hh, wn, c)
    xr_img = x_right.reshape(b, hh, wn, c)

    # Disparity-driven token selection (matches torch clamp + .long() for d >= 0).
    # LayerNorm is per-token so norm1(x)[gather] == norm1(x[gather]); we gather RAW
    # tokens here and apply norm1 inside the fused kernel.
    coords_b = jnp.arange(b)[:, None, None]
    coords_h = jnp.arange(hh)[None, :, None]
    coords_w = jnp.arange(wn, dtype=jnp.float32)[None, None, :]
    r2l_w = jnp.clip(coords_w + 0.5 - d_left, 0.0, wn - 1.0).astype(jnp.int32)
    l2r_w = jnp.clip(coords_w + 0.5 + d_right, 0.0, wn - 1.0).astype(jnp.int32)
    xl_sel = xl_img[coords_b, coords_h, l2r_w]       # (b, h, w, c)
    xr_sel = xr_img[coords_b, coords_h, r2l_w]

    if SHIFT > 0:
        sh = lambda t: jnp.roll(t, shift=(-SHIFT, -SHIFT), axis=(1, 2))
    else:
        sh = lambda t: t
    to_win = lambda t: window_partition_jax(sh(t), WIN)          # (b, NW, WW, c)

    xl_w, xr_w = to_win(xl_img), to_win(xr_img)
    xl_sel_w, xr_sel_w = to_win(xl_sel), to_win(xr_sel)

    # queries / shortcuts: [L | R]; keys/values come from the opposite stream's selection
    x_own = jnp.concatenate([xl_w, xr_w], axis=1)                # (b, 2*NW, WW, c)
    x_sel = jnp.concatenate([xr_sel_w, xl_sel_w], axis=1)

    out = coswin_fused(x_own, x_sel, params)                     # (BT, c)
    out = out.reshape(b, 2, (hh // WIN) * (wn // WIN), WW, c)
    out_l = window_reverse_jax(out[:, 0], WIN, hh, wn)
    out_r = window_reverse_jax(out[:, 1], WIN, hh, wn)
    if SHIFT > 0:
        out_l = jnp.roll(out_l, shift=(SHIFT, SHIFT), axis=(1, 2))
        out_r = jnp.roll(out_r, shift=(SHIFT, SHIFT), axis=(1, 2))
    return out_l.reshape(b, n, c), out_r.reshape(b, n, c)


# ----------------------------- parameters --------------------------------------
def init_params(key):
    ks = jax.random.split(key, 8)
    s = 0.02
    p = {
        'ln1_g': jnp.ones((1, DIM), jnp.float32),
        'ln1_b': jnp.zeros((1, DIM), jnp.float32),
        'ln2_g': jnp.ones((1, DIM), jnp.float32),
        'ln2_b': jnp.zeros((1, DIM), jnp.float32),
        'wq': jax.random.normal(ks[0], (DIM, DIM), jnp.float32) * s,
        'bq': jax.random.normal(ks[1], (1, DIM), jnp.float32) * s,
        'wkv': jax.random.normal(ks[2], (DIM, 2 * DIM), jnp.float32) * s,
        'bkv': jax.random.normal(ks[3], (1, 2 * DIM), jnp.float32) * s,
        'wproj': jax.random.normal(ks[4], (DIM, DIM), jnp.float32) * s,
        'bproj': jnp.zeros((1, DIM), jnp.float32),
        'w1': jax.random.normal(ks[5], (DIM, MLP_HIDDEN), jnp.float32) * s,
        'b1': jnp.zeros((1, MLP_HIDDEN), jnp.float32),
        'w2': jax.random.normal(ks[6], (MLP_HIDDEN, DIM), jnp.float32) * s,
        'b2': jnp.zeros((1, DIM), jnp.float32),
    }
    table = jax.random.normal(ks[7], ((2 * WIN - 1) ** 2, NUM_HEADS), jnp.float32) * 0.02
    rpi = jnp.asarray(relative_position_index(WIN))              # (WW, WW)
    rel_bias = table[rpi.reshape(-1)].reshape(WW, WW, NUM_HEADS).transpose(2, 0, 1)
    attn_mask = jnp.asarray(calculate_mask(H, W, WIN, SHIFT)) if SHIFT > 0 else None
    # TODO(synk): SHIFT>0 path is statically compiled out in this config (untested).
    p['dense_bias'] = build_dense_bias(rel_bias, attn_mask)
    return p


# ----------------------------- demo ---------------------------------------------
if __name__ == "__main__":
    key = jax.random.PRNGKey(0)
    k1, k2, k3, k4, kp = jax.random.split(key, 5)
    params = init_params(kp)

    x_left = jax.random.normal(k1, (B, N, DIM), jnp.float32)
    x_right = jax.random.normal(k2, (B, N, DIM), jnp.float32)
    d_left = jax.random.uniform(k3, (B, H, W), jnp.float32, 0.0, 3.0)
    d_right = jax.random.uniform(k4, (B, H, W), jnp.float32, 0.0, 3.0)

    fwd = jax.jit(functools.partial(coswin_forward, x_size=(H, W)))
    out_l, out_r = fwd(params, x_left, x_right, d_left, d_right)
    jax.block_until_ready((out_l, out_r))

    assert out_l.shape == (B, N, DIM) and out_r.shape == (B, N, DIM)
    assert bool(jnp.all(jnp.isfinite(out_l))) and bool(jnp.all(jnp.isfinite(out_r)))
    print("KERNEL_OK")
</pallas_src>

<mosaic_0001>
module attributes {stable_mosaic.version = 11 : i64} {
  func.func @_coswin_kernel(%arg0: i32, %arg1: memref<512x32xf32, #tpu.memory_space<vmem>>, %arg2: memref<1x32xf32, #tpu.memory_space<vmem>>, %arg3: memref<1x32xf32, #tpu.memory_space<vmem>>, %arg4: memref<32x32xbf16, #tpu.memory_space<vmem>>, %arg5: memref<1x32xf32, #tpu.memory_space<vmem>>, %arg6: memref<32x64xbf16, #tpu.memory_space<vmem>>, %arg7: memref<1x64xf32, #tpu.memory_space<vmem>>, %arg8: memref<32x32xbf16, #tpu.memory_space<vmem>>, %arg9: memref<1x32xf32, #tpu.memory_space<vmem>>, %arg10: memref<4x128x128xf32, #tpu.memory_space<vmem>>, %arg11: memref<1x32xf32, #tpu.memory_space<vmem>>, %arg12: memref<1x32xf32, #tpu.memory_space<vmem>>, %arg13: memref<32x128xbf16, #tpu.memory_space<vmem>>, %arg14: memref<1x128xf32, #tpu.memory_space<vmem>>, %arg15: memref<128x32xbf16, #tpu.memory_space<vmem>>, %arg16: memref<1x32xf32, #tpu.memory_space<vmem>>, %arg17: memref<256x32xf32, #tpu.memory_space<vmem>>) attributes {dimension_semantics = [#tpu.dimension_semantics<arbitrary>], iteration_bounds = array<i64: 1>, scalar_prefetch = 0 : i64, scratch_operands = 0 : i64, tpu.core_type = #tpu.core_type<tc>, window_params = [{pipeline_mode = #tpu.pipeline_mode<synchronous>, transform_indices = @transform_0, window_bounds = array<i64: 512, 32>}, {pipeline_mode = #tpu.pipeline_mode<synchronous>, transform_indices = @transform_1, window_bounds = array<i64: 1, 32>}, {pipeline_mode = #tpu.pipeline_mode<synchronous>, transform_indices = @transform_2, window_bounds = array<i64: 1, 32>}, {pipeline_mode = #tpu.pipeline_mode<synchronous>, transform_indices = @transform_3, window_bounds = array<i64: 32, 32>}, {pipeline_mode = #tpu.pipeline_mode<synchronous>, transform_indices = @transform_4, window_bounds = array<i64: 1, 32>}, {pipeline_mode = #tpu.pipeline_mode<synchronous>, transform_indices = @transform_5, window_bounds = array<i64: 32, 64>}, {pipeline_mode = #tpu.pipeline_mode<synchronous>, transform_indices = @transform_6, window_bounds = array<i64: 1, 64>}, {pipeline_mode = #tpu.pipeline_mode<synchronous>, transform_indices = @transform_7, window_bounds = array<i64: 32, 32>}, {pipeline_mode = #tpu.pipeline_mode<synchronous>, transform_indices = @transform_8, window_bounds = array<i64: 1, 32>}, {pipeline_mode = #tpu.pipeline_mode<synchronous>, transform_indices = @transform_9, window_bounds = array<i64: 4, 128, 128>}, {pipeline_mode = #tpu.pipeline_mode<synchronous>, transform_indices = @transform_10, window_bounds = array<i64: 1, 32>}, {pipeline_mode = #tpu.pipeline_mode<synchronous>, transform_indices = @transform_11, window_bounds = array<i64: 1, 32>}, {pipeline_mode = #tpu.pipeline_mode<synchronous>, transform_indices = @transform_12, window_bounds = array<i64: 32, 128>}, {pipeline_mode = #tpu.pipeline_mode<synchronous>, transform_indices = @transform_13, window_bounds = array<i64: 1, 128>}, {pipeline_mode = #tpu.pipeline_mode<synchronous>, transform_indices = @transform_14, window_bounds = array<i64: 128, 32>}, {pipeline_mode = #tpu.pipeline_mode<synchronous>, transform_indices = @transform_15, window_bounds = array<i64: 1, 32>}, {pipeline_mode = #tpu.pipeline_mode<synchronous>, transform_indices = @transform_16, window_bounds = array<i64: 256, 32>}]} {
    %c0 = arith.constant 0 : index
    %c0_0 = arith.constant 0 : index
    %0 = vector.load %arg1[%c0, %c0_0] : memref<512x32xf32, #tpu.memory_space<vmem>>, vector<512x32xf32>
    %c0_1 = arith.constant 0 : index
    %c0_2 = arith.constant 0 : index
    %1 = vector.load %arg2[%c0_1, %c0_2] : memref<1x32xf32, #tpu.memory_space<vmem>>, vector<1x32xf32>
    %c0_3 = arith.constant 0 : index
    %c0_4 = arith.constant 0 : index
    %2 = vector.load %arg3[%c0_3, %c0_4] : memref<1x32xf32, #tpu.memory_space<vmem>>, vector<1x32xf32>
    %cst = arith.constant dense<0.000000e+00> : vector<512xf32>
    %3 = vector.multi_reduction <add>, %0, %cst [1] : vector<512x32xf32> to vector<512xf32>
    %4 = vector.shape_cast %3 : vector<512xf32> to vector<512x1xf32>
    %cst_5 = arith.constant 3.200000e+01 : f32
    %5 = vector.broadcast %cst_5 : f32 to vector<512x1xf32>
    %6 = arith.divf %4, %5 : vector<512x1xf32>
    %7 = vector.broadcast %6 : vector<512x1xf32> to vector<512x32xf32>
    %8 = arith.subf %0, %7 : vector<512x32xf32>
    %9 = arith.mulf %8, %8 : vector<512x32xf32>
    %cst_6 = arith.constant dense<0.000000e+00> : vector<512xf32>
    %10 = vector.multi_reduction <add>, %9, %cst_6 [1] : vector<512x32xf32> to vector<512xf32>
    %11 = vector.shape_cast %10 : vector<512xf32> to vector<512x1xf32>
    %cst_7 = arith.constant 3.200000e+01 : f32
    %12 = vector.broadcast %cst_7 : f32 to vector<512x1xf32>
    %13 = arith.divf %11, %12 : vector<512x1xf32>
    %14 = vector.broadcast %6 : vector<512x1xf32> to vector<512x32xf32>
    %15 = arith.subf %0, %14 : vector<512x32xf32>
    %cst_8 = arith.constant 9.99999974E-6 : f32
    %16 = vector.broadcast %cst_8 : f32 to vector<512x1xf32>
    %17 = arith.addf %13, %16 : vector<512x1xf32>
    %18 = math.rsqrt %17 : vector<512x1xf32>
    %19 = vector.broadcast %18 : vector<512x1xf32> to vector<512x32xf32>
    %20 = arith.mulf %15, %19 : vector<512x32xf32>
    %21 = vector.broadcast %1 : vector<1x32xf32> to vector<512x32xf32>
    %22 = arith.mulf %20, %21 : vector<512x32xf32>
    %23 = vector.broadcast %2 : vector<1x32xf32> to vector<512x32xf32>
    %24 = arith.addf %22, %23 : vector<512x32xf32>
    %25 = vector.extract_strided_slice %0 {offsets = [0, 0], sizes = [256, 32], strides = [1, 1]} : vector<512x32xf32> to vector<256x32xf32>
    %26 = vector.extract_strided_slice %24 {offsets = [0, 0], sizes = [256, 32], strides = [1, 1]} : vector<512x32xf32> to vector<256x32xf32>
    %27 = vector.extract_strided_slice %24 {offsets = [256, 0], sizes = [256, 32], strides = [1, 1]} : vector<512x32xf32> to vector<256x32xf32>
    %28 = arith.truncf %26 : vector<256x32xf32> to vector<256x32xbf16>
    %c0_9 = arith.constant 0 : index
    %c0_10 = arith.constant 0 : index
    %29 = vector.load %arg4[%c0_9, %c0_10] : memref<32x32xbf16, #tpu.memory_space<vmem>>, vector<32x32xbf16>
    %cst_11 = arith.constant dense<0.000000e+00> : vector<256x32xf32>
    %30 = tpu.matmul %28, %29, %cst_11 {dimension_numbers = #tpu.dot_dimension_numbers<[1], [0], [0], [1], [0, 0, 1, 1], [], []>} : vector<256x32xbf16>, vector<32x32xbf16>, vector<256x32xf32> -> vector<256x32xf32>
    %c0_12 = arith.constant 0 : index
    %c0_13 = arith.constant 0 : index
    %31 = vector.load %arg5[%c0_12, %c0_13] : memref<1x32xf32, #tpu.memory_space<vmem>>, vector<1x32xf32>
    %32 = vector.broadcast %31 : vector<1x32xf32> to vector<256x32xf32>
    %33 = arith.addf %30, %32 : vector<256x32xf32>
    %34 = arith.truncf %27 : vector<256x32xf32> to vector<256x32xbf16>
    %c0_14 = arith.constant 0 : index
    %c0_15 = arith.constant 0 : index
    %35 = vector.load %arg6[%c0_14, %c0_15] : memref<32x64xbf16, #tpu.memory_space<vmem>>, vector<32x64xbf16>
    %cst_16 = arith.constant dense<0.000000e+00> : vector<256x64xf32>
    %36 = tpu.matmul %34, %35, %cst_16 {dimension_numbers = #tpu.dot_dimension_numbers<[1], [0], [0], [1], [0, 0, 1, 1], [], []>} : vector<256x32xbf16>, vector<32x64xbf16>, vector<256x64xf32> -> vector<256x64xf32>
    %c0_17 = arith.constant 0 : index
    %c0_18 = arith.constant 0 : index
    %37 = vector.load %arg7[%c0_17, %c0_18] : memref<1x64xf32, #tpu.memory_space<vmem>>, vector<1x64xf32>
    %38 = vector.broadcast %37 : vector<1x64xf32> to vector<256x64xf32>
    %39 = arith.addf %36, %38 : vector<256x64xf32>
    %40 = vector.extract_strided_slice %39 {offsets = [0, 0], sizes = [256, 32], strides = [1, 1]} : vector<256x64xf32> to vector<256x32xf32>
    %41 = vector.extract_strided_slice %39 {offsets = [0, 32], sizes = [256, 32], strides = [1, 1]} : vector<256x64xf32> to vector<256x32xf32>
    %cst_19 = arith.constant 0.353553385 : f32
    %42 = vector.broadcast %cst_19 : f32 to vector<256x32xf32>
    %43 = arith.mulf %33, %42 : vector<256x32xf32>
    %44 = vector.extract_strided_slice %43 {offsets = [0, 0], sizes = [256, 8], strides = [1, 1]} : vector<256x32xf32> to vector<256x8xf32>
    %45 = vector.extract_strided_slice %43 {offsets = [0, 8], sizes = [256, 8], strides = [1, 1]} : vector<256x32xf32> to vector<256x8xf32>
    %46 = vector.extract_strided_slice %43 {offsets = [0, 16], sizes = [256, 8], strides = [1, 1]} : vector<256x32xf32> to vector<256x8xf32>
    %47 = vector.extract_strided_slice %43 {offsets = [0, 24], sizes = [256, 8], strides = [1, 1]} : vector<256x32xf32> to vector<256x8xf32>
    %48 = vector.shape_cast %44 : vector<256x8xf32> to vector<1x256x8xf32>
    %49 = vector.shape_cast %45 : vector<256x8xf32> to vector<1x256x8xf32>
    %50 = vector.shape_cast %46 : vector<256x8xf32> to vector<1x256x8xf32>
    %51 = vector.shape_cast %47 : vector<256x8xf32> to vector<1x256x8xf32>
    %52 = tpu.concatenate %48, %49, %50, %51 in 0 : vector<1x256x8xf32>, vector<1x256x8xf32>, vector<1x256x8xf32>, vector<1x256x8xf32> -> vector<4x256x8xf32>
    %53 = vector.shape_cast %52 : vector<4x256x8xf32> to vector<8x128x8xf32>
    %54 = vector.extract_strided_slice %40 {offsets = [0, 0], sizes = [256, 8], strides = [1, 1]} : vector<256x32xf32> to vector<256x8xf32>
    %55 = vector.extract_strided_slice %40 {offsets = [0, 8], sizes = [256, 8], strides = [1, 1]} : vector<256x32xf32> to vector<256x8xf32>
    %56 = vector.extract_strided_slice %40 {offsets = [0, 16], sizes = [256, 8], strides = [1, 1]} : vector<256x32xf32> to vector<256x8xf32>
    %57 = vector.extract_strided_slice %40 {offsets = [0, 24], sizes = [256, 8], strides = [1, 1]} : vector<256x32xf32> to vector<256x8xf32>
    %58 = vector.shape_cast %54 : vector<256x8xf32> to vector<1x256x8xf32>
    %59 = vector.shape_cast %55 : vector<256x8xf32> to vector<1x256x8xf32>
    %60 = vector.shape_cast %56 : vector<256x8xf32> to vector<1x256x8xf32>
    %61 = vector.shape_cast %57 : vector<256x8xf32> to vector<1x256x8xf32>
    %62 = tpu.concatenate %58, %59, %60, %61 in 0 : vector<1x256x8xf32>, vector<1x256x8xf32>, vector<1x256x8xf32>, vector<1x256x8xf32> -> vector<4x256x8xf32>
    %63 = vector.shape_cast %62 : vector<4x256x8xf32> to vector<8x128x8xf32>
    %64 = vector.extract_strided_slice %41 {offsets = [0, 0], sizes = [256, 8], strides = [1, 1]} : vector<256x32xf32> to vector<256x8xf32>
    %65 = vector.extract_strided_slice %41 {offsets = [0, 8], sizes = [256, 8], strides = [1, 1]} : vector<256x32xf32> to vector<256x8xf32>
    %66 = vector.extract_strided_slice %41 {offsets = [0, 16], sizes = [256, 8], strides = [1, 1]} : vector<256x32xf32> to vector<256x8xf32>
    %67 = vector.extract_strided_slice %41 {offsets = [0, 24], sizes = [256, 8], strides = [1, 1]} : vector<256x32xf32> to vector<256x8xf32>
    %68 = vector.shape_cast %64 : vector<256x8xf32> to vector<1x256x8xf32>
    %69 = vector.shape_cast %65 : vector<256x8xf32> to vector<1x256x8xf32>
    %70 = vector.shape_cast %66 : vector<256x8xf32> to vector<1x256x8xf32>
    %71 = vector.shape_cast %67 : vector<256x8xf32> to vector<1x256x8xf32>
    %72 = tpu.concatenate %68, %69, %70, %71 in 0 : vector<1x256x8xf32>, vector<1x256x8xf32>, vector<1x256x8xf32>, vector<1x256x8xf32> -> vector<4x256x8xf32>
    %73 = vector.shape_cast %72 : vector<4x256x8xf32> to vector<8x128x8xf32>
    "tpu.trace_start"() <{level = 10 : i32, message = "bqd,bkd->bqk"}> : () -> ()
    %cst_20 = arith.constant dense<0.000000e+00> : vector<8x128x128xf32>
    %74 = tpu.matmul %53, %63, %cst_20 {dimension_numbers = #tpu.dot_dimension_numbers<[2], [2], [1], [1], [0, 0, 0, 1, 1, 1], [0], [0]>} : vector<8x128x8xf32>, vector<8x128x8xf32>, vector<8x128x128xf32> -> vector<8x128x128xf32>
    "tpu.trace_stop"() : () -> ()
    %75 = vector.shape_cast %74 : vector<8x128x128xf32> to vector<4x2x128x128xf32>
    %c0_21 = arith.constant 0 : index
    %c0_22 = arith.constant 0 : index
    %c0_23 = arith.constant 0 : index
    %76 = vector.load %arg10[%c0_21, %c0_22, %c0_23] : memref<4x128x128xf32, #tpu.memory_space<vmem>>, vector<4x128x128xf32>
    %77 = vector.shape_cast %76 : vector<4x128x128xf32> to vector<4x1x128x128xf32>
    %78 = vector.broadcast %77 : vector<4x1x128x128xf32> to vector<4x2x128x128xf32>
    %79 = arith.addf %75, %78 : vector<4x2x128x128xf32>
    %80 = vector.shape_cast %79 : vector<4x2x128x128xf32> to vector<8x128x128xf32>
    %cst_24 = arith.constant dense<0xFF800000> : vector<8x128xf32>
    %81 = vector.multi_reduction <maximumf>, %80, %cst_24 [2] : vector<8x128x128xf32> to vector<8x128xf32>
    %82 = vector.shape_cast %81 : vector<8x128xf32> to vector<8x128x1xf32>
    %83 = vector.broadcast %82 : vector<8x128x1xf32> to vector<8x128x128xf32>
    %84 = arith.subf %80, %83 : vector<8x128x128xf32>
    %85 = math.exp %84 : vector<8x128x128xf32>
    %cst_25 = arith.constant dense<0.000000e+00> : vector<8x128xf32>
    %86 = vector.multi_reduction <add>, %85, %cst_25 [2] : vector<8x128x128xf32> to vector<8x128xf32>
    %87 = vector.shape_cast %86 : vector<8x128xf32> to vector<8x128x1xf32>
    %88 = tpu.reciprocal %87 {approx = true} : vector<8x128x1xf32> -> vector<8x128x1xf32>
    %89 = vector.broadcast %88 : vector<8x128x1xf32> to vector<8x128x128xf32>
    %90 = arith.mulf %85, %89 : vector<8x128x128xf32>
    "tpu.trace_start"() <{level = 10 : i32, message = "bqk,bkd->bqd"}> : () -> ()
    %cst_26 = arith.constant dense<0.000000e+00> : vector<8x128x8xf32>
    %91 = tpu.matmul %90, %73, %cst_26 {dimension_numbers = #tpu.dot_dimension_numbers<[2], [1], [1], [2], [0, 0, 0, 1, 1, 2], [0], [0]>} : vector<8x128x128xf32>, vector<8x128x8xf32>, vector<8x128x8xf32> -> vector<8x128x8xf32>
    "tpu.trace_stop"() : () -> ()
    %92 = vector.extract_strided_slice %91 {offsets = [0, 0, 0], sizes = [2, 128, 8], strides = [1, 1, 1]} : vector<8x128x8xf32> to vector<2x128x8xf32>
    %93 = vector.extract_strided_slice %91 {offsets = [2, 0, 0], sizes = [2, 128, 8], strides = [1, 1, 1]} : vector<8x128x8xf32> to vector<2x128x8xf32>
    %94 = vector.extract_strided_slice %91 {offsets = [4, 0, 0], sizes = [2, 128, 8], strides = [1, 1, 1]} : vector<8x128x8xf32> to vector<2x128x8xf32>
    %95 = vector.extract_strided_slice %91 {offsets = [6, 0, 0], sizes = [2, 128, 8], strides = [1, 1, 1]} : vector<8x128x8xf32> to vector<2x128x8xf32>
    %96 = tpu.concatenate %92, %93, %94, %95 in 2 : vector<2x128x8xf32>, vector<2x128x8xf32>, vector<2x128x8xf32>, vector<2x128x8xf32> -> vector<2x128x32xf32>
    %97 = vector.shape_cast %96 : vector<2x128x32xf32> to vector<256x32xf32>
    %98 = arith.truncf %97 : vector<256x32xf32> to vector<256x32xbf16>
    %c0_27 = arith.constant 0 : index
    %c0_28 = arith.constant 0 : index
    %99 = vector.load %arg8[%c0_27, %c0_28] : memref<32x32xbf16, #tpu.memory_space<vmem>>, vector<32x32xbf16>
    %cst_29 = arith.constant dense<0.000000e+00> : vector<256x32xf32>
    %100 = tpu.matmul %98, %99, %cst_29 {dimension_numbers = #tpu.dot_dimension_numbers<[1], [0], [0], [1], [0, 0, 1, 1], [], []>} : vector<256x32xbf16>, vector<32x32xbf16>, vector<256x32xf32> -> vector<256x32xf32>
    %c0_30 = arith.constant 0 : index
    %c0_31 = arith.constant 0 : index
    %101 = vector.load %arg9[%c0_30, %c0_31] : memref<1x32xf32, #tpu.memory_space<vmem>>, vector<1x32xf32>
    %102 = vector.broadcast %101 : vector<1x32xf32> to vector<256x32xf32>
    %103 = arith.addf %100, %102 : vector<256x32xf32>
    %c64_i32 = arith.constant 64 : i32
    %104 = tpu.dynamic_rotate %90 by %c64_i32 dim 2 : vector<8x128x128xf32>, i32 -> vector<8x128x128xf32>
    %105 = vector.extract_strided_slice %104 {offsets = [0, 64, 0], sizes = [8, 64, 128], strides = [1, 1, 1]} : vector<8x128x128xf32> to vector<8x64x128xf32>
    %106 = vector.extract_strided_slice %104 {offsets = [0, 0, 0], sizes = [8, 64, 128], strides = [1, 1, 1]} : vector<8x128x128xf32> to vector<8x64x128xf32>
    %107 = tpu.concatenate %105, %106 in 1 : vector<8x64x128xf32>, vector<8x64x128xf32> -> vector<8x128x128xf32>
    "tpu.trace_start"() <{level = 10 : i32, message = "bqk,bkp->bqp"}> : () -> ()
    %cst_32 = arith.constant dense<0.000000e+00> : vector<8x128x128xf32>
    %108 = tpu.matmul %90, %107, %cst_32 {dimension_numbers = #tpu.dot_dimension_numbers<[2], [1], [1], [2], [0, 0, 0, 1, 1, 2], [0], [0]>} : vector<8x128x128xf32>, vector<8x128x128xf32>, vector<8x128x128xf32> -> vector<8x128x128xf32>
    "tpu.trace_stop"() : () -> ()
    %109 = tpu.iota {dimensions = array<i32: 0>} : vector<128x128xi32>
    %110 = tpu.iota {dimensions = array<i32: 1>} : vector<128x128xi32>
    %111 = arith.subi %109, %110 : vector<128x128xi32>
    %112 = math.absi %111 : vector<128x128xi32>
    %c2_i32 = arith.constant 2 : i32
    %113 = vector.broadcast %c2_i32 : i32 to vector<128x128xi32>
    %114 = arith.cmpi sle, %112, %113 : vector<128x128xi32>
    %115 = arith.extui %114 : vector<128x128xi1> to vector<128x128xi32>
    %116 = arith.sitofp %115 : vector<128x128xi32> to vector<128x128xf32>
    %117 = vector.shape_cast %116 : vector<128x128xf32> to vector<1x128x128xf32>
    %118 = vector.broadcast %117 : vector<1x128x128xf32> to vector<8x128x128xf32>
    %119 = arith.mulf %118, %108 : vector<8x128x128xf32>
    %cst_33 = arith.constant dense<0.000000e+00> : vector<8x128xf32>
    %120 = vector.multi_reduction <add>, %119, %cst_33 [1] : vector<8x128x128xf32> to vector<8x128xf32>
    %cst_34 = arith.constant 5.000000e+00 : f32
    %121 = vector.broadcast %cst_34 : f32 to vector<8x128xf32>
    %122 = arith.mulf %121, %120 : vector<8x128xf32>
    %123 = math.tanh %122 : vector<8x128xf32>
    %124 = vector.extract_strided_slice %123 {offsets = [0, 0], sizes = [2, 128], strides = [1, 1]} : vector<8x128xf32> to vector<2x128xf32>
    %125 = vector.shape_cast %124 : vector<2x128xf32> to vector<2x128x1xf32>
    %126 = vector.shape_cast %125 : vector<2x128x1xf32> to vector<2x128x1xf32>
    %127 = vector.broadcast %126 : vector<2x128x1xf32> to vector<2x128x8xf32>
    %128 = vector.extract_strided_slice %123 {offsets = [2, 0], sizes = [2, 128], strides = [1, 1]} : vector<8x128xf32> to vector<2x128xf32>
    %129 = vector.shape_cast %128 : vector<2x128xf32> to vector<2x128x1xf32>
    %130 = vector.shape_cast %129 : vector<2x128x1xf32> to vector<2x128x1xf32>
    %131 = vector.broadcast %130 : vector<2x128x1xf32> to vector<2x128x8xf32>
    %132 = vector.extract_strided_slice %123 {offsets = [4, 0], sizes = [2, 128], strides = [1, 1]} : vector<8x128xf32> to vector<2x128xf32>
    %133 = vector.shape_cast %132 : vector<2x128xf32> to vector<2x128x1xf32>
    %134 = vector.shape_cast %133 : vector<2x128x1xf32> to vector<2x128x1xf32>
    %135 = vector.broadcast %134 : vector<2x128x1xf32> to vector<2x128x8xf32>
    %136 = vector.extract_strided_slice %123 {offsets = [6, 0], sizes = [2, 128], strides = [1, 1]} : vector<8x128xf32> to vector<2x128xf32>
    %137 = vector.shape_cast %136 : vector<2x128xf32> to vector<2x128x1xf32>
    %138 = vector.shape_cast %137 : vector<2x128x1xf32> to vector<2x128x1xf32>
    %139 = vector.broadcast %138 : vector<2x128x1xf32> to vector<2x128x8xf32>
    %140 = tpu.concatenate %127, %131, %135, %139 in 2 : vector<2x128x8xf32>, vector<2x128x8xf32>, vector<2x128x8xf32>, vector<2x128x8xf32> -> vector<2x128x32xf32>
    %141 = vector.shape_cast %140 : vector<2x128x32xf32> to vector<256x32xf32>
    %142 = arith.addf %25, %26 : vector<256x32xf32>
    %143 = arith.subf %103, %26 : vector<256x32xf32>
    %144 = arith.mulf %143, %141 : vector<256x32xf32>
    %145 = arith.addf %142, %144 : vector<256x32xf32>
    %c0_35 = arith.constant 0 : index
    %c0_36 = arith.constant 0 : index
    %146 = vector.load %arg11[%c0_35, %c0_36] : memref<1x32xf32, #tpu.memory_space<vmem>>, vector<1x32xf32>
    %c0_37 = arith.constant 0 : index
    %c0_38 = arith.constant 0 : index
    %147 = vector.load %arg12[%c0_37, %c0_38] : memref<1x32xf32, #tpu.memory_space<vmem>>, vector<1x32xf32>
    %cst_39 = arith.constant dense<0.000000e+00> : vector<256xf32>
    %148 = vector.multi_reduction <add>, %145, %cst_39 [1] : vector<256x32xf32> to vector<256xf32>
    %149 = vector.shape_cast %148 : vector<256xf32> to vector<256x1xf32>
    %cst_40 = arith.constant 3.200000e+01 : f32
    %150 = vector.broadcast %cst_40 : f32 to vector<256x1xf32>
    %151 = arith.divf %149, %150 : vector<256x1xf32>
    %152 = vector.broadcast %151 : vector<256x1xf32> to vector<256x32xf32>
    %153 = arith.subf %145, %152 : vector<256x32xf32>
    %154 = arith.mulf %153, %153 : vector<256x32xf32>
    %cst_41 = arith.constant dense<0.000000e+00> : vector<256xf32>
    %155 = vector.multi_reduction <add>, %154, %cst_41 [1] : vector<256x32xf32> to vector<256xf32>
    %156 = vector.shape_cast %155 : vector<256xf32> to vector<256x1xf32>
    %cst_42 = arith.constant 3.200000e+01 : f32
    %157 = vector.broadcast %cst_42 : f32 to vector<256x1xf32>
    %158 = arith.divf %156, %157 : vector<256x1xf32>
    %159 = vector.broadcast %151 : vector<256x1xf32> to vector<256x32xf32>
    %160 = arith.subf %145, %159 : vector<256x32xf32>
    %cst_43 = arith.constant 9.99999974E-6 : f32
    %161 = vector.broadcast %cst_43 : f32 to vector<256x1xf32>
    %162 = arith.addf %158, %161 : vector<256x1xf32>
    %163 = math.rsqrt %162 : vector<256x1xf32>
    %164 = vector.broadcast %163 : vector<256x1xf32> to vector<256x32xf32>
    %165 = arith.mulf %160, %164 : vector<256x32xf32>
    %166 = vector.broadcast %146 : vector<1x32xf32> to vector<256x32xf32>
    %167 = arith.mulf %165, %166 : vector<256x32xf32>
    %168 = vector.broadcast %147 : vector<1x32xf32> to vector<256x32xf32>
    %169 = arith.addf %167, %168 : vector<256x32xf32>
    %170 = arith.truncf %169 : vector<256x32xf32> to vector<256x32xbf16>
    %c0_44 = arith.constant 0 : index
    %c0_45 = arith.constant 0 : index
    %171 = vector.load %arg13[%c0_44, %c0_45] : memref<32x128xbf16, #tpu.memory_space<vmem>>, vector<32x128xbf16>
    %cst_46 = arith.constant dense<0.000000e+00> : vector<256x128xf32>
    %172 = tpu.matmul %170, %171, %cst_46 {dimension_numbers = #tpu.dot_dimension_numbers<[1], [0], [0], [1], [0, 0, 1, 1], [], []>} : vector<256x32xbf16>, vector<32x128xbf16>, vector<256x128xf32> -> vector<256x128xf32>
    %c0_47 = arith.constant 0 : index
    %c0_48 = arith.constant 0 : index
    %173 = vector.load %arg14[%c0_47, %c0_48] : memref<1x128xf32, #tpu.memory_space<vmem>>, vector<1x128xf32>
    %174 = vector.broadcast %173 : vector<1x128xf32> to vector<256x128xf32>
    %175 = arith.addf %172, %174 : vector<256x128xf32>
    %cst_49 = arith.constant 5.000000e-01 : f32
    %176 = vector.broadcast %cst_49 : f32 to vector<256x128xf32>
    %177 = arith.mulf %176, %175 : vector<256x128xf32>
    %cst_50 = arith.constant 0.707106769 : f32
    %178 = vector.broadcast %cst_50 : f32 to vector<256x128xf32>
    %179 = arith.mulf %175, %178 : vector<256x128xf32>
    %180 = math.absf %179 : vector<256x128xf32>
    %cst_51 = arith.constant 0.327591091 : f32
    %181 = vector.broadcast %cst_51 : f32 to vector<256x128xf32>
    %182 = arith.mulf %181, %180 : vector<256x128xf32>
    %cst_52 = arith.constant 1.000000e+00 : f32
    %183 = vector.broadcast %cst_52 : f32 to vector<256x128xf32>
    %184 = arith.addf %183, %182 : vector<256x128xf32>
    %cst_53 = arith.constant 1.000000e+00 : f32
    %185 = vector.broadcast %cst_53 : f32 to vector<256x128xf32>
    %186 = arith.divf %185, %184 : vector<256x128xf32>
    %cst_54 = arith.constant 1.06140542 : f32
    %187 = vector.broadcast %cst_54 : f32 to vector<256x128xf32>
    %188 = arith.mulf %187, %186 : vector<256x128xf32>
    %cst_55 = arith.constant -1.45315206 : f32
    %189 = vector.broadcast %cst_55 : f32 to vector<256x128xf32>
    %190 = arith.addf %188, %189 : vector<256x128xf32>
    %191 = arith.mulf %190, %186 : vector<256x128xf32>
    %cst_56 = arith.constant 1.42141378 : f32
    %192 = vector.broadcast %cst_56 : f32 to vector<256x128xf32>
    %193 = arith.addf %191, %192 : vector<256x128xf32>
    %194 = arith.mulf %193, %186 : vector<256x128xf32>
    %cst_57 = arith.constant -0.284496725 : f32
    %195 = vector.broadcast %cst_57 : f32 to vector<256x128xf32>
    %196 = arith.addf %194, %195 : vector<256x128xf32>
    %197 = arith.mulf %196, %186 : vector<256x128xf32>
    %cst_58 = arith.constant 0.254829586 : f32
    %198 = vector.broadcast %cst_58 : f32 to vector<256x128xf32>
    %199 = arith.addf %197, %198 : vector<256x128xf32>
    %200 = arith.mulf %199, %186 : vector<256x128xf32>
    %201 = arith.mulf %180, %180 : vector<256x128xf32>
    %cst_59 = arith.constant 0.000000e+00 : f32
    %202 = vector.broadcast %cst_59 : f32 to vector<256x128xf32>
    %203 = arith.subf %202, %201 : vector<256x128xf32>
    %204 = math.exp %203 : vector<256x128xf32>
    %205 = arith.mulf %200, %204 : vector<256x128xf32>
    %cst_60 = arith.constant 1.000000e+00 : f32
    %206 = vector.broadcast %cst_60 : f32 to vector<256x128xf32>
    %207 = arith.subf %206, %205 : vector<256x128xf32>
    %cst_61 = arith.constant 0.000000e+00 : f32
    %208 = vector.broadcast %cst_61 : f32 to vector<256x128xf32>
    %209 = arith.cmpf oge, %179, %208 : vector<256x128xf32>
    %cst_62 = arith.constant 0.000000e+00 : f32
    %210 = vector.broadcast %cst_62 : f32 to vector<256x128xf32>
    %211 = arith.subf %210, %207 : vector<256x128xf32>
    %212 = arith.select %209, %207, %211 : vector<256x128xi1>, vector<256x128xf32>
    %cst_63 = arith.constant 1.000000e+00 : f32
    %213 = vector.broadcast %cst_63 : f32 to vector<256x128xf32>
    %214 = arith.addf %213, %212 : vector<256x128xf32>
    %215 = arith.mulf %177, %214 : vector<256x128xf32>
    %216 = arith.truncf %215 : vector<256x128xf32> to vector<256x128xbf16>
    %c0_64 = arith.constant 0 : index
    %c0_65 = arith.constant 0 : index
    %217 = vector.load %arg15[%c0_64, %c0_65] : memref<128x32xbf16, #tpu.memory_space<vmem>>, vector<128x32xbf16>
    %cst_66 = arith.constant dense<0.000000e+00> : vector<256x32xf32>
    %218 = tpu.matmul %216, %217, %cst_66 {dimension_numbers = #tpu.dot_dimension_numbers<[1], [0], [0], [1], [0, 0, 1, 1], [], []>} : vector<256x128xbf16>, vector<128x32xbf16>, vector<256x32xf32> -> vector<256x32xf32>
    %c0_67 = arith.constant 0 : index
    %c0_68 = arith.constant 0 : index
    %219 = vector.load %arg16[%c0_67, %c0_68] : memref<1x32xf32, #tpu.memory_space<vmem>>, vector<1x32xf32>
    %220 = vector.broadcast %219 : vector<1x32xf32> to vector<256x32xf32>
    %221 = arith.addf %218, %220 : vector<256x32xf32>
    %222 = arith.addf %145, %221 : vector<256x32xf32>
    %c0_69 = arith.constant 0 : index
    %c0_70 = arith.constant 0 : index
    %223 = vector.load %arg17[%c0_69, %c0_70] : memref<256x32xf32, #tpu.memory_space<vmem>>, vector<256x32xf32>
    tpu.vector_store %arg17[%c0_69, %c0_70], %222 {strides = array<i32>} : memref<256x32xf32, #tpu.memory_space<vmem>>, vector<256x32xf32>,
    return
  }
  func.func @transform_0(%arg0: i32) -> (i32, i32) {
    %c0_i32 = arith.constant 0 : i32
    %c0_i32_0 = arith.constant 0 : i32
    %c0_i32_1 = arith.constant 0 : i32
    return %c0_i32, %c0_i32_0 : i32, i32
  }
  func.func @transform_1(%arg0: i32) -> (i32, i32) {
    %c0_i32 = arith.constant 0 : i32
    %c0_i32_0 = arith.constant 0 : i32
    %c0_i32_1 = arith.constant 0 : i32
    return %c0_i32, %c0_i32_0 : i32, i32
  }
  func.func @transform_2(%arg0: i32) -> (i32, i32) {
    %c0_i32 = arith.constant 0 : i32
    %c0_i32_0 = arith.constant 0 : i32
    %c0_i32_1 = arith.constant 0 : i32
    return %c0_i32, %c0_i32_0 : i32, i32
  }
  func.func @transform_3(%arg0: i32) -> (i32, i32) {
    %c0_i32 = arith.constant 0 : i32
    %c0_i32_0 = arith.constant 0 : i32
    %c0_i32_1 = arith.constant 0 : i32
    return %c0_i32, %c0_i32_0 : i32, i32
  }
  func.func @transform_4(%arg0: i32) -> (i32, i32) {
    %c0_i32 = arith.constant 0 : i32
    %c0_i32_0 = arith.constant 0 : i32
    %c0_i32_1 = arith.constant 0 : i32
    return %c0_i32, %c0_i32_0 : i32, i32
  }
  func.func @transform_5(%arg0: i32) -> (i32, i32) {
    %c0_i32 = arith.constant 0 : i32
    %c0_i32_0 = arith.constant 0 : i32
    %c0_i32_1 = arith.constant 0 : i32
    return %c0_i32, %c0_i32_0 : i32, i32
  }
  func.func @transform_6(%arg0: i32) -> (i32, i32) {
    %c0_i32 = arith.constant 0 : i32
    %c0_i32_0 = arith.constant 0 : i32
    %c0_i32_1 = arith.constant 0 : i32
    return %c0_i32, %c0_i32_0 : i32, i32
  }
  func.func @transform_7(%arg0: i32) -> (i32, i32) {
    %c0_i32 = arith.constant 0 : i32
    %c0_i32_0 = arith.constant 0 : i32
    %c0_i32_1 = arith.constant 0 : i32
    return %c0_i32, %c0_i32_0 : i32, i32
  }
  func.func @transform_8(%arg0: i32) -> (i32, i32) {
    %c0_i32 = arith.constant 0 : i32
    %c0_i32_0 = arith.constant 0 : i32
    %c0_i32_1 = arith.constant 0 : i32
    return %c0_i32, %c0_i32_0 : i32, i32
  }
  func.func @transform_9(%arg0: i32) -> (i32, i32, i32) {
    %c0_i32 = arith.constant 0 : i32
    %c0_i32_0 = arith.constant 0 : i32
    %c0_i32_1 = arith.constant 0 : i32
    %c0_i32_2 = arith.constant 0 : i32
    return %c0_i32, %c0_i32_0, %c0_i32_1 : i32, i32, i32
  }
  func.func @transform_10(%arg0: i32) -> (i32, i32) {
    %c0_i32 = arith.constant 0 : i32
    %c0_i32_0 = arith.constant 0 : i32
    %c0_i32_1 = arith.constant 0 : i32
    return %c0_i32, %c0_i32_0 : i32, i32
  }
  func.func @transform_11(%arg0: i32) -> (i32, i32) {
    %c0_i32 = arith.constant 0 : i32
    %c0_i32_0 = arith.constant 0 : i32
    %c0_i32_1 = arith.constant 0 : i32
    return %c0_i32, %c0_i32_0 : i32, i32
  }
  func.func @transform_12(%arg0: i32) -> (i32, i32) {
    %c0_i32 = arith.constant 0 : i32
    %c0_i32_0 = arith.constant 0 : i32
    %c0_i32_1 = arith.constant 0 : i32
    return %c0_i32, %c0_i32_0 : i32, i32
  }
  func.func @transform_13(%arg0: i32) -> (i32, i32) {
    %c0_i32 = arith.constant 0 : i32
    %c0_i32_0 = arith.constant 0 : i32
    %c0_i32_1 = arith.constant 0 : i32
    return %c0_i32, %c0_i32_0 : i32, i32
  }
  func.func @transform_14(%arg0: i32) -> (i32, i32) {
    %c0_i32 = arith.constant 0 : i32
    %c0_i32_0 = arith.constant 0 : i32
    %c0_i32_1 = arith.constant 0 : i32
    return %c0_i32, %c0_i32_0 : i32, i32
  }
  func.func @transform_15(%arg0: i32) -> (i32, i32) {
    %c0_i32 = arith.constant 0 : i32
    %c0_i32_0 = arith.constant 0 : i32
    %c0_i32_1 = arith.constant 0 : i32
    return %c0_i32, %c0_i32_0 : i32, i32
  }
  func.func @transform_16(%arg0: i32) -> (i32, i32) {
    %c0_i32 = arith.constant 0 : i32
    %c0_i32_0 = arith.constant 0 : i32
    %c0_i32_1 = arith.constant 0 : i32
    return %c0_i32, %c0_i32_0 : i32, i32
  }
}

</mosaic_0001>

<llo_original>
// kernel: coswin_forward.1
$region0: #{coswin_forward.1}
  #allocation0 [shape = 'u32[]', space=smem, size = 0x4, offset = 0x4, fixed_abs, tag = 'smem constant byte address 0x4 - core index']
  #allocation1 [shape = 'u32[72,128]{1,0:T(1,128)}', space=vmem, size = 0x9000, scoped, tag = 'internal scratch']
  %s0 = inlined_call_operand.vmem [shape: f32[512,32], index: 0, kind: input, shape index: {}]
  %s1 = inlined_call_operand.vmem [shape: f32[1,32], index: 1, kind: input, shape index: {}]
  %s2 = inlined_call_operand.vmem [shape: f32[1,32], index: 2, kind: input, shape index: {}]
  %s3 = inlined_call_operand.vmem [shape: bf16[32,32], index: 3, kind: input, shape index: {}]
  %s4 = inlined_call_operand.vmem [shape: f32[1,32], index: 4, kind: input, shape index: {}]
  %s5 = inlined_call_operand.vmem [shape: bf16[32,64], index: 5, kind: input, shape index: {}]
  %s6 = inlined_call_operand.vmem [shape: f32[1,64], index: 6, kind: input, shape index: {}]
  %s7 = inlined_call_operand.vmem [shape: bf16[32,32], index: 7, kind: input, shape index: {}]
  %s8 = inlined_call_operand.vmem [shape: f32[1,32], index: 8, kind: input, shape index: {}]
  %s9 = inlined_call_operand.vmem [shape: f32[4,128,128], index: 9, kind: input, shape index: {}]
  %s10 = inlined_call_operand.vmem [shape: f32[1,32], index: 10, kind: input, shape index: {}]
  %s11 = inlined_call_operand.vmem [shape: f32[1,32], index: 11, kind: input, shape index: {}]
  %s12 = inlined_call_operand.vmem [shape: bf16[32,128], index: 12, kind: input, shape index: {}]
  %s13 = inlined_call_operand.vmem [shape: f32[1,128], index: 13, kind: input, shape index: {}]
  %s14 = inlined_call_operand.vmem [shape: bf16[128,32], index: 14, kind: input, shape index: {}]
  %s15 = inlined_call_operand.vmem [shape: f32[1,32], index: 15, kind: input, shape index: {}]
  %s16 = inlined_call_operand.vmem [shape: f32[256,32], index: 16, kind: output, shape index: {}]
  %s17 = sld [smem:[#allocation0]]
  $region74: #{coswin_forward.1} parent=0
    _
  %s19 = ssub.s32 1, %s17
  %s20 = scalar_select 0, %s19, %s17
  // Predicated region
  $region2: #{coswin_forward.1} parent=0 // pred_check
    _
  $region3: #{coswin_forward.1} parent=0 // pred_check_branch
    %22 = sbr.rel (0) target = $region5
  $region4: #{coswin_forward.1} parent=0 // pred_region
    _
  $region5: #{coswin_forward.1} parent=0 // pred_fallthru
    _
  // Predicated region
  $region6: #{coswin_forward.1} parent=0 // pred_check
    _
  $region7: #{coswin_forward.1} parent=0 // pred_check_branch
    %24 = sbr.rel (0) target = $region9
  $region8: #{coswin_forward.1} parent=0 // pred_region
    _
  $region9: #{coswin_forward.1} parent=0 // pred_fallthru
    _
  // Predicated region
  $region10: #{coswin_forward.1} parent=0 // pred_check
    _
  $region11: #{coswin_forward.1} parent=0 // pred_check_branch
    %26 = sbr.rel (0) target = $region13
  $region12: #{coswin_forward.1} parent=0 // pred_region
    _
  $region13: #{coswin_forward.1} parent=0 // pred_fallthru
    _
  // Predicated region
  $region14: #{coswin_forward.1} parent=0 // pred_check
    _
  $region15: #{coswin_forward.1} parent=0 // pred_check_branch
    %28 = sbr.rel (0) target = $region17
  $region16: #{coswin_forward.1} parent=0 // pred_region
    _
  $region17: #{coswin_forward.1} parent=0 // pred_fallthru
    _
  // Predicated region
  $region18: #{coswin_forward.1} parent=0 // pred_check
    _
  $region19: #{coswin_forward.1} parent=0 // pred_check_branch
    %30 = sbr.rel (0) target = $region21
  $region20: #{coswin_forward.1} parent=0 // pred_region
    _
  $region21: #{coswin_forward.1} parent=0 // pred_fallthru
    _
  // Predicated region
  $region22: #{coswin_forward.1} parent=0 // pred_check
    _
  $region23: #{coswin_forward.1} parent=0 // pred_check_branch
    %32 = sbr.rel (0) target = $region25
  $region24: #{coswin_forward.1} parent=0 // pred_region
    _
  $region25: #{coswin_forward.1} parent=0 // pred_fallthru
    _
  // Predicated region
  $region26: #{coswin_forward.1} parent=0 // pred_check
    _
  $region27: #{coswin_forward.1} parent=0 // pred_check_branch
    %34 = sbr.rel (0) target = $region29
  $region28: #{coswin_forward.1} parent=0 // pred_region
    _
  $region29: #{coswin_forward.1} parent=0 // pred_fallthru
    _
  // Predicated region
  $region30: #{coswin_forward.1} parent=0 // pred_check
    _
  $region31: #{coswin_forward.1} parent=0 // pred_check_branch
    %36 = sbr.rel (0) target = $region33
  $region32: #{coswin_forward.1} parent=0 // pred_region
    _
  $region33: #{coswin_forward.1} parent=0 // pred_fallthru
    _
  // Predicated region
  $region34: #{coswin_forward.1} parent=0 // pred_check
    _
  $region35: #{coswin_forward.1} parent=0 // pred_check_branch
    %38 = sbr.rel (0) target = $region37
  $region36: #{coswin_forward.1} parent=0 // pred_region
    _
  $region37: #{coswin_forward.1} parent=0 // pred_fallthru
    _
  // Predicated region
  $region38: #{coswin_forward.1} parent=0 // pred_check
    _
  $region39: #{coswin_forward.1} parent=0 // pred_check_branch
    %40 = sbr.rel (0) target = $region41
  $region40: #{coswin_forward.1} parent=0 // pred_region
    _
  $region41: #{coswin_forward.1} parent=0 // pred_fallthru
    _
  // Predicated region
  $region42: #{coswin_forward.1} parent=0 // pred_check
    _
  $region43: #{coswin_forward.1} parent=0 // pred_check_branch
    %42 = sbr.rel (0) target = $region45
  $region44: #{coswin_forward.1} parent=0 // pred_region
    _
  $region45: #{coswin_forward.1} parent=0 // pred_fallthru
    _
  // Predicated region
  $region46: #{coswin_forward.1} parent=0 // pred_check
    _
  $region47: #{coswin_forward.1} parent=0 // pred_check_branch
    %44 = sbr.rel (0) target = $region49
  $region48: #{coswin_forward.1} parent=0 // pred_region
    _
  $region49: #{coswin_forward.1} parent=0 // pred_fallthru
    _
  // Predicated region
  $region50: #{coswin_forward.1} parent=0 // pred_check
    _
  $region51: #{coswin_forward.1} parent=0 // pred_check_branch
    %46 = sbr.rel (0) target = $region53
  $region52: #{coswin_forward.1} parent=0 // pred_region
    _
  $region53: #{coswin_forward.1} parent=0 // pred_fallthru
    _
  // Predicated region
  $region54: #{coswin_forward.1} parent=0 // pred_check
    _
  $region55: #{coswin_forward.1} parent=0 // pred_check_branch
    %48 = sbr.rel (0) target = $region57
  $region56: #{coswin_forward.1} parent=0 // pred_region
    _
  $region57: #{coswin_forward.1} parent=0 // pred_fallthru
    _
  // Predicated region
  $region58: #{coswin_forward.1} parent=0 // pred_check
    _
  $region59: #{coswin_forward.1} parent=0 // pred_check_branch
    %50 = sbr.rel (0) target = $region61
  $region60: #{coswin_forward.1} parent=0 // pred_region
    _
  $region61: #{coswin_forward.1} parent=0 // pred_fallthru
    _
  // Predicated region
  $region62: #{coswin_forward.1} parent=0 // pred_check
    _
  $region63: #{coswin_forward.1} parent=0 // pred_check_branch
    %52 = sbr.rel (0) target = $region65
  $region64: #{coswin_forward.1} parent=0 // pred_region
    _
  $region65: #{coswin_forward.1} parent=0 // pred_fallthru
    _
  %v54 = vld [vmem:[%s0] sm:$0xff]
  %v55 = vld [vmem:[%s0 + $0x8] sm:$0xff]
  %v56 = vld [vmem:[%s0 + $0x10] sm:$0xff]
  %v57 = vld [vmem:[%s0 + $0x18] sm:$0xff]
  %v58 = vld [vmem:[%s0 + $0x20] sm:$0xff]
  %v59 = vld [vmem:[%s0 + $0x28] sm:$0xff]
  %v60 = vld [vmem:[%s0 + $0x30] sm:$0xff]
  %v61 = vld [vmem:[%s0 + $0x38] sm:$0xff]
  %v62 = vld [vmem:[%s0 + $0x40] sm:$0xff]
  %v63 = vld [vmem:[%s0 + $0x48] sm:$0xff]
  %v64 = vld [vmem:[%s0 + $0x50] sm:$0xff]
  %v65 = vld [vmem:[%s0 + $0x58] sm:$0xff]
  %v66 = vld [vmem:[%s0 + $0x60] sm:$0xff]
  %v67 = vld [vmem:[%s0 + $0x68] sm:$0xff]
  %v68 = vld [vmem:[%s0 + $0x70] sm:$0xff]
  %v69 = vld [vmem:[%s0 + $0x78] sm:$0xff]
  %v70 = vld [vmem:[%s0 + $0x80] sm:$0xff]
  %v71 = vld [vmem:[%s0 + $0x88] sm:$0xff]
  %v72 = vld [vmem:[%s0 + $0x90] sm:$0xff]
  %v73 = vld [vmem:[%s0 + $0x98] sm:$0xff]
  %v74 = vld [vmem:[%s0 + $0xa0] sm:$0xff]
  %v75 = vld [vmem:[%s0 + $0xa8] sm:$0xff]
  %v76 = vld [vmem:[%s0 + $0xb0] sm:$0xff]
  %v77 = vld [vmem:[%s0 + $0xb8] sm:$0xff]
  %v78 = vld [vmem:[%s0 + $0xc0] sm:$0xff]
  %v79 = vld [vmem:[%s0 + $0xc8] sm:$0xff]
  %v80 = vld [vmem:[%s0 + $0xd0] sm:$0xff]
  %v81 = vld [vmem:[%s0 + $0xd8] sm:$0xff]
  %v82 = vld [vmem:[%s0 + $0xe0] sm:$0xff]
  %v83 = vld [vmem:[%s0 + $0xe8] sm:$0xff]
  %v84 = vld [vmem:[%s0 + $0xf0] sm:$0xff]
  %v85 = vld [vmem:[%s0 + $0xf8] sm:$0xff]
  %v86 = vld [vmem:[%s0 + $0x100] sm:$0xff]
  %v87 = vld [vmem:[%s0 + $0x108] sm:$0xff]
  %v88 = vld [vmem:[%s0 + $0x110] sm:$0xff]
  %v89 = vld [vmem:[%s0 + $0x118] sm:$0xff]
  %v90 = vld [vmem:[%s0 + $0x120] sm:$0xff]
  %v91 = vld [vmem:[%s0 + $0x128] sm:$0xff]
  %v92 = vld [vmem:[%s0 + $0x130] sm:$0xff]
  %v93 = vld [vmem:[%s0 + $0x138] sm:$0xff]
  %v94 = vld [vmem:[%s0 + $0x140] sm:$0xff]
  %v95 = vld [vmem:[%s0 + $0x148] sm:$0xff]
  %v96 = vld [vmem:[%s0 + $0x150] sm:$0xff]
  %v97 = vld [vmem:[%s0 + $0x158] sm:$0xff]
  %v98 = vld [vmem:[%s0 + $0x160] sm:$0xff]
  %v99 = vld [vmem:[%s0 + $0x168] sm:$0xff]
  %v100 = vld [vmem:[%s0 + $0x170] sm:$0xff]
  %v101 = vld [vmem:[%s0 + $0x178] sm:$0xff]
  %v102 = vld [vmem:[%s0 + $0x180] sm:$0xff]
  %v103 = vld [vmem:[%s0 + $0x188] sm:$0xff]
  %v104 = vld [vmem:[%s0 + $0x190] sm:$0xff]
  %v105 = vld [vmem:[%s0 + $0x198] sm:$0xff]
  %v106 = vld [vmem:[%s0 + $0x1a0] sm:$0xff]
  %v107 = vld [vmem:[%s0 + $0x1a8] sm:$0xff]
  %v108 = vld [vmem:[%s0 + $0x1b0] sm:$0xff]
  %v109 = vld [vmem:[%s0 + $0x1b8] sm:$0xff]
  %v110 = vld [vmem:[%s0 + $0x1c0] sm:$0xff]
  %v111 = vld [vmem:[%s0 + $0x1c8] sm:$0xff]
  %v112 = vld [vmem:[%s0 + $0x1d0] sm:$0xff]
  %v113 = vld [vmem:[%s0 + $0x1d8] sm:$0xff]
  %v114 = vld [vmem:[%s0 + $0x1e0] sm:$0xff]
  %v115 = vld [vmem:[%s0 + $0x1e8] sm:$0xff]
  %v116 = vld [vmem:[%s0 + $0x1f0] sm:$0xff]
  %v117 = vld [vmem:[%s0 + $0x1f8] sm:$0xff]
  %v118 = vld [vmem:[%s1] sm:$0x1]
  %v119 = vld [vmem:[%s2] sm:$0x1]
  %vm120 = vcmask 261120
  %v121 = vsel %vm120, %v54, 0.0
  %122 = vadd.xlane.f32.xlu0 %v121
  %v123 = vpop.xlane.xlu0 %122
  %v124 = vsel %vm120, %v55, 0.0
  %125 = vadd.xlane.f32.xlu0 %v124
  %v126 = vpop.xlane.xlu0 %125
  %v127 = vsel %vm120, %v56, 0.0
  %128 = vadd.xlane.f32.xlu0 %v127
  %v129 = vpop.xlane.xlu0 %128
  %v130 = vsel %vm120, %v57, 0.0
  %131 = vadd.xlane.f32.xlu0 %v130
  %v132 = vpop.xlane.xlu0 %131
  %v133 = vsel %vm120, %v58, 0.0
  %134 = vadd.xlane.f32.xlu0 %v133
  %v135 = vpop.xlane.xlu0 %134
  %v136 = vsel %vm120, %v59, 0.0
  %137 = vadd.xlane.f32.xlu0 %v136
  %v138 = vpop.xlane.xlu0 %137
  %v139 = vsel %vm120, %v60, 0.0
  %140 = vadd.xlane.f32.xlu0 %v139
  %v141 = vpop.xlane.xlu0 %140
  %v142 = vsel %vm120, %v61, 0.0
  %143 = vadd.xlane.f32.xlu0 %v142
  %v144 = vpop.xlane.xlu0 %143
  %v145 = vsel %vm120, %v62, 0.0
  %146 = vadd.xlane.f32.xlu0 %v145
  %v147 = vpop.xlane.xlu0 %146
  %v148 = vsel %vm120, %v63, 0.0
  %149 = vadd.xlane.f32.xlu0 %v148
  %v150 = vpop.xlane.xlu0 %149
  %v151 = vsel %vm120, %v64, 0.0
  %152 = vadd.xlane.f32.xlu0 %v151
  %v153 = vpop.xlane.xlu0 %152
  %v154 = vsel %vm120, %v65, 0.0
  %155 = vadd.xlane.f32.xlu0 %v154
  %v156 = vpop.xlane.xlu0 %155
  %v157 = vsel %vm120, %v66, 0.0
  %158 = vadd.xlane.f32.xlu0 %v157
  %v159 = vpop.xlane.xlu0 %158
  %v160 = vsel %vm120, %v67, 0.0
  %161 = vadd.xlane.f32.xlu0 %v160
  %v162 = vpop.xlane.xlu0 %161
  %v163 = vsel %vm120, %v68, 0.0
  %164 = vadd.xlane.f32.xlu0 %v163
  %v165 = vpop.xlane.xlu0 %164
  %v166 = vsel %vm120, %v69, 0.0
  %167 = vadd.xlane.f32.xlu0 %v166
  %v168 = vpop.xlane.xlu0 %167
  %v169 = vsel %vm120, %v70, 0.0
  %170 = vadd.xlane.f32.xlu0 %v169
  %v171 = vpop.xlane.xlu0 %170
  %v172 = vsel %vm120, %v71, 0.0
  %173 = vadd.xlane.f32.xlu0 %v172
  %v174 = vpop.xlane.xlu0 %173
  %v175 = vsel %vm120, %v72, 0.0
  %176 = vadd.xlane.f32.xlu0 %v175
  %v177 = vpop.xlane.xlu0 %176
  %v178 = vsel %vm120, %v73, 0.0
  %179 = vadd.xlane.f32.xlu0 %v178
  %v180 = vpop.xlane.xlu0 %179
  %v181 = vsel %vm120, %v74, 0.0
  %182 = vadd.xlane.f32.xlu0 %v181
  %v183 = vpop.xlane.xlu0 %182
  %v184 = vsel %vm120, %v75, 0.0
  %185 = vadd.xlane.f32.xlu0 %v184
  %v186 = vpop.xlane.xlu0 %185
  %v187 = vsel %vm120, %v76, 0.0
  %188 = vadd.xlane.f32.xlu0 %v187
  %v189 = vpop.xlane.xlu0 %188
  %v190 = vsel %vm120, %v77, 0.0
  %191 = vadd.xlane.f32.xlu0 %v190
  %v192 = vpop.xlane.xlu0 %191
  %v193 = vsel %vm120, %v78, 0.0
  %194 = vadd.xlane.f32.xlu0 %v193
  %v195 = vpop.xlane.xlu0 %194
  %v196 = vsel %vm120, %v79, 0.0
  %197 = vadd.xlane.f32.xlu0 %v196
  %v198 = vpop.xlane.xlu0 %197
  %v199 = vsel %vm120, %v80, 0.0
  %200 = vadd.xlane.f32.xlu0 %v199
  %v201 = vpop.xlane.xlu0 %200
  %v202 = vsel %vm120, %v81, 0.0
  %203 = vadd.xlane.f32.xlu0 %v202
  %v204 = vpop.xlane.xlu0 %203
  %v205 = vsel %vm120, %v82, 0.0
  %206 = vadd.xlane.f32.xlu0 %v205
  %v207 = vpop.xlane.xlu0 %206
  %v208 = vsel %vm120, %v83, 0.0
  %209 = vadd.xlane.f32.xlu0 %v208
  %v210 = vpop.xlane.xlu0 %209
  %v211 = vsel %vm120, %v84, 0.0
  %212 = vadd.xlane.f32.xlu0 %v211
  %v213 = vpop.xlane.xlu0 %212
  %v214 = vsel %vm120, %v85, 0.0
  %215 = vadd.xlane.f32.xlu0 %v214
  %v216 = vpop.xlane.xlu0 %215
  %v217 = vsel %vm120, %v86, 0.0
  %218 = vadd.xlane.f32.xlu0 %v217
  %v219 = vpop.xlane.xlu0 %218
  %v220 = vsel %vm120, %v87, 0.0
  %221 = vadd.xlane.f32.xlu0 %v220
  %v222 = vpop.xlane.xlu0 %221
  %v223 = vsel %vm120, %v88, 0.0
  %224 = vadd.xlane.f32.xlu0 %v223
  %v225 = vpop.xlane.xlu0 %224
  %v226 = vsel %vm120, %v89, 0.0
  %227 = vadd.xlane.f32.xlu0 %v226
  %v228 = vpop.xlane.xlu0 %227
  %v229 = vsel %vm120, %v90, 0.0
  %230 = vadd.xlane.f32.xlu0 %v229
  %v231 = vpop.xlane.xlu0 %230
  %v232 = vsel %vm120, %v91, 0.0
  %233 = vadd.xlane.f32.xlu0 %v232
  %v234 = vpop.xlane.xlu0 %233
  %v235 = vsel %vm120, %v92, 0.0
  %236 = vadd.xlane.f32.xlu0 %v235
  %v237 = vpop.xlane.xlu0 %236
  %v238 = vsel %vm120, %v93, 0.0
  %239 = vadd.xlane.f32.xlu0 %v238
  %v240 = vpop.xlane.xlu0 %239
  %v241 = vsel %vm120, %v94, 0.0
  %242 = vadd.xlane.f32.xlu0 %v241
  %v243 = vpop.xlane.xlu0 %242
  %v244 = vsel %vm120, %v95, 0.0
  %245 = vadd.xlane.f32.xlu0 %v244
  %v246 = vpop.xlane.xlu0 %245
  %v247 = vsel %vm120, %v96, 0.0
  %248 = vadd.xlane.f32.xlu0 %v247
  %v249 = vpop.xlane.xlu0 %248
  %v250 = vsel %vm120, %v97, 0.0
  %251 = vadd.xlane.f32.xlu0 %v250
  %v252 = vpop.xlane.xlu0 %251
  %v253 = vsel %vm120, %v98, 0.0
  %254 = vadd.xlane.f32.xlu0 %v253
  %v255 = vpop.xlane.xlu0 %254
  %v256 = vsel %vm120, %v99, 0.0
  %257 = vadd.xlane.f32.xlu0 %v256
  %v258 = vpop.xlane.xlu0 %257
  %v259 = vsel %vm120, %v100, 0.0
  %260 = vadd.xlane.f32.xlu0 %v259
  %v261 = vpop.xlane.xlu0 %260
  %v262 = vsel %vm120, %v101, 0.0
  %263 = vadd.xlane.f32.xlu0 %v262
  %v264 = vpop.xlane.xlu0 %263
  %v265 = vsel %vm120, %v102, 0.0
  %266 = vadd.xlane.f32.xlu0 %v265
  %v267 = vpop.xlane.xlu0 %266
  %v268 = vsel %vm120, %v103, 0.0
  %269 = vadd.xlane.f32.xlu0 %v268
  %v270 = vpop.xlane.xlu0 %269
  %v271 = vsel %vm120, %v104, 0.0
  %272 = vadd.xlane.f32.xlu0 %v271
  %v273 = vpop.xlane.xlu0 %272
  %v274 = vsel %vm120, %v105, 0.0
  %275 = vadd.xlane.f32.xlu0 %v274
  %v276 = vpop.xlane.xlu0 %275
  %v277 = vsel %vm120, %v106, 0.0
  %278 = vadd.xlane.f32.xlu0 %v277
  %v279 = vpop.xlane.xlu0 %278
  %v280 = vsel %vm120, %v107, 0.0
  %281 = vadd.xlane.f32.xlu0 %v280
  %v282 = vpop.xlane.xlu0 %281
  %v283 = vsel %vm120, %v108, 0.0
  %284 = vadd.xlane.f32.xlu0 %v283
  %v285 = vpop.xlane.xlu0 %284
  %v286 = vsel %vm120, %v109, 0.0
  %287 = vadd.xlane.f32.xlu0 %v286
  %v288 = vpop.xlane.xlu0 %287
  %v289 = vsel %vm120, %v110, 0.0
  %290 = vadd.xlane.f32.xlu0 %v289
  %v291 = vpop.xlane.xlu0 %290
  %v292 = vsel %vm120, %v111, 0.0
  %293 = vadd.xlane.f32.xlu0 %v292
  %v294 = vpop.xlane.xlu0 %293
  %v295 = vsel %vm120, %v112, 0.0
  %296 = vadd.xlane.f32.xlu0 %v295
  %v297 = vpop.xlane.xlu0 %296
  %v298 = vsel %vm120, %v113, 0.0
  %299 = vadd.xlane.f32.xlu0 %v298
  %v300 = vpop.xlane.xlu0 %299
  %v301 = vsel %vm120, %v114, 0.0
  %302 = vadd.xlane.f32.xlu0 %v301
  %v303 = vpop.xlane.xlu0 %302
  %v304 = vsel %vm120, %v115, 0.0
  %305 = vadd.xlane.f32.xlu0 %v304
  %v306 = vpop.xlane.xlu0 %305
  %v307 = vsel %vm120, %v116, 0.0
  %308 = vadd.xlane.f32.xlu0 %v307
  %v309 = vpop.xlane.xlu0 %308
  %v310 = vsel %vm120, %v117, 0.0
  %311 = vadd.xlane.f32.xlu0 %v310
  %v312 = vpop.xlane.xlu0 %311
  %v313 = vrcp.pop 32.0
  %v314 = vmul.f32 32.0, %v313
  %v315 = vsub.f32 1.0, %v314
  %v316 = vmul.f32 %v313, %v315
  %v317 = vadd.f32 %v313, %v316
  %vm318 = vweird.f32 %v313
  %v319 = vsel %vm318, %v313, %v317
  %v320 = vmul.f32 %v123, %v319
  %v321 = vmul.f32 %v126, %v319
  %v322 = vmul.f32 %v129, %v319
  %v323 = vmul.f32 %v132, %v319
  %v324 = vmul.f32 %v135, %v319
  %v325 = vmul.f32 %v138, %v319
  %v326 = vmul.f32 %v141, %v319
  %v327 = vmul.f32 %v144, %v319
  %v328 = vmul.f32 %v147, %v319
  %v329 = vmul.f32 %v150, %v319
  %v330 = vmul.f32 %v153, %v319
  %v331 = vmul.f32 %v156, %v319
  %v332 = vmul.f32 %v159, %v319
  %v333 = vmul.f32 %v162, %v319
  %v334 = vmul.f32 %v165, %v319
  %v335 = vmul.f32 %v168, %v319
  %v336 = vmul.f32 %v171, %v319
  %v337 = vmul.f32 %v174, %v319
  %v338 = vmul.f32 %v177, %v319
  %v339 = vmul.f32 %v180, %v319
  %v340 = vmul.f32 %v183, %v319
  %v341 = vmul.f32 %v186, %v319
  %v342 = vmul.f32 %v189, %v319
  %v343 = vmul.f32 %v192, %v319
  %v344 = vmul.f32 %v195, %v319
  %v345 = vmul.f32 %v198, %v319
  %v346 = vmul.f32 %v201, %v319
  %v347 = vmul.f32 %v204, %v319
  %v348 = vmul.f32 %v207, %v319
  %v349 = vmul.f32 %v210, %v319
  %v350 = vmul.f32 %v213, %v319
  %v351 = vmul.f32 %v216, %v319
  %v352 = vmul.f32 %v219, %v319
  %v353 = vmul.f32 %v222, %v319
  %v354 = vmul.f32 %v225, %v319
  %v355 = vmul.f32 %v228, %v319
  %v356 = vmul.f32 %v231, %v319
  %v357 = vmul.f32 %v234, %v319
  %v358 = vmul.f32 %v237, %v319
  %v359 = vmul.f32 %v240, %v319
  %v360 = vmul.f32 %v243, %v319
  %v361 = vmul.f32 %v246, %v319
  %v362 = vmul.f32 %v249, %v319
  %v363 = vmul.f32 %v252, %v319
  %v364 = vmul.f32 %v255, %v319
  %v365 = vmul.f32 %v258, %v319
  %v366 = vmul.f32 %v261, %v319
  %v367 = vmul.f32 %v264, %v319
  %v368 = vmul.f32 %v267, %v319
  %v369 = vmul.f32 %v270, %v319
  %v370 = vmul.f32 %v273, %v319
  %v371 = vmul.f32 %v276, %v319
  %v372 = vmul.f32 %v279, %v319
  %v373 = vmul.f32 %v282, %v319
  %v374 = vmul.f32 %v285, %v319
  %v375 = vmul.f32 %v288, %v319
  %v376 = vmul.f32 %v291, %v319
  %v377 = vmul.f32 %v294, %v319
  %v378 = vmul.f32 %v297, %v319
  %v379 = vmul.f32 %v300, %v319
  %v380 = vmul.f32 %v303, %v319
  %v381 = vmul.f32 %v306, %v319
  %v382 = vmul.f32 %v309, %v319
  %v383 = vmul.f32 %v312, %v319
  %v384 = vsub.f32 %v54, %v320
  %v385 = vsub.f32 %v55, %v321
  %v386 = vsub.f32 %v56, %v322
  %v387 = vsub.f32 %v57, %v323
  %v388 = vsub.f32 %v58, %v324
  %v389 = vsub.f32 %v59, %v325
  %v390 = vsub.f32 %v60, %v326
  %v391 = vsub.f32 %v61, %v327
  %v392 = vsub.f32 %v62, %v328
  %v393 = vsub.f32 %v63, %v329
  %v394 = vsub.f32 %v64, %v330
  %v395 = vsub.f32 %v65, %v331
  %v396 = vsub.f32 %v66, %v332
  %v397 = vsub.f32 %v67, %v333
  %v398 = vsub.f32 %v68, %v334
  %v399 = vsub.f32 %v69, %v335
  %v400 = vsub.f32 %v70, %v336
  %v401 = vsub.f32 %v71, %v337
  %v402 = vsub.f32 %v72, %v338
  %v403 = vsub.f32 %v73, %v339
  %v404 = vsub.f32 %v74, %v340
  %v405 = vsub.f32 %v75, %v341
  %v406 = vsub.f32 %v76, %v342
  %v407 = vsub.f32 %v77, %v343
  %v408 = vsub.f32 %v78, %v344
  %v409 = vsub.f32 %v79, %v345
  %v410 = vsub.f32 %v80, %v346
  %v411 = vsub.f32 %v81, %v347
  %v412 = vsub.f32 %v82, %v348
  %v413 = vsub.f32 %v83, %v349
  %v414 = vsub.f32 %v84, %v350
  %v415 = vsub.f32 %v85, %v351
  %v416 = vsub.f32 %v86, %v352
  %v417 = vsub.f32 %v87, %v353
  %v418 = vsub.f32 %v88, %v354
  %v419 = vsub.f32 %v89, %v355
  %v420 = vsub.f32 %v90, %v356
  %v421 = vsub.f32 %v91, %v357
  %v422 = vsub.f32 %v92, %v358
  %v423 = vsub.f32 %v93, %v359
  %v424 = vsub.f32 %v94, %v360
  %v425 = vsub.f32 %v95, %v361
  %v426 = vsub.f32 %v96, %v362
  %v427 = vsub.f32 %v97, %v363
  %v428 = vsub.f32 %v98, %v364
  %v429 = vsub.f32 %v99, %v365
  %v430 = vsub.f32 %v100, %v366
  %v431 = vsub.f32 %v101, %v367
  %v432 = vsub.f32 %v102, %v368
  %v433 = vsub.f32 %v103, %v369
  %v434 = vsub.f32 %v104, %v370
  %v435 = vsub.f32 %v105, %v371
  %v436 = vsub.f32 %v106, %v372
  %v437 = vsub.f32 %v107, %v373
  %v438 = vsub.f32 %v108, %v374
  %v439 = vsub.f32 %v109, %v375
  %v440 = vsub.f32 %v110, %v376
  %v441 = vsub.f32 %v111, %v377
  %v442 = vsub.f32 %v112, %v378
  %v443 = vsub.f32 %v113, %v379
  %v444 = vsub.f32 %v114, %v380
  %v445 = vsub.f32 %v115, %v381
  %v446 = vsub.f32 %v116, %v382
  %v447 = vsub.f32 %v117, %v383
  %v448 = vmul.f32 %v384, %v384
  %v449 = vmul.f32 %v385, %v385
  %v450 = vmul.f32 %v386, %v386
  %v451 = vmul.f32 %v387, %v387
  %v452 = vmul.f32 %v388, %v388
  %v453 = vmul.f32 %v389, %v389
  %v454 = vmul.f32 %v390, %v390
  %v455 = vmul.f32 %v391, %v391
  %v456 = vmul.f32 %v392, %v392
  %v457 = vmul.f32 %v393, %v393
  %v458 = vmul.f32 %v394, %v394
  %v459 = vmul.f32 %v395, %v395
  %v460 = vmul.f32 %v396, %v396
  %v461 = vmul.f32 %v397, %v397
  %v462 = vmul.f32 %v398, %v398
  %v463 = vmul.f32 %v399, %v399
  %v464 = vmul.f32 %v400, %v400
  %v465 = vmul.f32 %v401, %v401
  %v466 = vmul.f32 %v402, %v402
  %v467 = vmul.f32 %v403, %v403
  %v468 = vmul.f32 %v404, %v404
  %v469 = vmul.f32 %v405, %v405
  %v470 = vmul.f32 %v406, %v406
  %v471 = vmul.f32 %v407, %v407
  %v472 = vmul.f32 %v408, %v408
  %v473 = vmul.f32 %v409, %v409
  %v474 = vmul.f32 %v410, %v410
  %v475 = vmul.f32 %v411, %v411
  %v476 = vmul.f32 %v412, %v412
  %v477 = vmul.f32 %v413, %v413
  %v478 = vmul.f32 %v414, %v414
  %v479 = vmul.f32 %v415, %v415
  %v480 = vmul.f32 %v416, %v416
  %v481 = vmul.f32 %v417, %v417
  %v482 = vmul.f32 %v418, %v418
  %v483 = vmul.f32 %v419, %v419
  %v484 = vmul.f32 %v420, %v420
  %v485 = vmul.f32 %v421, %v421
  %v486 = vmul.f32 %v422, %v422
  %v487 = vmul.f32 %v423, %v423
  %v488 = vmul.f32 %v424, %v424
  %v489 = vmul.f32 %v425, %v425
  %v490 = vmul.f32 %v426, %v426
  %v491 = vmul.f32 %v427, %v427
  %v492 = vmul.f32 %v428, %v428
  %v493 = vmul.f32 %v429, %v429
  %v494 = vmul.f32 %v430, %v430
  %v495 = vmul.f32 %v431, %v431
  %v496 = vmul.f32 %v432, %v432
  %v497 = vmul.f32 %v433, %v433
  %v498 = vmul.f32 %v434, %v434
  %v499 = vmul.f32 %v435, %v435
  %v500 = vmul.f32 %v436, %v436
  %v501 = vmul.f32 %v437, %v437
  %v502 = vmul.f32 %v438, %v438
  %v503 = vmul.f32 %v439, %v439
  %v504 = vmul.f32 %v440, %v440
  %v505 = vmul.f32 %v441, %v441
  %v506 = vmul.f32 %v442, %v442
  %v507 = vmul.f32 %v443, %v443
  %v508 = vmul.f32 %v444, %v444
  %v509 = vmul.f32 %v445, %v445
  %v510 = vmul.f32 %v446, %v446
  %v511 = vmul.f32 %v447, %v447
  %v512 = vsel %vm120, %v448, 0.0
  %513 = vadd.xlane.f32.xlu0 %v512
  %v514 = vpop.xlane.xlu0 %513
  %v515 = vsel %vm120, %v449, 0.0
  %516 = vadd.xlane.f32.xlu0 %v515
  %v517 = vpop.xlane.xlu0 %516
  %v518 = vsel %vm120, %v450, 0.0
  %519 = vadd.xlane.f32.xlu0 %v518
  %v520 = vpop.xlane.xlu0 %519
  %v521 = vsel %vm120, %v451, 0.0
  %522 = vadd.xlane.f32.xlu0 %v521
  %v523 = vpop.xlane.xlu0 %522
  %v524 = vsel %vm120, %v452, 0.0
  %525 = vadd.xlane.f32.xlu0 %v524
  %v526 = vpop.xlane.xlu0 %525
  %v527 = vsel %vm120, %v453, 0.0
  %528 = vadd.xlane.f32.xlu0 %v527
  %v529 = vpop.xlane.xlu0 %528
  %v530 = vsel %vm120, %v454, 0.0
  %531 = vadd.xlane.f32.xlu0 %v530
  %v532 = vpop.xlane.xlu0 %531
  %v533 = vsel %vm120, %v455, 0.0
  %534 = vadd.xlane.f32.xlu0 %v533
  %v535 = vpop.xlane.xlu0 %534
  %v536 = vsel %vm120, %v456, 0.0
  %537 = vadd.xlane.f32.xlu0 %v536
  %v538 = vpop.xlane.xlu0 %537
  %v539 = vsel %vm120, %v457, 0.0
  %540 = vadd.xlane.f32.xlu0 %v539
  %v541 = vpop.xlane.xlu0 %540
  %v542 = vsel %vm120, %v458, 0.0
  %543 = vadd.xlane.f32.xlu0 %v542
  %v544 = vpop.xlane.xlu0 %543
  %v545 = vsel %vm120, %v459, 0.0
  %546 = vadd.xlane.f32.xlu0 %v545
  %v547 = vpop.xlane.xlu0 %546
  %v548 = vsel %vm120, %v460, 0.0
  %549 = vadd.xlane.f32.xlu0 %v548
  %v550 = vpop.xlane.xlu0 %549
  %v551 = vsel %vm120, %v461, 0.0
  %552 = vadd.xlane.f32.xlu0 %v551
  %v553 = vpop.xlane.xlu0 %552
  %v554 = vsel %vm120, %v462, 0.0
  %555 = vadd.xlane.f32.xlu0 %v554
  %v556 = vpop.xlane.xlu0 %555
  %v557 = vsel %vm120, %v463, 0.0
  %558 = vadd.xlane.f32.xlu0 %v557
  %v559 = vpop.xlane.xlu0 %558
  %v560 = vsel %vm120, %v464, 0.0
  %561 = vadd.xlane.f32.xlu0 %v560
  %v562 = vpop.xlane.xlu0 %561
  %v563 = vsel %vm120, %v465, 0.0
  %564 = vadd.xlane.f32.xlu0 %v563
  %v565 = vpop.xlane.xlu0 %564
  %v566 = vsel %vm120, %v466, 0.0
  %567 = vadd.xlane.f32.xlu0 %v566
  %v568 = vpop.xlane.xlu0 %567
  %v569 = vsel %vm120, %v467, 0.0
  %570 = vadd.xlane.f32.xlu0 %v569
  %v571 = vpop.xlane.xlu0 %570
  %v572 = vsel %vm120, %v468, 0.0
  %573 = vadd.xlane.f32.xlu0 %v572
  %v574 = vpop.xlane.xlu0 %573
  %v575 = vsel %vm120, %v469, 0.0
  %576 = vadd.xlane.f32.xlu0 %v575
  %v577 = vpop.xlane.xlu0 %576
  %v578 = vsel %vm120, %v470, 0.0
  %579 = vadd.xlane.f32.xlu0 %v578
  %v580 = vpop.xlane.xlu0 %579
  %v581 = vsel %vm120, %v471, 0.0
  %582 = vadd.xlane.f32.xlu0 %v581
  %v583 = vpop.xlane.xlu0 %582
  %v584 = vsel %vm120, %v472, 0.0
  %585 = vadd.xlane.f32.xlu0 %v584
  %v586 = vpop.xlane.xlu0 %585
  %v587 = vsel %vm120, %v473, 0.0
  %588 = vadd.xlane.f32.xlu0 %v587
  %v589 = vpop.xlane.xlu0 %588
  %v590 = vsel %vm120, %v474, 0.0
  %591 = vadd.xlane.f32.xlu0 %v590
  %v592 = vpop.xlane.xlu0 %591
  %v593 = vsel %vm120, %v475, 0.0
  %594 = vadd.xlane.f32.xlu0 %v593
  %v595 = vpop.xlane.xlu0 %594
  %v596 = vsel %vm120, %v476, 0.0
  %597 = vadd.xlane.f32.xlu0 %v596
  %v598 = vpop.xlane.xlu0 %597
  %v599 = vsel %vm120, %v477, 0.0
  %600 = vadd.xlane.f32.xlu0 %v599
  %v601 = vpop.xlane.xlu0 %600
  %v602 = vsel %vm120, %v478, 0.0
  %603 = vadd.xlane.f32.xlu0 %v602
  %v604 = vpop.xlane.xlu0 %603
  %v605 = vsel %vm120, %v479, 0.0
  %606 = vadd.xlane.f32.xlu0 %v605
  %v607 = vpop.xlane.xlu0 %606
  %v608 = vsel %vm120, %v480, 0.0
  %609 = vadd.xlane.f32.xlu0 %v608
  %v610 = vpop.xlane.xlu0 %609
  %v611 = vsel %vm120, %v481, 0.0
  %612 = vadd.xlane.f32.xlu0 %v611
  %v613 = vpop.xlane.xlu0 %612
  %v614 = vsel %vm120, %v482, 0.0
  %615 = vadd.xlane.f32.xlu0 %v614
  %v616 = vpop.xlane.xlu0 %615
  %v617 = vsel %vm120, %v483, 0.0
  %618 = vadd.xlane.f32.xlu0 %v617
  %v619 = vpop.xlane.xlu0 %618
  %v620 = vsel %vm120, %v484, 0.0
  %621 = vadd.xlane.f32.xlu0 %v620
  %v622 = vpop.xlane.xlu0 %621
  %v623 = vsel %vm120, %v485, 0.0
  %624 = vadd.xlane.f32.xlu0 %v623
  %v625 = vpop.xlane.xlu0 %624
  %v626 = vsel %vm120, %v486, 0.0
  %627 = vadd.xlane.f32.xlu0 %v626
  %v628 = vpop.xlane.xlu0 %627
  %v629 = vsel %vm120, %v487, 0.0
  %630 = vadd.xlane.f32.xlu0 %v629
  %v631 = vpop.xlane.xlu0 %630
  %v632 = vsel %vm120, %v488, 0.0
  %633 = vadd.xlane.f32.xlu0 %v632
  %v634 = vpop.xlane.xlu0 %633
  %v635 = vsel %vm120, %v489, 0.0
  %636 = vadd.xlane.f32.xlu0 %v635
  %v637 = vpop.xlane.xlu0 %636
  %v638 = vsel %vm120, %v490, 0.0
  %639 = vadd.xlane.f32.xlu0 %v638
  %v640 = vpop.xlane.xlu0 %639
  %v641 = vsel %vm120, %v491, 0.0
  %642 = vadd.xlane.f32.xlu0 %v641
  %v643 = vpop.xlane.xlu0 %642
  %v644 = vsel %vm120, %v492, 0.0
  %645 = vadd.xlane.f32.xlu0 %v644
  %v646 = vpop.xlane.xlu0 %645
  %v647 = vsel %vm120, %v493, 0.0
  %648 = vadd.xlane.f32.xlu0 %v647
  %v649 = vpop.xlane.xlu0 %648
  %v650 = vsel %vm120, %v494, 0.0
  %651 = vadd.xlane.f32.xlu0 %v650
  %v652 = vpop.xlane.xlu0 %651
  %v653 = vsel %vm120, %v495, 0.0
  %654 = vadd.xlane.f32.xlu0 %v653
  %v655 = vpop.xlane.xlu0 %654
  %v656 = vsel %vm120, %v496, 0.0
  %657 = vadd.xlane.f32.xlu0 %v656
  %v658 = vpop.xlane.xlu0 %657
  %v659 = vsel %vm120, %v497, 0.0
  %660 = vadd.xlane.f32.xlu0 %v659
  %v661 = vpop.xlane.xlu0 %660
  %v662 = vsel %vm120, %v498, 0.0
  %663 = vadd.xlane.f32.xlu0 %v662
  %v664 = vpop.xlane.xlu0 %663
  %v665 = vsel %vm120, %v499, 0.0
  %666 = vadd.xlane.f32.xlu0 %v665
  %v667 = vpop.xlane.xlu0 %666
  %v668 = vsel %vm120, %v500, 0.0
  %669 = vadd.xlane.f32.xlu0 %v668
  %v670 = vpop.xlane.xlu0 %669
  %v671 = vsel %vm120, %v501, 0.0
  %672 = vadd.xlane.f32.xlu0 %v671
  %v673 = vpop.xlane.xlu0 %672
  %v674 = vsel %vm120, %v502, 0.0
  %675 = vadd.xlane.f32.xlu0 %v674
  %v676 = vpop.xlane.xlu0 %675
  %v677 = vsel %vm120, %v503, 0.0
  %678 = vadd.xlane.f32.xlu0 %v677
  %v679 = vpop.xlane.xlu0 %678
  %v680 = vsel %vm120, %v504, 0.0
  %681 = vadd.xlane.f32.xlu0 %v680
  %v682 = vpop.xlane.xlu0 %681
  %v683 = vsel %vm120, %v505, 0.0
  %684 = vadd.xlane.f32.xlu0 %v683
  %v685 = vpop.xlane.xlu0 %684
  %v686 = vsel %vm120, %v506, 0.0
  %687 = vadd.xlane.f32.xlu0 %v686
  %v688 = vpop.xlane.xlu0 %687
  %v689 = vsel %vm120, %v507, 0.0
  %690 = vadd.xlane.f32.xlu0 %v689
  %v691 = vpop.xlane.xlu0 %690
  %v692 = vsel %vm120, %v508, 0.0
  %693 = vadd.xlane.f32.xlu0 %v692
  %v694 = vpop.xlane.xlu0 %693
  %v695 = vsel %vm120, %v509, 0.0
  %696 = vadd.xlane.f32.xlu0 %v695
  %v697 = vpop.xlane.xlu0 %696
  %v698 = vsel %vm120, %v510, 0.0
  %699 = vadd.xlane.f32.xlu0 %v698
  %v700 = vpop.xlane.xlu0 %699
  %v701 = vsel %vm120, %v511, 0.0
  %702 = vadd.xlane.f32.xlu0 %v701
  %v703 = vpop.xlane.xlu0 %702
  %v704 = vmul.f32 %v514, %v319
  %v705 = vmul.f32 %v517, %v319
  %v706 = vmul.f32 %v520, %v319
  %v707 = vmul.f32 %v523, %v319
  %v708 = vmul.f32 %v526, %v319
  %v709 = vmul.f32 %v529, %v319
  %v710 = vmul.f32 %v532, %v319
  %v711 = vmul.f32 %v535, %v319
  %v712 = vmul.f32 %v538, %v319
  %v713 = vmul.f32 %v541, %v319
  %v714 = vmul.f32 %v544, %v319
  %v715 = vmul.f32 %v547, %v319
  %v716 = vmul.f32 %v550, %v319
  %v717 = vmul.f32 %v553, %v319
  %v718 = vmul.f32 %v556, %v319
  %v719 = vmul.f32 %v559, %v319
  %v720 = vmul.f32 %v562, %v319
  %v721 = vmul.f32 %v565, %v319
  %v722 = vmul.f32 %v568, %v319
  %v723 = vmul.f32 %v571, %v319
  %v724 = vmul.f32 %v574, %v319
  %v725 = vmul.f32 %v577, %v319
  %v726 = vmul.f32 %v580, %v319
  %v727 = vmul.f32 %v583, %v319
  %v728 = vmul.f32 %v586, %v319
  %v729 = vmul.f32 %v589, %v319
  %v730 = vmul.f32 %v592, %v319
  %v731 = vmul.f32 %v595, %v319
  %v732 = vmul.f32 %v598, %v319
  %v733 = vmul.f32 %v601, %v319
  %v734 = vmul.f32 %v604, %v319
  %v735 = vmul.f32 %v607, %v319
  %v736 = vmul.f32 %v610, %v319
  %v737 = vmul.f32 %v613, %v319
  %v738 = vmul.f32 %v616, %v319
  %v739 = vmul.f32 %v619, %v319
  %v740 = vmul.f32 %v622, %v319
  %v741 = vmul.f32 %v625, %v319
  %v742 = vmul.f32 %v628, %v319
  %v743 = vmul.f32 %v631, %v319
  %v744 = vmul.f32 %v634, %v319
  %v745 = vmul.f32 %v637, %v319
  %v746 = vmul.f32 %v640, %v319
  %v747 = vmul.f32 %v643, %v319
  %v748 = vmul.f32 %v646, %v319
  %v749 = vmul.f32 %v649, %v319
  %v750 = vmul.f32 %v652, %v319
  %v751 = vmul.f32 %v655, %v319
  %v752 = vmul.f32 %v658, %v319
  %v753 = vmul.f32 %v661, %v319
  %v754 = vmul.f32 %v664, %v319
  %v755 = vmul.f32 %v667, %v319
  %v756 = vmul.f32 %v670, %v319
  %v757 = vmul.f32 %v673, %v319
  %v758 = vmul.f32 %v676, %v319
  %v759 = vmul.f32 %v679, %v319
  %v760 = vmul.f32 %v682, %v319
  %v761 = vmul.f32 %v685, %v319
  %v762 = vmul.f32 %v688, %v319
  %v763 = vmul.f32 %v691, %v319
  %v764 = vmul.f32 %v694, %v319
  %v765 = vmul.f32 %v697, %v319
  %v766 = vmul.f32 %v700, %v319
  %v767 = vmul.f32 %v703, %v319
  %v768 = vadd.f32 %v704, 1e-05
  %v769 = vadd.f32 %v705, 1e-05
  %v770 = vadd.f32 %v706, 1e-05
  %v771 = vadd.f32 %v707, 1e-05
  %v772 = vadd.f32 %v708, 1e-05
  %v773 = vadd.f32 %v709, 1e-05
  %v774 = vadd.f32 %v710, 1e-05
  %v775 = vadd.f32 %v711, 1e-05
  %v776 = vadd.f32 %v712, 1e-05
  %v777 = vadd.f32 %v713, 1e-05
  %v778 = vadd.f32 %v714, 1e-05
  %v779 = vadd.f32 %v715, 1e-05
  %v780 = vadd.f32 %v716, 1e-05
  %v781 = vadd.f32 %v717, 1e-05
  %v782 = vadd.f32 %v718, 1e-05
  %v783 = vadd.f32 %v719, 1e-05
  %v784 = vadd.f32 %v720, 1e-05
  %v785 = vadd.f32 %v721, 1e-05
  %v786 = vadd.f32 %v722, 1e-05
  %v787 = vadd.f32 %v723, 1e-05
  %v788 = vadd.f32 %v724, 1e-05
  %v789 = vadd.f32 %v725, 1e-05
  %v790 = vadd.f32 %v726, 1e-05
  %v791 = vadd.f32 %v727, 1e-05
  %v792 = vadd.f32 %v728, 1e-05
  %v793 = vadd.f32 %v729, 1e-05
  %v794 = vadd.f32 %v730, 1e-05
  %v795 = vadd.f32 %v731, 1e-05
  %v796 = vadd.f32 %v732, 1e-05
  %v797 = vadd.f32 %v733, 1e-05
  %v798 = vadd.f32 %v734, 1e-05
  %v799 = vadd.f32 %v735, 1e-05
  %v800 = vadd.f32 %v736, 1e-05
  %v801 = vadd.f32 %v737, 1e-05
  %v802 = vadd.f32 %v738, 1e-05
  %v803 = vadd.f32 %v739, 1e-05
  %v804 = vadd.f32 %v740, 1e-05
  %v805 = vadd.f32 %v741, 1e-05
  %v806 = vadd.f32 %v742, 1e-05
  %v807 = vadd.f32 %v743, 1e-05
  %v808 = vadd.f32 %v744, 1e-05
  %v809 = vadd.f32 %v745, 1e-05
  %v810 = vadd.f32 %v746, 1e-05
  %v811 = vadd.f32 %v747, 1e-05
  %v812 = vadd.f32 %v748, 1e-05
  %v813 = vadd.f32 %v749, 1e-05
  %v814 = vadd.f32 %v750, 1e-05
  %v815 = vadd.f32 %v751, 1e-05
  %v816 = vadd.f32 %v752, 1e-05
  %v817 = vadd.f32 %v753, 1e-05
  %v818 = vadd.f32 %v754, 1e-05
  %v819 = vadd.f32 %v755, 1e-05
  %v820 = vadd.f32 %v756, 1e-05
  %v821 = vadd.f32 %v757, 1e-05
  %v822 = vadd.f32 %v758, 1e-05
  %v823 = vadd.f32 %v759, 1e-05
  %v824 = vadd.f32 %v760, 1e-05
  %v825 = vadd.f32 %v761, 1e-05
  %v826 = vadd.f32 %v762, 1e-05
  %v827 = vadd.f32 %v763, 1e-05
  %v828 = vadd.f32 %v764, 1e-05
  %v829 = vadd.f32 %v765, 1e-05
  %v830 = vadd.f32 %v766, 1e-05
  %v831 = vadd.f32 %v767, 1e-05
  %v832 = vrsqrt.pop %v768
  %v833 = vmul.f32 %v832, %v768
  %v834 = vmul.f32 %v833, %v832
  %v835 = vmul.f32 0.5, %v834
  %v836 = vsub.f32 1.5, %v835
  %v837 = vmul.f32 %v832, %v836
  %vm838 = vweird.f32 %v768
  %vm839 = vweird.f32 %v832
  %vm840 = vmor %vm838, %vm839
  %v841 = vsel %vm840, %v832, %v837
  %v842 = vrsqrt.pop %v769
  %v843 = vmul.f32 %v842, %v769
  %v844 = vmul.f32 %v843, %v842
  %v845 = vmul.f32 0.5, %v844
  %v846 = vsub.f32 1.5, %v845
  %v847 = vmul.f32 %v842, %v846
  %vm848 = vweird.f32 %v769
  %vm849 = vweird.f32 %v842
  %vm850 = vmor %vm848, %vm849
  %v851 = vsel %vm850, %v842, %v847
  %v852 = vrsqrt.pop %v770
  %v853 = vmul.f32 %v852, %v770
  %v854 = vmul.f32 %v853, %v852
  %v855 = vmul.f32 0.5, %v854
  %v856 = vsub.f32 1.5, %v855
  %v857 = vmul.f32 %v852, %v856
  %vm858 = vweird.f32 %v770
  %vm859 = vweird.f32 %v852
  %vm860 = vmor %vm858, %vm859
  %v861 = vsel %vm860, %v852, %v857
  %v862 = vrsqrt.pop %v771
  %v863 = vmul.f32 %v862, %v771
  %v864 = vmul.f32 %v863, %v862
  %v865 = vmul.f32 0.5, %v864
  %v866 = vsub.f32 1.5, %v865
  %v867 = vmul.f32 %v862, %v866
  %vm868 = vweird.f32 %v771
  %vm869 = vweird.f32 %v862
  %vm870 = vmor %vm868, %vm869
  %v871 = vsel %vm870, %v862, %v867
  %v872 = vrsqrt.pop %v772
  %v873 = vmul.f32 %v872, %v772
  %v874 = vmul.f32 %v873, %v872
  %v875 = vmul.f32 0.5, %v874
  %v876 = vsub.f32 1.5, %v875
  %v877 = vmul.f32 %v872, %v876
  %vm878 = vweird.f32 %v772
  %vm879 = vweird.f32 %v872
  %vm880 = vmor %vm878, %vm879
  %v881 = vsel %vm880, %v872, %v877
  %v882 = vrsqrt.pop %v773
  %v883 = vmul.f32 %v882, %v773
  %v884 = vmul.f32 %v883, %v882
  %v885 = vmul.f32 0.5, %v884
  %v886 = vsub.f32 1.5, %v885
  %v887 = vmul.f32 %v882, %v886
  %vm888 = vweird.f32 %v773
  %vm889 = vweird.f32 %v882
  %vm890 = vmor %vm888, %vm889
  %v891 = vsel %vm890, %v882, %v887
  %v892 = vrsqrt.pop %v774
  %v893 = vmul.f32 %v892, %v774
  %v894 = vmul.f32 %v893, %v892
  %v895 = vmul.f32 0.5, %v894
  %v896 = vsub.f32 1.5, %v895
  %v897 = vmul.f32 %v892, %v896
  %vm898 = vweird.f32 %v774
  %vm899 = vweird.f32 %v892
  %vm900 = vmor %vm898, %vm899
  %v901 = vsel %vm900, %v892, %v897
  %v902 = vrsqrt.pop %v775
  %v903 = vmul.f32 %v902, %v775
  %v904 = vmul.f32 %v903, %v902
  %v905 = vmul.f32 0.5, %v904
  %v906 = vsub.f32 1.5, %v905
  %v907 = vmul.f32 %v902, %v906
  %vm908 = vweird.f32 %v775
  %vm909 = vweird.f32 %v902
  %vm910 = vmor %vm908, %vm909
  %v911 = vsel %vm910, %v902, %v907
  %v912 = vrsqrt.pop %v776
  %v913 = vmul.f32 %v912, %v776
  %v914 = vmul.f32 %v913, %v912
  %v915 = vmul.f32 0.5, %v914
  %v916 = vsub.f32 1.5, %v915
  %v917 = vmul.f32 %v912, %v916
  %vm918 = vweird.f32 %v776
  %vm919 = vweird.f32 %v912
  %vm920 = vmor %vm918, %vm919
  %v921 = vsel %vm920, %v912, %v917
  %v922 = vrsqrt.pop %v777
  %v923 = vmul.f32 %v922, %v777
  %v924 = vmul.f32 %v923, %v922
  %v925 = vmul.f32 0.5, %v924
  %v926 = vsub.f32 1.5, %v925
  %v927 = vmul.f32 %v922, %v926
  %vm928 = vweird.f32 %v777
  %vm929 = vweird.f32 %v922
  %vm930 = vmor %vm928, %vm929
  %v931 = vsel %vm930, %v922, %v927
  %v932 = vrsqrt.pop %v778
  %v933 = vmul.f32 %v932, %v778
  %v934 = vmul.f32 %v933, %v932
  %v935 = vmul.f32 0.5, %v934
  %v936 = vsub.f32 1.5, %v935
  %v937 = vmul.f32 %v932, %v936
  %vm938 = vweird.f32 %v778
  %vm939 = vweird.f32 %v932
  %vm940 = vmor %vm938, %vm939
  %v941 = vsel %vm940, %v932, %v937
  %v942 = vrsqrt.pop %v779
  %v943 = vmul.f32 %v942, %v779
  %v944 = vmul.f32 %v943, %v942
  %v945 = vmul.f32 0.5, %v944
  %v946 = vsub.f32 1.5, %v945
  %v947 = vmul.f32 %v942, %v946
  %vm948 = vweird.f32 %v779
  %vm949 = vweird.f32 %v942
  %vm950 = vmor %vm948, %vm949
  %v951 = vsel %vm950, %v942, %v947
  %v952 = vrsqrt.pop %v780
  %v953 = vmul.f32 %v952, %v780
  %v954 = vmul.f32 %v953, %v952
  %v955 = vmul.f32 0.5, %v954
  %v956 = vsub.f32 1.5, %v955
  %v957 = vmul.f32 %v952, %v956
  %vm958 = vweird.f32 %v780
  %vm959 = vweird.f32 %v952
  %vm960 = vmor %vm958, %vm959
  %v961 = vsel %vm960, %v952, %v957
  %v962 = vrsqrt.pop %v781
  %v963 = vmul.f32 %v962, %v781
  %v964 = vmul.f32 %v963, %v962
  %v965 = vmul.f32 0.5, %v964
  %v966 = vsub.f32 1.5, %v965
  %v967 = vmul.f32 %v962, %v966
  %vm968 = vweird.f32 %v781
  %vm969 = vweird.f32 %v962
  %vm970 = vmor %vm968, %vm969
  %v971 = vsel %vm970, %v962, %v967
  %v972 = vrsqrt.pop %v782
  %v973 = vmul.f32 %v972, %v782
  %v974 = vmul.f32 %v973, %v972
  %v975 = vmul.f32 0.5, %v974
  %v976 = vsub.f32 1.5, %v975
  %v977 = vmul.f32 %v972, %v976
  %vm978 = vweird.f32 %v782
  %vm979 = vweird.f32 %v972
  %vm980 = vmor %vm978, %vm979
  %v981 = vsel %vm980, %v972, %v977
  %v982 = vrsqrt.pop %v783
  %v983 = vmul.f32 %v982, %v783
  %v984 = vmul.f32 %v983, %v982
  %v985 = vmul.f32 0.5, %v984
  %v986 = vsub.f32 1.5, %v985
  %v987 = vmul.f32 %v982, %v986
  %vm988 = vweird.f32 %v783
  %vm989 = vweird.f32 %v982
  %vm990 = vmor %vm988, %vm989
  %v991 = vsel %vm990, %v982, %v987
  %v992 = vrsqrt.pop %v784
  %v993 = vmul.f32 %v992, %v784
  %v994 = vmul.f32 %v993, %v992
  %v995 = vmul.f32 0.5, %v994
  %v996 = vsub.f32 1.5, %v995
  %v997 = vmul.f32 %v992, %v996
  %vm998 = vweird.f32 %v784
  %vm999 = vweird.f32 %v992
  %vm1000 = vmor %vm998, %vm999
  %v1001 = vsel %vm1000, %v992, %v997
  %v1002 = vrsqrt.pop %v785
  %v1003 = vmul.f32 %v1002, %v785
  %v1004 = vmul.f32 %v1003, %v1002
  %v1005 = vmul.f32 0.5, %v1004
  %v1006 = vsub.f32 1.5, %v1005
  %v1007 = vmul.f32 %v1002, %v1006
  %vm1008 = vweird.f32 %v785
  %vm1009 = vweird.f32 %v1002
  %vm1010 = vmor %vm1008, %vm1009
  %v1011 = vsel %vm1010, %v1002, %v1007
  %v1012 = vrsqrt.pop %v786
  %v1013 = vmul.f32 %v1012, %v786
  %v1014 = vmul.f32 %v1013, %v1012
  %v1015 = vmul.f32 0.5, %v1014
  %v1016 = vsub.f32 1.5, %v1015
  %v1017 = vmul.f32 %v1012, %v1016
  %vm1018 = vweird.f32 %v786
  %vm1019 = vweird.f32 %v1012
  %vm1020 = vmor %vm1018, %vm1019
  %v1021 = vsel %vm1020, %v1012, %v1017
  %v1022 = vrsqrt.pop %v787
  %v1023 = vmul.f32 %v1022, %v787
  %v1024 = vmul.f32 %v1023, %v1022
  %v1025 = vmul.f32 0.5, %v1024
  %v1026 = vsub.f32 1.5, %v1025
  %v1027 = vmul.f32 %v1022, %v1026
  %vm1028 = vweird.f32 %v787
  %vm1029 = vweird.f32 %v1022
  %vm1030 = vmor %vm1028, %vm1029
  %v1031 = vsel %vm1030, %v1022, %v1027
  %v1032 = vrsqrt.pop %v788
  %v1033 = vmul.f32 %v1032, %v788
  %v1034 = vmul.f32 %v1033, %v1032
  %v1035 = vmul.f32 0.5, %v1034
  %v1036 = vsub.f32 1.5, %v1035
  %v1037 = vmul.f32 %v1032, %v1036
  %vm1038 = vweird.f32 %v788
  %vm1039 = vweird.f32 %v1032
  %vm1040 = vmor %vm1038, %vm1039
  %v1041 = vsel %vm1040, %v1032, %v1037
  %v1042 = vrsqrt.pop %v789
  %v1043 = vmul.f32 %v1042, %v789
  %v1044 = vmul.f32 %v1043, %v1042
  %v1045 = vmul.f32 0.5, %v1044
  %v1046 = vsub.f32 1.5, %v1045
  %v1047 = vmul.f32 %v1042, %v1046
  %vm1048 = vweird.f32 %v789
  %vm1049 = vweird.f32 %v1042
  %vm1050 = vmor %vm1048, %vm1049
  %v1051 = vsel %vm1050, %v1042, %v1047
  %v1052 = vrsqrt.pop %v790
  %v1053 = vmul.f32 %v1052, %v790
  %v1054 = vmul.f32 %v1053, %v1052
  %v1055 = vmul.f32 0.5, %v1054
  %v1056 = vsub.f32 1.5, %v1055
  %v1057 = vmul.f32 %v1052, %v1056
  %vm1058 = vweird.f32 %v790
  %vm1059 = vweird.f32 %v1052
  %vm1060 = vmor %vm1058, %vm1059
  %v1061 = vsel %vm1060, %v1052, %v1057
  %v1062 = vrsqrt.pop %v791
  %v1063 = vmul.f32 %v1062, %v791
  %v1064 = vmul.f32 %v1063, %v1062
  %v1065 = vmul.f32 0.5, %v1064
  %v1066 = vsub.f32 1.5, %v1065
  %v1067 = vmul.f32 %v1062, %v1066
  %vm1068 = vweird.f32 %v791
  %vm1069 = vweird.f32 %v1062
  %vm1070 = vmor %vm1068, %vm1069
  %v1071 = vsel %vm1070, %v1062, %v1067
  %v1072 = vrsqrt.pop %v792
  %v1073 = vmul.f32 %v1072, %v792
  %v1074 = vmul.f32 %v1073, %v1072
  %v1075 = vmul.f32 0.5, %v1074
  %v1076 = vsub.f32 1.5, %v1075
  %v1077 = vmul.f32 %v1072, %v1076
  %vm1078 = vweird.f32 %v792
  %vm1079 = vweird.f32 %v1072
  %vm1080 = vmor %vm1078, %vm1079
  %v1081 = vsel %vm1080, %v1072, %v1077
  %v1082 = vrsqrt.pop %v793
  %v1083 = vmul.f32 %v1082, %v793
  %v1084 = vmul.f32 %v1083, %v1082
  %v1085 = vmul.f32 0.5, %v1084
  %v1086 = vsub.f32 1.5, %v1085
  %v1087 = vmul.f32 %v1082, %v1086
  %vm1088 = vweird.f32 %v793
  %vm1089 = vweird.f32 %v1082
  %vm1090 = vmor %vm1088, %vm1089
  %v1091 = vsel %vm1090, %v1082, %v1087
  %v1092 = vrsqrt.pop %v794
  %v1093 = vmul.f32 %v1092, %v794
  %v1094 = vmul.f32 %v1093, %v1092
  %v1095 = vmul.f32 0.5, %v1094
  %v1096 = vsub.f32 1.5, %v1095
  %v1097 = vmul.f32 %v1092, %v1096
  %vm1098 = vweird.f32 %v794
  %vm1099 = vweird.f32 %v1092
  %vm1100 = vmor %vm1098, %vm1099
  %v1101 = vsel %vm1100, %v1092, %v1097
  %v1102 = vrsqrt.pop %v795
  %v1103 = vmul.f32 %v1102, %v795
  %v1104 = vmul.f32 %v1103, %v1102
  %v1105 = vmul.f32 0.5, %v1104
  %v1106 = vsub.f32 1.5, %v1105
  %v1107 = vmul.f32 %v1102, %v1106
  %vm1108 = vweird.f32 %v795
  %vm1109 = vweird.f32 %v1102
  %vm1110 = vmor %vm1108, %vm1109
  %v1111 = vsel %vm1110, %v1102, %v1107
  %v1112 = vrsqrt.pop %v796
  %v1113 = vmul.f32 %v1112, %v796
  %v1114 = vmul.f32 %v1113, %v1112
  %v1115 = vmul.f32 0.5, %v1114
  %v1116 = vsub.f32 1.5, %v1115
  %v1117 = vmul.f32 %v1112, %v1116
  %vm1118 = vweird.f32 %v796
  %vm1119 = vweird.f32 %v1112
  %vm1120 = vmor %vm1118, %vm1119
  %v1121 = vsel %vm1120, %v1112, %v1117
  %v1122 = vrsqrt.pop %v797
  %v1123 = vmul.f32 %v1122, %v797
  %v1124 = vmul.f32 %v1123, %v1122
  %v1125 = vmul.f32 0.5, %v1124
  %v1126 = vsub.f32 1.5, %v1125
  %v1127 = vmul.f32 %v1122, %v1126
  %vm1128 = vweird.f32 %v797
  %vm1129 = vweird.f32 %v1122
  %vm1130 = vmor %vm1128, %vm1129
  %v1131 = vsel %vm1130, %v1122, %v1127
  %v1132 = vrsqrt.pop %v798
  %v1133 = vmul.f32 %v1132, %v798
  %v1134 = vmul.f32 %v1133, %v1132
  %v1135 = vmul.f32 0.5, %v1134
  %v1136 = vsub.f32 1.5, %v1135
  %v1137 = vmul.f32 %v1132, %v1136
  %vm1138 = vweird.f32 %v798
  %vm1139 = vweird.f32 %v1132
  %vm1140 = vmor %vm1138, %vm1139
  %v1141 = vsel %vm1140, %v1132, %v1137
  %v1142 = vrsqrt.pop %v799
  %v1143 = vmul.f32 %v1142, %v799
  %v1144 = vmul.f32 %v1143, %v1142
  %v1145 = vmul.f32 0.5, %v1144
  %v1146 = vsub.f32 1.5, %v1145
  %v1147 = vmul.f32 %v1142, %v1146
  %vm1148 = vweird.f32 %v799
  %vm1149 = vweird.f32 %v1142
  %vm1150 = vmor %vm1148, %vm1149
  %v1151 = vsel %vm1150, %v1142, %v1147
  %v1152 = vrsqrt.pop %v800
  %v1153 = vmul.f32 %v1152, %v800
  %v1154 = vmul.f32 %v1153, %v1152
  %v1155 = vmul.f32 0.5, %v1154
  %v1156 = vsub.f32 1.5, %v1155
  %v1157 = vmul.f32 %v1152, %v1156
  %vm1158 = vweird.f32 %v800
  %vm1159 = vweird.f32 %v1152
  %vm1160 = vmor %vm1158, %vm1159
  %v1161 = vsel %vm1160, %v1152, %v1157
  %v1162 = vrsqrt.pop %v801
  %v1163 = vmul.f32 %v1162, %v801
  %v1164 = vmul.f32 %v1163, %v1162
  %v1165 = vmul.f32 0.5, %v1164
  %v1166 = vsub.f32 1.5, %v1165
  %v1167 = vmul.f32 %v1162, %v1166
  %vm1168 = vweird.f32 %v801
  %vm1169 = vweird.f32 %v1162
  %vm1170 = vmor %vm1168, %vm1169
  %v1171 = vsel %vm1170, %v1162, %v1167
  %v1172 = vrsqrt.pop %v802
  %v1173 = vmul.f32 %v1172, %v802
  %v1174 = vmul.f32 %v1173, %v1172
  %v1175 = vmul.f32 0.5, %v1174
  %v1176 = vsub.f32 1.5, %v1175
  %v1177 = vmul.f32 %v1172, %v1176
  %vm1178 = vweird.f32 %v802
  %vm1179 = vweird.f32 %v1172
  %vm1180 = vmor %vm1178, %vm1179
  %v1181 = vsel %vm1180, %v1172, %v1177
  %v1182 = vrsqrt.pop %v803
  %v1183 = vmul.f32 %v1182, %v803
  %v1184 = vmul.f32 %v1183, %v1182
  %v1185 = vmul.f32 0.5, %v1184
  %v1186 = vsub.f32 1.5, %v1185
  %v1187 = vmul.f32 %v1182, %v1186
  %vm1188 = vweird.f32 %v803
  %vm1189 = vweird.f32 %v1182
  %vm1190 = vmor %vm1188, %vm1189
  %v1191 = vsel %vm1190, %v1182, %v1187
  %v1192 = vrsqrt.pop %v804
  %v1193 = vmul.f32 %v1192, %v804
  %v1194 = vmul.f32 %v1193, %v1192
  %v1195 = vmul.f32 0.5, %v1194
  %v1196 = vsub.f32 1.5, %v1195
  %v1197 = vmul.f32 %v1192, %v1196
  %vm1198 = vweird.f32 %v804
  %vm1199 = vweird.f32 %v1192
  %vm1200 = vmor %vm1198, %vm1199
  %v1201 = vsel %vm1200, %v1192, %v1197
  %v1202 = vrsqrt.pop %v805
  %v1203 = vmul.f32 %v1202, %v805
  %v1204 = vmul.f32 %v1203, %v1202
  %v1205 = vmul.f32 0.5, %v1204
  %v1206 = vsub.f32 1.5, %v1205
  %v1207 = vmul.f32 %v1202, %v1206
  %vm1208 = vweird.f32 %v805
  %vm1209 = vweird.f32 %v1202
  %vm1210 = vmor %vm1208, %vm1209
  %v1211 = vsel %vm1210, %v1202, %v1207
  %v1212 = vrsqrt.pop %v806
  %v1213 = vmul.f32 %v1212, %v806
  %v1214 = vmul.f32 %v1213, %v1212
  %v1215 = vmul.f32 0.5, %v1214
  %v1216 = vsub.f32 1.5, %v1215
  %v1217 = vmul.f32 %v1212, %v1216
  %vm1218 = vweird.f32 %v806
  %vm1219 = vweird.f32 %v1212
  %vm1220 = vmor %vm1218, %vm1219
  %v1221 = vsel %vm1220, %v1212, %v1217
  %v1222 = vrsqrt.pop %v807
  %v1223 = vmul.f32 %v1222, %v807
  %v1224 = vmul.f32 %v1223, %v1222
  %v1225 = vmul.f32 0.5, %v1224
  %v1226 = vsub.f32 1.5, %v1225
  %v1227 = vmul.f32 %v1222, %v1226
  %vm1228 = vweird.f32 %v807
  %vm1229 = vweird.f32 %v1222
  %vm1230 = vmor %vm1228, %vm1229
  %v1231 = vsel %vm1230, %v1222, %v1227
  %v1232 = vrsqrt.pop %v808
  %v1233 = vmul.f32 %v1232, %v808
  %v1234 = vmul.f32 %v1233, %v1232
  %v1235 = vmul.f32 0.5, %v1234
  %v1236 = vsub.f32 1.5, %v1235
  %v1237 = vmul.f32 %v1232, %v1236
  %vm1238 = vweird.f32 %v808
  %vm1239 = vweird.f32 %v1232
  %vm1240 = vmor %vm1238, %vm1239
  %v1241 = vsel %vm1240, %v1232, %v1237
  %v1242 = vrsqrt.pop %v809
  %v1243 = vmul.f32 %v1242, %v809
  %v1244 = vmul.f32 %v1243, %v1242
  %v1245 = vmul.f32 0.5, %v1244
  %v1246 = vsub.f32 1.5, %v1245
  %v1247 = vmul.f32 %v1242, %v1246
  %vm1248 = vweird.f32 %v809
  %vm1249 = vweird.f32 %v1242
  %vm1250 = vmor %vm1248, %vm1249
  %v1251 = vsel %vm1250, %v1242, %v1247
  %v1252 = vrsqrt.pop %v810
  %v1253 = vmul.f32 %v1252, %v810
  %v1254 = vmul.f32 %v1253, %v1252
  %v1255 = vmul.f32 0.5, %v1254
  %v1256 = vsub.f32 1.5, %v1255
  %v1257 = vmul.f32 %v1252, %v1256
  %vm1258 = vweird.f32 %v810
  %vm1259 = vweird.f32 %v1252
  %vm1260 = vmor %vm1258, %vm1259
  %v1261 = vsel %vm1260, %v1252, %v1257
  %v1262 = vrsqrt.pop %v811
  %v1263 = vmul.f32 %v1262, %v811
  %v1264 = vmul.f32 %v1263, %v1262
  %v1265 = vmul.f32 0.5, %v1264
  %v1266 = vsub.f32 1.5, %v1265
  %v1267 = vmul.f32 %v1262, %v1266
  %vm1268 = vweird.f32 %v811
  %vm1269 = vweird.f32 %v1262
  %vm1270 = vmor %vm1268, %vm1269
  %v1271 = vsel %vm1270, %v1262, %v1267
  %v1272 = vrsqrt.pop %v812
  %v1273 = vmul.f32 %v1272, %v812
  %v1274 = vmul.f32 %v1273, %v1272
  %v1275 = vmul.f32 0.5, %v1274
  %v1276 = vsub.f32 1.5, %v1275
  %v1277 = vmul.f32 %v1272, %v1276
  %vm1278 = vweird.f32 %v812
  %vm1279 = vweird.f32 %v1272
  %vm1280 = vmor %vm1278, %vm1279
  %v1281 = vsel %vm1280, %v1272, %v1277
  %v1282 = vrsqrt.pop %v813
  %v1283 = vmul.f32 %v1282, %v813
  %v1284 = vmul.f32 %v1283, %v1282
  %v1285 = vmul.f32 0.5, %v1284
  %v1286 = vsub.f32 1.5, %v1285
  %v1287 = vmul.f32 %v1282, %v1286
  %vm1288 = vweird.f32 %v813
  %vm1289 = vweird.f32 %v1282
  %vm1290 = vmor %vm1288, %vm1289
  %v1291 = vsel %vm1290, %v1282, %v1287
  %v1292 = vrsqrt.pop %v814
  %v1293 = vmul.f32 %v1292, %v814
  %v1294 = vmul.f32 %v1293, %v1292
  %v1295 = vmul.f32 0.5, %v1294
  %v1296 = vsub.f32 1.5, %v1295
  %v1297 = vmul.f32 %v1292, %v1296
  %vm1298 = vweird.f32 %v814
  %vm1299 = vweird.f32 %v1292
  %vm1300 = vmor %vm1298, %vm1299
  %v1301 = vsel %vm1300, %v1292, %v1297
  %v1302 = vrsqrt.pop %v815
  %v1303 = vmul.f32 %v1302, %v815
  %v1304 = vmul.f32 %v1303, %v1302
  %v1305 = vmul.f32 0.5, %v1304
  %v1306 = vsub.f32 1.5, %v1305
  %v1307 = vmul.f32 %v1302, %v1306
  %vm1308 = vweird.f32 %v815
  %vm1309 = vweird.f32 %v1302
  %vm1310 = vmor %vm1308, %vm1309
  %v1311 = vsel %vm1310, %v1302, %v1307
  %v1312 = vrsqrt.pop %v816
  %v1313 = vmul.f32 %v1312, %v816
  %v1314 = vmul.f32 %v1313, %v1312
  %v1315 = vmul.f32 0.5, %v1314
  %v1316 = vsub.f32 1.5, %v1315
  %v1317 = vmul.f32 %v1312, %v1316
  %vm1318 = vweird.f32 %v816
  %vm1319 = vweird.f32 %v1312
  %vm1320 = vmor %vm1318, %vm1319
  %v1321 = vsel %vm1320, %v1312, %v1317
  %v1322 = vrsqrt.pop %v817
  %v1323 = vmul.f32 %v1322, %v817
  %v1324 = vmul.f32 %v1323, %v1322
  %v1325 = vmul.f32 0.5, %v1324
  %v1326 = vsub.f32 1.5, %v1325
  %v1327 = vmul.f32 %v1322, %v1326
  %vm1328 = vweird.f32 %v817
  %vm1329 = vweird.f32 %v1322
  %vm1330 = vmor %vm1328, %vm1329
  %v1331 = vsel %vm1330, %v1322, %v1327
  %v1332 = vrsqrt.pop %v818
  %v1333 = vmul.f32 %v1332, %v818
  %v1334 = vmul.f32 %v1333, %v1332
  %v1335 = vmul.f32 0.5, %v1334
  %v1336 = vsub.f32 1.5, %v1335
  %v1337 = vmul.f32 %v1332, %v1336
  %vm1338 = vweird.f32 %v818
  %vm1339 = vweird.f32 %v1332
  %vm1340 = vmor %vm1338, %vm1339
  %v1341 = vsel %vm1340, %v1332, %v1337
  %v1342 = vrsqrt.pop %v819
  %v1343 = vmul.f32 %v1342, %v819
  %v1344 = vmul.f32 %v1343, %v1342
  %v1345 = vmul.f32 0.5, %v1344
  %v1346 = vsub.f32 1.5, %v1345
  %v1347 = vmul.f32 %v1342, %v1346
  %vm1348 = vweird.f32 %v819
  %vm1349 = vweird.f32 %v1342
  %vm1350 = vmor %vm1348, %vm1349
  %v1351 = vsel %vm1350, %v1342, %v1347
  %v1352 = vrsqrt.pop %v820
  %v1353 = vmul.f32 %v1352, %v820
  %v1354 = vmul.f32 %v1353, %v1352
  %v1355 = vmul.f32 0.5, %v1354
  %v1356 = vsub.f32 1.5, %v1355
  %v1357 = vmul.f32 %v1352, %v1356
  %vm1358 = vweird.f32 %v820
  %vm1359 = vweird.f32 %v1352
  %vm1360 = vmor %vm1358, %vm1359
  %v1361 = vsel %vm1360, %v1352, %v1357
  %v1362 = vrsqrt.pop %v821
  %v1363 = vmul.f32 %v1362, %v821
  %v1364 = vmul.f32 %v1363, %v1362
  %v1365 = vmul.f32 0.5, %v1364
  %v1366 = vsub.f32 1.5, %v1365
  %v1367 = vmul.f32 %v1362, %v1366
  %vm1368 = vweird.f32 %v821
  %vm1369 = vweird.f32 %v1362
  %vm1370 = vmor %vm1368, %vm1369
  %v1371 = vsel %vm1370, %v1362, %v1367
  %v1372 = vrsqrt.pop %v822
  %v1373 = vmul.f32 %v1372, %v822
  %v1374 = vmul.f32 %v1373, %v1372
  %v1375 = vmul.f32 0.5, %v1374
  %v1376 = vsub.f32 1.5, %v1375
  %v1377 = vmul.f32 %v1372, %v1376
  %vm1378 = vweird.f32 %v822
  %vm1379 = vweird.f32 %v1372
  %vm1380 = vmor %vm1378, %vm1379
  %v1381 = vsel %vm1380, %v1372, %v1377
  %v1382 = vrsqrt.pop %v823
  %v1383 = vmul.f32 %v1382, %v823
  %v1384 = vmul.f32 %v1383, %v1382
  %v1385 = vmul.f32 0.5, %v1384
  %v1386 = vsub.f32 1.5, %v1385
  %v1387 = vmul.f32 %v1382, %v1386
  %vm1388 = vweird.f32 %v823
  %vm1389 = vweird.f32 %v1382
  %vm1390 = vmor %vm1388, %vm1389
  %v1391 = vsel %vm1390, %v1382, %v1387
  %v1392 = vrsqrt.pop %v824
  %v1393 = vmul.f32 %v1392, %v824
  %v1394 = vmul.f32 %v1393, %v1392
  %v1395 = vmul.f32 0.5, %v1394
  %v1396 = vsub.f32 1.5, %v1395
  %v1397 = vmul.f32 %v1392, %v1396
  %vm1398 = vweird.f32 %v824
  %vm1399 = vweird.f32 %v1392
  %vm1400 = vmor %vm1398, %vm1399
  %v1401 = vsel %vm1400, %v1392, %v1397
  %v1402 = vrsqrt.pop %v825
  %v1403 = vmul.f32 %v1402, %v825
  %v1404 = vmul.f32 %v1403, %v1402
  %v1405 = vmul.f32 0.5, %v1404
  %v1406 = vsub.f32 1.5, %v1405
  %v1407 = vmul.f32 %v1402, %v1406
  %vm1408 = vweird.f32 %v825
  %vm1409 = vweird.f32 %v1402
  %vm1410 = vmor %vm1408, %vm1409
  %v1411 = vsel %vm1410, %v1402, %v1407
  %v1412 = vrsqrt.pop %v826
  %v1413 = vmul.f32 %v1412, %v826
  %v1414 = vmul.f32 %v1413, %v1412
  %v1415 = vmul.f32 0.5, %v1414
  %v1416 = vsub.f32 1.5, %v1415
  %v1417 = vmul.f32 %v1412, %v1416
  %vm1418 = vweird.f32 %v826
  %vm1419 = vweird.f32 %v1412
  %vm1420 = vmor %vm1418, %vm1419
  %v1421 = vsel %vm1420, %v1412, %v1417
  %v1422 = vrsqrt.pop %v827
  %v1423 = vmul.f32 %v1422, %v827
  %v1424 = vmul.f32 %v1423, %v1422
  %v1425 = vmul.f32 0.5, %v1424
  %v1426 = vsub.f32 1.5, %v1425
  %v1427 = vmul.f32 %v1422, %v1426
  %vm1428 = vweird.f32 %v827
  %vm1429 = vweird.f32 %v1422
  %vm1430 = vmor %vm1428, %vm1429
  %v1431 = vsel %vm1430, %v1422, %v1427
  %v1432 = vrsqrt.pop %v828
  %v1433 = vmul.f32 %v1432, %v828
  %v1434 = vmul.f32 %v1433, %v1432
  %v1435 = vmul.f32 0.5, %v1434
  %v1436 = vsub.f32 1.5, %v1435
  %v1437 = vmul.f32 %v1432, %v1436
  %vm1438 = vweird.f32 %v828
  %vm1439 = vweird.f32 %v1432
  %vm1440 = vmor %vm1438, %vm1439
  %v1441 = vsel %vm1440, %v1432, %v1437
  %v1442 = vrsqrt.pop %v829
  %v1443 = vmul.f32 %v1442, %v829
  %v1444 = vmul.f32 %v1443, %v1442
  %v1445 = vmul.f32 0.5, %v1444
  %v1446 = vsub.f32 1.5, %v1445
  %v1447 = vmul.f32 %v1442, %v1446
  %vm1448 = vweird.f32 %v829
  %vm1449 = vweird.f32 %v1442
  %vm1450 = vmor %vm1448, %vm1449
  %v1451 = vsel %vm1450, %v1442, %v1447
  %v1452 = vrsqrt.pop %v830
  %v1453 = vmul.f32 %v1452, %v830
  %v1454 = vmul.f32 %v1453, %v1452
  %v1455 = vmul.f32 0.5, %v1454
  %v1456 = vsub.f32 1.5, %v1455
  %v1457 = vmul.f32 %v1452, %v1456
  %vm1458 = vweird.f32 %v830
  %vm1459 = vweird.f32 %v1452
  %vm1460 = vmor %vm1458, %vm1459
  %v1461 = vsel %vm1460, %v1452, %v1457
  %v1462 = vrsqrt.pop %v831
  %v1463 = vmul.f32 %v1462, %v831
  %v1464 = vmul.f32 %v1463, %v1462
  %v1465 = vmul.f32 0.5, %v1464
  %v1466 = vsub.f32 1.5, %v1465
  %v1467 = vmul.f32 %v1462, %v1466
  %vm1468 = vweird.f32 %v831
  %vm1469 = vweird.f32 %v1462
  %vm1470 = vmor %vm1468, %vm1469
  %v1471 = vsel %vm1470, %v1462, %v1467
  %v1472 = vmul.f32 %v384, %v841
  %v1473 = vmul.f32 %v385, %v851
  %v1474 = vmul.f32 %v386, %v861
  %v1475 = vmul.f32 %v387, %v871
  %v1476 = vmul.f32 %v388, %v881
  %v1477 = vmul.f32 %v389, %v891
  %v1478 = vmul.f32 %v390, %v901
  %v1479 = vmul.f32 %v391, %v911
  %v1480 = vmul.f32 %v392, %v921
  %v1481 = vmul.f32 %v393, %v931
  %v1482 = vmul.f32 %v394, %v941
  %v1483 = vmul.f32 %v395, %v951
  %v1484 = vmul.f32 %v396, %v961
  %v1485 = vmul.f32 %v397, %v971
  %v1486 = vmul.f32 %v398, %v981
  %v1487 = vmul.f32 %v399, %v991
  %v1488 = vmul.f32 %v400, %v1001
  %v1489 = vmul.f32 %v401, %v1011
  %v1490 = vmul.f32 %v402, %v1021
  %v1491 = vmul.f32 %v403, %v1031
  %v1492 = vmul.f32 %v404, %v1041
  %v1493 = vmul.f32 %v405, %v1051
  %v1494 = vmul.f32 %v406, %v1061
  %v1495 = vmul.f32 %v407, %v1071
  %v1496 = vmul.f32 %v408, %v1081
  %v1497 = vmul.f32 %v409, %v1091
  %v1498 = vmul.f32 %v410, %v1101
  %v1499 = vmul.f32 %v411, %v1111
  %v1500 = vmul.f32 %v412, %v1121
  %v1501 = vmul.f32 %v413, %v1131
  %v1502 = vmul.f32 %v414, %v1141
  %v1503 = vmul.f32 %v415, %v1151
  %v1504 = vmul.f32 %v416, %v1161
  %v1505 = vmul.f32 %v417, %v1171
  %v1506 = vmul.f32 %v418, %v1181
  %v1507 = vmul.f32 %v419, %v1191
  %v1508 = vmul.f32 %v420, %v1201
  %v1509 = vmul.f32 %v421, %v1211
  %v1510 = vmul.f32 %v422, %v1221
  %v1511 = vmul.f32 %v423, %v1231
  %v1512 = vmul.f32 %v424, %v1241
  %v1513 = vmul.f32 %v425, %v1251
  %v1514 = vmul.f32 %v426, %v1261
  %v1515 = vmul.f32 %v427, %v1271
  %v1516 = vmul.f32 %v428, %v1281
  %v1517 = vmul.f32 %v429, %v1291
  %v1518 = vmul.f32 %v430, %v1301
  %v1519 = vmul.f32 %v431, %v1311
  %v1520 = vmul.f32 %v432, %v1321
  %v1521 = vmul.f32 %v433, %v1331
  %v1522 = vmul.f32 %v434, %v1341
  %v1523 = vmul.f32 %v435, %v1351
  %v1524 = vmul.f32 %v436, %v1361
  %v1525 = vmul.f32 %v437, %v1371
  %v1526 = vmul.f32 %v438, %v1381
  %v1527 = vmul.f32 %v439, %v1391
  %v1528 = vmul.f32 %v440, %v1401
  %v1529 = vmul.f32 %v441, %v1411
  %v1530 = vmul.f32 %v442, %v1421
  %v1531 = vmul.f32 %v443, %v1431
  %v1532 = vmul.f32 %v444, %v1441
  %v1533 = vmul.f32 %v445, %v1451
  %v1534 = vmul.f32 %v446, %v1461
  %v1535 = vmul.f32 %v447, %v1471
  %v1537 = vperm.slane %v118, 0
  %v1539 = vmul.f32 %v1472, %v1537
  %v1540 = vmul.f32 %v1473, %v1537
  %v1541 = vmul.f32 %v1474, %v1537
  %v1542 = vmul.f32 %v1475, %v1537
  %v1543 = vmul.f32 %v1476, %v1537
  %v1544 = vmul.f32 %v1477, %v1537
  %v1545 = vmul.f32 %v1478, %v1537
  %v1546 = vmul.f32 %v1479, %v1537
  %v1547 = vmul.f32 %v1480, %v1537
  %v1548 = vmul.f32 %v1481, %v1537
  %v1549 = vmul.f32 %v1482, %v1537
  %v1550 = vmul.f32 %v1483, %v1537
  %v1551 = vmul.f32 %v1484, %v1537
  %v1552 = vmul.f32 %v1485, %v1537
  %v1553 = vmul.f32 %v1486, %v1537
  %v1554 = vmul.f32 %v1487, %v1537
  %v1555 = vmul.f32 %v1488, %v1537
  %v1556 = vmul.f32 %v1489, %v1537
  %v1557 = vmul.f32 %v1490, %v1537
  %v1558 = vmul.f32 %v1491, %v1537
  %v1559 = vmul.f32 %v1492, %v1537
  %v1560 = vmul.f32 %v1493, %v1537
  %v1561 = vmul.f32 %v1494, %v1537
  %v1562 = vmul.f32 %v1495, %v1537
  %v1563 = vmul.f32 %v1496, %v1537
  %v1564 = vmul.f32 %v1497, %v1537
  %v1565 = vmul.f32 %v1498, %v1537
  %v1566 = vmul.f32 %v1499, %v1537
  %v1567 = vmul.f32 %v1500, %v1537
  %v1568 = vmul.f32 %v1501, %v1537
  %v1569 = vmul.f32 %v1502, %v1537
  %v1570 = vmul.f32 %v1503, %v1537
  %v1571 = vmul.f32 %v1504, %v1537
  %v1572 = vmul.f32 %v1505, %v1537
  %v1573 = vmul.f32 %v1506, %v1537
  %v1574 = vmul.f32 %v1507, %v1537
  %v1575 = vmul.f32 %v1508, %v1537
  %v1576 = vmul.f32 %v1509, %v1537
  %v1577 = vmul.f32 %v1510, %v1537
  %v1578 = vmul.f32 %v1511, %v1537
  %v1579 = vmul.f32 %v1512, %v1537
  %v1580 = vmul.f32 %v1513, %v1537
  %v1581 = vmul.f32 %v1514, %v1537
  %v1582 = vmul.f32 %v1515, %v1537
  %v1583 = vmul.f32 %v1516, %v1537
  %v1584 = vmul.f32 %v1517, %v1537
  %v1585 = vmul.f32 %v1518, %v1537
  %v1586 = vmul.f32 %v1519, %v1537
  %v1587 = vmul.f32 %v1520, %v1537
  %v1588 = vmul.f32 %v1521, %v1537
  %v1589 = vmul.f32 %v1522, %v1537
  %v1590 = vmul.f32 %v1523, %v1537
  %v1591 = vmul.f32 %v1524, %v1537
  %v1592 = vmul.f32 %v1525, %v1537
  %v1593 = vmul.f32 %v1526, %v1537
  %v1594 = vmul.f32 %v1527, %v1537
  %v1595 = vmul.f32 %v1528, %v1537
  %v1596 = vmul.f32 %v1529, %v1537
  %v1597 = vmul.f32 %v1530, %v1537
  %v1598 = vmul.f32 %v1531, %v1537
  %v1599 = vmul.f32 %v1532, %v1537
  %v1600 = vmul.f32 %v1533, %v1537
  %v1601 = vmul.f32 %v1534, %v1537
  %v1602 = vmul.f32 %v1535, %v1537
  %v1604 = vperm.slane %v119, 0
  %v1606 = vadd.f32 %v1539, %v1604
  %v1607 = vadd.f32 %v1540, %v1604
  %v1608 = vadd.f32 %v1541, %v1604
  %v1609 = vadd.f32 %v1542, %v1604
  %v1610 = vadd.f32 %v1543, %v1604
  %v1611 = vadd.f32 %v1544, %v1604
  %v1612 = vadd.f32 %v1545, %v1604
  %v1613 = vadd.f32 %v1546, %v1604
  %v1614 = vadd.f32 %v1547, %v1604
  %v1615 = vadd.f32 %v1548, %v1604
  %v1616 = vadd.f32 %v1549, %v1604
  %v1617 = vadd.f32 %v1550, %v1604
  %v1618 = vadd.f32 %v1551, %v1604
  %v1619 = vadd.f32 %v1552, %v1604
  %v1620 = vadd.f32 %v1553, %v1604
  %v1621 = vadd.f32 %v1554, %v1604
  %v1622 = vadd.f32 %v1555, %v1604
  %v1623 = vadd.f32 %v1556, %v1604
  %v1624 = vadd.f32 %v1557, %v1604
  %v1625 = vadd.f32 %v1558, %v1604
  %v1626 = vadd.f32 %v1559, %v1604
  %v1627 = vadd.f32 %v1560, %v1604
  %v1628 = vadd.f32 %v1561, %v1604
  %v1629 = vadd.f32 %v1562, %v1604
  %v1630 = vadd.f32 %v1563, %v1604
  %v1631 = vadd.f32 %v1564, %v1604
  %v1632 = vadd.f32 %v1565, %v1604
  %v1633 = vadd.f32 %v1566, %v1604
  %v1634 = vadd.f32 %v1567, %v1604
  %v1635 = vadd.f32 %v1568, %v1604
  %v1636 = vadd.f32 %v1569, %v1604
  %v1637 = vadd.f32 %v1570, %v1604
  %v1638 = vadd.f32 %v1571, %v1604
  %v1639 = vadd.f32 %v1572, %v1604
  %v1640 = vadd.f32 %v1573, %v1604
  %v1641 = vadd.f32 %v1574, %v1604
  %v1642 = vadd.f32 %v1575, %v1604
  %v1643 = vadd.f32 %v1576, %v1604
  %v1644 = vadd.f32 %v1577, %v1604
  %v1645 = vadd.f32 %v1578, %v1604
  %v1646 = vadd.f32 %v1579, %v1604
  %v1647 = vadd.f32 %v1580, %v1604
  %v1648 = vadd.f32 %v1581, %v1604
  %v1649 = vadd.f32 %v1582, %v1604
  %v1650 = vadd.f32 %v1583, %v1604
  %v1651 = vadd.f32 %v1584, %v1604
  %v1652 = vadd.f32 %v1585, %v1604
  %v1653 = vadd.f32 %v1586, %v1604
  %v1654 = vadd.f32 %v1587, %v1604
  %v1655 = vadd.f32 %v1588, %v1604
  %v1656 = vadd.f32 %v1589, %v1604
  %v1657 = vadd.f32 %v1590, %v1604
  %v1658 = vadd.f32 %v1591, %v1604
  %v1659 = vadd.f32 %v1592, %v1604
  %v1660 = vadd.f32 %v1593, %v1604
  %v1661 = vadd.f32 %v1594, %v1604
  %v1662 = vadd.f32 %v1595, %v1604
  %v1663 = vadd.f32 %v1596, %v1604
  %v1664 = vadd.f32 %v1597, %v1604
  %v1665 = vadd.f32 %v1598, %v1604
  %v1666 = vadd.f32 %v1599, %v1604
  %v1667 = vadd.f32 %v1600, %v1604
  %v1668 = vadd.f32 %v1601, %v1604
  %v1669 = vadd.f32 %v1602, %v1604
  %v1670 = vpack.c.bf16 %v1607, %v1606
  %v1671 = vpack.c.bf16 %v1609, %v1608
  %v1672 = vpack.c.bf16 %v1611, %v1610
  %v1673 = vpack.c.bf16 %v1613, %v1612
  %v1674 = vpack.c.bf16 %v1615, %v1614
  %v1675 = vpack.c.bf16 %v1617, %v1616
  %v1676 = vpack.c.bf16 %v1619, %v1618
  %v1677 = vpack.c.bf16 %v1621, %v1620
  %v1678 = vpack.c.bf16 %v1623, %v1622
  %v1679 = vpack.c.bf16 %v1625, %v1624
  %v1680 = vpack.c.bf16 %v1627, %v1626
  %v1681 = vpack.c.bf16 %v1629, %v1628
  %v1682 = vpack.c.bf16 %v1631, %v1630
  %v1683 = vpack.c.bf16 %v1633, %v1632
  %v1684 = vpack.c.bf16 %v1635, %v1634
  %v1685 = vpack.c.bf16 %v1637, %v1636
  %v1686 = vld [vmem:[%s3] sm:$0xf]
  %v1687 = vld [vmem:[%s3 + $0x4] sm:$0xf]
  %v1688 = vld [vmem:[%s3 + $0x8] sm:$0xf]
  %v1689 = vld [vmem:[%s3 + $0xc] sm:$0xf]
  %v1690 = vld [vmem:[%s4] sm:$0x1]
  %v1692 = vperm.slane %v1690, 0
  %v1698 = vunpack.c.l.b16 %v1686
  %v1699 = vunpack.c.l.b16 %v1687
  %v1700 = vunpack.c.l.b16 %v1688
  %v1701 = vunpack.c.l.b16 %v1689
  %v1702 = vpack.c.b16 %v1699, %v1698
  %v1703 = vpack.c.b16 %v1701, %v1700
  %v1707 = vsel %vm120, %v1670, 0
  %v1710 = vsel %vm120, %v1671, 0
  %v1713 = vsel %vm120, %v1672, 0
  %v1716 = vsel %vm120, %v1673, 0
  %v1719 = vsel %vm120, %v1674, 0
  %v1722 = vsel %vm120, %v1675, 0
  %v1725 = vsel %vm120, %v1676, 0
  %v1728 = vsel %vm120, %v1677, 0
  %v1731 = vsel %vm120, %v1678, 0
  %v1734 = vsel %vm120, %v1679, 0
  %v1737 = vsel %vm120, %v1680, 0
  %v1740 = vsel %vm120, %v1681, 0
  %v1743 = vsel %vm120, %v1682, 0
  %v1746 = vsel %vm120, %v1683, 0
  %v1749 = vsel %vm120, %v1684, 0
  %v1752 = vsel %vm120, %v1685, 0
  %1754 = vmatpush.bf16.msra.mxu0 0
  %1755 = vmatpush.bf16.msra.mxu0 0
  %1756 = vmatpush.bf16.msra.mxu0 0
  %1757 = vmatpush.bf16.msra.mxu0 0
  %1758 = vmatpush.bf16.msra.mxu0 0
  %1759 = vmatpush.bf16.msra.mxu0 0
  %1760 = vmatpush.bf16.msra.mxu0 %v1703
  %1761 = vmatpush.bf16.msra.mxu0 %v1702
  %1762 = vmatmul.bf16.gmra.mxu0 %v1707
  %v1763 = vpop.f32.mrf.mxu0
  %v1764 = vadd.f32 %v1692, %v1763
  %v1765 = vpop.f32.mrf.mxu0
  %v1766 = vadd.f32 %v1692, %v1765
  %1767 = vmatmul.bf16.gmra.mxu0 %v1710
  %v1768 = vpop.f32.mrf.mxu0
  %v1769 = vadd.f32 %v1692, %v1768
  %v1770 = vpop.f32.mrf.mxu0
  %v1771 = vadd.f32 %v1692, %v1770
  %1772 = vmatmul.bf16.gmra.mxu0 %v1713
  %v1773 = vpop.f32.mrf.mxu0
  %v1774 = vadd.f32 %v1692, %v1773
  %v1775 = vpop.f32.mrf.mxu0
  %v1776 = vadd.f32 %v1692, %v1775
  %1777 = vmatmul.bf16.gmra.mxu0 %v1716
  %v1778 = vpop.f32.mrf.mxu0
  %v1779 = vadd.f32 %v1692, %v1778
  %v1780 = vpop.f32.mrf.mxu0
  %v1781 = vadd.f32 %v1692, %v1780
  %1782 = vmatmul.bf16.gmra.mxu0 %v1719
  %v1783 = vpop.f32.mrf.mxu0
  %v1784 = vadd.f32 %v1692, %v1783
  %v1785 = vpop.f32.mrf.mxu0
  %v1786 = vadd.f32 %v1692, %v1785
  %1787 = vmatmul.bf16.gmra.mxu0 %v1722
  %v1788 = vpop.f32.mrf.mxu0
  %v1789 = vadd.f32 %v1692, %v1788
  %v1790 = vpop.f32.mrf.mxu0
  %v1791 = vadd.f32 %v1692, %v1790
  %1792 = vmatmul.bf16.gmra.mxu0 %v1725
  %v1793 = vpop.f32.mrf.mxu0
  %v1794 = vadd.f32 %v1692, %v1793
  %v1795 = vpop.f32.mrf.mxu0
  %v1796 = vadd.f32 %v1692, %v1795
  %1797 = vmatmul.bf16.gmra.mxu0 %v1728
  %v1798 = vpop.f32.mrf.mxu0
  %v1799 = vadd.f32 %v1692, %v1798
  %v1800 = vpop.f32.mrf.mxu0
  %v1801 = vadd.f32 %v1692, %v1800
  %1802 = vmatmul.bf16.gmra.mxu0 %v1731
  %v1803 = vpop.f32.mrf.mxu0
  %v1804 = vadd.f32 %v1692, %v1803
  %v1805 = vpop.f32.mrf.mxu0
  %v1806 = vadd.f32 %v1692, %v1805
  %1807 = vmatmul.bf16.gmra.mxu0 %v1734
  %v1808 = vpop.f32.mrf.mxu0
  %v1809 = vadd.f32 %v1692, %v1808
  %v1810 = vpop.f32.mrf.mxu0
  %v1811 = vadd.f32 %v1692, %v1810
  %1812 = vmatmul.bf16.gmra.mxu0 %v1737
  %v1813 = vpop.f32.mrf.mxu0
  %v1814 = vadd.f32 %v1692, %v1813
  %v1815 = vpop.f32.mrf.mxu0
  %v1816 = vadd.f32 %v1692, %v1815
  %1817 = vmatmul.bf16.gmra.mxu0 %v1740
  %v1818 = vpop.f32.mrf.mxu0
  %v1819 = vadd.f32 %v1692, %v1818
  %v1820 = vpop.f32.mrf.mxu0
  %v1821 = vadd.f32 %v1692, %v1820
  %1822 = vmatmul.bf16.gmra.mxu0 %v1743
  %v1823 = vpop.f32.mrf.mxu0
  %v1824 = vadd.f32 %v1692, %v1823
  %v1825 = vpop.f32.mrf.mxu0
  %v1826 = vadd.f32 %v1692, %v1825
  %1827 = vmatmul.bf16.gmra.mxu0 %v1746
  %v1828 = vpop.f32.mrf.mxu0
  %v1829 = vadd.f32 %v1692, %v1828
  %v1830 = vpop.f32.mrf.mxu0
  %v1831 = vadd.f32 %v1692, %v1830
  %1832 = vmatmul.bf16.gmra.mxu0 %v1749
  %v1833 = vpop.f32.mrf.mxu0
  %v1834 = vadd.f32 %v1692, %v1833
  %v1835 = vpop.f32.mrf.mxu0
  %v1836 = vadd.f32 %v1692, %v1835
  %1837 = vmatmul.bf16.gmra.mxu0 %v1752
  %v1838 = vpop.f32.mrf.mxu0
  %v1839 = vadd.f32 %v1692, %v1838
  %v1840 = vpop.f32.mrf.mxu0
  %v1841 = vadd.f32 %v1692, %v1840
  %1842 = vdwg.mxu0
  %v1843 = vpack.c.bf16 %v1639, %v1638
  %v1844 = vpack.c.bf16 %v1641, %v1640
  %v1845 = vpack.c.bf16 %v1643, %v1642
  %v1846 = vpack.c.bf16 %v1645, %v1644
  %v1847 = vpack.c.bf16 %v1647, %v1646
  %v1848 = vpack.c.bf16 %v1649, %v1648
  %v1849 = vpack.c.bf16 %v1651, %v1650
  %v1850 = vpack.c.bf16 %v1653, %v1652
  %v1851 = vpack.c.bf16 %v1655, %v1654
  %v1852 = vpack.c.bf16 %v1657, %v1656
  %v1853 = vpack.c.bf16 %v1659, %v1658
  %v1854 = vpack.c.bf16 %v1661, %v1660
  %v1855 = vpack.c.bf16 %v1663, %v1662
  %v1856 = vpack.c.bf16 %v1665, %v1664
  %v1857 = vpack.c.bf16 %v1667, %v1666
  %v1858 = vpack.c.bf16 %v1669, %v1668
  %v1859 = vld [vmem:[%s5] sm:$0xf]
  %v1860 = vld [vmem:[%s5 + $0x4] sm:$0xf]
  %v1861 = vld [vmem:[%s5 + $0x8] sm:$0xf]
  %v1862 = vld [vmem:[%s5 + $0xc] sm:$0xf]
  %v1863 = vld [vmem:[%s6] sm:$0x1]
  %v1865 = vperm.slane %v1863, 0
  %v1871 = vunpack.c.l.b16 %v1859
  %v1872 = vunpack.c.l.b16 %v1860
  %v1873 = vunpack.c.l.b16 %v1861
  %v1874 = vunpack.c.l.b16 %v1862
  %v1875 = vpack.c.b16 %v1872, %v1871
  %v1876 = vpack.c.b16 %v1874, %v1873
  %v1880 = vsel %vm120, %v1843, 0
  %v1883 = vsel %vm120, %v1844, 0
  %v1886 = vsel %vm120, %v1845, 0
  %v1889 = vsel %vm120, %v1846, 0
  %v1892 = vsel %vm120, %v1847, 0
  %v1895 = vsel %vm120, %v1848, 0
  %v1898 = vsel %vm120, %v1849, 0
  %v1901 = vsel %vm120, %v1850, 0
  %v1904 = vsel %vm120, %v1851, 0
  %v1907 = vsel %vm120, %v1852, 0
  %v1910 = vsel %vm120, %v1853, 0
  %v1913 = vsel %vm120, %v1854, 0
  %v1916 = vsel %vm120, %v1855, 0
  %v1919 = vsel %vm120, %v1856, 0
  %v1922 = vsel %vm120, %v1857, 0
  %v1925 = vsel %vm120, %v1858, 0
  %1927 = vmatpush.bf16.msra.mxu0 0
  %1928 = vmatpush.bf16.msra.mxu0 0
  %1929 = vmatpush.bf16.msra.mxu0 0
  %1930 = vmatpush.bf16.msra.mxu0 0
  %1931 = vmatpush.bf16.msra.mxu0 0
  %1932 = vmatpush.bf16.msra.mxu0 0
  %1933 = vmatpush.bf16.msra.mxu0 %v1876
  %1934 = vmatpush.bf16.msra.mxu0 %v1875
  %1935 = vmatmul.bf16.gmra.mxu0 %v1880
  %v1936 = vpop.f32.mrf.mxu0
  %v1937 = vadd.f32 %v1865, %v1936
  %v1938 = vpop.f32.mrf.mxu0
  %v1939 = vadd.f32 %v1865, %v1938
  %1940 = vmatmul.bf16.gmra.mxu0 %v1883
  %v1941 = vpop.f32.mrf.mxu0
  %v1942 = vadd.f32 %v1865, %v1941
  %v1943 = vpop.f32.mrf.mxu0
  %v1944 = vadd.f32 %v1865, %v1943
  %1945 = vmatmul.bf16.gmra.mxu0 %v1886
  %v1946 = vpop.f32.mrf.mxu0
  %v1947 = vadd.f32 %v1865, %v1946
  %v1948 = vpop.f32.mrf.mxu0
  %v1949 = vadd.f32 %v1865, %v1948
  %1950 = vmatmul.bf16.gmra.mxu0 %v1889
  %v1951 = vpop.f32.mrf.mxu0
  %v1952 = vadd.f32 %v1865, %v1951
  %v1953 = vpop.f32.mrf.mxu0
  %v1954 = vadd.f32 %v1865, %v1953
  %1955 = vmatmul.bf16.gmra.mxu0 %v1892
  %v1956 = vpop.f32.mrf.mxu0
  %v1957 = vadd.f32 %v1865, %v1956
  %v1958 = vpop.f32.mrf.mxu0
  %v1959 = vadd.f32 %v1865, %v1958
  %1960 = vmatmul.bf16.gmra.mxu0 %v1895
  %v1961 = vpop.f32.mrf.mxu0
  %v1962 = vadd.f32 %v1865, %v1961
  %v1963 = vpop.f32.mrf.mxu0
  %v1964 = vadd.f32 %v1865, %v1963
  %1965 = vmatmul.bf16.gmra.mxu0 %v1898
  %v1966 = vpop.f32.mrf.mxu0
  %v1967 = vadd.f32 %v1865, %v1966
  %v1968 = vpop.f32.mrf.mxu0
  %v1969 = vadd.f32 %v1865, %v1968
  %1970 = vmatmul.bf16.gmra.mxu0 %v1901
  %v1971 = vpop.f32.mrf.mxu0
  %v1972 = vadd.f32 %v1865, %v1971
  %v1973 = vpop.f32.mrf.mxu0
  %v1974 = vadd.f32 %v1865, %v1973
  %1975 = vmatmul.bf16.gmra.mxu0 %v1904
  %v1976 = vpop.f32.mrf.mxu0
  %v1977 = vadd.f32 %v1865, %v1976
  %v1978 = vpop.f32.mrf.mxu0
  %v1979 = vadd.f32 %v1865, %v1978
  %1980 = vmatmul.bf16.gmra.mxu0 %v1907
  %v1981 = vpop.f32.mrf.mxu0
  %v1982 = vadd.f32 %v1865, %v1981
  %v1983 = vpop.f32.mrf.mxu0
  %v1984 = vadd.f32 %v1865, %v1983
  %1985 = vmatmul.bf16.gmra.mxu0 %v1910
  %v1986 = vpop.f32.mrf.mxu0
  %v1987 = vadd.f32 %v1865, %v1986
  %v1988 = vpop.f32.mrf.mxu0
  %v1989 = vadd.f32 %v1865, %v1988
  %1990 = vmatmul.bf16.gmra.mxu0 %v1913
  %v1991 = vpop.f32.mrf.mxu0
  %v1992 = vadd.f32 %v1865, %v1991
  %v1993 = vpop.f32.mrf.mxu0
  %v1994 = vadd.f32 %v1865, %v1993
  %1995 = vmatmul.bf16.gmra.mxu0 %v1916
  %v1996 = vpop.f32.mrf.mxu0
  %v1997 = vadd.f32 %v1865, %v1996
  %v1998 = vpop.f32.mrf.mxu0
  %v1999 = vadd.f32 %v1865, %v1998
  %2000 = vmatmul.bf16.gmra.mxu0 %v1919
  %v2001 = vpop.f32.mrf.mxu0
  %v2002 = vadd.f32 %v1865, %v2001
  %v2003 = vpop.f32.mrf.mxu0
  %v2004 = vadd.f32 %v1865, %v2003
  %2005 = vmatmul.bf16.gmra.mxu0 %v1922
  %v2006 = vpop.f32.mrf.mxu0
  %v2007 = vadd.f32 %v1865, %v2006
  %v2008 = vpop.f32.mrf.mxu0
  %v2009 = vadd.f32 %v1865, %v2008
  %2010 = vmatmul.bf16.gmra.mxu0 %v1925
  %v2011 = vpop.f32.mrf.mxu0
  %v2012 = vadd.f32 %v1865, %v2011
  %v2013 = vpop.f32.mrf.mxu0
  %v2014 = vadd.f32 %v1865, %v2013
  %2015 = vdwg.mxu0
  %v2016 = vmul.f32 %v1764, 0.35355338
  %v2017 = vmul.f32 %v1766, 0.35355338
  %v2018 = vmul.f32 %v1769, 0.35355338
  %v2019 = vmul.f32 %v1771, 0.35355338
  %v2020 = vmul.f32 %v1774, 0.35355338
  %v2021 = vmul.f32 %v1776, 0.35355338
  %v2022 = vmul.f32 %v1779, 0.35355338
  %v2023 = vmul.f32 %v1781, 0.35355338
  %v2024 = vmul.f32 %v1784, 0.35355338
  %v2025 = vmul.f32 %v1786, 0.35355338
  %v2026 = vmul.f32 %v1789, 0.35355338
  %v2027 = vmul.f32 %v1791, 0.35355338
  %v2028 = vmul.f32 %v1794, 0.35355338
  %v2029 = vmul.f32 %v1796, 0.35355338
  %v2030 = vmul.f32 %v1799, 0.35355338
  %v2031 = vmul.f32 %v1801, 0.35355338
  %v2032 = vmul.f32 %v1804, 0.35355338
  %v2033 = vmul.f32 %v1806, 0.35355338
  %v2034 = vmul.f32 %v1809, 0.35355338
  %v2035 = vmul.f32 %v1811, 0.35355338
  %v2036 = vmul.f32 %v1814, 0.35355338
  %v2037 = vmul.f32 %v1816, 0.35355338
  %v2038 = vmul.f32 %v1819, 0.35355338
  %v2039 = vmul.f32 %v1821, 0.35355338
  %v2040 = vmul.f32 %v1824, 0.35355338
  %v2041 = vmul.f32 %v1826, 0.35355338
  %v2042 = vmul.f32 %v1829, 0.35355338
  %v2043 = vmul.f32 %v1831, 0.35355338
  %v2044 = vmul.f32 %v1834, 0.35355338
  %v2045 = vmul.f32 %v1836, 0.35355338
  %v2046 = vmul.f32 %v1839, 0.35355338
  %v2047 = vmul.f32 %v1841, 0.35355338
  %2080 = vrot.lane.b32.xlu0 %v2016, 120
  %v2081 = vpop.permute.xlu0 %2080
  %2082 = vrot.lane.b32.xlu0 %v2017, 120
  %v2083 = vpop.permute.xlu0 %2082
  %2084 = vrot.lane.b32.xlu0 %v2018, 120
  %v2085 = vpop.permute.xlu0 %2084
  %2086 = vrot.lane.b32.xlu0 %v2019, 120
  %v2087 = vpop.permute.xlu0 %2086
  %2088 = vrot.lane.b32.xlu0 %v2020, 120
  %v2089 = vpop.permute.xlu0 %2088
  %2090 = vrot.lane.b32.xlu0 %v2021, 120
  %v2091 = vpop.permute.xlu0 %2090
  %2092 = vrot.lane.b32.xlu0 %v2022, 120
  %v2093 = vpop.permute.xlu0 %2092
  %2094 = vrot.lane.b32.xlu0 %v2023, 120
  %v2095 = vpop.permute.xlu0 %2094
  %2096 = vrot.lane.b32.xlu0 %v2024, 120
  %v2097 = vpop.permute.xlu0 %2096
  %2098 = vrot.lane.b32.xlu0 %v2025, 120
  %v2099 = vpop.permute.xlu0 %2098
  %2100 = vrot.lane.b32.xlu0 %v2026, 120
  %v2101 = vpop.permute.xlu0 %2100
  %2102 = vrot.lane.b32.xlu0 %v2027, 120
  %v2103 = vpop.permute.xlu0 %2102
  %2104 = vrot.lane.b32.xlu0 %v2028, 120
  %v2105 = vpop.permute.xlu0 %2104
  %2106 = vrot.lane.b32.xlu0 %v2029, 120
  %v2107 = vpop.permute.xlu0 %2106
  %2108 = vrot.lane.b32.xlu0 %v2030, 120
  %v2109 = vpop.permute.xlu0 %2108
  %2110 = vrot.lane.b32.xlu0 %v2031, 120
  %v2111 = vpop.permute.xlu0 %2110
  %2112 = vrot.lane.b32.xlu0 %v2032, 120
  %v2113 = vpop.permute.xlu0 %2112
  %2114 = vrot.lane.b32.xlu0 %v2033, 120
  %v2115 = vpop.permute.xlu0 %2114
  %2116 = vrot.lane.b32.xlu0 %v2034, 120
  %v2117 = vpop.permute.xlu0 %2116
  %2118 = vrot.lane.b32.xlu0 %v2035, 120
  %v2119 = vpop.permute.xlu0 %2118
  %2120 = vrot.lane.b32.xlu0 %v2036, 120
  %v2121 = vpop.permute.xlu0 %2120
  %2122 = vrot.lane.b32.xlu0 %v2037, 120
  %v2123 = vpop.permute.xlu0 %2122
  %2124 = vrot.lane.b32.xlu0 %v2038, 120
  %v2125 = vpop.permute.xlu0 %2124
  %2126 = vrot.lane.b32.xlu0 %v2039, 120
  %v2127 = vpop.permute.xlu0 %2126
  %2128 = vrot.lane.b32.xlu0 %v2040, 120
  %v2129 = vpop.permute.xlu0 %2128
  %2130 = vrot.lane.b32.xlu0 %v2041, 120
  %v2131 = vpop.permute.xlu0 %2130
  %2132 = vrot.lane.b32.xlu0 %v2042, 120
  %v2133 = vpop.permute.xlu0 %2132
  %2134 = vrot.lane.b32.xlu0 %v2043, 120
  %v2135 = vpop.permute.xlu0 %2134
  %2136 = vrot.lane.b32.xlu0 %v2044, 120
  %v2137 = vpop.permute.xlu0 %2136
  %2138 = vrot.lane.b32.xlu0 %v2045, 120
  %v2139 = vpop.permute.xlu0 %2138
  %2140 = vrot.lane.b32.xlu0 %v2046, 120
  %v2141 = vpop.permute.xlu0 %2140
  %2142 = vrot.lane.b32.xlu0 %v2047, 120
  %v2143 = vpop.permute.xlu0 %2142
  %2144 = vrot.lane.b32.xlu0 %v2016, 112
  %v2145 = vpop.permute.xlu0 %2144
  %2146 = vrot.lane.b32.xlu0 %v2017, 112
  %v2147 = vpop.permute.xlu0 %2146
  %2148 = vrot.lane.b32.xlu0 %v2018, 112
  %v2149 = vpop.permute.xlu0 %2148
  %2150 = vrot.lane.b32.xlu0 %v2019, 112
  %v2151 = vpop.permute.xlu0 %2150
  %2152 = vrot.lane.b32.xlu0 %v2020, 112
  %v2153 = vpop.permute.xlu0 %2152
  %2154 = vrot.lane.b32.xlu0 %v2021, 112
  %v2155 = vpop.permute.xlu0 %2154
  %2156 = vrot.lane.b32.xlu0 %v2022, 112
  %v2157 = vpop.permute.xlu0 %2156
  %2158 = vrot.lane.b32.xlu0 %v2023, 112
  %v2159 = vpop.permute.xlu0 %2158
  %2160 = vrot.lane.b32.xlu0 %v2024, 112
  %v2161 = vpop.permute.xlu0 %2160
  %2162 = vrot.lane.b32.xlu0 %v2025, 112
  %v2163 = vpop.permute.xlu0 %2162
  %2164 = vrot.lane.b32.xlu0 %v2026, 112
  %v2165 = vpop.permute.xlu0 %2164
  %2166 = vrot.lane.b32.xlu0 %v2027, 112
  %v2167 = vpop.permute.xlu0 %2166
  %2168 = vrot.lane.b32.xlu0 %v2028, 112
  %v2169 = vpop.permute.xlu0 %2168
  %2170 = vrot.lane.b32.xlu0 %v2029, 112
  %v2171 = vpop.permute.xlu0 %2170
  %2172 = vrot.lane.b32.xlu0 %v2030, 112
  %v2173 = vpop.permute.xlu0 %2172
  %2174 = vrot.lane.b32.xlu0 %v2031, 112
  %v2175 = vpop.permute.xlu0 %2174
  %2176 = vrot.lane.b32.xlu0 %v2032, 112
  %v2177 = vpop.permute.xlu0 %2176
  %2178 = vrot.lane.b32.xlu0 %v2033, 112
  %v2179 = vpop.permute.xlu0 %2178
  %2180 = vrot.lane.b32.xlu0 %v2034, 112
  %v2181 = vpop.permute.xlu0 %2180
  %2182 = vrot.lane.b32.xlu0 %v2035, 112
  %v2183 = vpop.permute.xlu0 %2182
  %2184 = vrot.lane.b32.xlu0 %v2036, 112
  %v2185 = vpop.permute.xlu0 %2184
  %2186 = vrot.lane.b32.xlu0 %v2037, 112
  %v2187 = vpop.permute.xlu0 %2186
  %2188 = vrot.lane.b32.xlu0 %v2038, 112
  %v2189 = vpop.permute.xlu0 %2188
  %2190 = vrot.lane.b32.xlu0 %v2039, 112
  %v2191 = vpop.permute.xlu0 %2190
  %2192 = vrot.lane.b32.xlu0 %v2040, 112
  %v2193 = vpop.permute.xlu0 %2192
  %2194 = vrot.lane.b32.xlu0 %v2041, 112
  %v2195 = vpop.permute.xlu0 %2194
  %2196 = vrot.lane.b32.xlu0 %v2042, 112
  %v2197 = vpop.permute.xlu0 %2196
  %2198 = vrot.lane.b32.xlu0 %v2043, 112
  %v2199 = vpop.permute.xlu0 %2198
  %2200 = vrot.lane.b32.xlu0 %v2044, 112
  %v2201 = vpop.permute.xlu0 %2200
  %2202 = vrot.lane.b32.xlu0 %v2045, 112
  %v2203 = vpop.permute.xlu0 %2202
  %2204 = vrot.lane.b32.xlu0 %v2046, 112
  %v2205 = vpop.permute.xlu0 %2204
  %2206 = vrot.lane.b32.xlu0 %v2047, 112
  %v2207 = vpop.permute.xlu0 %2206
  %2208 = vrot.lane.b32.xlu0 %v2016, 104
  %v2209 = vpop.permute.xlu0 %2208
  %2210 = vrot.lane.b32.xlu0 %v2017, 104
  %v2211 = vpop.permute.xlu0 %2210
  %2212 = vrot.lane.b32.xlu0 %v2018, 104
  %v2213 = vpop.permute.xlu0 %2212
  %2214 = vrot.lane.b32.xlu0 %v2019, 104
  %v2215 = vpop.permute.xlu0 %2214
  %2216 = vrot.lane.b32.xlu0 %v2020, 104
  %v2217 = vpop.permute.xlu0 %2216
  %2218 = vrot.lane.b32.xlu0 %v2021, 104
  %v2219 = vpop.permute.xlu0 %2218
  %2220 = vrot.lane.b32.xlu0 %v2022, 104
  %v2221 = vpop.permute.xlu0 %2220
  %2222 = vrot.lane.b32.xlu0 %v2023, 104
  %v2223 = vpop.permute.xlu0 %2222
  %2224 = vrot.lane.b32.xlu0 %v2024, 104
  %v2225 = vpop.permute.xlu0 %2224
  %2226 = vrot.lane.b32.xlu0 %v2025, 104
  %v2227 = vpop.permute.xlu0 %2226
  %2228 = vrot.lane.b32.xlu0 %v2026, 104
  %v2229 = vpop.permute.xlu0 %2228
  %2230 = vrot.lane.b32.xlu0 %v2027, 104
  %v2231 = vpop.permute.xlu0 %2230
  %2232 = vrot.lane.b32.xlu0 %v2028, 104
  %v2233 = vpop.permute.xlu0 %2232
  %2234 = vrot.lane.b32.xlu0 %v2029, 104
  %v2235 = vpop.permute.xlu0 %2234
  %2236 = vrot.lane.b32.xlu0 %v2030, 104
  %v2237 = vpop.permute.xlu0 %2236
  %2238 = vrot.lane.b32.xlu0 %v2031, 104
  %v2239 = vpop.permute.xlu0 %2238
  %2240 = vrot.lane.b32.xlu0 %v2032, 104
  %v2241 = vpop.permute.xlu0 %2240
  %2242 = vrot.lane.b32.xlu0 %v2033, 104
  %v2243 = vpop.permute.xlu0 %2242
  %2244 = vrot.lane.b32.xlu0 %v2034, 104
  %v2245 = vpop.permute.xlu0 %2244
  %2246 = vrot.lane.b32.xlu0 %v2035, 104
  %v2247 = vpop.permute.xlu0 %2246
  %2248 = vrot.lane.b32.xlu0 %v2036, 104
  %v2249 = vpop.permute.xlu0 %2248
  %2250 = vrot.lane.b32.xlu0 %v2037, 104
  %v2251 = vpop.permute.xlu0 %2250
  %2252 = vrot.lane.b32.xlu0 %v2038, 104
  %v2253 = vpop.permute.xlu0 %2252
  %2254 = vrot.lane.b32.xlu0 %v2039, 104
  %v2255 = vpop.permute.xlu0 %2254
  %2256 = vrot.lane.b32.xlu0 %v2040, 104
  %v2257 = vpop.permute.xlu0 %2256
  %2258 = vrot.lane.b32.xlu0 %v2041, 104
  %v2259 = vpop.permute.xlu0 %2258
  %2260 = vrot.lane.b32.xlu0 %v2042, 104
  %v2261 = vpop.permute.xlu0 %2260
  %2262 = vrot.lane.b32.xlu0 %v2043, 104
  %v2263 = vpop.permute.xlu0 %2262
  %2264 = vrot.lane.b32.xlu0 %v2044, 104
  %v2265 = vpop.permute.xlu0 %2264
  %2266 = vrot.lane.b32.xlu0 %v2045, 104
  %v2267 = vpop.permute.xlu0 %2266
  %2268 = vrot.lane.b32.xlu0 %v2046, 104
  %v2269 = vpop.permute.xlu0 %2268
  %2270 = vrot.lane.b32.xlu0 %v2047, 104
  %v2271 = vpop.permute.xlu0 %2270
  %2304 = vrot.lane.b32.xlu0 %v1937, 120
  %v2305 = vpop.permute.xlu0 %2304
  %2306 = vrot.lane.b32.xlu0 %v1939, 120
  %v2307 = vpop.permute.xlu0 %2306
  %2308 = vrot.lane.b32.xlu0 %v1942, 120
  %v2309 = vpop.permute.xlu0 %2308
  %2310 = vrot.lane.b32.xlu0 %v1944, 120
  %v2311 = vpop.permute.xlu0 %2310
  %2312 = vrot.lane.b32.xlu0 %v1947, 120
  %v2313 = vpop.permute.xlu0 %2312
  %2314 = vrot.lane.b32.xlu0 %v1949, 120
  %v2315 = vpop.permute.xlu0 %2314
  %2316 = vrot.lane.b32.xlu0 %v1952, 120
  %v2317 = vpop.permute.xlu0 %2316
  %2318 = vrot.lane.b32.xlu0 %v1954, 120
  %v2319 = vpop.permute.xlu0 %2318
  %2320 = vrot.lane.b32.xlu0 %v1957, 120
  %v2321 = vpop.permute.xlu0 %2320
  %2322 = vrot.lane.b32.xlu0 %v1959, 120
  %v2323 = vpop.permute.xlu0 %2322
  %2324 = vrot.lane.b32.xlu0 %v1962, 120
  %v2325 = vpop.permute.xlu0 %2324
  %2326 = vrot.lane.b32.xlu0 %v1964, 120
  %v2327 = vpop.permute.xlu0 %2326
  %2328 = vrot.lane.b32.xlu0 %v1967, 120
  %v2329 = vpop.permute.xlu0 %2328
  %2330 = vrot.lane.b32.xlu0 %v1969, 120
  %v2331 = vpop.permute.xlu0 %2330
  %2332 = vrot.lane.b32.xlu0 %v1972, 120
  %v2333 = vpop.permute.xlu0 %2332
  %2334 = vrot.lane.b32.xlu0 %v1974, 120
  %v2335 = vpop.permute.xlu0 %2334
  %2336 = vrot.lane.b32.xlu0 %v1977, 120
  %v2337 = vpop.permute.xlu0 %2336
  %2338 = vrot.lane.b32.xlu0 %v1979, 120
  %v2339 = vpop.permute.xlu0 %2338
  %2340 = vrot.lane.b32.xlu0 %v1982, 120
  %v2341 = vpop.permute.xlu0 %2340
  %2342 = vrot.lane.b32.xlu0 %v1984, 120
  %v2343 = vpop.permute.xlu0 %2342
  %2344 = vrot.lane.b32.xlu0 %v1987, 120
  %v2345 = vpop.permute.xlu0 %2344
  %2346 = vrot.lane.b32.xlu0 %v1989, 120
  %v2347 = vpop.permute.xlu0 %2346
  %2348 = vrot.lane.b32.xlu0 %v1992, 120
  %v2349 = vpop.permute.xlu0 %2348
  %2350 = vrot.lane.b32.xlu0 %v1994, 120
  %v2351 = vpop.permute.xlu0 %2350
  %2352 = vrot.lane.b32.xlu0 %v1997, 120
  %v2353 = vpop.permute.xlu0 %2352
  %2354 = vrot.lane.b32.xlu0 %v1999, 120
  %v2355 = vpop.permute.xlu0 %2354
  %2356 = vrot.lane.b32.xlu0 %v2002, 120
  %v2357 = vpop.permute.xlu0 %2356
  %2358 = vrot.lane.b32.xlu0 %v2004, 120
  %v2359 = vpop.permute.xlu0 %2358
  %2360 = vrot.lane.b32.xlu0 %v2007, 120
  %v2361 = vpop.permute.xlu0 %2360
  %2362 = vrot.lane.b32.xlu0 %v2009, 120
  %v2363 = vpop.permute.xlu0 %2362
  %2364 = vrot.lane.b32.xlu0 %v2012, 120
  %v2365 = vpop.permute.xlu0 %2364
  %2366 = vrot.lane.b32.xlu0 %v2014, 120
  %v2367 = vpop.permute.xlu0 %2366
  %2368 = vrot.lane.b32.xlu0 %v1937, 112
  %v2369 = vpop.permute.xlu0 %2368
  %2370 = vrot.lane.b32.xlu0 %v1939, 112
  %v2371 = vpop.permute.xlu0 %2370
  %2372 = vrot.lane.b32.xlu0 %v1942, 112
  %v2373 = vpop.permute.xlu0 %2372
  %2374 = vrot.lane.b32.xlu0 %v1944, 112
  %v2375 = vpop.permute.xlu0 %2374
  %2376 = vrot.lane.b32.xlu0 %v1947, 112
  %v2377 = vpop.permute.xlu0 %2376
  %2378 = vrot.lane.b32.xlu0 %v1949, 112
  %v2379 = vpop.permute.xlu0 %2378
  %2380 = vrot.lane.b32.xlu0 %v1952, 112
  %v2381 = vpop.permute.xlu0 %2380
  %2382 = vrot.lane.b32.xlu0 %v1954, 112
  %v2383 = vpop.permute.xlu0 %2382
  %2384 = vrot.lane.b32.xlu0 %v1957, 112
  %v2385 = vpop.permute.xlu0 %2384
  %2386 = vrot.lane.b32.xlu0 %v1959, 112
  %v2387 = vpop.permute.xlu0 %2386
  %2388 = vrot.lane.b32.xlu0 %v1962, 112
  %v2389 = vpop.permute.xlu0 %2388
  %2390 = vrot.lane.b32.xlu0 %v1964, 112
  %v2391 = vpop.permute.xlu0 %2390
  %2392 = vrot.lane.b32.xlu0 %v1967, 112
  %v2393 = vpop.permute.xlu0 %2392
  %2394 = vrot.lane.b32.xlu0 %v1969, 112
  %v2395 = vpop.permute.xlu0 %2394
  %2396 = vrot.lane.b32.xlu0 %v1972, 112
  %v2397 = vpop.permute.xlu0 %2396
  %2398 = vrot.lane.b32.xlu0 %v1974, 112
  %v2399 = vpop.permute.xlu0 %2398
  %2400 = vrot.lane.b32.xlu0 %v1977, 112
  %v2401 = vpop.permute.xlu0 %2400
  %2402 = vrot.lane.b32.xlu0 %v1979, 112
  %v2403 = vpop.permute.xlu0 %2402
  %2404 = vrot.lane.b32.xlu0 %v1982, 112
  %v2405 = vpop.permute.xlu0 %2404
  %2406 = vrot.lane.b32.xlu0 %v1984, 112
  %v2407 = vpop.permute.xlu0 %2406
  %2408 = vrot.lane.b32.xlu0 %v1987, 112
  %v2409 = vpop.permute.xlu0 %2408
  %2410 = vrot.lane.b32.xlu0 %v1989, 112
  %v2411 = vpop.permute.xlu0 %2410
  %2412 = vrot.lane.b32.xlu0 %v1992, 112
  %v2413 = vpop.permute.xlu0 %2412
  %2414 = vrot.lane.b32.xlu0 %v1994, 112
  %v2415 = vpop.permute.xlu0 %2414
  %2416 = vrot.lane.b32.xlu0 %v1997, 112
  %v2417 = vpop.permute.xlu0 %2416
  %2418 = vrot.lane.b32.xlu0 %v1999, 112
  %v2419 = vpop.permute.xlu0 %2418
  %2420 = vrot.lane.b32.xlu0 %v2002, 112
  %v2421 = vpop.permute.xlu0 %2420
  %2422 = vrot.lane.b32.xlu0 %v2004, 112
  %v2423 = vpop.permute.xlu0 %2422
  %2424 = vrot.lane.b32.xlu0 %v2007, 112
  %v2425 = vpop.permute.xlu0 %2424
  %2426 = vrot.lane.b32.xlu0 %v2009, 112
  %v2427 = vpop.permute.xlu0 %2426
  %2428 = vrot.lane.b32.xlu0 %v2012, 112
  %v2429 = vpop.permute.xlu0 %2428
  %2430 = vrot.lane.b32.xlu0 %v2014, 112
  %v2431 = vpop.permute.xlu0 %2430
  %2432 = vrot.lane.b32.xlu0 %v1937, 104
  %v2433 = vpop.permute.xlu0 %2432
  %2434 = vrot.lane.b32.xlu0 %v1939, 104
  %v2435 = vpop.permute.xlu0 %2434
  %2436 = vrot.lane.b32.xlu0 %v1942, 104
  %v2437 = vpop.permute.xlu0 %2436
  %2438 = vrot.lane.b32.xlu0 %v1944, 104
  %v2439 = vpop.permute.xlu0 %2438
  %2440 = vrot.lane.b32.xlu0 %v1947, 104
  %v2441 = vpop.permute.xlu0 %2440
  %2442 = vrot.lane.b32.xlu0 %v1949, 104
  %v2443 = vpop.permute.xlu0 %2442
  %2444 = vrot.lane.b32.xlu0 %v1952, 104
  %v2445 = vpop.permute.xlu0 %2444
  %2446 = vrot.lane.b32.xlu0 %v1954, 104
  %v2447 = vpop.permute.xlu0 %2446
  %2448 = vrot.lane.b32.xlu0 %v1957, 104
  %v2449 = vpop.permute.xlu0 %2448
  %2450 = vrot.lane.b32.xlu0 %v1959, 104
  %v2451 = vpop.permute.xlu0 %2450
  %2452 = vrot.lane.b32.xlu0 %v1962, 104
  %v2453 = vpop.permute.xlu0 %2452
  %2454 = vrot.lane.b32.xlu0 %v1964, 104
  %v2455 = vpop.permute.xlu0 %2454
  %2456 = vrot.lane.b32.xlu0 %v1967, 104
  %v2457 = vpop.permute.xlu0 %2456
  %2458 = vrot.lane.b32.xlu0 %v1969, 104
  %v2459 = vpop.permute.xlu0 %2458
  %2460 = vrot.lane.b32.xlu0 %v1972, 104
  %v2461 = vpop.permute.xlu0 %2460
  %2462 = vrot.lane.b32.xlu0 %v1974, 104
  %v2463 = vpop.permute.xlu0 %2462
  %2464 = vrot.lane.b32.xlu0 %v1977, 104
  %v2465 = vpop.permute.xlu0 %2464
  %2466 = vrot.lane.b32.xlu0 %v1979, 104
  %v2467 = vpop.permute.xlu0 %2466
  %2468 = vrot.lane.b32.xlu0 %v1982, 104
  %v2469 = vpop.permute.xlu0 %2468
  %2470 = vrot.lane.b32.xlu0 %v1984, 104
  %v2471 = vpop.permute.xlu0 %2470
  %2472 = vrot.lane.b32.xlu0 %v1987, 104
  %v2473 = vpop.permute.xlu0 %2472
  %2474 = vrot.lane.b32.xlu0 %v1989, 104
  %v2475 = vpop.permute.xlu0 %2474
  %2476 = vrot.lane.b32.xlu0 %v1992, 104
  %v2477 = vpop.permute.xlu0 %2476
  %2478 = vrot.lane.b32.xlu0 %v1994, 104
  %v2479 = vpop.permute.xlu0 %2478
  %2480 = vrot.lane.b32.xlu0 %v1997, 104
  %v2481 = vpop.permute.xlu0 %2480
  %2482 = vrot.lane.b32.xlu0 %v1999, 104
  %v2483 = vpop.permute.xlu0 %2482
  %2484 = vrot.lane.b32.xlu0 %v2002, 104
  %v2485 = vpop.permute.xlu0 %2484
  %2486 = vrot.lane.b32.xlu0 %v2004, 104
  %v2487 = vpop.permute.xlu0 %2486
  %2488 = vrot.lane.b32.xlu0 %v2007, 104
  %v2489 = vpop.permute.xlu0 %2488
  %2490 = vrot.lane.b32.xlu0 %v2009, 104
  %v2491 = vpop.permute.xlu0 %2490
  %2492 = vrot.lane.b32.xlu0 %v2012, 104
  %v2493 = vpop.permute.xlu0 %2492
  %2494 = vrot.lane.b32.xlu0 %v2014, 104
  %v2495 = vpop.permute.xlu0 %2494
  %vm2496 = vcmask 64512
  %v2497 = vsel %vm2496, %v2016, 0
  %v2499 = vsel %vm2496, %v2017, 0
  %v2501 = vsel %vm2496, %v2018, 0
  %v2503 = vsel %vm2496, %v2019, 0
  %v2505 = vsel %vm2496, %v2020, 0
  %v2507 = vsel %vm2496, %v2021, 0
  %v2509 = vsel %vm2496, %v2022, 0
  %v2511 = vsel %vm2496, %v2023, 0
  %v2513 = vsel %vm2496, %v2024, 0
  %v2515 = vsel %vm2496, %v2025, 0
  %v2517 = vsel %vm2496, %v2026, 0
  %v2519 = vsel %vm2496, %v2027, 0
  %v2521 = vsel %vm2496, %v2028, 0
  %v2523 = vsel %vm2496, %v2029, 0
  %v2525 = vsel %vm2496, %v2030, 0
  %v2527 = vsel %vm2496, %v2031, 0
  %v2529 = vsel %vm2496, %v1937, 0
  %v2531 = vsel %vm2496, %v1939, 0
  %v2533 = vsel %vm2496, %v1942, 0
  %v2535 = vsel %vm2496, %v1944, 0
  %v2537 = vsel %vm2496, %v1947, 0
  %v2539 = vsel %vm2496, %v1949, 0
  %v2541 = vsel %vm2496, %v1952, 0
  %v2543 = vsel %vm2496, %v1954, 0
  %v2545 = vsel %vm2496, %v1957, 0
  %v2547 = vsel %vm2496, %v1959, 0
  %v2549 = vsel %vm2496, %v1962, 0
  %v2551 = vsel %vm2496, %v1964, 0
  %v2553 = vsel %vm2496, %v1967, 0
  %v2555 = vsel %vm2496, %v1969, 0
  %v2557 = vsel %vm2496, %v1972, 0
  %v2559 = vsel %vm2496, %v1974, 0
  %2561 = vmatpush.xpose.msra.mxu0 %v2559
  %2562 = vmatpush.xpose.msra.mxu0 %v2557
  %2563 = vmatpush.xpose.msra.mxu0 %v2555
  %2564 = vmatpush.xpose.msra.mxu0 %v2553
  %2565 = vmatpush.xpose.msra.mxu0 %v2551
  %2566 = vmatpush.xpose.msra.mxu0 %v2549
  %2567 = vmatpush.xpose.msra.mxu0 %v2547
  %2568 = vmatpush.xpose.msra.mxu0 %v2545
  %2569 = vmatpush.xpose.msra.mxu0 %v2543
  %2570 = vmatpush.xpose.msra.mxu0 %v2541
  %2571 = vmatpush.xpose.msra.mxu0 %v2539
  %2572 = vmatpush.xpose.msra.mxu0 %v2537
  %2573 = vmatpush.xpose.msra.mxu0 %v2535
  %2574 = vmatpush.xpose.msra.mxu0 %v2533
  %2575 = vmatpush.xpose.msra.mxu0 %v2531
  %2576 = vmatpush.xpose.msra.mxu0 %v2529
  %2577 = vmatmul.f32.gmra.mxu0 %v2497
  %v2578 = vpop.f32.mrf.mxu0
  %v2579 = vadd.f32 0.0, %v2578
  %2580 = vmatmul.f32.gmra.mxu0 %v2499
  %v2581 = vpop.f32.mrf.mxu0
  %v2582 = vadd.f32 0.0, %v2581
  %2583 = vmatmul.f32.gmra.mxu0 %v2501
  %v2584 = vpop.f32.mrf.mxu0
  %v2585 = vadd.f32 0.0, %v2584
  %2586 = vmatmul.f32.gmra.mxu0 %v2503
  %v2587 = vpop.f32.mrf.mxu0
  %v2588 = vadd.f32 0.0, %v2587
  %2589 = vmatmul.f32.gmra.mxu0 %v2505
  %v2590 = vpop.f32.mrf.mxu0
  %v2591 = vadd.f32 0.0, %v2590
  %2592 = vmatmul.f32.gmra.mxu0 %v2507
  %v2593 = vpop.f32.mrf.mxu0
  %v2594 = vadd.f32 0.0, %v2593
  %2595 = vmatmul.f32.gmra.mxu0 %v2509
  %v2596 = vpop.f32.mrf.mxu0
  %v2597 = vadd.f32 0.0, %v2596
  %2598 = vmatmul.f32.gmra.mxu0 %v2511
  %v2599 = vpop.f32.mrf.mxu0
  %v2600 = vadd.f32 0.0, %v2599
  %2601 = vmatmul.f32.gmra.mxu0 %v2513
  %v2602 = vpop.f32.mrf.mxu0
  %v2603 = vadd.f32 0.0, %v2602
  %2604 = vmatmul.f32.gmra.mxu0 %v2515
  %v2605 = vpop.f32.mrf.mxu0
  %v2606 = vadd.f32 0.0, %v2605
  %2607 = vmatmul.f32.gmra.mxu0 %v2517
  %v2608 = vpop.f32.mrf.mxu0
  %v2609 = vadd.f32 0.0, %v2608
  %2610 = vmatmul.f32.gmra.mxu0 %v2519
  %v2611 = vpop.f32.mrf.mxu0
  %v2612 = vadd.f32 0.0, %v2611
  %2613 = vmatmul.f32.gmra.mxu0 %v2521
  %v2614 = vpop.f32.mrf.mxu0
  %v2615 = vadd.f32 0.0, %v2614
  %2616 = vmatmul.f32.gmra.mxu0 %v2523
  %v2617 = vpop.f32.mrf.mxu0
  %v2618 = vadd.f32 0.0, %v2617
  %2619 = vmatmul.f32.gmra.mxu0 %v2525
  %v2620 = vpop.f32.mrf.mxu0
  %v2621 = vadd.f32 0.0, %v2620
  %2622 = vmatmul.f32.gmra.mxu0 %v2527
  %v2623 = vpop.f32.mrf.mxu0
  %v2624 = vadd.f32 0.0, %v2623
  %2625 = vdwg.mxu0
  %v2626 = vsel %vm2496, %v2032, 0
  %v2628 = vsel %vm2496, %v2033, 0
  %v2630 = vsel %vm2496, %v2034, 0
  %v2632 = vsel %vm2496, %v2035, 0
  %v2634 = vsel %vm2496, %v2036, 0
  %v2636 = vsel %vm2496, %v2037, 0
  %v2638 = vsel %vm2496, %v2038, 0
  %v2640 = vsel %vm2496, %v2039, 0
  %v2642 = vsel %vm2496, %v2040, 0
  %v2644 = vsel %vm2496, %v2041, 0
  %v2646 = vsel %vm2496, %v2042, 0
  %v2648 = vsel %vm2496, %v2043, 0
  %v2650 = vsel %vm2496, %v2044, 0
  %v2652 = vsel %vm2496, %v2045, 0
  %v2654 = vsel %vm2496, %v2046, 0
  %v2656 = vsel %vm2496, %v2047, 0
  %v2658 = vsel %vm2496, %v1977, 0
  %v2660 = vsel %vm2496, %v1979, 0
  %v2662 = vsel %vm2496, %v1982, 0
  %v2664 = vsel %vm2496, %v1984, 0
  %v2666 = vsel %vm2496, %v1987, 0
  %v2668 = vsel %vm2496, %v1989, 0
  %v2670 = vsel %vm2496, %v1992, 0
  %v2672 = vsel %vm2496, %v1994, 0
  %v2674 = vsel %vm2496, %v1997, 0
  %v2676 = vsel %vm2496, %v1999, 0
  %v2678 = vsel %vm2496, %v2002, 0
  %v2680 = vsel %vm2496, %v2004, 0
  %v2682 = vsel %vm2496, %v2007, 0
  %v2684 = vsel %vm2496, %v2009, 0
  %v2686 = vsel %vm2496, %v2012, 0
  %v2688 = vsel %vm2496, %v2014, 0
  %2690 = vmatpush.xpose.msra.mxu0 %v2688
  %2691 = vmatpush.xpose.msra.mxu0 %v2686
  %2692 = vmatpush.xpose.msra.mxu0 %v2684
  %2693 = vmatpush.xpose.msra.mxu0 %v2682
  %2694 = vmatpush.xpose.msra.mxu0 %v2680
  %2695 = vmatpush.xpose.msra.mxu0 %v2678
  %2696 = vmatpush.xpose.msra.mxu0 %v2676
  %2697 = vmatpush.xpose.msra.mxu0 %v2674
  %2698 = vmatpush.xpose.msra.mxu0 %v2672
  %2699 = vmatpush.xpose.msra.mxu0 %v2670
  %2700 = vmatpush.xpose.msra.mxu0 %v2668
  %2701 = vmatpush.xpose.msra.mxu0 %v2666
  %2702 = vmatpush.xpose.msra.mxu0 %v2664
  %2703 = vmatpush.xpose.msra.mxu0 %v2662
  %2704 = vmatpush.xpose.msra.mxu0 %v2660
  %2705 = vmatpush.xpose.msra.mxu0 %v2658
  %2706 = vmatmul.f32.gmra.mxu0 %v2626
  %v2707 = vpop.f32.mrf.mxu0
  %v2708 = vadd.f32 0.0, %v2707
  %2709 = vmatmul.f32.gmra.mxu0 %v2628
  %v2710 = vpop.f32.mrf.mxu0
  %v2711 = vadd.f32 0.0, %v2710
  %2712 = vmatmul.f32.gmra.mxu0 %v2630
  %v2713 = vpop.f32.mrf.mxu0
  %v2714 = vadd.f32 0.0, %v2713
  %2715 = vmatmul.f32.gmra.mxu0 %v2632
  %v2716 = vpop.f32.mrf.mxu0
  %v2717 = vadd.f32 0.0, %v2716
  %2718 = vmatmul.f32.gmra.mxu0 %v2634
  %v2719 = vpop.f32.mrf.mxu0
  %v2720 = vadd.f32 0.0, %v2719
  %2721 = vmatmul.f32.gmra.mxu0 %v2636
  %v2722 = vpop.f32.mrf.mxu0
  %v2723 = vadd.f32 0.0, %v2722
  %2724 = vmatmul.f32.gmra.mxu0 %v2638
  %v2725 = vpop.f32.mrf.mxu0
  %v2726 = vadd.f32 0.0, %v2725
  %2727 = vmatmul.f32.gmra.mxu0 %v2640
  %v2728 = vpop.f32.mrf.mxu0
  %v2729 = vadd.f32 0.0, %v2728
  %2730 = vmatmul.f32.gmra.mxu0 %v2642
  %v2731 = vpop.f32.mrf.mxu0
  %v2732 = vadd.f32 0.0, %v2731
  %2733 = vmatmul.f32.gmra.mxu0 %v2644
  %v2734 = vpop.f32.mrf.mxu0
  %v2735 = vadd.f32 0.0, %v2734
  %2736 = vmatmul.f32.gmra.mxu0 %v2646
  %v2737 = vpop.f32.mrf.mxu0
  %v2738 = vadd.f32 0.0, %v2737
  %2739 = vmatmul.f32.gmra.mxu0 %v2648
  %v2740 = vpop.f32.mrf.mxu0
  %v2741 = vadd.f32 0.0, %v2740
  %2742 = vmatmul.f32.gmra.mxu0 %v2650
  %v2743 = vpop.f32.mrf.mxu0
  %v2744 = vadd.f32 0.0, %v2743
  %2745 = vmatmul.f32.gmra.mxu0 %v2652
  %v2746 = vpop.f32.mrf.mxu0
  %v2747 = vadd.f32 0.0, %v2746
  %2748 = vmatmul.f32.gmra.mxu0 %v2654
  %v2749 = vpop.f32.mrf.mxu0
  %v2750 = vadd.f32 0.0, %v2749
  %2751 = vmatmul.f32.gmra.mxu0 %v2656
  %v2752 = vpop.f32.mrf.mxu0
  %v2753 = vadd.f32 0.0, %v2752
  %2754 = vdwg.mxu0
  %v2755 = vsel %vm2496, %v2081, 0
  %v2757 = vsel %vm2496, %v2083, 0
  %v2759 = vsel %vm2496, %v2085, 0
  %v2761 = vsel %vm2496, %v2087, 0
  %v2763 = vsel %vm2496, %v2089, 0
  %v2765 = vsel %vm2496, %v2091, 0
  %v2767 = vsel %vm2496, %v2093, 0
  %v2769 = vsel %vm2496, %v2095, 0
  %v2771 = vsel %vm2496, %v2097, 0
  %v2773 = vsel %vm2496, %v2099, 0
  %v2775 = vsel %vm2496, %v2101, 0
  %v2777 = vsel %vm2496, %v2103, 0
  %v2779 = vsel %vm2496, %v2105, 0
  %v2781 = vsel %vm2496, %v2107, 0
  %v2783 = vsel %vm2496, %v2109, 0
  %v2785 = vsel %vm2496, %v2111, 0
  %v2787 = vsel %vm2496, %v2305, 0
  %v2789 = vsel %vm2496, %v2307, 0
  %v2791 = vsel %vm2496, %v2309, 0
  %v2793 = vsel %vm2496, %v2311, 0
  %v2795 = vsel %vm2496, %v2313, 0
  %v2797 = vsel %vm2496, %v2315, 0
  %v2799 = vsel %vm2496, %v2317, 0
  %v2801 = vsel %vm2496, %v2319, 0
  %v2803 = vsel %vm2496, %v2321, 0
  %v2805 = vsel %vm2496, %v2323, 0
  %v2807 = vsel %vm2496, %v2325, 0
  %v2809 = vsel %vm2496, %v2327, 0
  %v2811 = vsel %vm2496, %v2329, 0
  %v2813 = vsel %vm2496, %v2331, 0
  %v2815 = vsel %vm2496, %v2333, 0
  %v2817 = vsel %vm2496, %v2335, 0
  %2819 = vmatpush.xpose.msra.mxu0 %v2817
  %2820 = vmatpush.xpose.msra.mxu0 %v2815
  %2821 = vmatpush.xpose.msra.mxu0 %v2813
  %2822 = vmatpush.xpose.msra.mxu0 %v2811
  %2823 = vmatpush.xpose.msra.mxu0 %v2809
  %2824 = vmatpush.xpose.msra.mxu0 %v2807
  %2825 = vmatpush.xpose.msra.mxu0 %v2805
  %2826 = vmatpush.xpose.msra.mxu0 %v2803
  %2827 = vmatpush.xpose.msra.mxu0 %v2801
  %2828 = vmatpush.xpose.msra.mxu0 %v2799
  %2829 = vmatpush.xpose.msra.mxu0 %v2797
  %2830 = vmatpush.xpose.msra.mxu0 %v2795
  %2831 = vmatpush.xpose.msra.mxu0 %v2793
  %2832 = vmatpush.xpose.msra.mxu0 %v2791
  %2833 = vmatpush.xpose.msra.mxu0 %v2789
  %2834 = vmatpush.xpose.msra.mxu0 %v2787
  %2835 = vmatmul.f32.gmra.mxu0 %v2755
  %v2836 = vpop.f32.mrf.mxu0
  %v2837 = vadd.f32 0.0, %v2836
  %2838 = vmatmul.f32.gmra.mxu0 %v2757
  %v2839 = vpop.f32.mrf.mxu0
  %v2840 = vadd.f32 0.0, %v2839
  %2841 = vmatmul.f32.gmra.mxu0 %v2759
  %v2842 = vpop.f32.mrf.mxu0
  %v2843 = vadd.f32 0.0, %v2842
  %2844 = vmatmul.f32.gmra.mxu0 %v2761
  %v2845 = vpop.f32.mrf.mxu0
  %v2846 = vadd.f32 0.0, %v2845
  %2847 = vmatmul.f32.gmra.mxu0 %v2763
  %v2848 = vpop.f32.mrf.mxu0
  %v2849 = vadd.f32 0.0, %v2848
  %2850 = vmatmul.f32.gmra.mxu0 %v2765
  %v2851 = vpop.f32.mrf.mxu0
  %v2852 = vadd.f32 0.0, %v2851
  %2853 = vmatmul.f32.gmra.mxu0 %v2767
  %v2854 = vpop.f32.mrf.mxu0
  %v2855 = vadd.f32 0.0, %v2854
  %2856 = vmatmul.f32.gmra.mxu0 %v2769
  %v2857 = vpop.f32.mrf.mxu0
  %v2858 = vadd.f32 0.0, %v2857
  %2859 = vmatmul.f32.gmra.mxu0 %v2771
  %v2860 = vpop.f32.mrf.mxu0
  %v2861 = vadd.f32 0.0, %v2860
  %2862 = vmatmul.f32.gmra.mxu0 %v2773
  %v2863 = vpop.f32.mrf.mxu0
  %v2864 = vadd.f32 0.0, %v2863
  %2865 = vmatmul.f32.gmra.mxu0 %v2775
  %v2866 = vpop.f32.mrf.mxu0
  %v2867 = vadd.f32 0.0, %v2866
  %2868 = vmatmul.f32.gmra.mxu0 %v2777
  %v2869 = vpop.f32.mrf.mxu0
  %v2870 = vadd.f32 0.0, %v2869
  %2871 = vmatmul.f32.gmra.mxu0 %v2779
  %v2872 = vpop.f32.mrf.mxu0
  %v2873 = vadd.f32 0.0, %v2872
  %2874 = vmatmul.f32.gmra.mxu0 %v2781
  %v2875 = vpop.f32.mrf.mxu0
  %v2876 = vadd.f32 0.0, %v2875
  %2877 = vmatmul.f32.gmra.mxu0 %v2783
  %v2878 = vpop.f32.mrf.mxu0
  %v2879 = vadd.f32 0.0, %v2878
  %2880 = vmatmul.f32.gmra.mxu0 %v2785
  %v2881 = vpop.f32.mrf.mxu0
  %v2882 = vadd.f32 0.0, %v2881
  %2883 = vdwg.mxu0
  %v2884 = vsel %vm2496, %v2113, 0
  %v2886 = vsel %vm2496, %v2115, 0
  %v2888 = vsel %vm2496, %v2117, 0
  %v2890 = vsel %vm2496, %v2119, 0
  %v2892 = vsel %vm2496, %v2121, 0
  %v2894 = vsel %vm2496, %v2123, 0
  %v2896 = vsel %vm2496, %v2125, 0
  %v2898 = vsel %vm2496, %v2127, 0
  %v2900 = vsel %vm2496, %v2129, 0
  %v2902 = vsel %vm2496, %v2131, 0
  %v2904 = vsel %vm2496, %v2133, 0
  %v2906 = vsel %vm2496, %v2135, 0
  %v2908 = vsel %vm2496, %v2137, 0
  %v2910 = vsel %vm2496, %v2139, 0
  %v2912 = vsel %vm2496, %v2141, 0
  %v2914 = vsel %vm2496, %v2143, 0
  %v2916 = vsel %vm2496, %v2337, 0
  %v2918 = vsel %vm2496, %v2339, 0
  %v2920 = vsel %vm2496, %v2341, 0
  %v2922 = vsel %vm2496, %v2343, 0
  %v2924 = vsel %vm2496, %v2345, 0
  %v2926 = vsel %vm2496, %v2347, 0
  %v2928 = vsel %vm2496, %v2349, 0
  %v2930 = vsel %vm2496, %v2351, 0
  %v2932 = vsel %vm2496, %v2353, 0
  %v2934 = vsel %vm2496, %v2355, 0
  %v2936 = vsel %vm2496, %v2357, 0
  %v2938 = vsel %vm2496, %v2359, 0
  %v2940 = vsel %vm2496, %v2361, 0
  %v2942 = vsel %vm2496, %v2363, 0
  %v2944 = vsel %vm2496, %v2365, 0
  %v2946 = vsel %vm2496, %v2367, 0
  %2948 = vmatpush.xpose.msra.mxu0 %v2946
  %2949 = vmatpush.xpose.msra.mxu0 %v2944
  %2950 = vmatpush.xpose.msra.mxu0 %v2942
  %2951 = vmatpush.xpose.msra.mxu0 %v2940
  %2952 = vmatpush.xpose.msra.mxu0 %v2938
  %2953 = vmatpush.xpose.msra.mxu0 %v2936
  %2954 = vmatpush.xpose.msra.mxu0 %v2934
  %2955 = vmatpush.xpose.msra.mxu0 %v2932
  %2956 = vmatpush.xpose.msra.mxu0 %v2930
  %2957 = vmatpush.xpose.msra.mxu0 %v2928
  %2958 = vmatpush.xpose.msra.mxu0 %v2926
  %2959 = vmatpush.xpose.msra.mxu0 %v2924
  %2960 = vmatpush.xpose.msra.mxu0 %v2922
  %2961 = vmatpush.xpose.msra.mxu0 %v2920
  %2962 = vmatpush.xpose.msra.mxu0 %v2918
  %2963 = vmatpush.xpose.msra.mxu0 %v2916
  %2964 = vmatmul.f32.gmra.mxu0 %v2884
  %v2965 = vpop.f32.mrf.mxu0
  %v2966 = vadd.f32 0.0, %v2965
  %2967 = vmatmul.f32.gmra.mxu0 %v2886
  %v2968 = vpop.f32.mrf.mxu0
  %v2969 = vadd.f32 0.0, %v2968
  %2970 = vmatmul.f32.gmra.mxu0 %v2888
  %v2971 = vpop.f32.mrf.mxu0
  %v2972 = vadd.f32 0.0, %v2971
  %2973 = vmatmul.f32.gmra.mxu0 %v2890
  %v2974 = vpop.f32.mrf.mxu0
  %v2975 = vadd.f32 0.0, %v2974
  %2976 = vmatmul.f32.gmra.mxu0 %v2892
  %v2977 = vpop.f32.mrf.mxu0
  %v2978 = vadd.f32 0.0, %v2977
  %2979 = vmatmul.f32.gmra.mxu0 %v2894
  %v2980 = vpop.f32.mrf.mxu0
  %v2981 = vadd.f32 0.0, %v2980
  %2982 = vmatmul.f32.gmra.mxu0 %v2896
  %v2983 = vpop.f32.mrf.mxu0
  %v2984 = vadd.f32 0.0, %v2983
  %2985 = vmatmul.f32.gmra.mxu0 %v2898
  %v2986 = vpop.f32.mrf.mxu0
  %v2987 = vadd.f32 0.0, %v2986
  %2988 = vmatmul.f32.gmra.mxu0 %v2900
  %v2989 = vpop.f32.mrf.mxu0
  %v2990 = vadd.f32 0.0, %v2989
  %2991 = vmatmul.f32.gmra.mxu0 %v2902
  %v2992 = vpop.f32.mrf.mxu0
  %v2993 = vadd.f32 0.0, %v2992
  %2994 = vmatmul.f32.gmra.mxu0 %v2904
  %v2995 = vpop.f32.mrf.mxu0
  %v2996 = vadd.f32 0.0, %v2995
  %2997 = vmatmul.f32.gmra.mxu0 %v2906
  %v2998 = vpop.f32.mrf.mxu0
  %v2999 = vadd.f32 0.0, %v2998
  %3000 = vmatmul.f32.gmra.mxu0 %v2908
  %v3001 = vpop.f32.mrf.mxu0
  %v3002 = vadd.f32 0.0, %v3001
  %3003 = vmatmul.f32.gmra.mxu0 %v2910
  %v3004 = vpop.f32.mrf.mxu0
  %v3005 = vadd.f32 0.0, %v3004
  %3006 = vmatmul.f32.gmra.mxu0 %v2912
  %v3007 = vpop.f32.mrf.mxu0
  %v3008 = vadd.f32 0.0, %v3007
  %3009 = vmatmul.f32.gmra.mxu0 %v2914
  %v3010 = vpop.f32.mrf.mxu0
  %v3011 = vadd.f32 0.0, %v3010
  %3012 = vdwg.mxu0
  %v3013 = vsel %vm2496, %v2145, 0
  %v3015 = vsel %vm2496, %v2147, 0
  %v3017 = vsel %vm2496, %v2149, 0
  %v3019 = vsel %vm2496, %v2151, 0
  %v3021 = vsel %vm2496, %v2153, 0
  %v3023 = vsel %vm2496, %v2155, 0
  %v3025 = vsel %vm2496, %v2157, 0
  %v3027 = vsel %vm2496, %v2159, 0
  %v3029 = vsel %vm2496, %v2161, 0
  %v3031 = vsel %vm2496, %v2163, 0
  %v3033 = vsel %vm2496, %v2165, 0
  %v3035 = vsel %vm2496, %v2167, 0
  %v3037 = vsel %vm2496, %v2169, 0
  %v3039 = vsel %vm2496, %v2171, 0
  %v3041 = vsel %vm2496, %v2173, 0
  %v3043 = vsel %vm2496, %v2175, 0
  %v3045 = vsel %vm2496, %v2369, 0
  %v3047 = vsel %vm2496, %v2371, 0
  %v3049 = vsel %vm2496, %v2373, 0
  %v3051 = vsel %vm2496, %v2375, 0
  %v3053 = vsel %vm2496, %v2377, 0
  %v3055 = vsel %vm2496, %v2379, 0
  %v3057 = vsel %vm2496, %v2381, 0
  %v3059 = vsel %vm2496, %v2383, 0
  %v3061 = vsel %vm2496, %v2385, 0
  %v3063 = vsel %vm2496, %v2387, 0
  %v3065 = vsel %vm2496, %v2389, 0
  %v3067 = vsel %vm2496, %v2391, 0
  %v3069 = vsel %vm2496, %v2393, 0
  %v3071 = vsel %vm2496, %v2395, 0
  %v3073 = vsel %vm2496, %v2397, 0
  %v3075 = vsel %vm2496, %v2399, 0
  %3077 = vmatpush.xpose.msra.mxu0 %v3075
  %3078 = vmatpush.xpose.msra.mxu0 %v3073
  %3079 = vmatpush.xpose.msra.mxu0 %v3071
  %3080 = vmatpush.xpose.msra.mxu0 %v3069
  %3081 = vmatpush.xpose.msra.mxu0 %v3067
  %3082 = vmatpush.xpose.msra.mxu0 %v3065
  %3083 = vmatpush.xpose.msra.mxu0 %v3063
  %3084 = vmatpush.xpose.msra.mxu0 %v3061
  %3085 = vmatpush.xpose.msra.mxu0 %v3059
  %3086 = vmatpush.xpose.msra.mxu0 %v3057
  %3087 = vmatpush.xpose.msra.mxu0 %v3055
  %3088 = vmatpush.xpose.msra.mxu0 %v3053
  %3089 = vmatpush.xpose.msra.mxu0 %v3051
  %3090 = vmatpush.xpose.msra.mxu0 %v3049
  %3091 = vmatpush.xpose.msra.mxu0 %v3047
  %3092 = vmatpush.xpose.msra.mxu0 %v3045
  %3093 = vmatmul.f32.gmra.mxu0 %v3013
  %v3094 = vpop.f32.mrf.mxu0
  %v3095 = vadd.f32 0.0, %v3094
  %3096 = vmatmul.f32.gmra.mxu0 %v3015
  %v3097 = vpop.f32.mrf.mxu0
  %v3098 = vadd.f32 0.0, %v3097
  %3099 = vmatmul.f32.gmra.mxu0 %v3017
  %v3100 = vpop.f32.mrf.mxu0
  %v3101 = vadd.f32 0.0, %v3100
  %3102 = vmatmul.f32.gmra.mxu0 %v3019
  %v3103 = vpop.f32.mrf.mxu0
  %v3104 = vadd.f32 0.0, %v3103
  %3105 = vmatmul.f32.gmra.mxu0 %v3021
  %v3106 = vpop.f32.mrf.mxu0
  %v3107 = vadd.f32 0.0, %v3106
  %3108 = vmatmul.f32.gmra.mxu0 %v3023
  %v3109 = vpop.f32.mrf.mxu0
  %v3110 = vadd.f32 0.0, %v3109
  %3111 = vmatmul.f32.gmra.mxu0 %v3025
  %v3112 = vpop.f32.mrf.mxu0
  %v3113 = vadd.f32 0.0, %v3112
  %3114 = vmatmul.f32.gmra.mxu0 %v3027
  %v3115 = vpop.f32.mrf.mxu0
  %v3116 = vadd.f32 0.0, %v3115
  %3117 = vmatmul.f32.gmra.mxu0 %v3029
  %v3118 = vpop.f32.mrf.mxu0
  %v3119 = vadd.f32 0.0, %v3118
  %3120 = vmatmul.f32.gmra.mxu0 %v3031
  %v3121 = vpop.f32.mrf.mxu0
  %v3122 = vadd.f32 0.0, %v3121
  %3123 = vmatmul.f32.gmra.mxu0 %v3033
  %v3124 = vpop.f32.mrf.mxu0
  %v3125 = vadd.f32 0.0, %v3124
  %3126 = vmatmul.f32.gmra.mxu0 %v3035
  %v3127 = vpop.f32.mrf.mxu0
  %v3128 = vadd.f32 0.0, %v3127
  %3129 = vmatmul.f32.gmra.mxu0 %v3037
  %v3130 = vpop.f32.mrf.mxu0
  %v3131 = vadd.f32 0.0, %v3130
  %3132 = vmatmul.f32.gmra.mxu0 %v3039
  %v3133 = vpop.f32.mrf.mxu0
  %v3134 = vadd.f32 0.0, %v3133
  %3135 = vmatmul.f32.gmra.mxu0 %v3041
  %v3136 = vpop.f32.mrf.mxu0
  %v3137 = vadd.f32 0.0, %v3136
  %3138 = vmatmul.f32.gmra.mxu0 %v3043
  %v3139 = vpop.f32.mrf.mxu0
  %v3140 = vadd.f32 0.0, %v3139
  %3141 = vdwg.mxu0
  %v3142 = vsel %vm2496, %v2177, 0
  %v3144 = vsel %vm2496, %v2179, 0
  %v3146 = vsel %vm2496, %v2181, 0
  %v3148 = vsel %vm2496, %v2183, 0
  %v3150 = vsel %vm2496, %v2185, 0
  %v3152 = vsel %vm2496, %v2187, 0
  %v3154 = vsel %vm2496, %v2189, 0
  %v3156 = vsel %vm2496, %v2191, 0
  %v3158 = vsel %vm2496, %v2193, 0
  %v3160 = vsel %vm2496, %v2195, 0
  %v3162 = vsel %vm2496, %v2197, 0
  %v3164 = vsel %vm2496, %v2199, 0
  %v3166 = vsel %vm2496, %v2201, 0
  %v3168 = vsel %vm2496, %v2203, 0
  %v3170 = vsel %vm2496, %v2205, 0
  %v3172 = vsel %vm2496, %v2207, 0
  %v3174 = vsel %vm2496, %v2401, 0
  %v3176 = vsel %vm2496, %v2403, 0
  %v3178 = vsel %vm2496, %v2405, 0
  %v3180 = vsel %vm2496, %v2407, 0
  %v3182 = vsel %vm2496, %v2409, 0
  %v3184 = vsel %vm2496, %v2411, 0
  %v3186 = vsel %vm2496, %v2413, 0
  %v3188 = vsel %vm2496, %v2415, 0
  %v3190 = vsel %vm2496, %v2417, 0
  %v3192 = vsel %vm2496, %v2419, 0
  %v3194 = vsel %vm2496, %v2421, 0
  %v3196 = vsel %vm2496, %v2423, 0
  %v3198 = vsel %vm2496, %v2425, 0
  %v3200 = vsel %vm2496, %v2427, 0
  %v3202 = vsel %vm2496, %v2429, 0
  %v3204 = vsel %vm2496, %v2431, 0
  %3206 = vmatpush.xpose.msra.mxu0 %v3204
  %3207 = vmatpush.xpose.msra.mxu0 %v3202
  %3208 = vmatpush.xpose.msra.mxu0 %v3200
  %3209 = vmatpush.xpose.msra.mxu0 %v3198
  %3210 = vmatpush.xpose.msra.mxu0 %v3196
  %3211 = vmatpush.xpose.msra.mxu0 %v3194
  %3212 = vmatpush.xpose.msra.mxu0 %v3192
  %3213 = vmatpush.xpose.msra.mxu0 %v3190
  %3214 = vmatpush.xpose.msra.mxu0 %v3188
  %3215 = vmatpush.xpose.msra.mxu0 %v3186
  %3216 = vmatpush.xpose.msra.mxu0 %v3184
  %3217 = vmatpush.xpose.msra.mxu0 %v3182
  %3218 = vmatpush.xpose.msra.mxu0 %v3180
  %3219 = vmatpush.xpose.msra.mxu0 %v3178
  %3220 = vmatpush.xpose.msra.mxu0 %v3176
  %3221 = vmatpush.xpose.msra.mxu0 %v3174
  %3222 = vmatmul.f32.gmra.mxu0 %v3142
  %v3223 = vpop.f32.mrf.mxu0
  %v3224 = vadd.f32 0.0, %v3223
  %3225 = vmatmul.f32.gmra.mxu0 %v3144
  %v3226 = vpop.f32.mrf.mxu0
  %v3227 = vadd.f32 0.0, %v3226
  %3228 = vmatmul.f32.gmra.mxu0 %v3146
  %v3229 = vpop.f32.mrf.mxu0
  %v3230 = vadd.f32 0.0, %v3229
  %3231 = vmatmul.f32.gmra.mxu0 %v3148
  %v3232 = vpop.f32.mrf.mxu0
  %v3233 = vadd.f32 0.0, %v3232
  %3234 = vmatmul.f32.gmra.mxu0 %v3150
  %v3235 = vpop.f32.mrf.mxu0
  %v3236 = vadd.f32 0.0, %v3235
  %3237 = vmatmul.f32.gmra.mxu0 %v3152
  %v3238 = vpop.f32.mrf.mxu0
  %v3239 = vadd.f32 0.0, %v3238
  %3240 = vmatmul.f32.gmra.mxu0 %v3154
  %v3241 = vpop.f32.mrf.mxu0
  %v3242 = vadd.f32 0.0, %v3241
  %3243 = vmatmul.f32.gmra.mxu0 %v3156
  %v3244 = vpop.f32.mrf.mxu0
  %v3245 = vadd.f32 0.0, %v3244
  %3246 = vmatmul.f32.gmra.mxu0 %v3158
  %v3247 = vpop.f32.mrf.mxu0
  %v3248 = vadd.f32 0.0, %v3247
  %3249 = vmatmul.f32.gmra.mxu0 %v3160
  %v3250 = vpop.f32.mrf.mxu0
  %v3251 = vadd.f32 0.0, %v3250
  %3252 = vmatmul.f32.gmra.mxu0 %v3162
  %v3253 = vpop.f32.mrf.mxu0
  %v3254 = vadd.f32 0.0, %v3253
  %3255 = vmatmul.f32.gmra.mxu0 %v3164
  %v3256 = vpop.f32.mrf.mxu0
  %v3257 = vadd.f32 0.0, %v3256
  %3258 = vmatmul.f32.gmra.mxu0 %v3166
  %v3259 = vpop.f32.mrf.mxu0
  %v3260 = vadd.f32 0.0, %v3259
  %3261 = vmatmul.f32.gmra.mxu0 %v3168
  %v3262 = vpop.f32.mrf.mxu0
  %v3263 = vadd.f32 0.0, %v3262
  %3264 = vmatmul.f32.gmra.mxu0 %v3170
  %v3265 = vpop.f32.mrf.mxu0
  %v3266 = vadd.f32 0.0, %v3265
  %3267 = vmatmul.f32.gmra.mxu0 %v3172
  %v3268 = vpop.f32.mrf.mxu0
  %v3269 = vadd.f32 0.0, %v3268
  %3270 = vdwg.mxu0
  %v3271 = vsel %vm2496, %v2209, 0
  %v3273 = vsel %vm2496, %v2211, 0
  %v3275 = vsel %vm2496, %v2213, 0
  %v3277 = vsel %vm2496, %v2215, 0
  %v3279 = vsel %vm2496, %v2217, 0
  %v3281 = vsel %vm2496, %v2219, 0
  %v3283 = vsel %vm2496, %v2221, 0
  %v3285 = vsel %vm2496, %v2223, 0
  %v3287 = vsel %vm2496, %v2225, 0
  %v3289 = vsel %vm2496, %v2227, 0
  %v3291 = vsel %vm2496, %v2229, 0
  %v3293 = vsel %vm2496, %v2231, 0
  %v3295 = vsel %vm2496, %v2233, 0
  %v3297 = vsel %vm2496, %v2235, 0
  %v3299 = vsel %vm2496, %v2237, 0
  %v3301 = vsel %vm2496, %v2239, 0
  %v3303 = vsel %vm2496, %v2433, 0
  %v3305 = vsel %vm2496, %v2435, 0
  %v3307 = vsel %vm2496, %v2437, 0
  %v3309 = vsel %vm2496, %v2439, 0
  %v3311 = vsel %vm2496, %v2441, 0
  %v3313 = vsel %vm2496, %v2443, 0
  %v3315 = vsel %vm2496, %v2445, 0
  %v3317 = vsel %vm2496, %v2447, 0
  %v3319 = vsel %vm2496, %v2449, 0
  %v3321 = vsel %vm2496, %v2451, 0
  %v3323 = vsel %vm2496, %v2453, 0
  %v3325 = vsel %vm2496, %v2455, 0
  %v3327 = vsel %vm2496, %v2457, 0
  %v3329 = vsel %vm2496, %v2459, 0
  %v3331 = vsel %vm2496, %v2461, 0
  %v3333 = vsel %vm2496, %v2463, 0
  %3335 = vmatpush.xpose.msra.mxu0 %v3333
  %3336 = vmatpush.xpose.msra.mxu0 %v3331
  %3337 = vmatpush.xpose.msra.mxu0 %v3329
  %3338 = vmatpush.xpose.msra.mxu0 %v3327
  %3339 = vmatpush.xpose.msra.mxu0 %v3325
  %3340 = vmatpush.xpose.msra.mxu0 %v3323
  %3341 = vmatpush.xpose.msra.mxu0 %v3321
  %3342 = vmatpush.xpose.msra.mxu0 %v3319
  %3343 = vmatpush.xpose.msra.mxu0 %v3317
  %3344 = vmatpush.xpose.msra.mxu0 %v3315
  %3345 = vmatpush.xpose.msra.mxu0 %v3313
  %3346 = vmatpush.xpose.msra.mxu0 %v3311
  %3347 = vmatpush.xpose.msra.mxu0 %v3309
  %3348 = vmatpush.xpose.msra.mxu0 %v3307
  %3349 = vmatpush.xpose.msra.mxu0 %v3305
  %3350 = vmatpush.xpose.msra.mxu0 %v3303
  %3351 = vmatmul.f32.gmra.mxu0 %v3271
  %v3352 = vpop.f32.mrf.mxu0
  %v3353 = vadd.f32 0.0, %v3352
  %3354 = vmatmul.f32.gmra.mxu0 %v3273
  %v3355 = vpop.f32.mrf.mxu0
  %v3356 = vadd.f32 0.0, %v3355
  %3357 = vmatmul.f32.gmra.mxu0 %v3275
  %v3358 = vpop.f32.mrf.mxu0
  %v3359 = vadd.f32 0.0, %v3358
  %3360 = vmatmul.f32.gmra.mxu0 %v3277
  %v3361 = vpop.f32.mrf.mxu0
  %v3362 = vadd.f32 0.0, %v3361
  %3363 = vmatmul.f32.gmra.mxu0 %v3279
  %v3364 = vpop.f32.mrf.mxu0
  %v3365 = vadd.f32 0.0, %v3364
  %3366 = vmatmul.f32.gmra.mxu0 %v3281
  %v3367 = vpop.f32.mrf.mxu0
  %v3368 = vadd.f32 0.0, %v3367
  %3369 = vmatmul.f32.gmra.mxu0 %v3283
  %v3370 = vpop.f32.mrf.mxu0
  %v3371 = vadd.f32 0.0, %v3370
  %3372 = vmatmul.f32.gmra.mxu0 %v3285
  %v3373 = vpop.f32.mrf.mxu0
  %v3374 = vadd.f32 0.0, %v3373
  %3375 = vmatmul.f32.gmra.mxu0 %v3287
  %v3376 = vpop.f32.mrf.mxu0
  %v3377 = vadd.f32 0.0, %v3376
  %3378 = vmatmul.f32.gmra.mxu0 %v3289
  %v3379 = vpop.f32.mrf.mxu0
  %v3380 = vadd.f32 0.0, %v3379
  %3381 = vmatmul.f32.gmra.mxu0 %v3291
  %v3382 = vpop.f32.mrf.mxu0
  %v3383 = vadd.f32 0.0, %v3382
  %3384 = vmatmul.f32.gmra.mxu0 %v3293
  %v3385 = vpop.f32.mrf.mxu0
  %v3386 = vadd.f32 0.0, %v3385
  %3387 = vmatmul.f32.gmra.mxu0 %v3295
  %v3388 = vpop.f32.mrf.mxu0
  %v3389 = vadd.f32 0.0, %v3388
  %3390 = vmatmul.f32.gmra.mxu0 %v3297
  %v3391 = vpop.f32.mrf.mxu0
  %v3392 = vadd.f32 0.0, %v3391
  %3393 = vmatmul.f32.gmra.mxu0 %v3299
  %v3394 = vpop.f32.mrf.mxu0
  %v3395 = vadd.f32 0.0, %v3394
  %3396 = vmatmul.f32.gmra.mxu0 %v3301
  %v3397 = vpop.f32.mrf.mxu0
  %v3398 = vadd.f32 0.0, %v3397
  %3399 = vdwg.mxu0
  %v3400 = vsel %vm2496, %v2241, 0
  %v3402 = vsel %vm2496, %v2243, 0
  %v3404 = vsel %vm2496, %v2245, 0
  %v3406 = vsel %vm2496, %v2247, 0
  %v3408 = vsel %vm2496, %v2249, 0
  %v3410 = vsel %vm2496, %v2251, 0
  %v3412 = vsel %vm2496, %v2253, 0
  %v3414 = vsel %vm2496, %v2255, 0
  %v3416 = vsel %vm2496, %v2257, 0
  %v3418 = vsel %vm2496, %v2259, 0
  %v3420 = vsel %vm2496, %v2261, 0
  %v3422 = vsel %vm2496, %v2263, 0
  %v3424 = vsel %vm2496, %v2265, 0
  %v3426 = vsel %vm2496, %v2267, 0
  %v3428 = vsel %vm2496, %v2269, 0
  %v3430 = vsel %vm2496, %v2271, 0
  %v3432 = vsel %vm2496, %v2465, 0
  %v3434 = vsel %vm2496, %v2467, 0
  %v3436 = vsel %vm2496, %v2469, 0
  %v3438 = vsel %vm2496, %v2471, 0
  %v3440 = vsel %vm2496, %v2473, 0
  %v3442 = vsel %vm2496, %v2475, 0
  %v3444 = vsel %vm2496, %v2477, 0
  %v3446 = vsel %vm2496, %v2479, 0
  %v3448 = vsel %vm2496, %v2481, 0
  %v3450 = vsel %vm2496, %v2483, 0
  %v3452 = vsel %vm2496, %v2485, 0
  %v3454 = vsel %vm2496, %v2487, 0
  %v3456 = vsel %vm2496, %v2489, 0
  %v3458 = vsel %vm2496, %v2491, 0
  %v3460 = vsel %vm2496, %v2493, 0
  %v3462 = vsel %vm2496, %v2495, 0
  %3464 = vmatpush.xpose.msra.mxu0 %v3462
  %3465 = vmatpush.xpose.msra.mxu0 %v3460
  %3466 = vmatpush.xpose.msra.mxu0 %v3458
  %3467 = vmatpush.xpose.msra.mxu0 %v3456
  %3468 = vmatpush.xpose.msra.mxu0 %v3454
  %3469 = vmatpush.xpose.msra.mxu0 %v3452
  %3470 = vmatpush.xpose.msra.mxu0 %v3450
  %3471 = vmatpush.xpose.msra.mxu0 %v3448
  %3472 = vmatpush.xpose.msra.mxu0 %v3446
  %3473 = vmatpush.xpose.msra.mxu0 %v3444
  %3474 = vmatpush.xpose.msra.mxu0 %v3442
  %3475 = vmatpush.xpose.msra.mxu0 %v3440
  %3476 = vmatpush.xpose.msra.mxu0 %v3438
  %3477 = vmatpush.xpose.msra.mxu0 %v3436
  %3478 = vmatpush.xpose.msra.mxu0 %v3434
  %3479 = vmatpush.xpose.msra.mxu0 %v3432
  %3480 = vmatmul.f32.gmra.mxu0 %v3400
  %v3481 = vpop.f32.mrf.mxu0
  %v3482 = vadd.f32 0.0, %v3481
  %3483 = vmatmul.f32.gmra.mxu0 %v3402
  %v3484 = vpop.f32.mrf.mxu0
  %v3485 = vadd.f32 0.0, %v3484
  %3486 = vmatmul.f32.gmra.mxu0 %v3404
  %v3487 = vpop.f32.mrf.mxu0
  %v3488 = vadd.f32 0.0, %v3487
  %3489 = vmatmul.f32.gmra.mxu0 %v3406
  %v3490 = vpop.f32.mrf.mxu0
  %v3491 = vadd.f32 0.0, %v3490
  %3492 = vmatmul.f32.gmra.mxu0 %v3408
  %v3493 = vpop.f32.mrf.mxu0
  %v3494 = vadd.f32 0.0, %v3493
  %3495 = vmatmul.f32.gmra.mxu0 %v3410
  %v3496 = vpop.f32.mrf.mxu0
  %v3497 = vadd.f32 0.0, %v3496
  %3498 = vmatmul.f32.gmra.mxu0 %v3412
  %v3499 = vpop.f32.mrf.mxu0
  %v3500 = vadd.f32 0.0, %v3499
  %3501 = vmatmul.f32.gmra.mxu0 %v3414
  %v3502 = vpop.f32.mrf.mxu0
  %v3503 = vadd.f32 0.0, %v3502
  %3504 = vmatmul.f32.gmra.mxu0 %v3416
  %v3505 = vpop.f32.mrf.mxu0
  %v3506 = vadd.f32 0.0, %v3505
  %3507 = vmatmul.f32.gmra.mxu0 %v3418
  %v3508 = vpop.f32.mrf.mxu0
  %v3509 = vadd.f32 0.0, %v3508
  %3510 = vmatmul.f32.gmra.mxu0 %v3420
  %v3511 = vpop.f32.mrf.mxu0
  %v3512 = vadd.f32 0.0, %v3511
  %3513 = vmatmul.f32.gmra.mxu0 %v3422
  %v3514 = vpop.f32.mrf.mxu0
  %v3515 = vadd.f32 0.0, %v3514
  %3516 = vmatmul.f32.gmra.mxu0 %v3424
  %v3517 = vpop.f32.mrf.mxu0
  %v3518 = vadd.f32 0.0, %v3517
  %3519 = vmatmul.f32.gmra.mxu0 %v3426
  %v3520 = vpop.f32.mrf.mxu0
  %v3521 = vadd.f32 0.0, %v3520
  %3522 = vmatmul.f32.gmra.mxu0 %v3428
  %v3523 = vpop.f32.mrf.mxu0
  %v3524 = vadd.f32 0.0, %v3523
  %3525 = vmatmul.f32.gmra.mxu0 %v3430
  %v3526 = vpop.f32.mrf.mxu0
  %v3527 = vadd.f32 0.0, %v3526
  %3528 = vdwg.mxu0
  %v3529 = vld [vmem:[%s9] sm:$0xff]
  %v3530 = vld [vmem:[%s9 + $0x8] sm:$0xff]
  %v3531 = vld [vmem:[%s9 + $0x10] sm:$0xff]
  %v3532 = vld [vmem:[%s9 + $0x18] sm:$0xff]
  %v3533 = vld [vmem:[%s9 + $0x20] sm:$0xff]
  %v3534 = vld [vmem:[%s9 + $0x28] sm:$0xff]
  %v3535 = vld [vmem:[%s9 + $0x30] sm:$0xff]
  %v3536 = vld [vmem:[%s9 + $0x38] sm:$0xff]
  %v3537 = vld [vmem:[%s9 + $0x40] sm:$0xff]
  %v3538 = vld [vmem:[%s9 + $0x48] sm:$0xff]
  %v3539 = vld [vmem:[%s9 + $0x50] sm:$0xff]
  %v3540 = vld [vmem:[%s9 + $0x58] sm:$0xff]
  %v3541 = vld [vmem:[%s9 + $0x60] sm:$0xff]
  %v3542 = vld [vmem:[%s9 + $0x68] sm:$0xff]
  %v3543 = vld [vmem:[%s9 + $0x70] sm:$0xff]
  %v3544 = vld [vmem:[%s9 + $0x78] sm:$0xff]
  %v3545 = vld [vmem:[%s9 + $0x80] sm:$0xff]
  %v3546 = vld [vmem:[%s9 + $0x88] sm:$0xff]
  %v3547 = vld [vmem:[%s9 + $0x90] sm:$0xff]
  %v3548 = vld [vmem:[%s9 + $0x98] sm:$0xff]
  %v3549 = vld [vmem:[%s9 + $0xa0] sm:$0xff]
  %v3550 = vld [vmem:[%s9 + $0xa8] sm:$0xff]
  %v3551 = vld [vmem:[%s9 + $0xb0] sm:$0xff]
  %v3552 = vld [vmem:[%s9 + $0xb8] sm:$0xff]
  %v3553 = vld [vmem:[%s9 + $0xc0] sm:$0xff]
  %v3554 = vld [vmem:[%s9 + $0xc8] sm:$0xff]
  %v3555 = vld [vmem:[%s9 + $0xd0] sm:$0xff]
  %v3556 = vld [vmem:[%s9 + $0xd8] sm:$0xff]
  %v3557 = vld [vmem:[%s9 + $0xe0] sm:$0xff]
  %v3558 = vld [vmem:[%s9 + $0xe8] sm:$0xff]
  %v3559 = vld [vmem:[%s9 + $0xf0] sm:$0xff]
  %v3560 = vld [vmem:[%s9 + $0xf8] sm:$0xff]
  %v3561 = vld [vmem:[%s9 + $0x100] sm:$0xff]
  %v3562 = vld [vmem:[%s9 + $0x108] sm:$0xff]
  %v3563 = vld [vmem:[%s9 + $0x110] sm:$0xff]
  %v3564 = vld [vmem:[%s9 + $0x118] sm:$0xff]
  %v3565 = vld [vmem:[%s9 + $0x120] sm:$0xff]
  %v3566 = vld [vmem:[%s9 + $0x128] sm:$0xff]
  %v3567 = vld [vmem:[%s9 + $0x130] sm:$0xff]
  %v3568 = vld [vmem:[%s9 + $0x138] sm:$0xff]
  %v3569 = vld [vmem:[%s9 + $0x140] sm:$0xff]
  %v3570 = vld [vmem:[%s9 + $0x148] sm:$0xff]
  %v3571 = vld [vmem:[%s9 + $0x150] sm:$0xff]
  %v3572 = vld [vmem:[%s9 + $0x158] sm:$0xff]
  %v3573 = vld [vmem:[%s9 + $0x160] sm:$0xff]
  %v3574 = vld [vmem:[%s9 + $0x168] sm:$0xff]
  %v3575 = vld [vmem:[%s9 + $0x170] sm:$0xff]
  %v3576 = vld [vmem:[%s9 + $0x178] sm:$0xff]
  %v3577 = vld [vmem:[%s9 + $0x180] sm:$0xff]
  %v3578 = vld [vmem:[%s9 + $0x188] sm:$0xff]
  %v3579 = vld [vmem:[%s9 + $0x190] sm:$0xff]
  %v3580 = vld [vmem:[%s9 + $0x198] sm:$0xff]
  %v3581 = vld [vmem:[%s9 + $0x1a0] sm:$0xff]
  %v3582 = vld [vmem:[%s9 + $0x1a8] sm:$0xff]
  %v3583 = vld [vmem:[%s9 + $0x1b0] sm:$0xff]
  %v3584 = vld [vmem:[%s9 + $0x1b8] sm:$0xff]
  %v3585 = vld [vmem:[%s9 + $0x1c0] sm:$0xff]
  %v3586 = vld [vmem:[%s9 + $0x1c8] sm:$0xff]
  %v3587 = vld [vmem:[%s9 + $0x1d0] sm:$0xff]
  %v3588 = vld [vmem:[%s9 + $0x1d8] sm:$0xff]
  %v3589 = vld [vmem:[%s9 + $0x1e0] sm:$0xff]
  %v3590 = vld [vmem:[%s9 + $0x1e8] sm:$0xff]
  %v3591 = vld [vmem:[%s9 + $0x1f0] sm:$0xff]
  %v3592 = vld [vmem:[%s9 + $0x1f8] sm:$0xff]
  %v3593 = vadd.f32 %v2579, %v3529
  %v3594 = vadd.f32 %v2582, %v3530
  %v3595 = vadd.f32 %v2585, %v3531
  %v3596 = vadd.f32 %v2588, %v3532
  %v3597 = vadd.f32 %v2591, %v3533
  %v3598 = vadd.f32 %v2594, %v3534
  %v3599 = vadd.f32 %v2597, %v3535
  %v3600 = vadd.f32 %v2600, %v3536
  %v3601 = vadd.f32 %v2603, %v3537
  %v3602 = vadd.f32 %v2606, %v3538
  %v3603 = vadd.f32 %v2609, %v3539
  %v3604 = vadd.f32 %v2612, %v3540
  %v3605 = vadd.f32 %v2615, %v3541
  %v3606 = vadd.f32 %v2618, %v3542
  %v3607 = vadd.f32 %v2621, %v3543
  %v3608 = vadd.f32 %v2624, %v3544
  %v3609 = vadd.f32 %v2708, %v3529
  %v3610 = vadd.f32 %v2711, %v3530
  %v3611 = vadd.f32 %v2714, %v3531
  %v3612 = vadd.f32 %v2717, %v3532
  %v3613 = vadd.f32 %v2720, %v3533
  %v3614 = vadd.f32 %v2723, %v3534
  %v3615 = vadd.f32 %v2726, %v3535
  %v3616 = vadd.f32 %v2729, %v3536
  %v3617 = vadd.f32 %v2732, %v3537
  %v3618 = vadd.f32 %v2735, %v3538
  %v3619 = vadd.f32 %v2738, %v3539
  %v3620 = vadd.f32 %v2741, %v3540
  %v3621 = vadd.f32 %v2744, %v3541
  %v3622 = vadd.f32 %v2747, %v3542
  %v3623 = vadd.f32 %v2750, %v3543
  %v3624 = vadd.f32 %v2753, %v3544
  %v3625 = vadd.f32 %v2837, %v3545
  %v3626 = vadd.f32 %v2840, %v3546
  %v3627 = vadd.f32 %v2843, %v3547
  %v3628 = vadd.f32 %v2846, %v3548
  %v3629 = vadd.f32 %v2849, %v3549
  %v3630 = vadd.f32 %v2852, %v3550
  %v3631 = vadd.f32 %v2855, %v3551
  %v3632 = vadd.f32 %v2858, %v3552
  %v3633 = vadd.f32 %v2861, %v3553
  %v3634 = vadd.f32 %v2864, %v3554
  %v3635 = vadd.f32 %v2867, %v3555
  %v3636 = vadd.f32 %v2870, %v3556
  %v3637 = vadd.f32 %v2873, %v3557
  %v3638 = vadd.f32 %v2876, %v3558
  %v3639 = vadd.f32 %v2879, %v3559
  %v3640 = vadd.f32 %v2882, %v3560
  %v3641 = vadd.f32 %v2966, %v3545
  %v3642 = vadd.f32 %v2969, %v3546
  %v3643 = vadd.f32 %v2972, %v3547
  %v3644 = vadd.f32 %v2975, %v3548
  %v3645 = vadd.f32 %v2978, %v3549
  %v3646 = vadd.f32 %v2981, %v3550
  %v3647 = vadd.f32 %v2984, %v3551
  %v3648 = vadd.f32 %v2987, %v3552
  %v3649 = vadd.f32 %v2990, %v3553
  %v3650 = vadd.f32 %v2993, %v3554
  %v3651 = vadd.f32 %v2996, %v3555
  %v3652 = vadd.f32 %v2999, %v3556
  %v3653 = vadd.f32 %v3002, %v3557
  %v3654 = vadd.f32 %v3005, %v3558
  %v3655 = vadd.f32 %v3008, %v3559
  %v3656 = vadd.f32 %v3011, %v3560
  %v3657 = vadd.f32 %v3095, %v3561
  %v3658 = vadd.f32 %v3098, %v3562
  %v3659 = vadd.f32 %v3101, %v3563
  %v3660 = vadd.f32 %v3104, %v3564
  %v3661 = vadd.f32 %v3107, %v3565
  %v3662 = vadd.f32 %v3110, %v3566
  %v3663 = vadd.f32 %v3113, %v3567
  %v3664 = vadd.f32 %v3116, %v3568
  %v3665 = vadd.f32 %v3119, %v3569
  %v3666 = vadd.f32 %v3122, %v3570
  %v3667 = vadd.f32 %v3125, %v3571
  %v3668 = vadd.f32 %v3128, %v3572
  %v3669 = vadd.f32 %v3131, %v3573
  %v3670 = vadd.f32 %v3134, %v3574
  %v3671 = vadd.f32 %v3137, %v3575
  %v3672 = vadd.f32 %v3140, %v3576
  %v3673 = vadd.f32 %v3224, %v3561
  %v3674 = vadd.f32 %v3227, %v3562
  %v3675 = vadd.f32 %v3230, %v3563
  %v3676 = vadd.f32 %v3233, %v3564
  %v3677 = vadd.f32 %v3236, %v3565
  %v3678 = vadd.f32 %v3239, %v3566
  %v3679 = vadd.f32 %v3242, %v3567
  %v3680 = vadd.f32 %v3245, %v3568
  %v3681 = vadd.f32 %v3248, %v3569
  %v3682 = vadd.f32 %v3251, %v3570
  %v3683 = vadd.f32 %v3254, %v3571
  %v3684 = vadd.f32 %v3257, %v3572
  %v3685 = vadd.f32 %v3260, %v3573
  %v3686 = vadd.f32 %v3263, %v3574
  %v3687 = vadd.f32 %v3266, %v3575
  %v3688 = vadd.f32 %v3269, %v3576
  %v3689 = vadd.f32 %v3353, %v3577
  %v3690 = vadd.f32 %v3356, %v3578
  %v3691 = vadd.f32 %v3359, %v3579
  %v3692 = vadd.f32 %v3362, %v3580
  %v3693 = vadd.f32 %v3365, %v3581
  %v3694 = vadd.f32 %v3368, %v3582
  %v3695 = vadd.f32 %v3371, %v3583
  %v3696 = vadd.f32 %v3374, %v3584
  %v3697 = vadd.f32 %v3377, %v3585
  %v3698 = vadd.f32 %v3380, %v3586
  %v3699 = vadd.f32 %v3383, %v3587
  %v3700 = vadd.f32 %v3386, %v3588
  %v3701 = vadd.f32 %v3389, %v3589
  %v3702 = vadd.f32 %v3392, %v3590
  %v3703 = vadd.f32 %v3395, %v3591
  %v3704 = vadd.f32 %v3398, %v3592
  %v3705 = vadd.f32 %v3482, %v3577
  %v3706 = vadd.f32 %v3485, %v3578
  %v3707 = vadd.f32 %v3488, %v3579
  %v3708 = vadd.f32 %v3491, %v3580
  %v3709 = vadd.f32 %v3494, %v3581
  %v3710 = vadd.f32 %v3497, %v3582
  %v3711 = vadd.f32 %v3500, %v3583
  %v3712 = vadd.f32 %v3503, %v3584
  %v3713 = vadd.f32 %v3506, %v3585
  %v3714 = vadd.f32 %v3509, %v3586
  %v3715 = vadd.f32 %v3512, %v3587
  %v3716 = vadd.f32 %v3515, %v3588
  %v3717 = vadd.f32 %v3518, %v3589
  %v3718 = vadd.f32 %v3521, %v3590
  %v3719 = vadd.f32 %v3524, %v3591
  %v3720 = vadd.f32 %v3527, %v3592
  %3721 = vmax.xlane.f32.xlu0 %v3593
  %v3722 = vpop.xlane.xlu0 %3721
  %3723 = vmax.xlane.f32.xlu0 %v3594
  %v3724 = vpop.xlane.xlu0 %3723
  %3725 = vmax.xlane.f32.xlu0 %v3595
  %v3726 = vpop.xlane.xlu0 %3725
  %3727 = vmax.xlane.f32.xlu0 %v3596
  %v3728 = vpop.xlane.xlu0 %3727
  %3729 = vmax.xlane.f32.xlu0 %v3597
  %v3730 = vpop.xlane.xlu0 %3729
  %3731 = vmax.xlane.f32.xlu0 %v3598
  %v3732 = vpop.xlane.xlu0 %3731
  %3733 = vmax.xlane.f32.xlu0 %v3599
  %v3734 = vpop.xlane.xlu0 %3733
  %3735 = vmax.xlane.f32.xlu0 %v3600
  %v3736 = vpop.xlane.xlu0 %3735
  %3737 = vmax.xlane.f32.xlu0 %v3601
  %v3738 = vpop.xlane.xlu0 %3737
  %3739 = vmax.xlane.f32.xlu0 %v3602
  %v3740 = vpop.xlane.xlu0 %3739
  %3741 = vmax.xlane.f32.xlu0 %v3603
  %v3742 = vpop.xlane.xlu0 %3741
  %3743 = vmax.xlane.f32.xlu0 %v3604
  %v3744 = vpop.xlane.xlu0 %3743
  %3745 = vmax.xlane.f32.xlu0 %v3605
  %v3746 = vpop.xlane.xlu0 %3745
  %3747 = vmax.xlane.f32.xlu0 %v3606
  %v3748 = vpop.xlane.xlu0 %3747
  %3749 = vmax.xlane.f32.xlu0 %v3607
  %v3750 = vpop.xlane.xlu0 %3749
  %3751 = vmax.xlane.f32.xlu0 %v3608
  %v3752 = vpop.xlane.xlu0 %3751
  %3753 = vmax.xlane.f32.xlu0 %v3609
  %v3754 = vpop.xlane.xlu0 %3753
  %3755 = vmax.xlane.f32.xlu0 %v3610
  %v3756 = vpop.xlane.xlu0 %3755
  %3757 = vmax.xlane.f32.xlu0 %v3611
  %v3758 = vpop.xlane.xlu0 %3757
  %3759 = vmax.xlane.f32.xlu0 %v3612
  %v3760 = vpop.xlane.xlu0 %3759
  %3761 = vmax.xlane.f32.xlu0 %v3613
  %v3762 = vpop.xlane.xlu0 %3761
  %3763 = vmax.xlane.f32.xlu0 %v3614
  %v3764 = vpop.xlane.xlu0 %3763
  %3765 = vmax.xlane.f32.xlu0 %v3615
  %v3766 = vpop.xlane.xlu0 %3765
  %3767 = vmax.xlane.f32.xlu0 %v3616
  %v3768 = vpop.xlane.xlu0 %3767
  %3769 = vmax.xlane.f32.xlu0 %v3617
  %v3770 = vpop.xlane.xlu0 %3769
  %3771 = vmax.xlane.f32.xlu0 %v3618
  %v3772 = vpop.xlane.xlu0 %3771
  %3773 = vmax.xlane.f32.xlu0 %v3619
  %v3774 = vpop.xlane.xlu0 %3773
  %3775 = vmax.xlane.f32.xlu0 %v3620
  %v3776 = vpop.xlane.xlu0 %3775
  %3777 = vmax.xlane.f32.xlu0 %v3621
  %v3778 = vpop.xlane.xlu0 %3777
  %3779 = vmax.xlane.f32.xlu0 %v3622
  %v3780 = vpop.xlane.xlu0 %3779
  %3781 = vmax.xlane.f32.xlu0 %v3623
  %v3782 = vpop.xlane.xlu0 %3781
  %3783 = vmax.xlane.f32.xlu0 %v3624
  %v3784 = vpop.xlane.xlu0 %3783
  %3785 = vmax.xlane.f32.xlu0 %v3625
  %v3786 = vpop.xlane.xlu0 %3785
  %3787 = vmax.xlane.f32.xlu0 %v3626
  %v3788 = vpop.xlane.xlu0 %3787
  %3789 = vmax.xlane.f32.xlu0 %v3627
  %v3790 = vpop.xlane.xlu0 %3789
  %3791 = vmax.xlane.f32.xlu0 %v3628
  %v3792 = vpop.xlane.xlu0 %3791
  %3793 = vmax.xlane.f32.xlu0 %v3629
  %v3794 = vpop.xlane.xlu0 %3793
  %3795 = vmax.xlane.f32.xlu0 %v3630
  %v3796 = vpop.xlane.xlu0 %3795
  %3797 = vmax.xlane.f32.xlu0 %v3631
  %v3798 = vpop.xlane.xlu0 %3797
  %3799 = vmax.xlane.f32.xlu0 %v3632
  %v3800 = vpop.xlane.xlu0 %3799
  %3801 = vmax.xlane.f32.xlu0 %v3633
  %v3802 = vpop.xlane.xlu0 %3801
  %3803 = vmax.xlane.f32.xlu0 %v3634
  %v3804 = vpop.xlane.xlu0 %3803
  %3805 = vmax.xlane.f32.xlu0 %v3635
  %v3806 = vpop.xlane.xlu0 %3805
  %3807 = vmax.xlane.f32.xlu0 %v3636
  %v3808 = vpop.xlane.xlu0 %3807
  %3809 = vmax.xlane.f32.xlu0 %v3637
  %v3810 = vpop.xlane.xlu0 %3809
  %3811 = vmax.xlane.f32.xlu0 %v3638
  %v3812 = vpop.xlane.xlu0 %3811
  %3813 = vmax.xlane.f32.xlu0 %v3639
  %v3814 = vpop.xlane.xlu0 %3813
  %3815 = vmax.xlane.f32.xlu0 %v3640
  %v3816 = vpop.xlane.xlu0 %3815
  %3817 = vmax.xlane.f32.xlu0 %v3641
  %v3818 = vpop.xlane.xlu0 %3817
  %3819 = vmax.xlane.f32.xlu0 %v3642
  %v3820 = vpop.xlane.xlu0 %3819
  %3821 = vmax.xlane.f32.xlu0 %v3643
  %v3822 = vpop.xlane.xlu0 %3821
  %3823 = vmax.xlane.f32.xlu0 %v3644
  %v3824 = vpop.xlane.xlu0 %3823
  %3825 = vmax.xlane.f32.xlu0 %v3645
  %v3826 = vpop.xlane.xlu0 %3825
  %3827 = vmax.xlane.f32.xlu0 %v3646
  %v3828 = vpop.xlane.xlu0 %3827
  %3829 = vmax.xlane.f32.xlu0 %v3647
  %v3830 = vpop.xlane.xlu0 %3829
  %3831 = vmax.xlane.f32.xlu0 %v3648
  %v3832 = vpop.xlane.xlu0 %3831
  %3833 = vmax.xlane.f32.xlu0 %v3649
  %v3834 = vpop.xlane.xlu0 %3833
  %3835 = vmax.xlane.f32.xlu0 %v3650
  %v3836 = vpop.xlane.xlu0 %3835
  %3837 = vmax.xlane.f32.xlu0 %v3651
  %v3838 = vpop.xlane.xlu0 %3837
  %3839 = vmax.xlane.f32.xlu0 %v3652
  %v3840 = vpop.xlane.xlu0 %3839
  %3841 = vmax.xlane.f32.xlu0 %v3653
  %v3842 = vpop.xlane.xlu0 %3841
  %3843 = vmax.xlane.f32.xlu0 %v3654
  %v3844 = vpop.xlane.xlu0 %3843
  %3845 = vmax.xlane.f32.xlu0 %v3655
  %v3846 = vpop.xlane.xlu0 %3845
  %3847 = vmax.xlane.f32.xlu0 %v3656
  %v3848 = vpop.xlane.xlu0 %3847
  %3849 = vmax.xlane.f32.xlu0 %v3657
  %v3850 = vpop.xlane.xlu0 %3849
  %3851 = vmax.xlane.f32.xlu0 %v3658
  %v3852 = vpop.xlane.xlu0 %3851
  %3853 = vmax.xlane.f32.xlu0 %v3659
  %v3854 = vpop.xlane.xlu0 %3853
  %3855 = vmax.xlane.f32.xlu0 %v3660
  %v3856 = vpop.xlane.xlu0 %3855
  %3857 = vmax.xlane.f32.xlu0 %v3661
  %v3858 = vpop.xlane.xlu0 %3857
  %3859 = vmax.xlane.f32.xlu0 %v3662
  %v3860 = vpop.xlane.xlu0 %3859
  %3861 = vmax.xlane.f32.xlu0 %v3663
  %v3862 = vpop.xlane.xlu0 %3861
  %3863 = vmax.xlane.f32.xlu0 %v3664
  %v3864 = vpop.xlane.xlu0 %3863
  %3865 = vmax.xlane.f32.xlu0 %v3665
  %v3866 = vpop.xlane.xlu0 %3865
  %3867 = vmax.xlane.f32.xlu0 %v3666
  %v3868 = vpop.xlane.xlu0 %3867
  %3869 = vmax.xlane.f32.xlu0 %v3667
  %v3870 = vpop.xlane.xlu0 %3869
  %3871 = vmax.xlane.f32.xlu0 %v3668
  %v3872 = vpop.xlane.xlu0 %3871
  %3873 = vmax.xlane.f32.xlu0 %v3669
  %v3874 = vpop.xlane.xlu0 %3873
  %3875 = vmax.xlane.f32.xlu0 %v3670
  %v3876 = vpop.xlane.xlu0 %3875
  %3877 = vmax.xlane.f32.xlu0 %v3671
  %v3878 = vpop.xlane.xlu0 %3877
  %3879 = vmax.xlane.f32.xlu0 %v3672
  %v3880 = vpop.xlane.xlu0 %3879
  %3881 = vmax.xlane.f32.xlu0 %v3673
  %v3882 = vpop.xlane.xlu0 %3881
  %3883 = vmax.xlane.f32.xlu0 %v3674
  %v3884 = vpop.xlane.xlu0 %3883
  %3885 = vmax.xlane.f32.xlu0 %v3675
  %v3886 = vpop.xlane.xlu0 %3885
  %3887 = vmax.xlane.f32.xlu0 %v3676
  %v3888 = vpop.xlane.xlu0 %3887
  %3889 = vmax.xlane.f32.xlu0 %v3677
  %v3890 = vpop.xlane.xlu0 %3889
  %3891 = vmax.xlane.f32.xlu0 %v3678
  %v3892 = vpop.xlane.xlu0 %3891
  %3893 = vmax.xlane.f32.xlu0 %v3679
  %v3894 = vpop.xlane.xlu0 %3893
  %3895 = vmax.xlane.f32.xlu0 %v3680
  %v3896 = vpop.xlane.xlu0 %3895
  %3897 = vmax.xlane.f32.xlu0 %v3681
  %v3898 = vpop.xlane.xlu0 %3897
  %3899 = vmax.xlane.f32.xlu0 %v3682
  %v3900 = vpop.xlane.xlu0 %3899
  %3901 = vmax.xlane.f32.xlu0 %v3683
  %v3902 = vpop.xlane.xlu0 %3901
  %3903 = vmax.xlane.f32.xlu0 %v3684
  %v3904 = vpop.xlane.xlu0 %3903
  %3905 = vmax.xlane.f32.xlu0 %v3685
  %v3906 = vpop.xlane.xlu0 %3905
  %3907 = vmax.xlane.f32.xlu0 %v3686
  %v3908 = vpop.xlane.xlu0 %3907
  %3909 = vmax.xlane.f32.xlu0 %v3687
  %v3910 = vpop.xlane.xlu0 %3909
  %3911 = vmax.xlane.f32.xlu0 %v3688
  %v3912 = vpop.xlane.xlu0 %3911
  %3913 = vmax.xlane.f32.xlu0 %v3689
  %v3914 = vpop.xlane.xlu0 %3913
  %3915 = vmax.xlane.f32.xlu0 %v3690
  %v3916 = vpop.xlane.xlu0 %3915
  %3917 = vmax.xlane.f32.xlu0 %v3691
  %v3918 = vpop.xlane.xlu0 %3917
  %3919 = vmax.xlane.f32.xlu0 %v3692
  %v3920 = vpop.xlane.xlu0 %3919
  %3921 = vmax.xlane.f32.xlu0 %v3693
  %v3922 = vpop.xlane.xlu0 %3921
  %3923 = vmax.xlane.f32.xlu0 %v3694
  %v3924 = vpop.xlane.xlu0 %3923
  %3925 = vmax.xlane.f32.xlu0 %v3695
  %v3926 = vpop.xlane.xlu0 %3925
  %3927 = vmax.xlane.f32.xlu0 %v3696
  %v3928 = vpop.xlane.xlu0 %3927
  %3929 = vmax.xlane.f32.xlu0 %v3697
  %v3930 = vpop.xlane.xlu0 %3929
  %3931 = vmax.xlane.f32.xlu0 %v3698
  %v3932 = vpop.xlane.xlu0 %3931
  %3933 = vmax.xlane.f32.xlu0 %v3699
  %v3934 = vpop.xlane.xlu0 %3933
  %3935 = vmax.xlane.f32.xlu0 %v3700
  %v3936 = vpop.xlane.xlu0 %3935
  %3937 = vmax.xlane.f32.xlu0 %v3701
  %v3938 = vpop.xlane.xlu0 %3937
  %3939 = vmax.xlane.f32.xlu0 %v3702
  %v3940 = vpop.xlane.xlu0 %3939
  %3941 = vmax.xlane.f32.xlu0 %v3703
  %v3942 = vpop.xlane.xlu0 %3941
  %3943 = vmax.xlane.f32.xlu0 %v3704
  %v3944 = vpop.xlane.xlu0 %3943
  %3945 = vmax.xlane.f32.xlu0 %v3705
  %v3946 = vpop.xlane.xlu0 %3945
  %3947 = vmax.xlane.f32.xlu0 %v3706
  %v3948 = vpop.xlane.xlu0 %3947
  %3949 = vmax.xlane.f32.xlu0 %v3707
  %v3950 = vpop.xlane.xlu0 %3949
  %3951 = vmax.xlane.f32.xlu0 %v3708
  %v3952 = vpop.xlane.xlu0 %3951
  %3953 = vmax.xlane.f32.xlu0 %v3709
  %v3954 = vpop.xlane.xlu0 %3953
  %3955 = vmax.xlane.f32.xlu0 %v3710
  %v3956 = vpop.xlane.xlu0 %3955
  %3957 = vmax.xlane.f32.xlu0 %v3711
  %v3958 = vpop.xlane.xlu0 %3957
  %3959 = vmax.xlane.f32.xlu0 %v3712
  %v3960 = vpop.xlane.xlu0 %3959
  %3961 = vmax.xlane.f32.xlu0 %v3713
  %v3962 = vpop.xlane.xlu0 %3961
  %3963 = vmax.xlane.f32.xlu0 %v3714
  %v3964 = vpop.xlane.xlu0 %3963
  %3965 = vmax.xlane.f32.xlu0 %v3715
  %v3966 = vpop.xlane.xlu0 %3965
  %3967 = vmax.xlane.f32.xlu0 %v3716
  %v3968 = vpop.xlane.xlu0 %3967
  %3969 = vmax.xlane.f32.xlu0 %v3717
  %v3970 = vpop.xlane.xlu0 %3969
  %3971 = vmax.xlane.f32.xlu0 %v3718
  %v3972 = vpop.xlane.xlu0 %3971
  %3973 = vmax.xlane.f32.xlu0 %v3719
  %v3974 = vpop.xlane.xlu0 %3973
  %3975 = vmax.xlane.f32.xlu0 %v3720
  %v3976 = vpop.xlane.xlu0 %3975
  %v3977 = vsub.f32 %v3593, %v3722
  %v3978 = vsub.f32 %v3594, %v3724
  %v3979 = vsub.f32 %v3595, %v3726
  %v3980 = vsub.f32 %v3596, %v3728
  %v3981 = vsub.f32 %v3597, %v3730
  %v3982 = vsub.f32 %v3598, %v3732
  %v3983 = vsub.f32 %v3599, %v3734
  %v3984 = vsub.f32 %v3600, %v3736
  %v3985 = vsub.f32 %v3601, %v3738
  %v3986 = vsub.f32 %v3602, %v3740
  %v3987 = vsub.f32 %v3603, %v3742
  %v3988 = vsub.f32 %v3604, %v3744
  %v3989 = vsub.f32 %v3605, %v3746
  %v3990 = vsub.f32 %v3606, %v3748
  %v3991 = vsub.f32 %v3607, %v3750
  %v3992 = vsub.f32 %v3608, %v3752
  %v3993 = vsub.f32 %v3609, %v3754
  %v3994 = vsub.f32 %v3610, %v3756
  %v3995 = vsub.f32 %v3611, %v3758
  %v3996 = vsub.f32 %v3612, %v3760
  %v3997 = vsub.f32 %v3613, %v3762
  %v3998 = vsub.f32 %v3614, %v3764
  %v3999 = vsub.f32 %v3615, %v3766
  %v4000 = vsub.f32 %v3616, %v3768
  %v4001 = vsub.f32 %v3617, %v3770
  %v4002 = vsub.f32 %v3618, %v3772
  %v4003 = vsub.f32 %v3619, %v3774
  %v4004 = vsub.f32 %v3620, %v3776
  %v4005 = vsub.f32 %v3621, %v3778
  %v4006 = vsub.f32 %v3622, %v3780
  %v4007 = vsub.f32 %v3623, %v3782
  %v4008 = vsub.f32 %v3624, %v3784
  %v4009 = vsub.f32 %v3625, %v3786
  %v4010 = vsub.f32 %v3626, %v3788
  %v4011 = vsub.f32 %v3627, %v3790
  %v4012 = vsub.f32 %v3628, %v3792
  %v4013 = vsub.f32 %v3629, %v3794
  %v4014 = vsub.f32 %v3630, %v3796
  %v4015 = vsub.f32 %v3631, %v3798
  %v4016 = vsub.f32 %v3632, %v3800
  %v4017 = vsub.f32 %v3633, %v3802
  %v4018 = vsub.f32 %v3634, %v3804
  %v4019 = vsub.f32 %v3635, %v3806
  %v4020 = vsub.f32 %v3636, %v3808
  %v4021 = vsub.f32 %v3637, %v3810
  %v4022 = vsub.f32 %v3638, %v3812
  %v4023 = vsub.f32 %v3639, %v3814
  %v4024 = vsub.f32 %v3640, %v3816
  %v4025 = vsub.f32 %v3641, %v3818
  %v4026 = vsub.f32 %v3642, %v3820
  %v4027 = vsub.f32 %v3643, %v3822
  %v4028 = vsub.f32 %v3644, %v3824
  %v4029 = vsub.f32 %v3645, %v3826
  %v4030 = vsub.f32 %v3646, %v3828
  %v4031 = vsub.f32 %v3647, %v3830
  %v4032 = vsub.f32 %v3648, %v3832
  %v4033 = vsub.f32 %v3649, %v3834
  %v4034 = vsub.f32 %v3650, %v3836
  %v4035 = vsub.f32 %v3651, %v3838
  %v4036 = vsub.f32 %v3652, %v3840
  %v4037 = vsub.f32 %v3653, %v3842
  %v4038 = vsub.f32 %v3654, %v3844
  %v4039 = vsub.f32 %v3655, %v3846
  %v4040 = vsub.f32 %v3656, %v3848
  %v4041 = vsub.f32 %v3657, %v3850
  %v4042 = vsub.f32 %v3658, %v3852
  %v4043 = vsub.f32 %v3659, %v3854
  %v4044 = vsub.f32 %v3660, %v3856
  %v4045 = vsub.f32 %v3661, %v3858
  %v4046 = vsub.f32 %v3662, %v3860
  %v4047 = vsub.f32 %v3663, %v3862
  %v4048 = vsub.f32 %v3664, %v3864
  %v4049 = vsub.f32 %v3665, %v3866
  %v4050 = vsub.f32 %v3666, %v3868
  %v4051 = vsub.f32 %v3667, %v3870
  %v4052 = vsub.f32 %v3668, %v3872
  %v4053 = vsub.f32 %v3669, %v3874
  %v4054 = vsub.f32 %v3670, %v3876
  %v4055 = vsub.f32 %v3671, %v3878
  %v4056 = vsub.f32 %v3672, %v3880
  %v4057 = vsub.f32 %v3673, %v3882
  %v4058 = vsub.f32 %v3674, %v3884
  %v4059 = vsub.f32 %v3675, %v3886
  %v4060 = vsub.f32 %v3676, %v3888
  %v4061 = vsub.f32 %v3677, %v3890
  %v4062 = vsub.f32 %v3678, %v3892
  %v4063 = vsub.f32 %v3679, %v3894
  %v4064 = vsub.f32 %v3680, %v3896
  %v4065 = vsub.f32 %v3681, %v3898
  %v4066 = vsub.f32 %v3682, %v3900
  %v4067 = vsub.f32 %v3683, %v3902
  %v4068 = vsub.f32 %v3684, %v3904
  %v4069 = vsub.f32 %v3685, %v3906
  %v4070 = vsub.f32 %v3686, %v3908
  %v4071 = vsub.f32 %v3687, %v3910
  %v4072 = vsub.f32 %v3688, %v3912
  %v4073 = vsub.f32 %v3689, %v3914
  %v4074 = vsub.f32 %v3690, %v3916
  %v4075 = vsub.f32 %v3691, %v3918
  %v4076 = vsub.f32 %v3692, %v3920
  %v4077 = vsub.f32 %v3693, %v3922
  %v4078 = vsub.f32 %v3694, %v3924
  %v4079 = vsub.f32 %v3695, %v3926
  %v4080 = vsub.f32 %v3696, %v3928
  %v4081 = vsub.f32 %v3697, %v3930
  %v4082 = vsub.f32 %v3698, %v3932
  %v4083 = vsub.f32 %v3699, %v3934
  %v4084 = vsub.f32 %v3700, %v3936
  %v4085 = vsub.f32 %v3701, %v3938
  %v4086 = vsub.f32 %v3702, %v3940
  %v4087 = vsub.f32 %v3703, %v3942
  %v4088 = vsub.f32 %v3704, %v3944
  %v4089 = vsub.f32 %v3705, %v3946
  %v4090 = vsub.f32 %v3706, %v3948
  %v4091 = vsub.f32 %v3707, %v3950
  %v4092 = vsub.f32 %v3708, %v3952
  %v4093 = vsub.f32 %v3709, %v3954
  %v4094 = vsub.f32 %v3710, %v3956
  %v4095 = vsub.f32 %v3711, %v3958
  %v4096 = vsub.f32 %v3712, %v3960
  %v4097 = vsub.f32 %v3713, %v3962
  %v4098 = vsub.f32 %v3714, %v3964
  %v4099 = vsub.f32 %v3715, %v3966
  %v4100 = vsub.f32 %v3716, %v3968
  %v4101 = vsub.f32 %v3717, %v3970
  %v4102 = vsub.f32 %v3718, %v3972
  %v4103 = vsub.f32 %v3719, %v3974
  %v4104 = vsub.f32 %v3720, %v3976
  %v4105 = vmul.f32 %v3977, 1.442695
  %v4106 = vpow.pop %v4105
  %v4107 = vmul.f32 %v3978, 1.442695
  %v4108 = vpow.pop %v4107
  %v4109 = vmul.f32 %v3979, 1.442695
  %v4110 = vpow.pop %v4109
  %v4111 = vmul.f32 %v3980, 1.442695
  %v4112 = vpow.pop %v4111
  %v4113 = vmul.f32 %v3981, 1.442695
  %v4114 = vpow.pop %v4113
  %v4115 = vmul.f32 %v3982, 1.442695
  %v4116 = vpow.pop %v4115
  %v4117 = vmul.f32 %v3983, 1.442695
  %v4118 = vpow.pop %v4117
  %v4119 = vmul.f32 %v3984, 1.442695
  %v4120 = vpow.pop %v4119
  %v4121 = vmul.f32 %v3985, 1.442695
  %v4122 = vpow.pop %v4121
  %v4123 = vmul.f32 %v3986, 1.442695
  %v4124 = vpow.pop %v4123
  %v4125 = vmul.f32 %v3987, 1.442695
  %v4126 = vpow.pop %v4125
  %v4127 = vmul.f32 %v3988, 1.442695
  %v4128 = vpow.pop %v4127
  %v4129 = vmul.f32 %v3989, 1.442695
  %v4130 = vpow.pop %v4129
  %v4131 = vmul.f32 %v3990, 1.442695
  %v4132 = vpow.pop %v4131
  %v4133 = vmul.f32 %v3991, 1.442695
  %v4134 = vpow.pop %v4133
  %v4135 = vmul.f32 %v3992, 1.442695
  %v4136 = vpow.pop %v4135
  %v4137 = vmul.f32 %v3993, 1.442695
  %v4138 = vpow.pop %v4137
  %v4139 = vmul.f32 %v3994, 1.442695
  %v4140 = vpow.pop %v4139
  %v4141 = vmul.f32 %v3995, 1.442695
  %v4142 = vpow.pop %v4141
  %v4143 = vmul.f32 %v3996, 1.442695
  %v4144 = vpow.pop %v4143
  %v4145 = vmul.f32 %v3997, 1.442695
  %v4146 = vpow.pop %v4145
  %v4147 = vmul.f32 %v3998, 1.442695
  %v4148 = vpow.pop %v4147
  %v4149 = vmul.f32 %v3999, 1.442695
  %v4150 = vpow.pop %v4149
  %v4151 = vmul.f32 %v4000, 1.442695
  %v4152 = vpow.pop %v4151
  %v4153 = vmul.f32 %v4001, 1.442695
  %v4154 = vpow.pop %v4153
  %v4155 = vmul.f32 %v4002, 1.442695
  %v4156 = vpow.pop %v4155
  %v4157 = vmul.f32 %v4003, 1.442695
  %v4158 = vpow.pop %v4157
  %v4159 = vmul.f32 %v4004, 1.442695
  %v4160 = vpow.pop %v4159
  %v4161 = vmul.f32 %v4005, 1.442695
  %v4162 = vpow.pop %v4161
  %v4163 = vmul.f32 %v4006, 1.442695
  %v4164 = vpow.pop %v4163
  %v4165 = vmul.f32 %v4007, 1.442695
  %v4166 = vpow.pop %v4165
  %v4167 = vmul.f32 %v4008, 1.442695
  %v4168 = vpow.pop %v4167
  %v4169 = vmul.f32 %v4009, 1.442695
  %v4170 = vpow.pop %v4169
  %v4171 = vmul.f32 %v4010, 1.442695
  %v4172 = vpow.pop %v4171
  %v4173 = vmul.f32 %v4011, 1.442695
  %v4174 = vpow.pop %v4173
  %v4175 = vmul.f32 %v4012, 1.442695
  %v4176 = vpow.pop %v4175
  %v4177 = vmul.f32 %v4013, 1.442695
  %v4178 = vpow.pop %v4177
  %v4179 = vmul.f32 %v4014, 1.442695
  %v4180 = vpow.pop %v4179
  %v4181 = vmul.f32 %v4015, 1.442695
  %v4182 = vpow.pop %v4181
  %v4183 = vmul.f32 %v4016, 1.442695
  %v4184 = vpow.pop %v4183
  %v4185 = vmul.f32 %v4017, 1.442695
  %v4186 = vpow.pop %v4185
  %v4187 = vmul.f32 %v4018, 1.442695
  %v4188 = vpow.pop %v4187
  %v4189 = vmul.f32 %v4019, 1.442695
  %v4190 = vpow.pop %v4189
  %v4191 = vmul.f32 %v4020, 1.442695
  %v4192 = vpow.pop %v4191
  %v4193 = vmul.f32 %v4021, 1.442695
  %v4194 = vpow.pop %v4193
  %v4195 = vmul.f32 %v4022, 1.442695
  %v4196 = vpow.pop %v4195
  %v4197 = vmul.f32 %v4023, 1.442695
  %v4198 = vpow.pop %v4197
  %v4199 = vmul.f32 %v4024, 1.442695
  %v4200 = vpow.pop %v4199
  %v4201 = vmul.f32 %v4025, 1.442695
  %v4202 = vpow.pop %v4201
  %v4203 = vmul.f32 %v4026, 1.442695
  %v4204 = vpow.pop %v4203
  %v4205 = vmul.f32 %v4027, 1.442695
  %v4206 = vpow.pop %v4205
  %v4207 = vmul.f32 %v4028, 1.442695
  %v4208 = vpow.pop %v4207
  %v4209 = vmul.f32 %v4029, 1.442695
  %v4210 = vpow.pop %v4209
  %v4211 = vmul.f32 %v4030, 1.442695
  %v4212 = vpow.pop %v4211
  %v4213 = vmul.f32 %v4031, 1.442695
  %v4214 = vpow.pop %v4213
  %v4215 = vmul.f32 %v4032, 1.442695
  %v4216 = vpow.pop %v4215
  %v4217 = vmul.f32 %v4033, 1.442695
  %v4218 = vpow.pop %v4217
  %v4219 = vmul.f32 %v4034, 1.442695
  %v4220 = vpow.pop %v4219
  %v4221 = vmul.f32 %v4035, 1.442695
  %v4222 = vpow.pop %v4221
  %v4223 = vmul.f32 %v4036, 1.442695
  %v4224 = vpow.pop %v4223
  %v4225 = vmul.f32 %v4037, 1.442695
  %v4226 = vpow.pop %v4225
  %v4227 = vmul.f32 %v4038, 1.442695
  %v4228 = vpow.pop %v4227
  %v4229 = vmul.f32 %v4039, 1.442695
  %v4230 = vpow.pop %v4229
  %v4231 = vmul.f32 %v4040, 1.442695
  %v4232 = vpow.pop %v4231
  %v4233 = vmul.f32 %v4041, 1.442695
  %v4234 = vpow.pop %v4233
  %v4235 = vmul.f32 %v4042, 1.442695
  %v4236 = vpow.pop %v4235
  %v4237 = vmul.f32 %v4043, 1.442695
  %v4238 = vpow.pop %v4237
  %v4239 = vmul.f32 %v4044, 1.442695
  %v4240 = vpow.pop %v4239
  %v4241 = vmul.f32 %v4045, 1.442695
  %v4242 = vpow.pop %v4241
  %v4243 = vmul.f32 %v4046, 1.442695
  %v4244 = vpow.pop %v4243
  %v4245 = vmul.f32 %v4047, 1.442695
  %v4246 = vpow.pop %v4245
  %v4247 = vmul.f32 %v4048, 1.442695
  %v4248 = vpow.pop %v4247
  %v4249 = vmul.f32 %v4049, 1.442695
  %v4250 = vpow.pop %v4249
  %v4251 = vmul.f32 %v4050, 1.442695
  %v4252 = vpow.pop %v4251
  %v4253 = vmul.f32 %v4051, 1.442695
  %v4254 = vpow.pop %v4253
  %v4255 = vmul.f32 %v4052, 1.442695
  %v4256 = vpow.pop %v4255
  %v4257 = vmul.f32 %v4053, 1.442695
  %v4258 = vpow.pop %v4257
  %v4259 = vmul.f32 %v4054, 1.442695
  %v4260 = vpow.pop %v4259
  %v4261 = vmul.f32 %v4055, 1.442695
  %v4262 = vpow.pop %v4261
  %v4263 = vmul.f32 %v4056, 1.442695
  %v4264 = vpow.pop %v4263
  %v4265 = vmul.f32 %v4057, 1.442695
  %v4266 = vpow.pop %v4265
  %v4267 = vmul.f32 %v4058, 1.442695
  %v4268 = vpow.pop %v4267
  %v4269 = vmul.f32 %v4059, 1.442695
  %v4270 = vpow.pop %v4269
  %v4271 = vmul.f32 %v4060, 1.442695
  %v4272 = vpow.pop %v4271
  %v4273 = vmul.f32 %v4061, 1.442695
  %v4274 = vpow.pop %v4273
  %v4275 = vmul.f32 %v4062, 1.442695
  %v4276 = vpow.pop %v4275
  %v4277 = vmul.f32 %v4063, 1.442695
  %v4278 = vpow.pop %v4277
  %v4279 = vmul.f32 %v4064, 1.442695
  %v4280 = vpow.pop %v4279
  %v4281 = vmul.f32 %v4065, 1.442695
  %v4282 = vpow.pop %v4281
  %v4283 = vmul.f32 %v4066, 1.442695
  %v4284 = vpow.pop %v4283
  %v4285 = vmul.f32 %v4067, 1.442695
  %v4286 = vpow.pop %v4285
  %v4287 = vmul.f32 %v4068, 1.442695
  %v4288 = vpow.pop %v4287
  %v4289 = vmul.f32 %v4069, 1.442695
  %v4290 = vpow.pop %v4289
  %v4291 = vmul.f32 %v4070, 1.442695
  %v4292 = vpow.pop %v4291
  %v4293 = vmul.f32 %v4071, 1.442695
  %v4294 = vpow.pop %v4293
  %v4295 = vmul.f32 %v4072, 1.442695
  %v4296 = vpow.pop %v4295
  %v4297 = vmul.f32 %v4073, 1.442695
  %v4298 = vpow.pop %v4297
  %v4299 = vmul.f32 %v4074, 1.442695
  %v4300 = vpow.pop %v4299
  %v4301 = vmul.f32 %v4075, 1.442695
  %v4302 = vpow.pop %v4301
  %v4303 = vmul.f32 %v4076, 1.442695
  %v4304 = vpow.pop %v4303
  %v4305 = vmul.f32 %v4077, 1.442695
  %v4306 = vpow.pop %v4305
  %v4307 = vmul.f32 %v4078, 1.442695
  %v4308 = vpow.pop %v4307
  %v4309 = vmul.f32 %v4079, 1.442695
  %v4310 = vpow.pop %v4309
  %v4311 = vmul.f32 %v4080, 1.442695
  %v4312 = vpow.pop %v4311
  %v4313 = vmul.f32 %v4081, 1.442695
  %v4314 = vpow.pop %v4313
  %v4315 = vmul.f32 %v4082, 1.442695
  %v4316 = vpow.pop %v4315
  %v4317 = vmul.f32 %v4083, 1.442695
  %v4318 = vpow.pop %v4317
  %v4319 = vmul.f32 %v4084, 1.442695
  %v4320 = vpow.pop %v4319
  %v4321 = vmul.f32 %v4085, 1.442695
  %v4322 = vpow.pop %v4321
  %v4323 = vmul.f32 %v4086, 1.442695
  %v4324 = vpow.pop %v4323
  %v4325 = vmul.f32 %v4087, 1.442695
  %v4326 = vpow.pop %v4325
  %v4327 = vmul.f32 %v4088, 1.442695
  %v4328 = vpow.pop %v4327
  %v4329 = vmul.f32 %v4089, 1.442695
  %v4330 = vpow.pop %v4329
  %v4331 = vmul.f32 %v4090, 1.442695
  %v4332 = vpow.pop %v4331
  %v4333 = vmul.f32 %v4091, 1.442695
  %v4334 = vpow.pop %v4333
  %v4335 = vmul.f32 %v4092, 1.442695
  %v4336 = vpow.pop %v4335
  %v4337 = vmul.f32 %v4093, 1.442695
  %v4338 = vpow.pop %v4337
  %v4339 = vmul.f32 %v4094, 1.442695
  %v4340 = vpow.pop %v4339
  %v4341 = vmul.f32 %v4095, 1.442695
  %v4342 = vpow.pop %v4341
  %v4343 = vmul.f32 %v4096, 1.442695
  %v4344 = vpow.pop %v4343
  %v4345 = vmul.f32 %v4097, 1.442695
  %v4346 = vpow.pop %v4345
  %v4347 = vmul.f32 %v4098, 1.442695
  %v4348 = vpow.pop %v4347
  %v4349 = vmul.f32 %v4099, 1.442695
  %v4350 = vpow.pop %v4349
  %v4351 = vmul.f32 %v4100, 1.442695
  %v4352 = vpow.pop %v4351
  %v4353 = vmul.f32 %v4101, 1.442695
  %v4354 = vpow.pop %v4353
  %v4355 = vmul.f32 %v4102, 1.442695
  %v4356 = vpow.pop %v4355
  %v4357 = vmul.f32 %v4103, 1.442695
  %v4358 = vpow.pop %v4357
  %v4359 = vmul.f32 %v4104, 1.442695
  %v4360 = vpow.pop %v4359
  %4361 = vadd.xlane.f32.xlu0 %v4106
  %v4362 = vpop.xlane.xlu0 %4361
  %4363 = vadd.xlane.f32.xlu0 %v4108
  %v4364 = vpop.xlane.xlu0 %4363
  %4365 = vadd.xlane.f32.xlu0 %v4110
  %v4366 = vpop.xlane.xlu0 %4365
  %4367 = vadd.xlane.f32.xlu0 %v4112
  %v4368 = vpop.xlane.xlu0 %4367
  %4369 = vadd.xlane.f32.xlu0 %v4114
  %v4370 = vpop.xlane.xlu0 %4369
  %4371 = vadd.xlane.f32.xlu0 %v4116
  %v4372 = vpop.xlane.xlu0 %4371
  %4373 = vadd.xlane.f32.xlu0 %v4118
  %v4374 = vpop.xlane.xlu0 %4373
  %4375 = vadd.xlane.f32.xlu0 %v4120
  %v4376 = vpop.xlane.xlu0 %4375
  %4377 = vadd.xlane.f32.xlu0 %v4122
  %v4378 = vpop.xlane.xlu0 %4377
  %4379 = vadd.xlane.f32.xlu0 %v4124
  %v4380 = vpop.xlane.xlu0 %4379
  %4381 = vadd.xlane.f32.xlu0 %v4126
  %v4382 = vpop.xlane.xlu0 %4381
  %4383 = vadd.xlane.f32.xlu0 %v4128
  %v4384 = vpop.xlane.xlu0 %4383
  %4385 = vadd.xlane.f32.xlu0 %v4130
  %v4386 = vpop.xlane.xlu0 %4385
  %4387 = vadd.xlane.f32.xlu0 %v4132
  %v4388 = vpop.xlane.xlu0 %4387
  %4389 = vadd.xlane.f32.xlu0 %v4134
  %v4390 = vpop.xlane.xlu0 %4389
  %4391 = vadd.xlane.f32.xlu0 %v4136
  %v4392 = vpop.xlane.xlu0 %4391
  %4393 = vadd.xlane.f32.xlu0 %v4138
  %v4394 = vpop.xlane.xlu0 %4393
  %4395 = vadd.xlane.f32.xlu0 %v4140
  %v4396 = vpop.xlane.xlu0 %4395
  %4397 = vadd.xlane.f32.xlu0 %v4142
  %v4398 = vpop.xlane.xlu0 %4397
  %4399 = vadd.xlane.f32.xlu0 %v4144
  %v4400 = vpop.xlane.xlu0 %4399
  %4401 = vadd.xlane.f32.xlu0 %v4146
  %v4402 = vpop.xlane.xlu0 %4401
  %4403 = vadd.xlane.f32.xlu0 %v4148
  %v4404 = vpop.xlane.xlu0 %4403
  %4405 = vadd.xlane.f32.xlu0 %v4150
  %v4406 = vpop.xlane.xlu0 %4405
  %4407 = vadd.xlane.f32.xlu0 %v4152
  %v4408 = vpop.xlane.xlu0 %4407
  %4409 = vadd.xlane.f32.xlu0 %v4154
  %v4410 = vpop.xlane.xlu0 %4409
  %4411 = vadd.xlane.f32.xlu0 %v4156
  %v4412 = vpop.xlane.xlu0 %4411
  %4413 = vadd.xlane.f32.xlu0 %v4158
  %v4414 = vpop.xlane.xlu0 %4413
  %4415 = vadd.xlane.f32.xlu0 %v4160
  %v4416 = vpop.xlane.xlu0 %4415
  %4417 = vadd.xlane.f32.xlu0 %v4162
  %v4418 = vpop.xlane.xlu0 %4417
  %4419 = vadd.xlane.f32.xlu0 %v4164
  %v4420 = vpop.xlane.xlu0 %4419
  %4421 = vadd.xlane.f32.xlu0 %v4166
  %v4422 = vpop.xlane.xlu0 %4421
  %4423 = vadd.xlane.f32.xlu0 %v4168
  %v4424 = vpop.xlane.xlu0 %4423
  %4425 = vadd.xlane.f32.xlu0 %v4170
  %v4426 = vpop.xlane.xlu0 %4425
  %4427 = vadd.xlane.f32.xlu0 %v4172
  %v4428 = vpop.xlane.xlu0 %4427
  %4429 = vadd.xlane.f32.xlu0 %v4174
  %v4430 = vpop.xlane.xlu0 %4429
  %4431 = vadd.xlane.f32.xlu0 %v4176
  %v4432 = vpop.xlane.xlu0 %4431
  %4433 = vadd.xlane.f32.xlu0 %v4178
  %v4434 = vpop.xlane.xlu0 %4433
  %4435 = vadd.xlane.f32.xlu0 %v4180
  %v4436 = vpop.xlane.xlu0 %4435
  %4437 = vadd.xlane.f32.xlu0 %v4182
  %v4438 = vpop.xlane.xlu0 %4437
  %4439 = vadd.xlane.f32.xlu0 %v4184
  %v4440 = vpop.xlane.xlu0 %4439
  %4441 = vadd.xlane.f32.xlu0 %v4186
  %v4442 = vpop.xlane.xlu0 %4441
  %4443 = vadd.xlane.f32.xlu0 %v4188
  %v4444 = vpop.xlane.xlu0 %4443
  %4445 = vadd.xlane.f32.xlu0 %v4190
  %v4446 = vpop.xlane.xlu0 %4445
  %4447 = vadd.xlane.f32.xlu0 %v4192
  %v4448 = vpop.xlane.xlu0 %4447
  %4449 = vadd.xlane.f32.xlu0 %v4194
  %v4450 = vpop.xlane.xlu0 %4449
  %4451 = vadd.xlane.f32.xlu0 %v4196
  %v4452 = vpop.xlane.xlu0 %4451
  %4453 = vadd.xlane.f32.xlu0 %v4198
  %v4454 = vpop.xlane.xlu0 %4453
  %4455 = vadd.xlane.f32.xlu0 %v4200
  %v4456 = vpop.xlane.xlu0 %4455
  %4457 = vadd.xlane.f32.xlu0 %v4202
  %v4458 = vpop.xlane.xlu0 %4457
  %4459 = vadd.xlane.f32.xlu0 %v4204
  %v4460 = vpop.xlane.xlu0 %4459
  %4461 = vadd.xlane.f32.xlu0 %v4206
  %v4462 = vpop.xlane.xlu0 %4461
  %4463 = vadd.xlane.f32.xlu0 %v4208
  %v4464 = vpop.xlane.xlu0 %4463
  %4465 = vadd.xlane.f32.xlu0 %v4210
  %v4466 = vpop.xlane.xlu0 %4465
  %4467 = vadd.xlane.f32.xlu0 %v4212
  %v4468 = vpop.xlane.xlu0 %4467
  %4469 = vadd.xlane.f32.xlu0 %v4214
  %v4470 = vpop.xlane.xlu0 %4469
  %4471 = vadd.xlane.f32.xlu0 %v4216
  %v4472 = vpop.xlane.xlu0 %4471
  %4473 = vadd.xlane.f32.xlu0 %v4218
  %v4474 = vpop.xlane.xlu0 %4473
  %4475 = vadd.xlane.f32.xlu0 %v4220
  %v4476 = vpop.xlane.xlu0 %4475
  %4477 = vadd.xlane.f32.xlu0 %v4222
  %v4478 = vpop.xlane.xlu0 %4477
  %4479 = vadd.xlane.f32.xlu0 %v4224
  %v4480 = vpop.xlane.xlu0 %4479
  %4481 = vadd.xlane.f32.xlu0 %v4226
  %v4482 = vpop.xlane.xlu0 %4481
  %4483 = vadd.xlane.f32.xlu0 %v4228
  %v4484 = vpop.xlane.xlu0 %4483
  %4485 = vadd.xlane.f32.xlu0 %v4230
  %v4486 = vpop.xlane.xlu0 %4485
  %4487 = vadd.xlane.f32.xlu0 %v4232
  %v4488 = vpop.xlane.xlu0 %4487
  %4489 = vadd.xlane.f32.xlu0 %v4234
  %v4490 = vpop.xlane.xlu0 %4489
  %4491 = vadd.xlane.f32.xlu0 %v4236
  %v4492 = vpop.xlane.xlu0 %4491
  %4493 = vadd.xlane.f32.xlu0 %v4238
  %v4494 = vpop.xlane.xlu0 %4493
  %4495 = vadd.xlane.f32.xlu0 %v4240
  %v4496 = vpop.xlane.xlu0 %4495
  %4497 = vadd.xlane.f32.xlu0 %v4242
  %v4498 = vpop.xlane.xlu0 %4497
  %4499 = vadd.xlane.f32.xlu0 %v4244
  %v4500 = vpop.xlane.xlu0 %4499
  %4501 = vadd.xlane.f32.xlu0 %v4246
  %v4502 = vpop.xlane.xlu0 %4501
  %4503 = vadd.xlane.f32.xlu0 %v4248
  %v4504 = vpop.xlane.xlu0 %4503
  %4505 = vadd.xlane.f32.xlu0 %v4250
  %v4506 = vpop.xlane.xlu0 %4505
  %4507 = vadd.xlane.f32.xlu0 %v4252
  %v4508 = vpop.xlane.xlu0 %4507
  %4509 = vadd.xlane.f32.xlu0 %v4254
  %v4510 = vpop.xlane.xlu0 %4509
  %4511 = vadd.xlane.f32.xlu0 %v4256
  %v4512 = vpop.xlane.xlu0 %4511
  %4513 = vadd.xlane.f32.xlu0 %v4258
  %v4514 = vpop.xlane.xlu0 %4513
  %4515 = vadd.xlane.f32.xlu0 %v4260
  %v4516 = vpop.xlane.xlu0 %4515
  %4517 = vadd.xlane.f32.xlu0 %v4262
  %v4518 = vpop.xlane.xlu0 %4517
  %4519 = vadd.xlane.f32.xlu0 %v4264
  %v4520 = vpop.xlane.xlu0 %4519
  %4521 = vadd.xlane.f32.xlu0 %v4266
  %v4522 = vpop.xlane.xlu0 %4521
  %4523 = vadd.xlane.f32.xlu0 %v4268
  %v4524 = vpop.xlane.xlu0 %4523
  %4525 = vadd.xlane.f32.xlu0 %v4270
  %v4526 = vpop.xlane.xlu0 %4525
  %4527 = vadd.xlane.f32.xlu0 %v4272
  %v4528 = vpop.xlane.xlu0 %4527
  %4529 = vadd.xlane.f32.xlu0 %v4274
  %v4530 = vpop.xlane.xlu0 %4529
  %4531 = vadd.xlane.f32.xlu0 %v4276
  %v4532 = vpop.xlane.xlu0 %4531
  %4533 = vadd.xlane.f32.xlu0 %v4278
  %v4534 = vpop.xlane.xlu0 %4533
  %4535 = vadd.xlane.f32.xlu0 %v4280
  %v4536 = vpop.xlane.xlu0 %4535
  %4537 = vadd.xlane.f32.xlu0 %v4282
  %v4538 = vpop.xlane.xlu0 %4537
  %4539 = vadd.xlane.f32.xlu0 %v4284
  %v4540 = vpop.xlane.xlu0 %4539
  %4541 = vadd.xlane.f32.xlu0 %v4286
  %v4542 = vpop.xlane.xlu0 %4541
  %4543 = vadd.xlane.f32.xlu0 %v4288
  %v4544 = vpop.xlane.xlu0 %4543
  %4545 = vadd.xlane.f32.xlu0 %v4290
  %v4546 = vpop.xlane.xlu0 %4545
  %4547 = vadd.xlane.f32.xlu0 %v4292
  %v4548 = vpop.xlane.xlu0 %4547
  %4549 = vadd.xlane.f32.xlu0 %v4294
  %v4550 = vpop.xlane.xlu0 %4549
  %4551 = vadd.xlane.f32.xlu0 %v4296
  %v4552 = vpop.xlane.xlu0 %4551
  %4553 = vadd.xlane.f32.xlu0 %v4298
  %v4554 = vpop.xlane.xlu0 %4553
  %4555 = vadd.xlane.f32.xlu0 %v4300
  %v4556 = vpop.xlane.xlu0 %4555
  %4557 = vadd.xlane.f32.xlu0 %v4302
  %v4558 = vpop.xlane.xlu0 %4557
  %4559 = vadd.xlane.f32.xlu0 %v4304
  %v4560 = vpop.xlane.xlu0 %4559
  %4561 = vadd.xlane.f32.xlu0 %v4306
  %v4562 = vpop.xlane.xlu0 %4561
  %4563 = vadd.xlane.f32.xlu0 %v4308
  %v4564 = vpop.xlane.xlu0 %4563
  %4565 = vadd.xlane.f32.xlu0 %v4310
  %v4566 = vpop.xlane.xlu0 %4565
  %4567 = vadd.xlane.f32.xlu0 %v4312
  %v4568 = vpop.xlane.xlu0 %4567
  %4569 = vadd.xlane.f32.xlu0 %v4314
  %v4570 = vpop.xlane.xlu0 %4569
  %4571 = vadd.xlane.f32.xlu0 %v4316
  %v4572 = vpop.xlane.xlu0 %4571
  %4573 = vadd.xlane.f32.xlu0 %v4318
  %v4574 = vpop.xlane.xlu0 %4573
  %4575 = vadd.xlane.f32.xlu0 %v4320
  %v4576 = vpop.xlane.xlu0 %4575
  %4577 = vadd.xlane.f32.xlu0 %v4322
  %v4578 = vpop.xlane.xlu0 %4577
  %4579 = vadd.xlane.f32.xlu0 %v4324
  %v4580 = vpop.xlane.xlu0 %4579
  %4581 = vadd.xlane.f32.xlu0 %v4326
  %v4582 = vpop.xlane.xlu0 %4581
  %4583 = vadd.xlane.f32.xlu0 %v4328
  %v4584 = vpop.xlane.xlu0 %4583
  %4585 = vadd.xlane.f32.xlu0 %v4330
  %v4586 = vpop.xlane.xlu0 %4585
  %4587 = vadd.xlane.f32.xlu0 %v4332
  %v4588 = vpop.xlane.xlu0 %4587
  %4589 = vadd.xlane.f32.xlu0 %v4334
  %v4590 = vpop.xlane.xlu0 %4589
  %4591 = vadd.xlane.f32.xlu0 %v4336
  %v4592 = vpop.xlane.xlu0 %4591
  %4593 = vadd.xlane.f32.xlu0 %v4338
  %v4594 = vpop.xlane.xlu0 %4593
  %4595 = vadd.xlane.f32.xlu0 %v4340
  %v4596 = vpop.xlane.xlu0 %4595
  %4597 = vadd.xlane.f32.xlu0 %v4342
  %v4598 = vpop.xlane.xlu0 %4597
  %4599 = vadd.xlane.f32.xlu0 %v4344
  %v4600 = vpop.xlane.xlu0 %4599
  %4601 = vadd.xlane.f32.xlu0 %v4346
  %v4602 = vpop.xlane.xlu0 %4601
  %4603 = vadd.xlane.f32.xlu0 %v4348
  %v4604 = vpop.xlane.xlu0 %4603
  %4605 = vadd.xlane.f32.xlu0 %v4350
  %v4606 = vpop.xlane.xlu0 %4605
  %4607 = vadd.xlane.f32.xlu0 %v4352
  %v4608 = vpop.xlane.xlu0 %4607
  %4609 = vadd.xlane.f32.xlu0 %v4354
  %v4610 = vpop.xlane.xlu0 %4609
  %4611 = vadd.xlane.f32.xlu0 %v4356
  %v4612 = vpop.xlane.xlu0 %4611
  %4613 = vadd.xlane.f32.xlu0 %v4358
  %v4614 = vpop.xlane.xlu0 %4613
  %4615 = vadd.xlane.f32.xlu0 %v4360
  %v4616 = vpop.xlane.xlu0 %4615
  %v4617 = vrcp.pop %v4362
  %v4618 = vrcp.pop %v4364
  %v4619 = vrcp.pop %v4366
  %v4620 = vrcp.pop %v4368
  %v4621 = vrcp.pop %v4370
  %v4622 = vrcp.pop %v4372
  %v4623 = vrcp.pop %v4374
  %v4624 = vrcp.pop %v4376
  %v4625 = vrcp.pop %v4378
  %v4626 = vrcp.pop %v4380
  %v4627 = vrcp.pop %v4382
  %v4628 = vrcp.pop %v4384
  %v4629 = vrcp.pop %v4386
  %v4630 = vrcp.pop %v4388
  %v4631 = vrcp.pop %v4390
  %v4632 = vrcp.pop %v4392
  %v4633 = vrcp.pop %v4394
  %v4634 = vrcp.pop %v4396
  %v4635 = vrcp.pop %v4398
  %v4636 = vrcp.pop %v4400
  %v4637 = vrcp.pop %v4402
  %v4638 = vrcp.pop %v4404
  %v4639 = vrcp.pop %v4406
  %v4640 = vrcp.pop %v4408
  %v4641 = vrcp.pop %v4410
  %v4642 = vrcp.pop %v4412
  %v4643 = vrcp.pop %v4414
  %v4644 = vrcp.pop %v4416
  %v4645 = vrcp.pop %v4418
  %v4646 = vrcp.pop %v4420
  %v4647 = vrcp.pop %v4422
  %v4648 = vrcp.pop %v4424
  %v4649 = vrcp.pop %v4426
  %v4650 = vrcp.pop %v4428
  %v4651 = vrcp.pop %v4430
  %v4652 = vrcp.pop %v4432
  %v4653 = vrcp.pop %v4434
  %v4654 = vrcp.pop %v4436
  %v4655 = vrcp.pop %v4438
  %v4656 = vrcp.pop %v4440
  %v4657 = vrcp.pop %v4442
  %v4658 = vrcp.pop %v4444
  %v4659 = vrcp.pop %v4446
  %v4660 = vrcp.pop %v4448
  %v4661 = vrcp.pop %v4450
  %v4662 = vrcp.pop %v4452
  %v4663 = vrcp.pop %v4454
  %v4664 = vrcp.pop %v4456
  %v4665 = vrcp.pop %v4458
  %v4666 = vrcp.pop %v4460
  %v4667 = vrcp.pop %v4462
  %v4668 = vrcp.pop %v4464
  %v4669 = vrcp.pop %v4466
  %v4670 = vrcp.pop %v4468
  %v4671 = vrcp.pop %v4470
  %v4672 = vrcp.pop %v4472
  %v4673 = vrcp.pop %v4474
  %v4674 = vrcp.pop %v4476
  %v4675 = vrcp.pop %v4478
  %v4676 = vrcp.pop %v4480
  %v4677 = vrcp.pop %v4482
  %v4678 = vrcp.pop %v4484
  %v4679 = vrcp.pop %v4486
  %v4680 = vrcp.pop %v4488
  %v4681 = vrcp.pop %v4490
  %v4682 = vrcp.pop %v4492
  %v4683 = vrcp.pop %v4494
  %v4684 = vrcp.pop %v4496
  %v4685 = vrcp.pop %v4498
  %v4686 = vrcp.pop %v4500
  %v4687 = vrcp.pop %v4502
  %v4688 = vrcp.pop %v4504
  %v4689 = vrcp.pop %v4506
  %v4690 = vrcp.pop %v4508
  %v4691 = vrcp.pop %v4510
  %v4692 = vrcp.pop %v4512
  %v4693 = vrcp.pop %v4514
  %v4694 = vrcp.pop %v4516
  %v4695 = vrcp.pop %v4518
  %v4696 = vrcp.pop %v4520
  %v4697 = vrcp.pop %v4522
  %v4698 = vrcp.pop %v4524
  %v4699 = vrcp.pop %v4526
  %v4700 = vrcp.pop %v4528
  %v4701 = vrcp.pop %v4530
  %v4702 = vrcp.pop %v4532
  %v4703 = vrcp.pop %v4534
  %v4704 = vrcp.pop %v4536
  %v4705 = vrcp.pop %v4538
  %v4706 = vrcp.pop %v4540
  %v4707 = vrcp.pop %v4542
  %v4708 = vrcp.pop %v4544
  %v4709 = vrcp.pop %v4546
  %v4710 = vrcp.pop %v4548
  %v4711 = vrcp.pop %v4550
  %v4712 = vrcp.pop %v4552
  %v4713 = vrcp.pop %v4554
  %v4714 = vrcp.pop %v4556
  %v4715 = vrcp.pop %v4558
  %v4716 = vrcp.pop %v4560
  %v4717 = vrcp.pop %v4562
  %v4718 = vrcp.pop %v4564
  %v4719 = vrcp.pop %v4566
  %v4720 = vrcp.pop %v4568
  %v4721 = vrcp.pop %v4570
  %v4722 = vrcp.pop %v4572
  %v4723 = vrcp.pop %v4574
  %v4724 = vrcp.pop %v4576
  %v4725 = vrcp.pop %v4578
  %v4726 = vrcp.pop %v4580
  %v4727 = vrcp.pop %v4582
  %v4728 = vrcp.pop %v4584
  %v4729 = vrcp.pop %v4586
  %v4730 = vrcp.pop %v4588
  %v4731 = vrcp.pop %v4590
  %v4732 = vrcp.pop %v4592
  %v4733 = vrcp.pop %v4594
  %v4734 = vrcp.pop %v4596
  %v4735 = vrcp.pop %v4598
  %v4736 = vrcp.pop %v4600
  %v4737 = vrcp.pop %v4602
  %v4738 = vrcp.pop %v4604
  %v4739 = vrcp.pop %v4606
  %v4740 = vrcp.pop %v4608
  %v4741 = vrcp.pop %v4610
  %v4742 = vrcp.pop %v4612
  %v4743 = vrcp.pop %v4614
  %v4744 = vrcp.pop %v4616
  %v4745 = vmul.f32 %v4106, %v4617
  %v4746 = vmul.f32 %v4108, %v4618
  %v4747 = vmul.f32 %v4110, %v4619
  %v4748 = vmul.f32 %v4112, %v4620
  %v4749 = vmul.f32 %v4114, %v4621
  %v4750 = vmul.f32 %v4116, %v4622
  %v4751 = vmul.f32 %v4118, %v4623
  %v4752 = vmul.f32 %v4120, %v4624
  %v4753 = vmul.f32 %v4122, %v4625
  %v4754 = vmul.f32 %v4124, %v4626
  %v4755 = vmul.f32 %v4126, %v4627
  %v4756 = vmul.f32 %v4128, %v4628
  %v4757 = vmul.f32 %v4130, %v4629
  %v4758 = vmul.f32 %v4132, %v4630
  %v4759 = vmul.f32 %v4134, %v4631
  %v4760 = vmul.f32 %v4136, %v4632
  %v4761 = vmul.f32 %v4138, %v4633
  %v4762 = vmul.f32 %v4140, %v4634
  %v4763 = vmul.f32 %v4142, %v4635
  %v4764 = vmul.f32 %v4144, %v4636
  %v4765 = vmul.f32 %v4146, %v4637
  %v4766 = vmul.f32 %v4148, %v4638
  %v4767 = vmul.f32 %v4150, %v4639
  %v4768 = vmul.f32 %v4152, %v4640
  %v4769 = vmul.f32 %v4154, %v4641
  %v4770 = vmul.f32 %v4156, %v4642
  %v4771 = vmul.f32 %v4158, %v4643
  %v4772 = vmul.f32 %v4160, %v4644
  %v4773 = vmul.f32 %v4162, %v4645
  %v4774 = vmul.f32 %v4164, %v4646
  %v4775 = vmul.f32 %v4166, %v4647
  %v4776 = vmul.f32 %v4168, %v4648
  %v4777 = vmul.f32 %v4170, %v4649
  %v4778 = vmul.f32 %v4172, %v4650
  %v4779 = vmul.f32 %v4174, %v4651
  %v4780 = vmul.f32 %v4176, %v4652
  %v4781 = vmul.f32 %v4178, %v4653
  %v4782 = vmul.f32 %v4180, %v4654
  %v4783 = vmul.f32 %v4182, %v4655
  %v4784 = vmul.f32 %v4184, %v4656
  %v4785 = vmul.f32 %v4186, %v4657
  %v4786 = vmul.f32 %v4188, %v4658
  %v4787 = vmul.f32 %v4190, %v4659
  %v4788 = vmul.f32 %v4192, %v4660
  %v4789 = vmul.f32 %v4194, %v4661
  %v4790 = vmul.f32 %v4196, %v4662
  %v4791 = vmul.f32 %v4198, %v4663
  %v4792 = vmul.f32 %v4200, %v4664
  %v4793 = vmul.f32 %v4202, %v4665
  %v4794 = vmul.f32 %v4204, %v4666
  %v4795 = vmul.f32 %v4206, %v4667
  %v4796 = vmul.f32 %v4208, %v4668
  %v4797 = vmul.f32 %v4210, %v4669
  %v4798 = vmul.f32 %v4212, %v4670
  %v4799 = vmul.f32 %v4214, %v4671
  %v4800 = vmul.f32 %v4216, %v4672
  %v4801 = vmul.f32 %v4218, %v4673
  %v4802 = vmul.f32 %v4220, %v4674
  %v4803 = vmul.f32 %v4222, %v4675
  %v4804 = vmul.f32 %v4224, %v4676
  %v4805 = vmul.f32 %v4226, %v4677
  %v4806 = vmul.f32 %v4228, %v4678
  %v4807 = vmul.f32 %v4230, %v4679
  %v4808 = vmul.f32 %v4232, %v4680
  %v4809 = vmul.f32 %v4234, %v4681
  %v4810 = vmul.f32 %v4236, %v4682
  %v4811 = vmul.f32 %v4238, %v4683
  %v4812 = vmul.f32 %v4240, %v4684
  %v4813 = vmul.f32 %v4242, %v4685
  %v4814 = vmul.f32 %v4244, %v4686
  %v4815 = vmul.f32 %v4246, %v4687
  %v4816 = vmul.f32 %v4248, %v4688
  %v4817 = vmul.f32 %v4250, %v4689
  %v4818 = vmul.f32 %v4252, %v4690
  %v4819 = vmul.f32 %v4254, %v4691
  %v4820 = vmul.f32 %v4256, %v4692
  %v4821 = vmul.f32 %v4258, %v4693
  %v4822 = vmul.f32 %v4260, %v4694
  %v4823 = vmul.f32 %v4262, %v4695
  %v4824 = vmul.f32 %v4264, %v4696
  %v4825 = vmul.f32 %v4266, %v4697
  %v4826 = vmul.f32 %v4268, %v4698
  %v4827 = vmul.f32 %v4270, %v4699
  %v4828 = vmul.f32 %v4272, %v4700
  %v4829 = vmul.f32 %v4274, %v4701
  %v4830 = vmul.f32 %v4276, %v4702
  %v4831 = vmul.f32 %v4278, %v4703
  %v4832 = vmul.f32 %v4280, %v4704
  %v4833 = vmul.f32 %v4282, %v4705
  %v4834 = vmul.f32 %v4284, %v4706
  %v4835 = vmul.f32 %v4286, %v4707
  %v4836 = vmul.f32 %v4288, %v4708
  %v4837 = vmul.f32 %v4290, %v4709
  %v4838 = vmul.f32 %v4292, %v4710
  %v4839 = vmul.f32 %v4294, %v4711
  %v4840 = vmul.f32 %v4296, %v4712
  %v4841 = vmul.f32 %v4298, %v4713
  %v4842 = vmul.f32 %v4300, %v4714
  %v4843 = vmul.f32 %v4302, %v4715
  %v4844 = vmul.f32 %v4304, %v4716
  %v4845 = vmul.f32 %v4306, %v4717
  %v4846 = vmul.f32 %v4308, %v4718
  %v4847 = vmul.f32 %v4310, %v4719
  %v4848 = vmul.f32 %v4312, %v4720
  %v4849 = vmul.f32 %v4314, %v4721
  %v4850 = vmul.f32 %v4316, %v4722
  %v4851 = vmul.f32 %v4318, %v4723
  %v4852 = vmul.f32 %v4320, %v4724
  %v4853 = vmul.f32 %v4322, %v4725
  %v4854 = vmul.f32 %v4324, %v4726
  %v4855 = vmul.f32 %v4326, %v4727
  %v4856 = vmul.f32 %v4328, %v4728
  %v4857 = vmul.f32 %v4330, %v4729
  %v4858 = vmul.f32 %v4332, %v4730
  %v4859 = vmul.f32 %v4334, %v4731
  %v4860 = vmul.f32 %v4336, %v4732
  %v4861 = vmul.f32 %v4338, %v4733
  %v4862 = vmul.f32 %v4340, %v4734
  %v4863 = vmul.f32 %v4342, %v4735
  %v4864 = vmul.f32 %v4344, %v4736
  %v4865 = vmul.f32 %v4346, %v4737
  %v4866 = vmul.f32 %v4348, %v4738
  %v4867 = vmul.f32 %v4350, %v4739
  %v4868 = vmul.f32 %v4352, %v4740
  %v4869 = vmul.f32 %v4354, %v4741
  %v4870 = vmul.f32 %v4356, %v4742
  %v4871 = vmul.f32 %v4358, %v4743
  %v4872 = vmul.f32 %v4360, %v4744
  %4873 = vrot.lane.b32.xlu0 %v1937, 96
  %v4874 = vpop.permute.xlu0 %4873
  %4875 = vrot.lane.b32.xlu0 %v1939, 96
  %v4876 = vpop.permute.xlu0 %4875
  %4877 = vrot.lane.b32.xlu0 %v1942, 96
  %v4878 = vpop.permute.xlu0 %4877
  %4879 = vrot.lane.b32.xlu0 %v1944, 96
  %v4880 = vpop.permute.xlu0 %4879
  %4881 = vrot.lane.b32.xlu0 %v1947, 96
  %v4882 = vpop.permute.xlu0 %4881
  %4883 = vrot.lane.b32.xlu0 %v1949, 96
  %v4884 = vpop.permute.xlu0 %4883
  %4885 = vrot.lane.b32.xlu0 %v1952, 96
  %v4886 = vpop.permute.xlu0 %4885
  %4887 = vrot.lane.b32.xlu0 %v1954, 96
  %v4888 = vpop.permute.xlu0 %4887
  %4889 = vrot.lane.b32.xlu0 %v1957, 96
  %v4890 = vpop.permute.xlu0 %4889
  %4891 = vrot.lane.b32.xlu0 %v1959, 96
  %v4892 = vpop.permute.xlu0 %4891
  %4893 = vrot.lane.b32.xlu0 %v1962, 96
  %v4894 = vpop.permute.xlu0 %4893
  %4895 = vrot.lane.b32.xlu0 %v1964, 96
  %v4896 = vpop.permute.xlu0 %4895
  %4897 = vrot.lane.b32.xlu0 %v1967, 96
  %v4898 = vpop.permute.xlu0 %4897
  %4899 = vrot.lane.b32.xlu0 %v1969, 96
  %v4900 = vpop.permute.xlu0 %4899
  %4901 = vrot.lane.b32.xlu0 %v1972, 96
  %v4902 = vpop.permute.xlu0 %4901
  %4903 = vrot.lane.b32.xlu0 %v1974, 96
  %v4904 = vpop.permute.xlu0 %4903
  %4921 = vmatpush.msra.mxu0 %v4904
  %4922 = vmatpush.msra.mxu0 %v4902
  %4923 = vmatpush.msra.mxu0 %v4900
  %4924 = vmatpush.msra.mxu0 %v4898
  %4925 = vmatpush.msra.mxu0 %v4896
  %4926 = vmatpush.msra.mxu0 %v4894
  %4927 = vmatpush.msra.mxu0 %v4892
  %4928 = vmatpush.msra.mxu0 %v4890
  %4929 = vmatpush.msra.mxu0 %v4888
  %4930 = vmatpush.msra.mxu0 %v4886
  %4931 = vmatpush.msra.mxu0 %v4884
  %4932 = vmatpush.msra.mxu0 %v4882
  %4933 = vmatpush.msra.mxu0 %v4880
  %4934 = vmatpush.msra.mxu0 %v4878
  %4935 = vmatpush.msra.mxu0 %v4876
  %4936 = vmatpush.msra.mxu0 %v4874
  %4937 = vmatmul.f32.gmra.mxu0 %v4745
  %v4938 = vpop.f32.mrf.mxu0
  %v4939 = vadd.f32 0.0, %v4938
  %4940 = vmatmul.f32.gmra.mxu0 %v4746
  %v4941 = vpop.f32.mrf.mxu0
  %v4942 = vadd.f32 0.0, %v4941
  %4943 = vmatmul.f32.gmra.mxu0 %v4747
  %v4944 = vpop.f32.mrf.mxu0
  %v4945 = vadd.f32 0.0, %v4944
  %4946 = vmatmul.f32.gmra.mxu0 %v4748
  %v4947 = vpop.f32.mrf.mxu0
  %v4948 = vadd.f32 0.0, %v4947
  %4949 = vmatmul.f32.gmra.mxu0 %v4749
  %v4950 = vpop.f32.mrf.mxu0
  %v4951 = vadd.f32 0.0, %v4950
  %4952 = vmatmul.f32.gmra.mxu0 %v4750
  %v4953 = vpop.f32.mrf.mxu0
  %v4954 = vadd.f32 0.0, %v4953
  %4955 = vmatmul.f32.gmra.mxu0 %v4751
  %v4956 = vpop.f32.mrf.mxu0
  %v4957 = vadd.f32 0.0, %v4956
  %4958 = vmatmul.f32.gmra.mxu0 %v4752
  %v4959 = vpop.f32.mrf.mxu0
  %v4960 = vadd.f32 0.0, %v4959
  %4961 = vmatmul.f32.gmra.mxu0 %v4753
  %v4962 = vpop.f32.mrf.mxu0
  %v4963 = vadd.f32 0.0, %v4962
  %4964 = vmatmul.f32.gmra.mxu0 %v4754
  %v4965 = vpop.f32.mrf.mxu0
  %v4966 = vadd.f32 0.0, %v4965
  %4967 = vmatmul.f32.gmra.mxu0 %v4755
  %v4968 = vpop.f32.mrf.mxu0
  %v4969 = vadd.f32 0.0, %v4968
  %4970 = vmatmul.f32.gmra.mxu0 %v4756
  %v4971 = vpop.f32.mrf.mxu0
  %v4972 = vadd.f32 0.0, %v4971
  %4973 = vmatmul.f32.gmra.mxu0 %v4757
  %v4974 = vpop.f32.mrf.mxu0
  %v4975 = vadd.f32 0.0, %v4974
  %4976 = vmatmul.f32.gmra.mxu0 %v4758
  %v4977 = vpop.f32.mrf.mxu0
  %v4978 = vadd.f32 0.0, %v4977
  %4979 = vmatmul.f32.gmra.mxu0 %v4759
  %v4980 = vpop.f32.mrf.mxu0
  %v4981 = vadd.f32 0.0, %v4980
  %4982 = vmatmul.f32.gmra.mxu0 %v4760
  %v4983 = vpop.f32.mrf.mxu0
  %v4984 = vadd.f32 0.0, %v4983
  %4985 = vdwg.mxu0
  %4986 = vrot.lane.b32.xlu0 %v1977, 96
  %v4987 = vpop.permute.xlu0 %4986
  %4988 = vrot.lane.b32.xlu0 %v1979, 96
  %v4989 = vpop.permute.xlu0 %4988
  %4990 = vrot.lane.b32.xlu0 %v1982, 96
  %v4991 = vpop.permute.xlu0 %4990
  %4992 = vrot.lane.b32.xlu0 %v1984, 96
  %v4993 = vpop.permute.xlu0 %4992
  %4994 = vrot.lane.b32.xlu0 %v1987, 96
  %v4995 = vpop.permute.xlu0 %4994
  %4996 = vrot.lane.b32.xlu0 %v1989, 96
  %v4997 = vpop.permute.xlu0 %4996
  %4998 = vrot.lane.b32.xlu0 %v1992, 96
  %v4999 = vpop.permute.xlu0 %4998
  %5000 = vrot.lane.b32.xlu0 %v1994, 96
  %v5001 = vpop.permute.xlu0 %5000
  %5002 = vrot.lane.b32.xlu0 %v1997, 96
  %v5003 = vpop.permute.xlu0 %5002
  %5004 = vrot.lane.b32.xlu0 %v1999, 96
  %v5005 = vpop.permute.xlu0 %5004
  %5006 = vrot.lane.b32.xlu0 %v2002, 96
  %v5007 = vpop.permute.xlu0 %5006
  %5008 = vrot.lane.b32.xlu0 %v2004, 96
  %v5009 = vpop.permute.xlu0 %5008
  %5010 = vrot.lane.b32.xlu0 %v2007, 96
  %v5011 = vpop.permute.xlu0 %5010
  %5012 = vrot.lane.b32.xlu0 %v2009, 96
  %v5013 = vpop.permute.xlu0 %5012
  %5014 = vrot.lane.b32.xlu0 %v2012, 96
  %v5015 = vpop.permute.xlu0 %5014
  %5016 = vrot.lane.b32.xlu0 %v2014, 96
  %v5017 = vpop.permute.xlu0 %5016
  %5034 = vmatpush.msra.mxu0 %v5017
  %5035 = vmatpush.msra.mxu0 %v5015
  %5036 = vmatpush.msra.mxu0 %v5013
  %5037 = vmatpush.msra.mxu0 %v5011
  %5038 = vmatpush.msra.mxu0 %v5009
  %5039 = vmatpush.msra.mxu0 %v5007
  %5040 = vmatpush.msra.mxu0 %v5005
  %5041 = vmatpush.msra.mxu0 %v5003
  %5042 = vmatpush.msra.mxu0 %v5001
  %5043 = vmatpush.msra.mxu0 %v4999
  %5044 = vmatpush.msra.mxu0 %v4997
  %5045 = vmatpush.msra.mxu0 %v4995
  %5046 = vmatpush.msra.mxu0 %v4993
  %5047 = vmatpush.msra.mxu0 %v4991
  %5048 = vmatpush.msra.mxu0 %v4989
  %5049 = vmatpush.msra.mxu0 %v4987
  %5050 = vmatmul.f32.gmra.mxu0 %v4761
  %v5051 = vpop.f32.mrf.mxu0
  %v5052 = vadd.f32 0.0, %v5051
  %5053 = vmatmul.f32.gmra.mxu0 %v4762
  %v5054 = vpop.f32.mrf.mxu0
  %v5055 = vadd.f32 0.0, %v5054
  %5056 = vmatmul.f32.gmra.mxu0 %v4763
  %v5057 = vpop.f32.mrf.mxu0
  %v5058 = vadd.f32 0.0, %v5057
  %5059 = vmatmul.f32.gmra.mxu0 %v4764
  %v5060 = vpop.f32.mrf.mxu0
  %v5061 = vadd.f32 0.0, %v5060
  %5062 = vmatmul.f32.gmra.mxu0 %v4765
  %v5063 = vpop.f32.mrf.mxu0
  %v5064 = vadd.f32 0.0, %v5063
  %5065 = vmatmul.f32.gmra.mxu0 %v4766
  %v5066 = vpop.f32.mrf.mxu0
  %v5067 = vadd.f32 0.0, %v5066
  %5068 = vmatmul.f32.gmra.mxu0 %v4767
  %v5069 = vpop.f32.mrf.mxu0
  %v5070 = vadd.f32 0.0, %v5069
  %5071 = vmatmul.f32.gmra.mxu0 %v4768
  %v5072 = vpop.f32.mrf.mxu0
  %v5073 = vadd.f32 0.0, %v5072
  %5074 = vmatmul.f32.gmra.mxu0 %v4769
  %v5075 = vpop.f32.mrf.mxu0
  %v5076 = vadd.f32 0.0, %v5075
  %5077 = vmatmul.f32.gmra.mxu0 %v4770
  %v5078 = vpop.f32.mrf.mxu0
  %v5079 = vadd.f32 0.0, %v5078
  %5080 = vmatmul.f32.gmra.mxu0 %v4771
  %v5081 = vpop.f32.mrf.mxu0
  %v5082 = vadd.f32 0.0, %v5081
  %5083 = vmatmul.f32.gmra.mxu0 %v4772
  %v5084 = vpop.f32.mrf.mxu0
  %v5085 = vadd.f32 0.0, %v5084
  %5086 = vmatmul.f32.gmra.mxu0 %v4773
  %v5087 = vpop.f32.mrf.mxu0
  %v5088 = vadd.f32 0.0, %v5087
  %5089 = vmatmul.f32.gmra.mxu0 %v4774
  %v5090 = vpop.f32.mrf.mxu0
  %v5091 = vadd.f32 0.0, %v5090
  %5092 = vmatmul.f32.gmra.mxu0 %v4775
  %v5093 = vpop.f32.mrf.mxu0
  %v5094 = vadd.f32 0.0, %v5093
  %5095 = vmatmul.f32.gmra.mxu0 %v4776
  %v5096 = vpop.f32.mrf.mxu0
  %v5097 = vadd.f32 0.0, %v5096
  %5098 = vdwg.mxu0
  %5099 = vrot.lane.b32.xlu0 %v2305, 96
  %v5100 = vpop.permute.xlu0 %5099
  %5101 = vrot.lane.b32.xlu0 %v2307, 96
  %v5102 = vpop.permute.xlu0 %5101
  %5103 = vrot.lane.b32.xlu0 %v2309, 96
  %v5104 = vpop.permute.xlu0 %5103
  %5105 = vrot.lane.b32.xlu0 %v2311, 96
  %v5106 = vpop.permute.xlu0 %5105
  %5107 = vrot.lane.b32.xlu0 %v2313, 96
  %v5108 = vpop.permute.xlu0 %5107
  %5109 = vrot.lane.b32.xlu0 %v2315, 96
  %v5110 = vpop.permute.xlu0 %5109
  %5111 = vrot.lane.b32.xlu0 %v2317, 96
  %v5112 = vpop.permute.xlu0 %5111
  %5113 = vrot.lane.b32.xlu0 %v2319, 96
  %v5114 = vpop.permute.xlu0 %5113
  %5115 = vrot.lane.b32.xlu0 %v2321, 96
  %v5116 = vpop.permute.xlu0 %5115
  %5117 = vrot.lane.b32.xlu0 %v2323, 96
  %v5118 = vpop.permute.xlu0 %5117
  %5119 = vrot.lane.b32.xlu0 %v2325, 96
  %v5120 = vpop.permute.xlu0 %5119
  %5121 = vrot.lane.b32.xlu0 %v2327, 96
  %v5122 = vpop.permute.xlu0 %5121
  %5123 = vrot.lane.b32.xlu0 %v2329, 96
  %v5124 = vpop.permute.xlu0 %5123
  %5125 = vrot.lane.b32.xlu0 %v2331, 96
  %v5126 = vpop.permute.xlu0 %5125
  %5127 = vrot.lane.b32.xlu0 %v2333, 96
  %v5128 = vpop.permute.xlu0 %5127
  %5129 = vrot.lane.b32.xlu0 %v2335, 96
  %v5130 = vpop.permute.xlu0 %5129
  %5147 = vmatpush.msra.mxu0 %v5130
  %5148 = vmatpush.msra.mxu0 %v5128
  %5149 = vmatpush.msra.mxu0 %v5126
  %5150 = vmatpush.msra.mxu0 %v5124
  %5151 = vmatpush.msra.mxu0 %v5122
  %5152 = vmatpush.msra.mxu0 %v5120
  %5153 = vmatpush.msra.mxu0 %v5118
  %5154 = vmatpush.msra.mxu0 %v5116
  %5155 = vmatpush.msra.mxu0 %v5114
  %5156 = vmatpush.msra.mxu0 %v5112
  %5157 = vmatpush.msra.mxu0 %v5110
  %5158 = vmatpush.msra.mxu0 %v5108
  %5159 = vmatpush.msra.mxu0 %v5106
  %5160 = vmatpush.msra.mxu0 %v5104
  %5161 = vmatpush.msra.mxu0 %v5102
  %5162 = vmatpush.msra.mxu0 %v5100
  %5163 = vmatmul.f32.gmra.mxu0 %v4777
  %v5164 = vpop.f32.mrf.mxu0
  %v5165 = vadd.f32 0.0, %v5164
  %5166 = vmatmul.f32.gmra.mxu0 %v4778
  %v5167 = vpop.f32.mrf.mxu0
  %v5168 = vadd.f32 0.0, %v5167
  %5169 = vmatmul.f32.gmra.mxu0 %v4779
  %v5170 = vpop.f32.mrf.mxu0
  %v5171 = vadd.f32 0.0, %v5170
  %5172 = vmatmul.f32.gmra.mxu0 %v4780
  %v5173 = vpop.f32.mrf.mxu0
  %v5174 = vadd.f32 0.0, %v5173
  %5175 = vmatmul.f32.gmra.mxu0 %v4781
  %v5176 = vpop.f32.mrf.mxu0
  %v5177 = vadd.f32 0.0, %v5176
  %5178 = vmatmul.f32.gmra.mxu0 %v4782
  %v5179 = vpop.f32.mrf.mxu0
  %v5180 = vadd.f32 0.0, %v5179
  %5181 = vmatmul.f32.gmra.mxu0 %v4783
  %v5182 = vpop.f32.mrf.mxu0
  %v5183 = vadd.f32 0.0, %v5182
  %5184 = vmatmul.f32.gmra.mxu0 %v4784
  %v5185 = vpop.f32.mrf.mxu0
  %v5186 = vadd.f32 0.0, %v5185
  %5187 = vmatmul.f32.gmra.mxu0 %v4785
  %v5188 = vpop.f32.mrf.mxu0
  %v5189 = vadd.f32 0.0, %v5188
  %5190 = vmatmul.f32.gmra.mxu0 %v4786
  %v5191 = vpop.f32.mrf.mxu0
  %v5192 = vadd.f32 0.0, %v5191
  %5193 = vmatmul.f32.gmra.mxu0 %v4787
  %v5194 = vpop.f32.mrf.mxu0
  %v5195 = vadd.f32 0.0, %v5194
  %5196 = vmatmul.f32.gmra.mxu0 %v4788
  %v5197 = vpop.f32.mrf.mxu0
  %v5198 = vadd.f32 0.0, %v5197
  %5199 = vmatmul.f32.gmra.mxu0 %v4789
  %v5200 = vpop.f32.mrf.mxu0
  %v5201 = vadd.f32 0.0, %v5200
  %5202 = vmatmul.f32.gmra.mxu0 %v4790
  %v5203 = vpop.f32.mrf.mxu0
  %v5204 = vadd.f32 0.0, %v5203
  %5205 = vmatmul.f32.gmra.mxu0 %v4791
  %v5206 = vpop.f32.mrf.mxu0
  %v5207 = vadd.f32 0.0, %v5206
  %5208 = vmatmul.f32.gmra.mxu0 %v4792
  %v5209 = vpop.f32.mrf.mxu0
  %v5210 = vadd.f32 0.0, %v5209
  %5211 = vdwg.mxu0
  %5212 = vrot.lane.b32.xlu0 %v2337, 96
  %v5213 = vpop.permute.xlu0 %5212
  %5214 = vrot.lane.b32.xlu0 %v2339, 96
  %v5215 = vpop.permute.xlu0 %5214
  %5216 = vrot.lane.b32.xlu0 %v2341, 96
  %v5217 = vpop.permute.xlu0 %5216
  %5218 = vrot.lane.b32.xlu0 %v2343, 96
  %v5219 = vpop.permute.xlu0 %5218
  %5220 = vrot.lane.b32.xlu0 %v2345, 96
  %v5221 = vpop.permute.xlu0 %5220
  %5222 = vrot.lane.b32.xlu0 %v2347, 96
  %v5223 = vpop.permute.xlu0 %5222
  %5224 = vrot.lane.b32.xlu0 %v2349, 96
  %v5225 = vpop.permute.xlu0 %5224
  %5226 = vrot.lane.b32.xlu0 %v2351, 96
  %v5227 = vpop.permute.xlu0 %5226
  %5228 = vrot.lane.b32.xlu0 %v2353, 96
  %v5229 = vpop.permute.xlu0 %5228
  %5230 = vrot.lane.b32.xlu0 %v2355, 96
  %v5231 = vpop.permute.xlu0 %5230
  %5232 = vrot.lane.b32.xlu0 %v2357, 96
  %v5233 = vpop.permute.xlu0 %5232
  %5234 = vrot.lane.b32.xlu0 %v2359, 96
  %v5235 = vpop.permute.xlu0 %5234
  %5236 = vrot.lane.b32.xlu0 %v2361, 96
  %v5237 = vpop.permute.xlu0 %5236
  %5238 = vrot.lane.b32.xlu0 %v2363, 96
  %v5239 = vpop.permute.xlu0 %5238
  %5240 = vrot.lane.b32.xlu0 %v2365, 96
  %v5241 = vpop.permute.xlu0 %5240
  %5242 = vrot.lane.b32.xlu0 %v2367, 96
  %v5243 = vpop.permute.xlu0 %5242
  %5260 = vmatpush.msra.mxu0 %v5243
  %5261 = vmatpush.msra.mxu0 %v5241
  %5262 = vmatpush.msra.mxu0 %v5239
  %5263 = vmatpush.msra.mxu0 %v5237
  %5264 = vmatpush.msra.mxu0 %v5235
  %5265 = vmatpush.msra.mxu0 %v5233
  %5266 = vmatpush.msra.mxu0 %v5231
  %5267 = vmatpush.msra.mxu0 %v5229
  %5268 = vmatpush.msra.mxu0 %v5227
  %5269 = vmatpush.msra.mxu0 %v5225
  %5270 = vmatpush.msra.mxu0 %v5223
  %5271 = vmatpush.msra.mxu0 %v5221
  %5272 = vmatpush.msra.mxu0 %v5219
  %5273 = vmatpush.msra.mxu0 %v5217
  %5274 = vmatpush.msra.mxu0 %v5215
  %5275 = vmatpush.msra.mxu0 %v5213
  %5276 = vmatmul.f32.gmra.mxu0 %v4793
  %v5277 = vpop.f32.mrf.mxu0
  %v5278 = vadd.f32 0.0, %v5277
  %5279 = vmatmul.f32.gmra.mxu0 %v4794
  %v5280 = vpop.f32.mrf.mxu0
  %v5281 = vadd.f32 0.0, %v5280
  %5282 = vmatmul.f32.gmra.mxu0 %v4795
  %v5283 = vpop.f32.mrf.mxu0
  %v5284 = vadd.f32 0.0, %v5283
  %5285 = vmatmul.f32.gmra.mxu0 %v4796
  %v5286 = vpop.f32.mrf.mxu0
  %v5287 = vadd.f32 0.0, %v5286
  %5288 = vmatmul.f32.gmra.mxu0 %v4797
  %v5289 = vpop.f32.mrf.mxu0
  %v5290 = vadd.f32 0.0, %v5289
  %5291 = vmatmul.f32.gmra.mxu0 %v4798
  %v5292 = vpop.f32.mrf.mxu0
  %v5293 = vadd.f32 0.0, %v5292
  %5294 = vmatmul.f32.gmra.mxu0 %v4799
  %v5295 = vpop.f32.mrf.mxu0
  %v5296 = vadd.f32 0.0, %v5295
  %5297 = vmatmul.f32.gmra.mxu0 %v4800
  %v5298 = vpop.f32.mrf.mxu0
  %v5299 = vadd.f32 0.0, %v5298
  %5300 = vmatmul.f32.gmra.mxu0 %v4801
  %v5301 = vpop.f32.mrf.mxu0
  %v5302 = vadd.f32 0.0, %v5301
  %5303 = vmatmul.f32.gmra.mxu0 %v4802
  %v5304 = vpop.f32.mrf.mxu0
  %v5305 = vadd.f32 0.0, %v5304
  %5306 = vmatmul.f32.gmra.mxu0 %v4803
  %v5307 = vpop.f32.mrf.mxu0
  %v5308 = vadd.f32 0.0, %v5307
  %5309 = vmatmul.f32.gmra.mxu0 %v4804
  %v5310 = vpop.f32.mrf.mxu0
  %v5311 = vadd.f32 0.0, %v5310
  %5312 = vmatmul.f32.gmra.mxu0 %v4805
  %v5313 = vpop.f32.mrf.mxu0
  %v5314 = vadd.f32 0.0, %v5313
  %5315 = vmatmul.f32.gmra.mxu0 %v4806
  %v5316 = vpop.f32.mrf.mxu0
  %v5317 = vadd.f32 0.0, %v5316
  %5318 = vmatmul.f32.gmra.mxu0 %v4807
  %v5319 = vpop.f32.mrf.mxu0
  %v5320 = vadd.f32 0.0, %v5319
  %5321 = vmatmul.f32.gmra.mxu0 %v4808
  %v5322 = vpop.f32.mrf.mxu0
  %v5323 = vadd.f32 0.0, %v5322
  %5324 = vdwg.mxu0
  %5325 = vrot.lane.b32.xlu0 %v2369, 96
  %v5326 = vpop.permute.xlu0 %5325
  %5327 = vrot.lane.b32.xlu0 %v2371, 96
  %v5328 = vpop.permute.xlu0 %5327
  %5329 = vrot.lane.b32.xlu0 %v2373, 96
  %v5330 = vpop.permute.xlu0 %5329
  %5331 = vrot.lane.b32.xlu0 %v2375, 96
  %v5332 = vpop.permute.xlu0 %5331
  %5333 = vrot.lane.b32.xlu0 %v2377, 96
  %v5334 = vpop.permute.xlu0 %5333
  %5335 = vrot.lane.b32.xlu0 %v2379, 96
  %v5336 = vpop.permute.xlu0 %5335
  %5337 = vrot.lane.b32.xlu0 %v2381, 96
  %v5338 = vpop.permute.xlu0 %5337
  %5339 = vrot.lane.b32.xlu0 %v2383, 96
  %v5340 = vpop.permute.xlu0 %5339
  %5341 = vrot.lane.b32.xlu0 %v2385, 96
  %v5342 = vpop.permute.xlu0 %5341
  %5343 = vrot.lane.b32.xlu0 %v2387, 96
  %v5344 = vpop.permute.xlu0 %5343
  %5345 = vrot.lane.b32.xlu0 %v2389, 96
  %v5346 = vpop.permute.xlu0 %5345
  %5347 = vrot.lane.b32.xlu0 %v2391, 96
  %v5348 = vpop.permute.xlu0 %5347
  %5349 = vrot.lane.b32.xlu0 %v2393, 96
  %v5350 = vpop.permute.xlu0 %5349
  %5351 = vrot.lane.b32.xlu0 %v2395, 96
  %v5352 = vpop.permute.xlu0 %5351
  %5353 = vrot.lane.b32.xlu0 %v2397, 96
  %v5354 = vpop.permute.xlu0 %5353
  %5355 = vrot.lane.b32.xlu0 %v2399, 96
  %v5356 = vpop.permute.xlu0 %5355
  %5373 = vmatpush.msra.mxu0 %v5356
  %5374 = vmatpush.msra.mxu0 %v5354
  %5375 = vmatpush.msra.mxu0 %v5352
  %5376 = vmatpush.msra.mxu0 %v5350
  %5377 = vmatpush.msra.mxu0 %v5348
  %5378 = vmatpush.msra.mxu0 %v5346
  %5379 = vmatpush.msra.mxu0 %v5344
  %5380 = vmatpush.msra.mxu0 %v5342
  %5381 = vmatpush.msra.mxu0 %v5340
  %5382 = vmatpush.msra.mxu0 %v5338
  %5383 = vmatpush.msra.mxu0 %v5336
  %5384 = vmatpush.msra.mxu0 %v5334
  %5385 = vmatpush.msra.mxu0 %v5332
  %5386 = vmatpush.msra.mxu0 %v5330
  %5387 = vmatpush.msra.mxu0 %v5328
  %5388 = vmatpush.msra.mxu0 %v5326
  %5389 = vmatmul.f32.gmra.mxu0 %v4809
  %v5390 = vpop.f32.mrf.mxu0
  %v5391 = vadd.f32 0.0, %v5390
  %5392 = vmatmul.f32.gmra.mxu0 %v4810
  %v5393 = vpop.f32.mrf.mxu0
  %v5394 = vadd.f32 0.0, %v5393
  %5395 = vmatmul.f32.gmra.mxu0 %v4811
  %v5396 = vpop.f32.mrf.mxu0
  %v5397 = vadd.f32 0.0, %v5396
  %5398 = vmatmul.f32.gmra.mxu0 %v4812
  %v5399 = vpop.f32.mrf.mxu0
  %v5400 = vadd.f32 0.0, %v5399
  %5401 = vmatmul.f32.gmra.mxu0 %v4813
  %v5402 = vpop.f32.mrf.mxu0
  %v5403 = vadd.f32 0.0, %v5402
  %5404 = vmatmul.f32.gmra.mxu0 %v4814
  %v5405 = vpop.f32.mrf.mxu0
  %v5406 = vadd.f32 0.0, %v5405
  %5407 = vmatmul.f32.gmra.mxu0 %v4815
  %v5408 = vpop.f32.mrf.mxu0
  %v5409 = vadd.f32 0.0, %v5408
  %5410 = vmatmul.f32.gmra.mxu0 %v4816
  %v5411 = vpop.f32.mrf.mxu0
  %v5412 = vadd.f32 0.0, %v5411
  %5413 = vmatmul.f32.gmra.mxu0 %v4817
  %v5414 = vpop.f32.mrf.mxu0
  %v5415 = vadd.f32 0.0, %v5414
  %5416 = vmatmul.f32.gmra.mxu0 %v4818
  %v5417 = vpop.f32.mrf.mxu0
  %v5418 = vadd.f32 0.0, %v5417
  %5419 = vmatmul.f32.gmra.mxu0 %v4819
  %v5420 = vpop.f32.mrf.mxu0
  %v5421 = vadd.f32 0.0, %v5420
  %5422 = vmatmul.f32.gmra.mxu0 %v4820
  %v5423 = vpop.f32.mrf.mxu0
  %v5424 = vadd.f32 0.0, %v5423
  %5425 = vmatmul.f32.gmra.mxu0 %v4821
  %v5426 = vpop.f32.mrf.mxu0
  %v5427 = vadd.f32 0.0, %v5426
  %5428 = vmatmul.f32.gmra.mxu0 %v4822
  %v5429 = vpop.f32.mrf.mxu0
  %v5430 = vadd.f32 0.0, %v5429
  %5431 = vmatmul.f32.gmra.mxu0 %v4823
  %v5432 = vpop.f32.mrf.mxu0
  %v5433 = vadd.f32 0.0, %v5432
  %5434 = vmatmul.f32.gmra.mxu0 %v4824
  %v5435 = vpop.f32.mrf.mxu0
  %v5436 = vadd.f32 0.0, %v5435
  %5437 = vdwg.mxu0
  %5438 = vrot.lane.b32.xlu0 %v2401, 96
  %v5439 = vpop.permute.xlu0 %5438
  %5440 = vrot.lane.b32.xlu0 %v2403, 96
  %v5441 = vpop.permute.xlu0 %5440
  %5442 = vrot.lane.b32.xlu0 %v2405, 96
  %v5443 = vpop.permute.xlu0 %5442
  %5444 = vrot.lane.b32.xlu0 %v2407, 96
  %v5445 = vpop.permute.xlu0 %5444
  %5446 = vrot.lane.b32.xlu0 %v2409, 96
  %v5447 = vpop.permute.xlu0 %5446
  %5448 = vrot.lane.b32.xlu0 %v2411, 96
  %v5449 = vpop.permute.xlu0 %5448
  %5450 = vrot.lane.b32.xlu0 %v2413, 96
  %v5451 = vpop.permute.xlu0 %5450
  %5452 = vrot.lane.b32.xlu0 %v2415, 96
  %v5453 = vpop.permute.xlu0 %5452
  %5454 = vrot.lane.b32.xlu0 %v2417, 96
  %v5455 = vpop.permute.xlu0 %5454
  %5456 = vrot.lane.b32.xlu0 %v2419, 96
  %v5457 = vpop.permute.xlu0 %5456
  %5458 = vrot.lane.b32.xlu0 %v2421, 96
  %v5459 = vpop.permute.xlu0 %5458
  %5460 = vrot.lane.b32.xlu0 %v2423, 96
  %v5461 = vpop.permute.xlu0 %5460
  %5462 = vrot.lane.b32.xlu0 %v2425, 96
  %v5463 = vpop.permute.xlu0 %5462
  %5464 = vrot.lane.b32.xlu0 %v2427, 96
  %v5465 = vpop.permute.xlu0 %5464
  %5466 = vrot.lane.b32.xlu0 %v2429, 96
  %v5467 = vpop.permute.xlu0 %5466
  %5468 = vrot.lane.b32.xlu0 %v2431, 96
  %v5469 = vpop.permute.xlu0 %5468
  %5486 = vmatpush.msra.mxu0 %v5469
  %5487 = vmatpush.msra.mxu0 %v5467
  %5488 = vmatpush.msra.mxu0 %v5465
  %5489 = vmatpush.msra.mxu0 %v5463
  %5490 = vmatpush.msra.mxu0 %v5461
  %5491 = vmatpush.msra.mxu0 %v5459
  %5492 = vmatpush.msra.mxu0 %v5457
  %5493 = vmatpush.msra.mxu0 %v5455
  %5494 = vmatpush.msra.mxu0 %v5453
  %5495 = vmatpush.msra.mxu0 %v5451
  %5496 = vmatpush.msra.mxu0 %v5449
  %5497 = vmatpush.msra.mxu0 %v5447
  %5498 = vmatpush.msra.mxu0 %v5445
  %5499 = vmatpush.msra.mxu0 %v5443
  %5500 = vmatpush.msra.mxu0 %v5441
  %5501 = vmatpush.msra.mxu0 %v5439
  %5502 = vmatmul.f32.gmra.mxu0 %v4825
  %v5503 = vpop.f32.mrf.mxu0
  %v5504 = vadd.f32 0.0, %v5503
  %5505 = vmatmul.f32.gmra.mxu0 %v4826
  %v5506 = vpop.f32.mrf.mxu0
  %v5507 = vadd.f32 0.0, %v5506
  %5508 = vmatmul.f32.gmra.mxu0 %v4827
  %v5509 = vpop.f32.mrf.mxu0
  %v5510 = vadd.f32 0.0, %v5509
  %5511 = vmatmul.f32.gmra.mxu0 %v4828
  %v5512 = vpop.f32.mrf.mxu0
  %v5513 = vadd.f32 0.0, %v5512
  %5514 = vmatmul.f32.gmra.mxu0 %v4829
  %v5515 = vpop.f32.mrf.mxu0
  %v5516 = vadd.f32 0.0, %v5515
  %5517 = vmatmul.f32.gmra.mxu0 %v4830
  %v5518 = vpop.f32.mrf.mxu0
  %v5519 = vadd.f32 0.0, %v5518
  %5520 = vmatmul.f32.gmra.mxu0 %v4831
  %v5521 = vpop.f32.mrf.mxu0
  %v5522 = vadd.f32 0.0, %v5521
  %5523 = vmatmul.f32.gmra.mxu0 %v4832
  %v5524 = vpop.f32.mrf.mxu0
  %v5525 = vadd.f32 0.0, %v5524
  %5526 = vmatmul.f32.gmra.mxu0 %v4833
  %v5527 = vpop.f32.mrf.mxu0
  %v5528 = vadd.f32 0.0, %v5527
  %5529 = vmatmul.f32.gmra.mxu0 %v4834
  %v5530 = vpop.f32.mrf.mxu0
  %v5531 = vadd.f32 0.0, %v5530
  %5532 = vmatmul.f32.gmra.mxu0 %v4835
  %v5533 = vpop.f32.mrf.mxu0
  %v5534 = vadd.f32 0.0, %v5533
  %5535 = vmatmul.f32.gmra.mxu0 %v4836
  %v5536 = vpop.f32.mrf.mxu0
  %v5537 = vadd.f32 0.0, %v5536
  %5538 = vmatmul.f32.gmra.mxu0 %v4837
  %v5539 = vpop.f32.mrf.mxu0
  %v5540 = vadd.f32 0.0, %v5539
  %5541 = vmatmul.f32.gmra.mxu0 %v4838
  %v5542 = vpop.f32.mrf.mxu0
  %v5543 = vadd.f32 0.0, %v5542
  %5544 = vmatmul.f32.gmra.mxu0 %v4839
  %v5545 = vpop.f32.mrf.mxu0
  %v5546 = vadd.f32 0.0, %v5545
  %5547 = vmatmul.f32.gmra.mxu0 %v4840
  %v5548 = vpop.f32.mrf.mxu0
  %v5549 = vadd.f32 0.0, %v5548
  %5550 = vdwg.mxu0
  %5551 = vrot.lane.b32.xlu0 %v2433, 96
  %v5552 = vpop.permute.xlu0 %5551
  %5553 = vrot.lane.b32.xlu0 %v2435, 96
  %v5554 = vpop.permute.xlu0 %5553
  %5555 = vrot.lane.b32.xlu0 %v2437, 96
  %v5556 = vpop.permute.xlu0 %5555
  %5557 = vrot.lane.b32.xlu0 %v2439, 96
  %v5558 = vpop.permute.xlu0 %5557
  %5559 = vrot.lane.b32.xlu0 %v2441, 96
  %v5560 = vpop.permute.xlu0 %5559
  %5561 = vrot.lane.b32.xlu0 %v2443, 96
  %v5562 = vpop.permute.xlu0 %5561
  %5563 = vrot.lane.b32.xlu0 %v2445, 96
  %v5564 = vpop.permute.xlu0 %5563
  %5565 = vrot.lane.b32.xlu0 %v2447, 96
  %v5566 = vpop.permute.xlu0 %5565
  %5567 = vrot.lane.b32.xlu0 %v2449, 96
  %v5568 = vpop.permute.xlu0 %5567
  %5569 = vrot.lane.b32.xlu0 %v2451, 96
  %v5570 = vpop.permute.xlu0 %5569
  %5571 = vrot.lane.b32.xlu0 %v2453, 96
  %v5572 = vpop.permute.xlu0 %5571
  %5573 = vrot.lane.b32.xlu0 %v2455, 96
  %v5574 = vpop.permute.xlu0 %5573
  %5575 = vrot.lane.b32.xlu0 %v2457, 96
  %v5576 = vpop.permute.xlu0 %5575
  %5577 = vrot.lane.b32.xlu0 %v2459, 96
  %v5578 = vpop.permute.xlu0 %5577
  %5579 = vrot.lane.b32.xlu0 %v2461, 96
  %v5580 = vpop.permute.xlu0 %5579
  %5581 = vrot.lane.b32.xlu0 %v2463, 96
  %v5582 = vpop.permute.xlu0 %5581
  %5599 = vmatpush.msra.mxu0 %v5582
  %5600 = vmatpush.msra.mxu0 %v5580
  %5601 = vmatpush.msra.mxu0 %v5578
  %5602 = vmatpush.msra.mxu0 %v5576
  %5603 = vmatpush.msra.mxu0 %v5574
  %5604 = vmatpush.msra.mxu0 %v5572
  %5605 = vmatpush.msra.mxu0 %v5570
  %5606 = vmatpush.msra.mxu0 %v5568
  %5607 = vmatpush.msra.mxu0 %v5566
  %5608 = vmatpush.msra.mxu0 %v5564
  %5609 = vmatpush.msra.mxu0 %v5562
  %5610 = vmatpush.msra.mxu0 %v5560
  %5611 = vmatpush.msra.mxu0 %v5558
  %5612 = vmatpush.msra.mxu0 %v5556
  %5613 = vmatpush.msra.mxu0 %v5554
  %5614 = vmatpush.msra.mxu0 %v5552
  %5615 = vmatmul.f32.gmra.mxu0 %v4841
  %v5616 = vpop.f32.mrf.mxu0
  %v5617 = vadd.f32 0.0, %v5616
  %5618 = vmatmul.f32.gmra.mxu0 %v4842
  %v5619 = vpop.f32.mrf.mxu0
  %v5620 = vadd.f32 0.0, %v5619
  %5621 = vmatmul.f32.gmra.mxu0 %v4843
  %v5622 = vpop.f32.mrf.mxu0
  %v5623 = vadd.f32 0.0, %v5622
  %5624 = vmatmul.f32.gmra.mxu0 %v4844
  %v5625 = vpop.f32.mrf.mxu0
  %v5626 = vadd.f32 0.0, %v5625
  %5627 = vmatmul.f32.gmra.mxu0 %v4845
  %v5628 = vpop.f32.mrf.mxu0
  %v5629 = vadd.f32 0.0, %v5628
  %5630 = vmatmul.f32.gmra.mxu0 %v4846
  %v5631 = vpop.f32.mrf.mxu0
  %v5632 = vadd.f32 0.0, %v5631
  %5633 = vmatmul.f32.gmra.mxu0 %v4847
  %v5634 = vpop.f32.mrf.mxu0
  %v5635 = vadd.f32 0.0, %v5634
  %5636 = vmatmul.f32.gmra.mxu0 %v4848
  %v5637 = vpop.f32.mrf.mxu0
  %v5638 = vadd.f32 0.0, %v5637
  %5639 = vmatmul.f32.gmra.mxu0 %v4849
  %v5640 = vpop.f32.mrf.mxu0
  %v5641 = vadd.f32 0.0, %v5640
  %5642 = vmatmul.f32.gmra.mxu0 %v4850
  %v5643 = vpop.f32.mrf.mxu0
  %v5644 = vadd.f32 0.0, %v5643
  %5645 = vmatmul.f32.gmra.mxu0 %v4851
  %v5646 = vpop.f32.mrf.mxu0
  %v5647 = vadd.f32 0.0, %v5646
  %5648 = vmatmul.f32.gmra.mxu0 %v4852
  %v5649 = vpop.f32.mrf.mxu0
  %v5650 = vadd.f32 0.0, %v5649
  %5651 = vmatmul.f32.gmra.mxu0 %v4853
  %v5652 = vpop.f32.mrf.mxu0
  %v5653 = vadd.f32 0.0, %v5652
  %5654 = vmatmul.f32.gmra.mxu0 %v4854
  %v5655 = vpop.f32.mrf.mxu0
  %v5656 = vadd.f32 0.0, %v5655
  %5657 = vmatmul.f32.gmra.mxu0 %v4855
  %v5658 = vpop.f32.mrf.mxu0
  %v5659 = vadd.f32 0.0, %v5658
  %5660 = vmatmul.f32.gmra.mxu0 %v4856
  %v5661 = vpop.f32.mrf.mxu0
  %v5662 = vadd.f32 0.0, %v5661
  %5663 = vdwg.mxu0
  %5664 = vrot.lane.b32.xlu0 %v2465, 96
  %v5665 = vpop.permute.xlu0 %5664
  %5666 = vrot.lane.b32.xlu0 %v2467, 96
  %v5667 = vpop.permute.xlu0 %5666
  %5668 = vrot.lane.b32.xlu0 %v2469, 96
  %v5669 = vpop.permute.xlu0 %5668
  %5670 = vrot.lane.b32.xlu0 %v2471, 96
  %v5671 = vpop.permute.xlu0 %5670
  %5672 = vrot.lane.b32.xlu0 %v2473, 96
  %v5673 = vpop.permute.xlu0 %5672
  %5674 = vrot.lane.b32.xlu0 %v2475, 96
  %v5675 = vpop.permute.xlu0 %5674
  %5676 = vrot.lane.b32.xlu0 %v2477, 96
  %v5677 = vpop.permute.xlu0 %5676
  %5678 = vrot.lane.b32.xlu0 %v2479, 96
  %v5679 = vpop.permute.xlu0 %5678
  %5680 = vrot.lane.b32.xlu0 %v2481, 96
  %v5681 = vpop.permute.xlu0 %5680
  %5682 = vrot.lane.b32.xlu0 %v2483, 96
  %v5683 = vpop.permute.xlu0 %5682
  %5684 = vrot.lane.b32.xlu0 %v2485, 96
  %v5685 = vpop.permute.xlu0 %5684
  %5686 = vrot.lane.b32.xlu0 %v2487, 96
  %v5687 = vpop.permute.xlu0 %5686
  %5688 = vrot.lane.b32.xlu0 %v2489, 96
  %v5689 = vpop.permute.xlu0 %5688
  %5690 = vrot.lane.b32.xlu0 %v2491, 96
  %v5691 = vpop.permute.xlu0 %5690
  %5692 = vrot.lane.b32.xlu0 %v2493, 96
  %v5693 = vpop.permute.xlu0 %5692
  %5694 = vrot.lane.b32.xlu0 %v2495, 96
  %v5695 = vpop.permute.xlu0 %5694
  %5712 = vmatpush.msra.mxu0 %v5695
  %5713 = vmatpush.msra.mxu0 %v5693
  %5714 = vmatpush.msra.mxu0 %v5691
  %5715 = vmatpush.msra.mxu0 %v5689
  %5716 = vmatpush.msra.mxu0 %v5687
  %5717 = vmatpush.msra.mxu0 %v5685
  %5718 = vmatpush.msra.mxu0 %v5683
  %5719 = vmatpush.msra.mxu0 %v5681
  %5720 = vmatpush.msra.mxu0 %v5679
  %5721 = vmatpush.msra.mxu0 %v5677
  %5722 = vmatpush.msra.mxu0 %v5675
  %5723 = vmatpush.msra.mxu0 %v5673
  %5724 = vmatpush.msra.mxu0 %v5671
  %5725 = vmatpush.msra.mxu0 %v5669
  %5726 = vmatpush.msra.mxu0 %v5667
  %5727 = vmatpush.msra.mxu0 %v5665
  %5728 = vmatmul.f32.gmra.mxu0 %v4857
  %v5729 = vpop.f32.mrf.mxu0
  %v5730 = vadd.f32 0.0, %v5729
  %5731 = vmatmul.f32.gmra.mxu0 %v4858
  %v5732 = vpop.f32.mrf.mxu0
  %v5733 = vadd.f32 0.0, %v5732
  %5734 = vmatmul.f32.gmra.mxu0 %v4859
  %v5735 = vpop.f32.mrf.mxu0
  %v5736 = vadd.f32 0.0, %v5735
  %5737 = vmatmul.f32.gmra.mxu0 %v4860
  %v5738 = vpop.f32.mrf.mxu0
  %v5739 = vadd.f32 0.0, %v5738
  %5740 = vmatmul.f32.gmra.mxu0 %v4861
  %v5741 = vpop.f32.mrf.mxu0
  %v5742 = vadd.f32 0.0, %v5741
  %5743 = vmatmul.f32.gmra.mxu0 %v4862
  %v5744 = vpop.f32.mrf.mxu0
  %v5745 = vadd.f32 0.0, %v5744
  %5746 = vmatmul.f32.gmra.mxu0 %v4863
  %v5747 = vpop.f32.mrf.mxu0
  %v5748 = vadd.f32 0.0, %v5747
  %5749 = vmatmul.f32.gmra.mxu0 %v4864
  %v5750 = vpop.f32.mrf.mxu0
  %v5751 = vadd.f32 0.0, %v5750
  %5752 = vmatmul.f32.gmra.mxu0 %v4865
  %v5753 = vpop.f32.mrf.mxu0
  %v5754 = vadd.f32 0.0, %v5753
  %5755 = vmatmul.f32.gmra.mxu0 %v4866
  %v5756 = vpop.f32.mrf.mxu0
  %v5757 = vadd.f32 0.0, %v5756
  %5758 = vmatmul.f32.gmra.mxu0 %v4867
  %v5759 = vpop.f32.mrf.mxu0
  %v5760 = vadd.f32 0.0, %v5759
  %5761 = vmatmul.f32.gmra.mxu0 %v4868
  %v5762 = vpop.f32.mrf.mxu0
  %v5763 = vadd.f32 0.0, %v5762
  %5764 = vmatmul.f32.gmra.mxu0 %v4869
  %v5765 = vpop.f32.mrf.mxu0
  %v5766 = vadd.f32 0.0, %v5765
  %5767 = vmatmul.f32.gmra.mxu0 %v4870
  %v5768 = vpop.f32.mrf.mxu0
  %v5769 = vadd.f32 0.0, %v5768
  %5770 = vmatmul.f32.gmra.mxu0 %v4871
  %v5771 = vpop.f32.mrf.mxu0
  %v5772 = vadd.f32 0.0, %v5771
  %5773 = vmatmul.f32.gmra.mxu0 %v4872
  %v5774 = vpop.f32.mrf.mxu0
  %v5775 = vadd.f32 0.0, %v5774
  %5776 = vdwg.mxu0
  %5809 = vrot.lane.b32.xlu0 %v5165, 8
  %v5810 = vpop.permute.xlu0 %5809
  %5811 = vrot.lane.b32.xlu0 %v5168, 8
  %v5812 = vpop.permute.xlu0 %5811
  %5813 = vrot.lane.b32.xlu0 %v5171, 8
  %v5814 = vpop.permute.xlu0 %5813
  %5815 = vrot.lane.b32.xlu0 %v5174, 8
  %v5816 = vpop.permute.xlu0 %5815
  %5817 = vrot.lane.b32.xlu0 %v5177, 8
  %v5818 = vpop.permute.xlu0 %5817
  %5819 = vrot.lane.b32.xlu0 %v5180, 8
  %v5820 = vpop.permute.xlu0 %5819
  %5821 = vrot.lane.b32.xlu0 %v5183, 8
  %v5822 = vpop.permute.xlu0 %5821
  %5823 = vrot.lane.b32.xlu0 %v5186, 8
  %v5824 = vpop.permute.xlu0 %5823
  %5825 = vrot.lane.b32.xlu0 %v5189, 8
  %v5826 = vpop.permute.xlu0 %5825
  %5827 = vrot.lane.b32.xlu0 %v5192, 8
  %v5828 = vpop.permute.xlu0 %5827
  %5829 = vrot.lane.b32.xlu0 %v5195, 8
  %v5830 = vpop.permute.xlu0 %5829
  %5831 = vrot.lane.b32.xlu0 %v5198, 8
  %v5832 = vpop.permute.xlu0 %5831
  %5833 = vrot.lane.b32.xlu0 %v5201, 8
  %v5834 = vpop.permute.xlu0 %5833
  %5835 = vrot.lane.b32.xlu0 %v5204, 8
  %v5836 = vpop.permute.xlu0 %5835
  %5837 = vrot.lane.b32.xlu0 %v5207, 8
  %v5838 = vpop.permute.xlu0 %5837
  %5839 = vrot.lane.b32.xlu0 %v5210, 8
  %v5840 = vpop.permute.xlu0 %5839
  %5841 = vrot.lane.b32.xlu0 %v5278, 8
  %v5842 = vpop.permute.xlu0 %5841
  %5843 = vrot.lane.b32.xlu0 %v5281, 8
  %v5844 = vpop.permute.xlu0 %5843
  %5845 = vrot.lane.b32.xlu0 %v5284, 8
  %v5846 = vpop.permute.xlu0 %5845
  %5847 = vrot.lane.b32.xlu0 %v5287, 8
  %v5848 = vpop.permute.xlu0 %5847
  %5849 = vrot.lane.b32.xlu0 %v5290, 8
  %v5850 = vpop.permute.xlu0 %5849
  %5851 = vrot.lane.b32.xlu0 %v5293, 8
  %v5852 = vpop.permute.xlu0 %5851
  %5853 = vrot.lane.b32.xlu0 %v5296, 8
  %v5854 = vpop.permute.xlu0 %5853
  %5855 = vrot.lane.b32.xlu0 %v5299, 8
  %v5856 = vpop.permute.xlu0 %5855
  %5857 = vrot.lane.b32.xlu0 %v5302, 8
  %v5858 = vpop.permute.xlu0 %5857
  %5859 = vrot.lane.b32.xlu0 %v5305, 8
  %v5860 = vpop.permute.xlu0 %5859
  %5861 = vrot.lane.b32.xlu0 %v5308, 8
  %v5862 = vpop.permute.xlu0 %5861
  %5863 = vrot.lane.b32.xlu0 %v5311, 8
  %v5864 = vpop.permute.xlu0 %5863
  %5865 = vrot.lane.b32.xlu0 %v5314, 8
  %v5866 = vpop.permute.xlu0 %5865
  %5867 = vrot.lane.b32.xlu0 %v5317, 8
  %v5868 = vpop.permute.xlu0 %5867
  %5869 = vrot.lane.b32.xlu0 %v5320, 8
  %v5870 = vpop.permute.xlu0 %5869
  %5871 = vrot.lane.b32.xlu0 %v5323, 8
  %v5872 = vpop.permute.xlu0 %5871
  %5937 = vrot.lane.b32.xlu0 %v5391, 16
  %v5938 = vpop.permute.xlu0 %5937
  %5939 = vrot.lane.b32.xlu0 %v5394, 16
  %v5940 = vpop.permute.xlu0 %5939
  %5941 = vrot.lane.b32.xlu0 %v5397, 16
  %v5942 = vpop.permute.xlu0 %5941
  %5943 = vrot.lane.b32.xlu0 %v5400, 16
  %v5944 = vpop.permute.xlu0 %5943
  %5945 = vrot.lane.b32.xlu0 %v5403, 16
  %v5946 = vpop.permute.xlu0 %5945
  %5947 = vrot.lane.b32.xlu0 %v5406, 16
  %v5948 = vpop.permute.xlu0 %5947
  %5949 = vrot.lane.b32.xlu0 %v5409, 16
  %v5950 = vpop.permute.xlu0 %5949
  %5951 = vrot.lane.b32.xlu0 %v5412, 16
  %v5952 = vpop.permute.xlu0 %5951
  %5953 = vrot.lane.b32.xlu0 %v5415, 16
  %v5954 = vpop.permute.xlu0 %5953
  %5955 = vrot.lane.b32.xlu0 %v5418, 16
  %v5956 = vpop.permute.xlu0 %5955
  %5957 = vrot.lane.b32.xlu0 %v5421, 16
  %v5958 = vpop.permute.xlu0 %5957
  %5959 = vrot.lane.b32.xlu0 %v5424, 16
  %v5960 = vpop.permute.xlu0 %5959
  %5961 = vrot.lane.b32.xlu0 %v5427, 16
  %v5962 = vpop.permute.xlu0 %5961
  %5963 = vrot.lane.b32.xlu0 %v5430, 16
  %v5964 = vpop.permute.xlu0 %5963
  %5965 = vrot.lane.b32.xlu0 %v5433, 16
  %v5966 = vpop.permute.xlu0 %5965
  %5967 = vrot.lane.b32.xlu0 %v5436, 16
  %v5968 = vpop.permute.xlu0 %5967
  %5969 = vrot.lane.b32.xlu0 %v5504, 16
  %v5970 = vpop.permute.xlu0 %5969
  %5971 = vrot.lane.b32.xlu0 %v5507, 16
  %v5972 = vpop.permute.xlu0 %5971
  %5973 = vrot.lane.b32.xlu0 %v5510, 16
  %v5974 = vpop.permute.xlu0 %5973
  %5975 = vrot.lane.b32.xlu0 %v5513, 16
  %v5976 = vpop.permute.xlu0 %5975
  %5977 = vrot.lane.b32.xlu0 %v5516, 16
  %v5978 = vpop.permute.xlu0 %5977
  %5979 = vrot.lane.b32.xlu0 %v5519, 16
  %v5980 = vpop.permute.xlu0 %5979
  %5981 = vrot.lane.b32.xlu0 %v5522, 16
  %v5982 = vpop.permute.xlu0 %5981
  %5983 = vrot.lane.b32.xlu0 %v5525, 16
  %v5984 = vpop.permute.xlu0 %5983
  %5985 = vrot.lane.b32.xlu0 %v5528, 16
  %v5986 = vpop.permute.xlu0 %5985
  %5987 = vrot.lane.b32.xlu0 %v5531, 16
  %v5988 = vpop.permute.xlu0 %5987
  %5989 = vrot.lane.b32.xlu0 %v5534, 16
  %v5990 = vpop.permute.xlu0 %5989
  %5991 = vrot.lane.b32.xlu0 %v5537, 16
  %v5992 = vpop.permute.xlu0 %5991
  %5993 = vrot.lane.b32.xlu0 %v5540, 16
  %v5994 = vpop.permute.xlu0 %5993
  %5995 = vrot.lane.b32.xlu0 %v5543, 16
  %v5996 = vpop.permute.xlu0 %5995
  %5997 = vrot.lane.b32.xlu0 %v5546, 16
  %v5998 = vpop.permute.xlu0 %5997
  %5999 = vrot.lane.b32.xlu0 %v5549, 16
  %v6000 = vpop.permute.xlu0 %5999
  %6065 = vrot.lane.b32.xlu0 %v5617, 24
  %v6066 = vpop.permute.xlu0 %6065
  %6067 = vrot.lane.b32.xlu0 %v5620, 24
  %v6068 = vpop.permute.xlu0 %6067
  %6069 = vrot.lane.b32.xlu0 %v5623, 24
  %v6070 = vpop.permute.xlu0 %6069
  %6071 = vrot.lane.b32.xlu0 %v5626, 24
  %v6072 = vpop.permute.xlu0 %6071
  %6073 = vrot.lane.b32.xlu0 %v5629, 24
  %v6074 = vpop.permute.xlu0 %6073
  %6075 = vrot.lane.b32.xlu0 %v5632, 24
  %v6076 = vpop.permute.xlu0 %6075
  %6077 = vrot.lane.b32.xlu0 %v5635, 24
  %v6078 = vpop.permute.xlu0 %6077
  %6079 = vrot.lane.b32.xlu0 %v5638, 24
  %v6080 = vpop.permute.xlu0 %6079
  %6081 = vrot.lane.b32.xlu0 %v5641, 24
  %v6082 = vpop.permute.xlu0 %6081
  %6083 = vrot.lane.b32.xlu0 %v5644, 24
  %v6084 = vpop.permute.xlu0 %6083
  %6085 = vrot.lane.b32.xlu0 %v5647, 24
  %v6086 = vpop.permute.xlu0 %6085
  %6087 = vrot.lane.b32.xlu0 %v5650, 24
  %v6088 = vpop.permute.xlu0 %6087
  %6089 = vrot.lane.b32.xlu0 %v5653, 24
  %v6090 = vpop.permute.xlu0 %6089
  %6091 = vrot.lane.b32.xlu0 %v5656, 24
  %v6092 = vpop.permute.xlu0 %6091
  %6093 = vrot.lane.b32.xlu0 %v5659, 24
  %v6094 = vpop.permute.xlu0 %6093
  %6095 = vrot.lane.b32.xlu0 %v5662, 24
  %v6096 = vpop.permute.xlu0 %6095
  %6097 = vrot.lane.b32.xlu0 %v5730, 24
  %v6098 = vpop.permute.xlu0 %6097
  %6099 = vrot.lane.b32.xlu0 %v5733, 24
  %v6100 = vpop.permute.xlu0 %6099
  %6101 = vrot.lane.b32.xlu0 %v5736, 24
  %v6102 = vpop.permute.xlu0 %6101
  %6103 = vrot.lane.b32.xlu0 %v5739, 24
  %v6104 = vpop.permute.xlu0 %6103
  %6105 = vrot.lane.b32.xlu0 %v5742, 24
  %v6106 = vpop.permute.xlu0 %6105
  %6107 = vrot.lane.b32.xlu0 %v5745, 24
  %v6108 = vpop.permute.xlu0 %6107
  %6109 = vrot.lane.b32.xlu0 %v5748, 24
  %v6110 = vpop.permute.xlu0 %6109
  %6111 = vrot.lane.b32.xlu0 %v5751, 24
  %v6112 = vpop.permute.xlu0 %6111
  %6113 = vrot.lane.b32.xlu0 %v5754, 24
  %v6114 = vpop.permute.xlu0 %6113
  %6115 = vrot.lane.b32.xlu0 %v5757, 24
  %v6116 = vpop.permute.xlu0 %6115
  %6117 = vrot.lane.b32.xlu0 %v5760, 24
  %v6118 = vpop.permute.xlu0 %6117
  %6119 = vrot.lane.b32.xlu0 %v5763, 24
  %v6120 = vpop.permute.xlu0 %6119
  %6121 = vrot.lane.b32.xlu0 %v5766, 24
  %v6122 = vpop.permute.xlu0 %6121
  %6123 = vrot.lane.b32.xlu0 %v5769, 24
  %v6124 = vpop.permute.xlu0 %6123
  %6125 = vrot.lane.b32.xlu0 %v5772, 24
  %v6126 = vpop.permute.xlu0 %6125
  %6127 = vrot.lane.b32.xlu0 %v5775, 24
  %v6128 = vpop.permute.xlu0 %6127
  %v6161 = vsel %vm2496, %v4939, %v5810
  %v6162 = vsel %vm2496, %v4942, %v5812
  %v6163 = vsel %vm2496, %v4945, %v5814
  %v6164 = vsel %vm2496, %v4948, %v5816
  %v6165 = vsel %vm2496, %v4951, %v5818
  %v6166 = vsel %vm2496, %v4954, %v5820
  %v6167 = vsel %vm2496, %v4957, %v5822
  %v6168 = vsel %vm2496, %v4960, %v5824
  %v6169 = vsel %vm2496, %v4963, %v5826
  %v6170 = vsel %vm2496, %v4966, %v5828
  %v6171 = vsel %vm2496, %v4969, %v5830
  %v6172 = vsel %vm2496, %v4972, %v5832
  %v6173 = vsel %vm2496, %v4975, %v5834
  %v6174 = vsel %vm2496, %v4978, %v5836
  %v6175 = vsel %vm2496, %v4981, %v5838
  %v6176 = vsel %vm2496, %v4984, %v5840
  %v6177 = vsel %vm2496, %v5052, %v5842
  %v6178 = vsel %vm2496, %v5055, %v5844
  %v6179 = vsel %vm2496, %v5058, %v5846
  %v6180 = vsel %vm2496, %v5061, %v5848
  %v6181 = vsel %vm2496, %v5064, %v5850
  %v6182 = vsel %vm2496, %v5067, %v5852
  %v6183 = vsel %vm2496, %v5070, %v5854
  %v6184 = vsel %vm2496, %v5073, %v5856
  %v6185 = vsel %vm2496, %v5076, %v5858
  %v6186 = vsel %vm2496, %v5079, %v5860
  %v6187 = vsel %vm2496, %v5082, %v5862
  %v6188 = vsel %vm2496, %v5085, %v5864
  %v6189 = vsel %vm2496, %v5088, %v5866
  %v6190 = vsel %vm2496, %v5091, %v5868
  %v6191 = vsel %vm2496, %v5094, %v5870
  %v6192 = vsel %vm2496, %v5097, %v5872
  %vm6193 = vcmask 130048
  %v6194 = vsel %vm6193, %v6161, %v5938
  %v6195 = vsel %vm6193, %v6162, %v5940
  %v6196 = vsel %vm6193, %v6163, %v5942
  %v6197 = vsel %vm6193, %v6164, %v5944
  %v6198 = vsel %vm6193, %v6165, %v5946
  %v6199 = vsel %vm6193, %v6166, %v5948
  %v6200 = vsel %vm6193, %v6167, %v5950
  %v6201 = vsel %vm6193, %v6168, %v5952
  %v6202 = vsel %vm6193, %v6169, %v5954
  %v6203 = vsel %vm6193, %v6170, %v5956
  %v6204 = vsel %vm6193, %v6171, %v5958
  %v6205 = vsel %vm6193, %v6172, %v5960
  %v6206 = vsel %vm6193, %v6173, %v5962
  %v6207 = vsel %vm6193, %v6174, %v5964
  %v6208 = vsel %vm6193, %v6175, %v5966
  %v6209 = vsel %vm6193, %v6176, %v5968
  %v6210 = vsel %vm6193, %v6177, %v5970
  %v6211 = vsel %vm6193, %v6178, %v5972
  %v6212 = vsel %vm6193, %v6179, %v5974
  %v6213 = vsel %vm6193, %v6180, %v5976
  %v6214 = vsel %vm6193, %v6181, %v5978
  %v6215 = vsel %vm6193, %v6182, %v5980
  %v6216 = vsel %vm6193, %v6183, %v5982
  %v6217 = vsel %vm6193, %v6184, %v5984
  %v6218 = vsel %vm6193, %v6185, %v5986
  %v6219 = vsel %vm6193, %v6186, %v5988
  %v6220 = vsel %vm6193, %v6187, %v5990
  %v6221 = vsel %vm6193, %v6188, %v5992
  %v6222 = vsel %vm6193, %v6189, %v5994
  %v6223 = vsel %vm6193, %v6190, %v5996
  %v6224 = vsel %vm6193, %v6191, %v5998
  %v6225 = vsel %vm6193, %v6192, %v6000
  %vm6226 = vcmask 195584
  %v6227 = vsel %vm6226, %v6194, %v6066
  %v6228 = vsel %vm6226, %v6195, %v6068
  %v6229 = vsel %vm6226, %v6196, %v6070
  %v6230 = vsel %vm6226, %v6197, %v6072
  %v6231 = vsel %vm6226, %v6198, %v6074
  %v6232 = vsel %vm6226, %v6199, %v6076
  %v6233 = vsel %vm6226, %v6200, %v6078
  %v6234 = vsel %vm6226, %v6201, %v6080
  %v6235 = vsel %vm6226, %v6202, %v6082
  %v6236 = vsel %vm6226, %v6203, %v6084
  %v6237 = vsel %vm6226, %v6204, %v6086
  %v6238 = vsel %vm6226, %v6205, %v6088
  %v6239 = vsel %vm6226, %v6206, %v6090
  %v6240 = vsel %vm6226, %v6207, %v6092
  %v6241 = vsel %vm6226, %v6208, %v6094
  %v6242 = vsel %vm6226, %v6209, %v6096
  %v6243 = vsel %vm6226, %v6210, %v6098
  %v6244 = vsel %vm6226, %v6211, %v6100
  %v6245 = vsel %vm6226, %v6212, %v6102
  %v6246 = vsel %vm6226, %v6213, %v6104
  %v6247 = vsel %vm6226, %v6214, %v6106
  %v6248 = vsel %vm6226, %v6215, %v6108
  %v6249 = vsel %vm6226, %v6216, %v6110
  %v6250 = vsel %vm6226, %v6217, %v6112
  %v6251 = vsel %vm6226, %v6218, %v6114
  %v6252 = vsel %vm6226, %v6219, %v6116
  %v6253 = vsel %vm6226, %v6220, %v6118
  %v6254 = vsel %vm6226, %v6221, %v6120
  %v6255 = vsel %vm6226, %v6222, %v6122
  %v6256 = vsel %vm6226, %v6223, %v6124
  %v6257 = vsel %vm6226, %v6224, %v6126
  %v6258 = vsel %vm6226, %v6225, %v6128
  %v6259 = vpack.c.bf16 %v6228, %v6227
  %v6260 = vpack.c.bf16 %v6230, %v6229
  %v6261 = vpack.c.bf16 %v6232, %v6231
  %v6262 = vpack.c.bf16 %v6234, %v6233
  %v6263 = vpack.c.bf16 %v6236, %v6235
  %v6264 = vpack.c.bf16 %v6238, %v6237
  %v6265 = vpack.c.bf16 %v6240, %v6239
  %v6266 = vpack.c.bf16 %v6242, %v6241
  %v6267 = vpack.c.bf16 %v6244, %v6243
  %v6268 = vpack.c.bf16 %v6246, %v6245
  %v6269 = vpack.c.bf16 %v6248, %v6247
  %v6270 = vpack.c.bf16 %v6250, %v6249
  %v6271 = vpack.c.bf16 %v6252, %v6251
  %v6272 = vpack.c.bf16 %v6254, %v6253
  %v6273 = vpack.c.bf16 %v6256, %v6255
  %v6274 = vpack.c.bf16 %v6258, %v6257
  %v6275 = vld [vmem:[%s7] sm:$0xf]
  %v6276 = vld [vmem:[%s7 + $0x4] sm:$0xf]
  %v6277 = vld [vmem:[%s7 + $0x8] sm:$0xf]
  %v6278 = vld [vmem:[%s7 + $0xc] sm:$0xf]
  %v6279 = vld [vmem:[%s8] sm:$0x1]
  %v6281 = vperm.slane %v6279, 0
  %v6287 = vunpack.c.l.b16 %v6275
  %v6288 = vunpack.c.l.b16 %v6276
  %v6289 = vunpack.c.l.b16 %v6277
  %v6290 = vunpack.c.l.b16 %v6278
  %v6291 = vpack.c.b16 %v6288, %v6287
  %v6292 = vpack.c.b16 %v6290, %v6289
  %v6296 = vsel %vm120, %v6259, 0
  %v6299 = vsel %vm120, %v6260, 0
  %v6302 = vsel %vm120, %v6261, 0
  %v6305 = vsel %vm120, %v6262, 0
  %v6308 = vsel %vm120, %v6263, 0
  %v6311 = vsel %vm120, %v6264, 0
  %v6314 = vsel %vm120, %v6265, 0
  %v6317 = vsel %vm120, %v6266, 0
  %v6320 = vsel %vm120, %v6267, 0
  %v6323 = vsel %vm120, %v6268, 0
  %v6326 = vsel %vm120, %v6269, 0
  %v6329 = vsel %vm120, %v6270, 0
  %v6332 = vsel %vm120, %v6271, 0
  %v6335 = vsel %vm120, %v6272, 0
  %v6338 = vsel %vm120, %v6273, 0
  %v6341 = vsel %vm120, %v6274, 0
  %6343 = vmatpush.bf16.msra.mxu0 0
  %6344 = vmatpush.bf16.msra.mxu0 0
  %6345 = vmatpush.bf16.msra.mxu0 0
  %6346 = vmatpush.bf16.msra.mxu0 0
  %6347 = vmatpush.bf16.msra.mxu0 0
  %6348 = vmatpush.bf16.msra.mxu0 0
  %6349 = vmatpush.bf16.msra.mxu0 %v6292
  %6350 = vmatpush.bf16.msra.mxu0 %v6291
  %6351 = vmatmul.bf16.gmra.mxu0 %v6296
  %v6352 = vpop.f32.mrf.mxu0
  %v6353 = vadd.f32 %v6281, %v6352
  %v6354 = vpop.f32.mrf.mxu0
  %v6355 = vadd.f32 %v6281, %v6354
  %6356 = vmatmul.bf16.gmra.mxu0 %v6299
  %v6357 = vpop.f32.mrf.mxu0
  %v6358 = vadd.f32 %v6281, %v6357
  %v6359 = vpop.f32.mrf.mxu0
  %v6360 = vadd.f32 %v6281, %v6359
  %6361 = vmatmul.bf16.gmra.mxu0 %v6302
  %v6362 = vpop.f32.mrf.mxu0
  %v6363 = vadd.f32 %v6281, %v6362
  %v6364 = vpop.f32.mrf.mxu0
  %v6365 = vadd.f32 %v6281, %v6364
  %6366 = vmatmul.bf16.gmra.mxu0 %v6305
  %v6367 = vpop.f32.mrf.mxu0
  %v6368 = vadd.f32 %v6281, %v6367
  %v6369 = vpop.f32.mrf.mxu0
  %v6370 = vadd.f32 %v6281, %v6369
  %6371 = vmatmul.bf16.gmra.mxu0 %v6308
  %v6372 = vpop.f32.mrf.mxu0
  %v6373 = vadd.f32 %v6281, %v6372
  %v6374 = vpop.f32.mrf.mxu0
  %v6375 = vadd.f32 %v6281, %v6374
  %6376 = vmatmul.bf16.gmra.mxu0 %v6311
  %v6377 = vpop.f32.mrf.mxu0
  %v6378 = vadd.f32 %v6281, %v6377
  %v6379 = vpop.f32.mrf.mxu0
  %v6380 = vadd.f32 %v6281, %v6379
  %6381 = vmatmul.bf16.gmra.mxu0 %v6314
  %v6382 = vpop.f32.mrf.mxu0
  %v6383 = vadd.f32 %v6281, %v6382
  %v6384 = vpop.f32.mrf.mxu0
  %v6385 = vadd.f32 %v6281, %v6384
  %6386 = vmatmul.bf16.gmra.mxu0 %v6317
  %v6387 = vpop.f32.mrf.mxu0
  %v6388 = vadd.f32 %v6281, %v6387
  %v6389 = vpop.f32.mrf.mxu0
  %v6390 = vadd.f32 %v6281, %v6389
  %6391 = vmatmul.bf16.gmra.mxu0 %v6320
  %v6392 = vpop.f32.mrf.mxu0
  %v6393 = vadd.f32 %v6281, %v6392
  %v6394 = vpop.f32.mrf.mxu0
  %v6395 = vadd.f32 %v6281, %v6394
  %6396 = vmatmul.bf16.gmra.mxu0 %v6323
  %v6397 = vpop.f32.mrf.mxu0
  %v6398 = vadd.f32 %v6281, %v6397
  %v6399 = vpop.f32.mrf.mxu0
  %v6400 = vadd.f32 %v6281, %v6399
  %6401 = vmatmul.bf16.gmra.mxu0 %v6326
  %v6402 = vpop.f32.mrf.mxu0
  %v6403 = vadd.f32 %v6281, %v6402
  %v6404 = vpop.f32.mrf.mxu0
  %v6405 = vadd.f32 %v6281, %v6404
  %6406 = vmatmul.bf16.gmra.mxu0 %v6329
  %v6407 = vpop.f32.mrf.mxu0
  %v6408 = vadd.f32 %v6281, %v6407
  %v6409 = vpop.f32.mrf.mxu0
  %v6410 = vadd.f32 %v6281, %v6409
  %6411 = vmatmul.bf16.gmra.mxu0 %v6332
  %v6412 = vpop.f32.mrf.mxu0
  %v6413 = vadd.f32 %v6281, %v6412
  %v6414 = vpop.f32.mrf.mxu0
  %v6415 = vadd.f32 %v6281, %v6414
  %6416 = vmatmul.bf16.gmra.mxu0 %v6335
  %v6417 = vpop.f32.mrf.mxu0
  %v6418 = vadd.f32 %v6281, %v6417
  %v6419 = vpop.f32.mrf.mxu0
  %v6420 = vadd.f32 %v6281, %v6419
  %6421 = vmatmul.bf16.gmra.mxu0 %v6338
  %v6422 = vpop.f32.mrf.mxu0
  %v6423 = vadd.f32 %v6281, %v6422
  %v6424 = vpop.f32.mrf.mxu0
  %v6425 = vadd.f32 %v6281, %v6424
  %6426 = vmatmul.bf16.gmra.mxu0 %v6341
  %v6427 = vpop.f32.mrf.mxu0
  %v6428 = vadd.f32 %v6281, %v6427
  %v6429 = vpop.f32.mrf.mxu0
  %v6430 = vadd.f32 %v6281, %v6429
  %6431 = vdwg.mxu0
  %6432 = vrot.lane.b32.xlu0 %v4745, 64
  %v6433 = vpop.permute.xlu0 %6432
  %6434 = vrot.lane.b32.xlu0 %v4746, 64
  %v6435 = vpop.permute.xlu0 %6434
  %6436 = vrot.lane.b32.xlu0 %v4747, 64
  %v6437 = vpop.permute.xlu0 %6436
  %6438 = vrot.lane.b32.xlu0 %v4748, 64
  %v6439 = vpop.permute.xlu0 %6438
  %6440 = vrot.lane.b32.xlu0 %v4749, 64
  %v6441 = vpop.permute.xlu0 %6440
  %6442 = vrot.lane.b32.xlu0 %v4750, 64
  %v6443 = vpop.permute.xlu0 %6442
  %6444 = vrot.lane.b32.xlu0 %v4751, 64
  %v6445 = vpop.permute.xlu0 %6444
  %6446 = vrot.lane.b32.xlu0 %v4752, 64
  %v6447 = vpop.permute.xlu0 %6446
  %6448 = vrot.lane.b32.xlu0 %v4753, 64
  %v6449 = vpop.permute.xlu0 %6448
  %6450 = vrot.lane.b32.xlu0 %v4754, 64
  %v6451 = vpop.permute.xlu0 %6450
  %6452 = vrot.lane.b32.xlu0 %v4755, 64
  %v6453 = vpop.permute.xlu0 %6452
  %6454 = vrot.lane.b32.xlu0 %v4756, 64
  %v6455 = vpop.permute.xlu0 %6454
  %6456 = vrot.lane.b32.xlu0 %v4757, 64
  %v6457 = vpop.permute.xlu0 %6456
  %6458 = vrot.lane.b32.xlu0 %v4758, 64
  %v6459 = vpop.permute.xlu0 %6458
  %6460 = vrot.lane.b32.xlu0 %v4759, 64
  %v6461 = vpop.permute.xlu0 %6460
  %6462 = vrot.lane.b32.xlu0 %v4760, 64
  %v6463 = vpop.permute.xlu0 %6462
  %6464 = vrot.lane.b32.xlu0 %v4761, 64
  %v6465 = vpop.permute.xlu0 %6464
  %6466 = vrot.lane.b32.xlu0 %v4762, 64
  %v6467 = vpop.permute.xlu0 %6466
  %6468 = vrot.lane.b32.xlu0 %v4763, 64
  %v6469 = vpop.permute.xlu0 %6468
  %6470 = vrot.lane.b32.xlu0 %v4764, 64
  %v6471 = vpop.permute.xlu0 %6470
  %6472 = vrot.lane.b32.xlu0 %v4765, 64
  %v6473 = vpop.permute.xlu0 %6472
  %6474 = vrot.lane.b32.xlu0 %v4766, 64
  %v6475 = vpop.permute.xlu0 %6474
  %6476 = vrot.lane.b32.xlu0 %v4767, 64
  %v6477 = vpop.permute.xlu0 %6476
  %6478 = vrot.lane.b32.xlu0 %v4768, 64
  %v6479 = vpop.permute.xlu0 %6478
  %6480 = vrot.lane.b32.xlu0 %v4769, 64
  %v6481 = vpop.permute.xlu0 %6480
  %6482 = vrot.lane.b32.xlu0 %v4770, 64
  %v6483 = vpop.permute.xlu0 %6482
  %6484 = vrot.lane.b32.xlu0 %v4771, 64
  %v6485 = vpop.permute.xlu0 %6484
  %6486 = vrot.lane.b32.xlu0 %v4772, 64
  %v6487 = vpop.permute.xlu0 %6486
  %6488 = vrot.lane.b32.xlu0 %v4773, 64
  %v6489 = vpop.permute.xlu0 %6488
  %6490 = vrot.lane.b32.xlu0 %v4774, 64
  %v6491 = vpop.permute.xlu0 %6490
  %6492 = vrot.lane.b32.xlu0 %v4775, 64
  %v6493 = vpop.permute.xlu0 %6492
  %6494 = vrot.lane.b32.xlu0 %v4776, 64
  %v6495 = vpop.permute.xlu0 %6494
  %6496 = vrot.lane.b32.xlu0 %v4777, 64
  %v6497 = vpop.permute.xlu0 %6496
  %6498 = vrot.lane.b32.xlu0 %v4778, 64
  %v6499 = vpop.permute.xlu0 %6498
  %6500 = vrot.lane.b32.xlu0 %v4779, 64
  %v6501 = vpop.permute.xlu0 %6500
  %6502 = vrot.lane.b32.xlu0 %v4780, 64
  %v6503 = vpop.permute.xlu0 %6502
  %6504 = vrot.lane.b32.xlu0 %v4781, 64
  %v6505 = vpop.permute.xlu0 %6504
  %6506 = vrot.lane.b32.xlu0 %v4782, 64
  %v6507 = vpop.permute.xlu0 %6506
  %6508 = vrot.lane.b32.xlu0 %v4783, 64
  %v6509 = vpop.permute.xlu0 %6508
  %6510 = vrot.lane.b32.xlu0 %v4784, 64
  %v6511 = vpop.permute.xlu0 %6510
  %6512 = vrot.lane.b32.xlu0 %v4785, 64
  %v6513 = vpop.permute.xlu0 %6512
  %6514 = vrot.lane.b32.xlu0 %v4786, 64
  %v6515 = vpop.permute.xlu0 %6514
  %6516 = vrot.lane.b32.xlu0 %v4787, 64
  %v6517 = vpop.permute.xlu0 %6516
  %6518 = vrot.lane.b32.xlu0 %v4788, 64
  %v6519 = vpop.permute.xlu0 %6518
  %6520 = vrot.lane.b32.xlu0 %v4789, 64
  %v6521 = vpop.permute.xlu0 %6520
  %6522 = vrot.lane.b32.xlu0 %v4790, 64
  %v6523 = vpop.permute.xlu0 %6522
  %6524 = vrot.lane.b32.xlu0 %v4791, 64
  %v6525 = vpop.permute.xlu0 %6524
  %6526 = vrot.lane.b32.xlu0 %v4792, 64
  %v6527 = vpop.permute.xlu0 %6526
  %6528 = vrot.lane.b32.xlu0 %v4793, 64
  %v6529 = vpop.permute.xlu0 %6528
  %6530 = vrot.lane.b32.xlu0 %v4794, 64
  %v6531 = vpop.permute.xlu0 %6530
  %6532 = vrot.lane.b32.xlu0 %v4795, 64
  %v6533 = vpop.permute.xlu0 %6532
  %6534 = vrot.lane.b32.xlu0 %v4796, 64
  %v6535 = vpop.permute.xlu0 %6534
  %6536 = vrot.lane.b32.xlu0 %v4797, 64
  %v6537 = vpop.permute.xlu0 %6536
  %6538 = vrot.lane.b32.xlu0 %v4798, 64
  %v6539 = vpop.permute.xlu0 %6538
  %6540 = vrot.lane.b32.xlu0 %v4799, 64
  %v6541 = vpop.permute.xlu0 %6540
  %6542 = vrot.lane.b32.xlu0 %v4800, 64
  %v6543 = vpop.permute.xlu0 %6542
  %6544 = vrot.lane.b32.xlu0 %v4801, 64
  %v6545 = vpop.permute.xlu0 %6544
  %6546 = vrot.lane.b32.xlu0 %v4802, 64
  %v6547 = vpop.permute.xlu0 %6546
  %6548 = vrot.lane.b32.xlu0 %v4803, 64
  %v6549 = vpop.permute.xlu0 %6548
  %6550 = vrot.lane.b32.xlu0 %v4804, 64
  %v6551 = vpop.permute.xlu0 %6550
  %6552 = vrot.lane.b32.xlu0 %v4805, 64
  %v6553 = vpop.permute.xlu0 %6552
  %6554 = vrot.lane.b32.xlu0 %v4806, 64
  %v6555 = vpop.permute.xlu0 %6554
  %6556 = vrot.lane.b32.xlu0 %v4807, 64
  %v6557 = vpop.permute.xlu0 %6556
  %6558 = vrot.lane.b32.xlu0 %v4808, 64
  %v6559 = vpop.permute.xlu0 %6558
  %6560 = vrot.lane.b32.xlu0 %v4809, 64
  %v6561 = vpop.permute.xlu0 %6560
  %6562 = vrot.lane.b32.xlu0 %v4810, 64
  %v6563 = vpop.permute.xlu0 %6562
  %6564 = vrot.lane.b32.xlu0 %v4811, 64
  %v6565 = vpop.permute.xlu0 %6564
  %6566 = vrot.lane.b32.xlu0 %v4812, 64
  %v6567 = vpop.permute.xlu0 %6566
  %6568 = vrot.lane.b32.xlu0 %v4813, 64
  %v6569 = vpop.permute.xlu0 %6568
  %6570 = vrot.lane.b32.xlu0 %v4814, 64
  %v6571 = vpop.permute.xlu0 %6570
  %6572 = vrot.lane.b32.xlu0 %v4815, 64
  %v6573 = vpop.permute.xlu0 %6572
  %6574 = vrot.lane.b32.xlu0 %v4816, 64
  %v6575 = vpop.permute.xlu0 %6574
  %6576 = vrot.lane.b32.xlu0 %v4817, 64
  %v6577 = vpop.permute.xlu0 %6576
  %6578 = vrot.lane.b32.xlu0 %v4818, 64
  %v6579 = vpop.permute.xlu0 %6578
  %6580 = vrot.lane.b32.xlu0 %v4819, 64
  %v6581 = vpop.permute.xlu0 %6580
  %6582 = vrot.lane.b32.xlu0 %v4820, 64
  %v6583 = vpop.permute.xlu0 %6582
  %6584 = vrot.lane.b32.xlu0 %v4821, 64
  %v6585 = vpop.permute.xlu0 %6584
  %6586 = vrot.lane.b32.xlu0 %v4822, 64
  %v6587 = vpop.permute.xlu0 %6586
  %6588 = vrot.lane.b32.xlu0 %v4823, 64
  %v6589 = vpop.permute.xlu0 %6588
  %6590 = vrot.lane.b32.xlu0 %v4824, 64
  %v6591 = vpop.permute.xlu0 %6590
  %6592 = vrot.lane.b32.xlu0 %v4825, 64
  %v6593 = vpop.permute.xlu0 %6592
  %6594 = vrot.lane.b32.xlu0 %v4826, 64
  %v6595 = vpop.permute.xlu0 %6594
  %6596 = vrot.lane.b32.xlu0 %v4827, 64
  %v6597 = vpop.permute.xlu0 %6596
  %6598 = vrot.lane.b32.xlu0 %v4828, 64
  %v6599 = vpop.permute.xlu0 %6598
  %6600 = vrot.lane.b32.xlu0 %v4829, 64
  %v6601 = vpop.permute.xlu0 %6600
  %6602 = vrot.lane.b32.xlu0 %v4830, 64
  %v6603 = vpop.permute.xlu0 %6602
  %6604 = vrot.lane.b32.xlu0 %v4831, 64
  %v6605 = vpop.permute.xlu0 %6604
  %6606 = vrot.lane.b32.xlu0 %v4832, 64
  %v6607 = vpop.permute.xlu0 %6606
  %6608 = vrot.lane.b32.xlu0 %v4833, 64
  %v6609 = vpop.permute.xlu0 %6608
  %6610 = vrot.lane.b32.xlu0 %v4834, 64
  %v6611 = vpop.permute.xlu0 %6610
  %6612 = vrot.lane.b32.xlu0 %v4835, 64
  %v6613 = vpop.permute.xlu0 %6612
  %6614 = vrot.lane.b32.xlu0 %v4836, 64
  %v6615 = vpop.permute.xlu0 %6614
  %6616 = vrot.lane.b32.xlu0 %v4837, 64
  %v6617 = vpop.permute.xlu0 %6616
  %6618 = vrot.lane.b32.xlu0 %v4838, 64
  %v6619 = vpop.permute.xlu0 %6618
  %6620 = vrot.lane.b32.xlu0 %v4839, 64
  %v6621 = vpop.permute.xlu0 %6620
  %6622 = vrot.lane.b32.xlu0 %v4840, 64
  %v6623 = vpop.permute.xlu0 %6622
  %6624 = vrot.lane.b32.xlu0 %v4841, 64
  %v6625 = vpop.permute.xlu0 %6624
  %6626 = vrot.lane.b32.xlu0 %v4842, 64
  %v6627 = vpop.permute.xlu0 %6626
  %6628 = vrot.lane.b32.xlu0 %v4843, 64
  %v6629 = vpop.permute.xlu0 %6628
  %6630 = vrot.lane.b32.xlu0 %v4844, 64
  %v6631 = vpop.permute.xlu0 %6630
  %6632 = vrot.lane.b32.xlu0 %v4845, 64
  %v6633 = vpop.permute.xlu0 %6632
  %6634 = vrot.lane.b32.xlu0 %v4846, 64
  %v6635 = vpop.permute.xlu0 %6634
  %6636 = vrot.lane.b32.xlu0 %v4847, 64
  %v6637 = vpop.permute.xlu0 %6636
  %6638 = vrot.lane.b32.xlu0 %v4848, 64
  %v6639 = vpop.permute.xlu0 %6638
  %6640 = vrot.lane.b32.xlu0 %v4849, 64
  %v6641 = vpop.permute.xlu0 %6640
  %6642 = vrot.lane.b32.xlu0 %v4850, 64
  %v6643 = vpop.permute.xlu0 %6642
  %6644 = vrot.lane.b32.xlu0 %v4851, 64
  %v6645 = vpop.permute.xlu0 %6644
  %6646 = vrot.lane.b32.xlu0 %v4852, 64
  %v6647 = vpop.permute.xlu0 %6646
  %6648 = vrot.lane.b32.xlu0 %v4853, 64
  %v6649 = vpop.permute.xlu0 %6648
  %6650 = vrot.lane.b32.xlu0 %v4854, 64
  %v6651 = vpop.permute.xlu0 %6650
  %6652 = vrot.lane.b32.xlu0 %v4855, 64
  %v6653 = vpop.permute.xlu0 %6652
  %6654 = vrot.lane.b32.xlu0 %v4856, 64
  %v6655 = vpop.permute.xlu0 %6654
  %6656 = vrot.lane.b32.xlu0 %v4857, 64
  %v6657 = vpop.permute.xlu0 %6656
  %6658 = vrot.lane.b32.xlu0 %v4858, 64
  %v6659 = vpop.permute.xlu0 %6658
  %6660 = vrot.lane.b32.xlu0 %v4859, 64
  %v6661 = vpop.permute.xlu0 %6660
  %6662 = vrot.lane.b32.xlu0 %v4860, 64
  %v6663 = vpop.permute.xlu0 %6662
  %6664 = vrot.lane.b32.xlu0 %v4861, 64
  %v6665 = vpop.permute.xlu0 %6664
  %6666 = vrot.lane.b32.xlu0 %v4862, 64
  %v6667 = vpop.permute.xlu0 %6666
  %6668 = vrot.lane.b32.xlu0 %v4863, 64
  %v6669 = vpop.permute.xlu0 %6668
  %6670 = vrot.lane.b32.xlu0 %v4864, 64
  %v6671 = vpop.permute.xlu0 %6670
  %6672 = vrot.lane.b32.xlu0 %v4865, 64
  %v6673 = vpop.permute.xlu0 %6672
  %6674 = vrot.lane.b32.xlu0 %v4866, 64
  %v6675 = vpop.permute.xlu0 %6674
  %6676 = vrot.lane.b32.xlu0 %v4867, 64
  %v6677 = vpop.permute.xlu0 %6676
  %6678 = vrot.lane.b32.xlu0 %v4868, 64
  %v6679 = vpop.permute.xlu0 %6678
  %6680 = vrot.lane.b32.xlu0 %v4869, 64
  %v6681 = vpop.permute.xlu0 %6680
  %6682 = vrot.lane.b32.xlu0 %v4870, 64
  %v6683 = vpop.permute.xlu0 %6682
  %6684 = vrot.lane.b32.xlu0 %v4871, 64
  %v6685 = vpop.permute.xlu0 %6684
  %6686 = vrot.lane.b32.xlu0 %v4872, 64
  %v6687 = vpop.permute.xlu0 %6686
  %6688 = vmatpush.msra.mxu0 %v6447
  %6689 = vmatpush.msra.mxu0 %v6445
  %6690 = vmatpush.msra.mxu0 %v6443
  %6691 = vmatpush.msra.mxu0 %v6441
  %6692 = vmatpush.msra.mxu0 %v6439
  %6693 = vmatpush.msra.mxu0 %v6437
  %6694 = vmatpush.msra.mxu0 %v6435
  %6695 = vmatpush.msra.mxu0 %v6433
  %6696 = vmatpush.msra.mxu0 %v6463
  %6697 = vmatpush.msra.mxu0 %v6461
  %6698 = vmatpush.msra.mxu0 %v6459
  %6699 = vmatpush.msra.mxu0 %v6457
  %6700 = vmatpush.msra.mxu0 %v6455
  %6701 = vmatpush.msra.mxu0 %v6453
  %6702 = vmatpush.msra.mxu0 %v6451
  %6703 = vmatpush.msra.mxu0 %v6449
  %6704 = vmatmul.f32.gmra.mxu0 %v4745
  %v6705 = vpop.f32.mrf.mxu0
  %v6706 = vadd.f32 0.0, %v6705
  %6707 = vmatmul.f32.gmra.mxu0 %v4746
  %v6708 = vpop.f32.mrf.mxu0
  %v6709 = vadd.f32 0.0, %v6708
  %6710 = vmatmul.f32.gmra.mxu0 %v4747
  %v6711 = vpop.f32.mrf.mxu0
  %v6712 = vadd.f32 0.0, %v6711
  %6713 = vmatmul.f32.gmra.mxu0 %v4748
  %v6714 = vpop.f32.mrf.mxu0
  %v6715 = vadd.f32 0.0, %v6714
  %6716 = vmatmul.f32.gmra.mxu0 %v4749
  %v6717 = vpop.f32.mrf.mxu0
  %v6718 = vadd.f32 0.0, %v6717
  %6719 = vmatmul.f32.gmra.mxu0 %v4750
  %v6720 = vpop.f32.mrf.mxu0
  %v6721 = vadd.f32 0.0, %v6720
  %6722 = vmatmul.f32.gmra.mxu0 %v4751
  %v6723 = vpop.f32.mrf.mxu0
  %v6724 = vadd.f32 0.0, %v6723
  %6725 = vmatmul.f32.gmra.mxu0 %v4752
  %v6726 = vpop.f32.mrf.mxu0
  %v6727 = vadd.f32 0.0, %v6726
  %6728 = vmatmul.f32.gmra.mxu0 %v4753
  %v6729 = vpop.f32.mrf.mxu0
  %v6730 = vadd.f32 0.0, %v6729
  %6731 = vmatmul.f32.gmra.mxu0 %v4754
  %v6732 = vpop.f32.mrf.mxu0
  %v6733 = vadd.f32 0.0, %v6732
  %6734 = vmatmul.f32.gmra.mxu0 %v4755
  %v6735 = vpop.f32.mrf.mxu0
  %v6736 = vadd.f32 0.0, %v6735
  %6737 = vmatmul.f32.gmra.mxu0 %v4756
  %v6738 = vpop.f32.mrf.mxu0
  %v6739 = vadd.f32 0.0, %v6738
  %6740 = vmatmul.f32.gmra.mxu0 %v4757
  %v6741 = vpop.f32.mrf.mxu0
  %v6742 = vadd.f32 0.0, %v6741
  %6743 = vmatmul.f32.gmra.mxu0 %v4758
  %v6744 = vpop.f32.mrf.mxu0
  %v6745 = vadd.f32 0.0, %v6744
  %6746 = vmatmul.f32.gmra.mxu0 %v4759
  %v6747 = vpop.f32.mrf.mxu0
  %v6748 = vadd.f32 0.0, %v6747
  %6749 = vmatmul.f32.gmra.mxu0 %v4760
  %v6750 = vpop.f32.mrf.mxu0
  %v6751 = vadd.f32 0.0, %v6750
  %6752 = vdwg.mxu0
  %6753 = vmatpush.msra.mxu0 %v6479
  %6754 = vmatpush.msra.mxu0 %v6477
  %6755 = vmatpush.msra.mxu0 %v6475
  %6756 = vmatpush.msra.mxu0 %v6473
  %6757 = vmatpush.msra.mxu0 %v6471
  %6758 = vmatpush.msra.mxu0 %v6469
  %6759 = vmatpush.msra.mxu0 %v6467
  %6760 = vmatpush.msra.mxu0 %v6465
  %6761 = vmatpush.msra.mxu0 %v6495
  %6762 = vmatpush.msra.mxu0 %v6493
  %6763 = vmatpush.msra.mxu0 %v6491
  %6764 = vmatpush.msra.mxu0 %v6489
  %6765 = vmatpush.msra.mxu0 %v6487
  %6766 = vmatpush.msra.mxu0 %v6485
  %6767 = vmatpush.msra.mxu0 %v6483
  %6768 = vmatpush.msra.mxu0 %v6481
  %6769 = vmatmul.f32.gmra.mxu0 %v4761
  %v6770 = vpop.f32.mrf.mxu0
  %v6771 = vadd.f32 0.0, %v6770
  %6772 = vmatmul.f32.gmra.mxu0 %v4762
  %v6773 = vpop.f32.mrf.mxu0
  %v6774 = vadd.f32 0.0, %v6773
  %6775 = vmatmul.f32.gmra.mxu0 %v4763
  %v6776 = vpop.f32.mrf.mxu0
  %v6777 = vadd.f32 0.0, %v6776
  %6778 = vmatmul.f32.gmra.mxu0 %v4764
  %v6779 = vpop.f32.mrf.mxu0
  %v6780 = vadd.f32 0.0, %v6779
  %6781 = vmatmul.f32.gmra.mxu0 %v4765
  %v6782 = vpop.f32.mrf.mxu0
  %v6783 = vadd.f32 0.0, %v6782
  %6784 = vmatmul.f32.gmra.mxu0 %v4766
  %v6785 = vpop.f32.mrf.mxu0
  %v6786 = vadd.f32 0.0, %v6785
  %6787 = vmatmul.f32.gmra.mxu0 %v4767
  %v6788 = vpop.f32.mrf.mxu0
  %v6789 = vadd.f32 0.0, %v6788
  %6790 = vmatmul.f32.gmra.mxu0 %v4768
  %v6791 = vpop.f32.mrf.mxu0
  %v6792 = vadd.f32 0.0, %v6791
  %6793 = vmatmul.f32.gmra.mxu0 %v4769
  %v6794 = vpop.f32.mrf.mxu0
  %v6795 = vadd.f32 0.0, %v6794
  %6796 = vmatmul.f32.gmra.mxu0 %v4770
  %v6797 = vpop.f32.mrf.mxu0
  %v6798 = vadd.f32 0.0, %v6797
  %6799 = vmatmul.f32.gmra.mxu0 %v4771
  %v6800 = vpop.f32.mrf.mxu0
  %v6801 = vadd.f32 0.0, %v6800
  %6802 = vmatmul.f32.gmra.mxu0 %v4772
  %v6803 = vpop.f32.mrf.mxu0
  %v6804 = vadd.f32 0.0, %v6803
  %6805 = vmatmul.f32.gmra.mxu0 %v4773
  %v6806 = vpop.f32.mrf.mxu0
  %v6807 = vadd.f32 0.0, %v6806
  %6808 = vmatmul.f32.gmra.mxu0 %v4774
  %v6809 = vpop.f32.mrf.mxu0
  %v6810 = vadd.f32 0.0, %v6809
  %6811 = vmatmul.f32.gmra.mxu0 %v4775
  %v6812 = vpop.f32.mrf.mxu0
  %v6813 = vadd.f32 0.0, %v6812
  %6814 = vmatmul.f32.gmra.mxu0 %v4776
  %v6815 = vpop.f32.mrf.mxu0
  %v6816 = vadd.f32 0.0, %v6815
  %6817 = vdwg.mxu0
  %6818 = vmatpush.msra.mxu0 %v6511
  %6819 = vmatpush.msra.mxu0 %v6509
  %6820 = vmatpush.msra.mxu0 %v6507
  %6821 = vmatpush.msra.mxu0 %v6505
  %6822 = vmatpush.msra.mxu0 %v6503
  %6823 = vmatpush.msra.mxu0 %v6501
  %6824 = vmatpush.msra.mxu0 %v6499
  %6825 = vmatpush.msra.mxu0 %v6497
  %6826 = vmatpush.msra.mxu0 %v6527
  %6827 = vmatpush.msra.mxu0 %v6525
  %6828 = vmatpush.msra.mxu0 %v6523
  %6829 = vmatpush.msra.mxu0 %v6521
  %6830 = vmatpush.msra.mxu0 %v6519
  %6831 = vmatpush.msra.mxu0 %v6517
  %6832 = vmatpush.msra.mxu0 %v6515
  %6833 = vmatpush.msra.mxu0 %v6513
  %6834 = vmatmul.f32.gmra.mxu0 %v4777
  %v6835 = vpop.f32.mrf.mxu0
  %v6836 = vadd.f32 0.0, %v6835
  %6837 = vmatmul.f32.gmra.mxu0 %v4778
  %v6838 = vpop.f32.mrf.mxu0
  %v6839 = vadd.f32 0.0, %v6838
  %6840 = vmatmul.f32.gmra.mxu0 %v4779
  %v6841 = vpop.f32.mrf.mxu0
  %v6842 = vadd.f32 0.0, %v6841
  %6843 = vmatmul.f32.gmra.mxu0 %v4780
  %v6844 = vpop.f32.mrf.mxu0
  %v6845 = vadd.f32 0.0, %v6844
  %6846 = vmatmul.f32.gmra.mxu0 %v4781
  %v6847 = vpop.f32.mrf.mxu0
  %v6848 = vadd.f32 0.0, %v6847
  %6849 = vmatmul.f32.gmra.mxu0 %v4782
  %v6850 = vpop.f32.mrf.mxu0
  %v6851 = vadd.f32 0.0, %v6850
  %6852 = vmatmul.f32.gmra.mxu0 %v4783
  %v6853 = vpop.f32.mrf.mxu0
  %v6854 = vadd.f32 0.0, %v6853
  %6855 = vmatmul.f32.gmra.mxu0 %v4784
  %v6856 = vpop.f32.mrf.mxu0
  %v6857 = vadd.f32 0.0, %v6856
  %6858 = vmatmul.f32.gmra.mxu0 %v4785
  %v6859 = vpop.f32.mrf.mxu0
  %v6860 = vadd.f32 0.0, %v6859
  %6861 = vmatmul.f32.gmra.mxu0 %v4786
  %v6862 = vpop.f32.mrf.mxu0
  %v6863 = vadd.f32 0.0, %v6862
  %6864 = vmatmul.f32.gmra.mxu0 %v4787
  %v6865 = vpop.f32.mrf.mxu0
  %v6866 = vadd.f32 0.0, %v6865
  %6867 = vmatmul.f32.gmra.mxu0 %v4788
  %v6868 = vpop.f32.mrf.mxu0
  %v6869 = vadd.f32 0.0, %v6868
  %6870 = vmatmul.f32.gmra.mxu0 %v4789
  %v6871 = vpop.f32.mrf.mxu0
  %v6872 = vadd.f32 0.0, %v6871
  %6873 = vmatmul.f32.gmra.mxu0 %v4790
  %v6874 = vpop.f32.mrf.mxu0
  %v6875 = vadd.f32 0.0, %v6874
  %6876 = vmatmul.f32.gmra.mxu0 %v4791
  %v6877 = vpop.f32.mrf.mxu0
  %v6878 = vadd.f32 0.0, %v6877
  %6879 = vmatmul.f32.gmra.mxu0 %v4792
  %v6880 = vpop.f32.mrf.mxu0
  %v6881 = vadd.f32 0.0, %v6880
  %6882 = vdwg.mxu0
  %6883 = vmatpush.msra.mxu0 %v6543
  %6884 = vmatpush.msra.mxu0 %v6541
  %6885 = vmatpush.msra.mxu0 %v6539
  %6886 = vmatpush.msra.mxu0 %v6537
  %6887 = vmatpush.msra.mxu0 %v6535
  %6888 = vmatpush.msra.mxu0 %v6533
  %6889 = vmatpush.msra.mxu0 %v6531
  %6890 = vmatpush.msra.mxu0 %v6529
  %6891 = vmatpush.msra.mxu0 %v6559
  %6892 = vmatpush.msra.mxu0 %v6557
  %6893 = vmatpush.msra.mxu0 %v6555
  %6894 = vmatpush.msra.mxu0 %v6553
  %6895 = vmatpush.msra.mxu0 %v6551
  %6896 = vmatpush.msra.mxu0 %v6549
  %6897 = vmatpush.msra.mxu0 %v6547
  %6898 = vmatpush.msra.mxu0 %v6545
  %6899 = vmatmul.f32.gmra.mxu0 %v4793
  %v6900 = vpop.f32.mrf.mxu0
  %v6901 = vadd.f32 0.0, %v6900
  %6902 = vmatmul.f32.gmra.mxu0 %v4794
  %v6903 = vpop.f32.mrf.mxu0
  %v6904 = vadd.f32 0.0, %v6903
  %6905 = vmatmul.f32.gmra.mxu0 %v4795
  %v6906 = vpop.f32.mrf.mxu0
  %v6907 = vadd.f32 0.0, %v6906
  %6908 = vmatmul.f32.gmra.mxu0 %v4796
  %v6909 = vpop.f32.mrf.mxu0
  %v6910 = vadd.f32 0.0, %v6909
  %6911 = vmatmul.f32.gmra.mxu0 %v4797
  %v6912 = vpop.f32.mrf.mxu0
  %v6913 = vadd.f32 0.0, %v6912
  %6914 = vmatmul.f32.gmra.mxu0 %v4798
  %v6915 = vpop.f32.mrf.mxu0
  %v6916 = vadd.f32 0.0, %v6915
  %6917 = vmatmul.f32.gmra.mxu0 %v4799
  %v6918 = vpop.f32.mrf.mxu0
  %v6919 = vadd.f32 0.0, %v6918
  %6920 = vmatmul.f32.gmra.mxu0 %v4800
  %v6921 = vpop.f32.mrf.mxu0
  %v6922 = vadd.f32 0.0, %v6921
  %6923 = vmatmul.f32.gmra.mxu0 %v4801
  %v6924 = vpop.f32.mrf.mxu0
  %v6925 = vadd.f32 0.0, %v6924
  %6926 = vmatmul.f32.gmra.mxu0 %v4802
  %v6927 = vpop.f32.mrf.mxu0
  %v6928 = vadd.f32 0.0, %v6927
  %6929 = vmatmul.f32.gmra.mxu0 %v4803
  %v6930 = vpop.f32.mrf.mxu0
  %v6931 = vadd.f32 0.0, %v6930
  %6932 = vmatmul.f32.gmra.mxu0 %v4804
  %v6933 = vpop.f32.mrf.mxu0
  %v6934 = vadd.f32 0.0, %v6933
  %6935 = vmatmul.f32.gmra.mxu0 %v4805
  %v6936 = vpop.f32.mrf.mxu0
  %v6937 = vadd.f32 0.0, %v6936
  %6938 = vmatmul.f32.gmra.mxu0 %v4806
  %v6939 = vpop.f32.mrf.mxu0
  %v6940 = vadd.f32 0.0, %v6939
  %6941 = vmatmul.f32.gmra.mxu0 %v4807
  %v6942 = vpop.f32.mrf.mxu0
  %v6943 = vadd.f32 0.0, %v6942
  %6944 = vmatmul.f32.gmra.mxu0 %v4808
  %v6945 = vpop.f32.mrf.mxu0
  %v6946 = vadd.f32 0.0, %v6945
  %6947 = vdwg.mxu0
  %6948 = vmatpush.msra.mxu0 %v6575
  %6949 = vmatpush.msra.mxu0 %v6573
  %6950 = vmatpush.msra.mxu0 %v6571
  %6951 = vmatpush.msra.mxu0 %v6569
  %6952 = vmatpush.msra.mxu0 %v6567
  %6953 = vmatpush.msra.mxu0 %v6565
  %6954 = vmatpush.msra.mxu0 %v6563
  %6955 = vmatpush.msra.mxu0 %v6561
  %6956 = vmatpush.msra.mxu0 %v6591
  %6957 = vmatpush.msra.mxu0 %v6589
  %6958 = vmatpush.msra.mxu0 %v6587
  %6959 = vmatpush.msra.mxu0 %v6585
  %6960 = vmatpush.msra.mxu0 %v6583
  %6961 = vmatpush.msra.mxu0 %v6581
  %6962 = vmatpush.msra.mxu0 %v6579
  %6963 = vmatpush.msra.mxu0 %v6577
  %6964 = vmatmul.f32.gmra.mxu0 %v4809
  %v6965 = vpop.f32.mrf.mxu0
  %v6966 = vadd.f32 0.0, %v6965
  %6967 = vmatmul.f32.gmra.mxu0 %v4810
  %v6968 = vpop.f32.mrf.mxu0
  %v6969 = vadd.f32 0.0, %v6968
  %6970 = vmatmul.f32.gmra.mxu0 %v4811
  %v6971 = vpop.f32.mrf.mxu0
  %v6972 = vadd.f32 0.0, %v6971
  %6973 = vmatmul.f32.gmra.mxu0 %v4812
  %v6974 = vpop.f32.mrf.mxu0
  %v6975 = vadd.f32 0.0, %v6974
  %6976 = vmatmul.f32.gmra.mxu0 %v4813
  %v6977 = vpop.f32.mrf.mxu0
  %v6978 = vadd.f32 0.0, %v6977
  %6979 = vmatmul.f32.gmra.mxu0 %v4814
  %v6980 = vpop.f32.mrf.mxu0
  %v6981 = vadd.f32 0.0, %v6980
  %6982 = vmatmul.f32.gmra.mxu0 %v4815
  %v6983 = vpop.f32.mrf.mxu0
  %v6984 = vadd.f32 0.0, %v6983
  %6985 = vmatmul.f32.gmra.mxu0 %v4816
  %v6986 = vpop.f32.mrf.mxu0
  %v6987 = vadd.f32 0.0, %v6986
  %6988 = vmatmul.f32.gmra.mxu0 %v4817
  %v6989 = vpop.f32.mrf.mxu0
  %v6990 = vadd.f32 0.0, %v6989
  %6991 = vmatmul.f32.gmra.mxu0 %v4818
  %v6992 = vpop.f32.mrf.mxu0
  %v6993 = vadd.f32 0.0, %v6992
  %6994 = vmatmul.f32.gmra.mxu0 %v4819
  %v6995 = vpop.f32.mrf.mxu0
  %v6996 = vadd.f32 0.0, %v6995
  %6997 = vmatmul.f32.gmra.mxu0 %v4820
  %v6998 = vpop.f32.mrf.mxu0
  %v6999 = vadd.f32 0.0, %v6998
  %7000 = vmatmul.f32.gmra.mxu0 %v4821
  %v7001 = vpop.f32.mrf.mxu0
  %v7002 = vadd.f32 0.0, %v7001
  %7003 = vmatmul.f32.gmra.mxu0 %v4822
  %v7004 = vpop.f32.mrf.mxu0
  %v7005 = vadd.f32 0.0, %v7004
  %7006 = vmatmul.f32.gmra.mxu0 %v4823
  %v7007 = vpop.f32.mrf.mxu0
  %v7008 = vadd.f32 0.0, %v7007
  %7009 = vmatmul.f32.gmra.mxu0 %v4824
  %v7010 = vpop.f32.mrf.mxu0
  %v7011 = vadd.f32 0.0, %v7010
  %7012 = vdwg.mxu0
  %7013 = vmatpush.msra.mxu0 %v6607
  %7014 = vmatpush.msra.mxu0 %v6605
  %7015 = vmatpush.msra.mxu0 %v6603
  %7016 = vmatpush.msra.mxu0 %v6601
  %7017 = vmatpush.msra.mxu0 %v6599
  %7018 = vmatpush.msra.mxu0 %v6597
  %7019 = vmatpush.msra.mxu0 %v6595
  %7020 = vmatpush.msra.mxu0 %v6593
  %7021 = vmatpush.msra.mxu0 %v6623
  %7022 = vmatpush.msra.mxu0 %v6621
  %7023 = vmatpush.msra.mxu0 %v6619
  %7024 = vmatpush.msra.mxu0 %v6617
  %7025 = vmatpush.msra.mxu0 %v6615
  %7026 = vmatpush.msra.mxu0 %v6613
  %7027 = vmatpush.msra.mxu0 %v6611
  %7028 = vmatpush.msra.mxu0 %v6609
  %7029 = vmatmul.f32.gmra.mxu0 %v4825
  %v7030 = vpop.f32.mrf.mxu0
  %v7031 = vadd.f32 0.0, %v7030
  %7032 = vmatmul.f32.gmra.mxu0 %v4826
  %v7033 = vpop.f32.mrf.mxu0
  %v7034 = vadd.f32 0.0, %v7033
  %7035 = vmatmul.f32.gmra.mxu0 %v4827
  %v7036 = vpop.f32.mrf.mxu0
  %v7037 = vadd.f32 0.0, %v7036
  %7038 = vmatmul.f32.gmra.mxu0 %v4828
  %v7039 = vpop.f32.mrf.mxu0
  %v7040 = vadd.f32 0.0, %v7039
  %7041 = vmatmul.f32.gmra.mxu0 %v4829
  %v7042 = vpop.f32.mrf.mxu0
  %v7043 = vadd.f32 0.0, %v7042
  %7044 = vmatmul.f32.gmra.mxu0 %v4830
  %v7045 = vpop.f32.mrf.mxu0
  %v7046 = vadd.f32 0.0, %v7045
  %7047 = vmatmul.f32.gmra.mxu0 %v4831
  %v7048 = vpop.f32.mrf.mxu0
  %v7049 = vadd.f32 0.0, %v7048
  %7050 = vmatmul.f32.gmra.mxu0 %v4832
  %v7051 = vpop.f32.mrf.mxu0
  %v7052 = vadd.f32 0.0, %v7051
  %7053 = vmatmul.f32.gmra.mxu0 %v4833
  %v7054 = vpop.f32.mrf.mxu0
  %v7055 = vadd.f32 0.0, %v7054
  %7056 = vmatmul.f32.gmra.mxu0 %v4834
  %v7057 = vpop.f32.mrf.mxu0
  %v7058 = vadd.f32 0.0, %v7057
  %7059 = vmatmul.f32.gmra.mxu0 %v4835
  %v7060 = vpop.f32.mrf.mxu0
  %v7061 = vadd.f32 0.0, %v7060
  %7062 = vmatmul.f32.gmra.mxu0 %v4836
  %v7063 = vpop.f32.mrf.mxu0
  %v7064 = vadd.f32 0.0, %v7063
  %7065 = vmatmul.f32.gmra.mxu0 %v4837
  %v7066 = vpop.f32.mrf.mxu0
  %v7067 = vadd.f32 0.0, %v7066
  %7068 = vmatmul.f32.gmra.mxu0 %v4838
  %v7069 = vpop.f32.mrf.mxu0
  %v7070 = vadd.f32 0.0, %v7069
  %7071 = vmatmul.f32.gmra.mxu0 %v4839
  %v7072 = vpop.f32.mrf.mxu0
  %v7073 = vadd.f32 0.0, %v7072
  %7074 = vmatmul.f32.gmra.mxu0 %v4840
  %v7075 = vpop.f32.mrf.mxu0
  %v7076 = vadd.f32 0.0, %v7075
  %7077 = vdwg.mxu0
  %7078 = vmatpush.msra.mxu0 %v6639
  %7079 = vmatpush.msra.mxu0 %v6637
  %7080 = vmatpush.msra.mxu0 %v6635
  %7081 = vmatpush.msra.mxu0 %v6633
  %7082 = vmatpush.msra.mxu0 %v6631
  %7083 = vmatpush.msra.mxu0 %v6629
  %7084 = vmatpush.msra.mxu0 %v6627
  %7085 = vmatpush.msra.mxu0 %v6625
  %7086 = vmatpush.msra.mxu0 %v6655
  %7087 = vmatpush.msra.mxu0 %v6653
  %7088 = vmatpush.msra.mxu0 %v6651
  %7089 = vmatpush.msra.mxu0 %v6649
  %7090 = vmatpush.msra.mxu0 %v6647
  %7091 = vmatpush.msra.mxu0 %v6645
  %7092 = vmatpush.msra.mxu0 %v6643
  %7093 = vmatpush.msra.mxu0 %v6641
  %7094 = vmatmul.f32.gmra.mxu0 %v4841
  %v7095 = vpop.f32.mrf.mxu0
  %v7096 = vadd.f32 0.0, %v7095
  %7097 = vmatmul.f32.gmra.mxu0 %v4842
  %v7098 = vpop.f32.mrf.mxu0
  %v7099 = vadd.f32 0.0, %v7098
  %7100 = vmatmul.f32.gmra.mxu0 %v4843
  %v7101 = vpop.f32.mrf.mxu0
  %v7102 = vadd.f32 0.0, %v7101
  %7103 = vmatmul.f32.gmra.mxu0 %v4844
  %v7104 = vpop.f32.mrf.mxu0
  %v7105 = vadd.f32 0.0, %v7104
  %7106 = vmatmul.f32.gmra.mxu0 %v4845
  %v7107 = vpop.f32.mrf.mxu0
  %v7108 = vadd.f32 0.0, %v7107
  %7109 = vmatmul.f32.gmra.mxu0 %v4846
  %v7110 = vpop.f32.mrf.mxu0
  %v7111 = vadd.f32 0.0, %v7110
  %7112 = vmatmul.f32.gmra.mxu0 %v4847
  %v7113 = vpop.f32.mrf.mxu0
  %v7114 = vadd.f32 0.0, %v7113
  %7115 = vmatmul.f32.gmra.mxu0 %v4848
  %v7116 = vpop.f32.mrf.mxu0
  %v7117 = vadd.f32 0.0, %v7116
  %7118 = vmatmul.f32.gmra.mxu0 %v4849
  %v7119 = vpop.f32.mrf.mxu0
  %v7120 = vadd.f32 0.0, %v7119
  %7121 = vmatmul.f32.gmra.mxu0 %v4850
  %v7122 = vpop.f32.mrf.mxu0
  %v7123 = vadd.f32 0.0, %v7122
  %7124 = vmatmul.f32.gmra.mxu0 %v4851
  %v7125 = vpop.f32.mrf.mxu0
  %v7126 = vadd.f32 0.0, %v7125
  %7127 = vmatmul.f32.gmra.mxu0 %v4852
  %v7128 = vpop.f32.mrf.mxu0
  %v7129 = vadd.f32 0.0, %v7128
  %7130 = vmatmul.f32.gmra.mxu0 %v4853
  %v7131 = vpop.f32.mrf.mxu0
  %v7132 = vadd.f32 0.0, %v7131
  %7133 = vmatmul.f32.gmra.mxu0 %v4854
  %v7134 = vpop.f32.mrf.mxu0
  %v7135 = vadd.f32 0.0, %v7134
  %7136 = vmatmul.f32.gmra.mxu0 %v4855
  %v7137 = vpop.f32.mrf.mxu0
  %v7138 = vadd.f32 0.0, %v7137
  %7139 = vmatmul.f32.gmra.mxu0 %v4856
  %v7140 = vpop.f32.mrf.mxu0
  %v7141 = vadd.f32 0.0, %v7140
  %7142 = vdwg.mxu0
  %7143 = vmatpush.msra.mxu0 %v6671
  %7144 = vmatpush.msra.mxu0 %v6669
  %7145 = vmatpush.msra.mxu0 %v6667
  %7146 = vmatpush.msra.mxu0 %v6665
  %7147 = vmatpush.msra.mxu0 %v6663
  %7148 = vmatpush.msra.mxu0 %v6661
  %7149 = vmatpush.msra.mxu0 %v6659
  %7150 = vmatpush.msra.mxu0 %v6657
  %7151 = vmatpush.msra.mxu0 %v6687
  %7152 = vmatpush.msra.mxu0 %v6685
  %7153 = vmatpush.msra.mxu0 %v6683
  %7154 = vmatpush.msra.mxu0 %v6681
  %7155 = vmatpush.msra.mxu0 %v6679
  %7156 = vmatpush.msra.mxu0 %v6677
  %7157 = vmatpush.msra.mxu0 %v6675
  %7158 = vmatpush.msra.mxu0 %v6673
  %7159 = vmatmul.f32.gmra.mxu0 %v4857
  %v7160 = vpop.f32.mrf.mxu0
  %v7161 = vadd.f32 0.0, %v7160
  %7162 = vmatmul.f32.gmra.mxu0 %v4858
  %v7163 = vpop.f32.mrf.mxu0
  %v7164 = vadd.f32 0.0, %v7163
  %7165 = vmatmul.f32.gmra.mxu0 %v4859
  %v7166 = vpop.f32.mrf.mxu0
  %v7167 = vadd.f32 0.0, %v7166
  %7168 = vmatmul.f32.gmra.mxu0 %v4860
  %v7169 = vpop.f32.mrf.mxu0
  %v7170 = vadd.f32 0.0, %v7169
  %7171 = vmatmul.f32.gmra.mxu0 %v4861
  %v7172 = vpop.f32.mrf.mxu0
  %v7173 = vadd.f32 0.0, %v7172
  %7174 = vmatmul.f32.gmra.mxu0 %v4862
  %v7175 = vpop.f32.mrf.mxu0
  %v7176 = vadd.f32 0.0, %v7175
  %7177 = vmatmul.f32.gmra.mxu0 %v4863
  %v7178 = vpop.f32.mrf.mxu0
  %v7179 = vadd.f32 0.0, %v7178
  %7180 = vmatmul.f32.gmra.mxu0 %v4864
  %v7181 = vpop.f32.mrf.mxu0
  %v7182 = vadd.f32 0.0, %v7181
  %7183 = vmatmul.f32.gmra.mxu0 %v4865
  %v7184 = vpop.f32.mrf.mxu0
  %v7185 = vadd.f32 0.0, %v7184
  %7186 = vmatmul.f32.gmra.mxu0 %v4866
  %v7187 = vpop.f32.mrf.mxu0
  %v7188 = vadd.f32 0.0, %v7187
  %7189 = vmatmul.f32.gmra.mxu0 %v4867
  %v7190 = vpop.f32.mrf.mxu0
  %v7191 = vadd.f32 0.0, %v7190
  %7192 = vmatmul.f32.gmra.mxu0 %v4868
  %v7193 = vpop.f32.mrf.mxu0
  %v7194 = vadd.f32 0.0, %v7193
  %7195 = vmatmul.f32.gmra.mxu0 %v4869
  %v7196 = vpop.f32.mrf.mxu0
  %v7197 = vadd.f32 0.0, %v7196
  %7198 = vmatmul.f32.gmra.mxu0 %v4870
  %v7199 = vpop.f32.mrf.mxu0
  %v7200 = vadd.f32 0.0, %v7199
  %7201 = vmatmul.f32.gmra.mxu0 %v4871
  %v7202 = vpop.f32.mrf.mxu0
  %v7203 = vadd.f32 0.0, %v7202
  %7204 = vmatmul.f32.gmra.mxu0 %v4872
  %v7205 = vpop.f32.mrf.mxu0
  %v7206 = vadd.f32 0.0, %v7205
  %7207 = vdwg.mxu0
  %v7208 = vlaneseq
  %v7209 = vshrl.u32 %v7208, 7
  %v7210 = vadd.s32 %v7209, 8
  %v7211 = vadd.s32 %v7209, 16
  %v7212 = vadd.s32 %v7209, 24
  %v7213 = vadd.s32 %v7209, 32
  %v7214 = vadd.s32 %v7209, 40
  %v7215 = vadd.s32 %v7209, 48
  %v7216 = vadd.s32 %v7209, 56
  %v7217 = vadd.s32 %v7209, 64
  %v7218 = vadd.s32 %v7209, 72
  %v7219 = vadd.s32 %v7209, 80
  %v7220 = vadd.s32 %v7209, 88
  %v7221 = vadd.s32 %v7209, 96
  %v7222 = vadd.s32 %v7209, 104
  %v7223 = vadd.s32 %v7209, 112
  %v7224 = vadd.s32 %v7209, 120
  %v7225 = vlaneseq
  %v7226 = vand.u32 %v7225, 127
  %v7227 = vsub.s32 %v7209, %v7226
  %v7228 = vsub.s32 %v7210, %v7226
  %v7229 = vsub.s32 %v7211, %v7226
  %v7230 = vsub.s32 %v7212, %v7226
  %v7231 = vsub.s32 %v7213, %v7226
  %v7232 = vsub.s32 %v7214, %v7226
  %v7233 = vsub.s32 %v7215, %v7226
  %v7234 = vsub.s32 %v7216, %v7226
  %v7235 = vsub.s32 %v7217, %v7226
  %v7236 = vsub.s32 %v7218, %v7226
  %v7237 = vsub.s32 %v7219, %v7226
  %v7238 = vsub.s32 %v7220, %v7226
  %v7239 = vsub.s32 %v7221, %v7226
  %v7240 = vsub.s32 %v7222, %v7226
  %v7241 = vsub.s32 %v7223, %v7226
  %v7242 = vsub.s32 %v7224, %v7226
  %vm7243 = vcmp.lt.s32.totalorder %v7227, 0
  %v7244 = vsub.s32 0, %v7227
  %v7245 = vsel %vm7243, %v7244, %v7227
  %vm7246 = vcmp.lt.s32.totalorder %v7228, 0
  %v7247 = vsub.s32 0, %v7228
  %v7248 = vsel %vm7246, %v7247, %v7228
  %vm7249 = vcmp.lt.s32.totalorder %v7229, 0
  %v7250 = vsub.s32 0, %v7229
  %v7251 = vsel %vm7249, %v7250, %v7229
  %vm7252 = vcmp.lt.s32.totalorder %v7230, 0
  %v7253 = vsub.s32 0, %v7230
  %v7254 = vsel %vm7252, %v7253, %v7230
  %vm7255 = vcmp.lt.s32.totalorder %v7231, 0
  %v7256 = vsub.s32 0, %v7231
  %v7257 = vsel %vm7255, %v7256, %v7231
  %vm7258 = vcmp.lt.s32.totalorder %v7232, 0
  %v7259 = vsub.s32 0, %v7232
  %v7260 = vsel %vm7258, %v7259, %v7232
  %vm7261 = vcmp.lt.s32.totalorder %v7233, 0
  %v7262 = vsub.s32 0, %v7233
  %v7263 = vsel %vm7261, %v7262, %v7233
  %vm7264 = vcmp.lt.s32.totalorder %v7234, 0
  %v7265 = vsub.s32 0, %v7234
  %v7266 = vsel %vm7264, %v7265, %v7234
  %vm7267 = vcmp.lt.s32.totalorder %v7235, 0
  %v7268 = vsub.s32 0, %v7235
  %v7269 = vsel %vm7267, %v7268, %v7235
  %vm7270 = vcmp.lt.s32.totalorder %v7236, 0
  %v7271 = vsub.s32 0, %v7236
  %v7272 = vsel %vm7270, %v7271, %v7236
  %vm7273 = vcmp.lt.s32.totalorder %v7237, 0
  %v7274 = vsub.s32 0, %v7237
  %v7275 = vsel %vm7273, %v7274, %v7237
  %vm7276 = vcmp.lt.s32.totalorder %v7238, 0
  %v7277 = vsub.s32 0, %v7238
  %v7278 = vsel %vm7276, %v7277, %v7238
  %vm7279 = vcmp.lt.s32.totalorder %v7239, 0
  %v7280 = vsub.s32 0, %v7239
  %v7281 = vsel %vm7279, %v7280, %v7239
  %vm7282 = vcmp.lt.s32.totalorder %v7240, 0
  %v7283 = vsub.s32 0, %v7240
  %v7284 = vsel %vm7282, %v7283, %v7240
  %vm7285 = vcmp.lt.s32.totalorder %v7241, 0
  %v7286 = vsub.s32 0, %v7241
  %v7287 = vsel %vm7285, %v7286, %v7241
  %vm7288 = vcmp.lt.s32.totalorder %v7242, 0
  %v7289 = vsub.s32 0, %v7242
  %v7290 = vsel %vm7288, %v7289, %v7242
  %vm7291 = vcmp.le.s32.totalorder %v7245, 2
  %vm7292 = vcmp.le.s32.totalorder %v7248, 2
  %vm7293 = vcmp.le.s32.totalorder %v7251, 2
  %vm7294 = vcmp.le.s32.totalorder %v7254, 2
  %vm7295 = vcmp.le.s32.totalorder %v7257, 2
  %vm7296 = vcmp.le.s32.totalorder %v7260, 2
  %vm7297 = vcmp.le.s32.totalorder %v7263, 2
  %vm7298 = vcmp.le.s32.totalorder %v7266, 2
  %vm7299 = vcmp.le.s32.totalorder %v7269, 2
  %vm7300 = vcmp.le.s32.totalorder %v7272, 2
  %vm7301 = vcmp.le.s32.totalorder %v7275, 2
  %vm7302 = vcmp.le.s32.totalorder %v7278, 2
  %vm7303 = vcmp.le.s32.totalorder %v7281, 2
  %vm7304 = vcmp.le.s32.totalorder %v7284, 2
  %vm7305 = vcmp.le.s32.totalorder %v7287, 2
  %vm7306 = vcmp.le.s32.totalorder %v7290, 2
  %v7307 = vsel %vm7291, 1, 0
  %v7308 = vsel %vm7292, 1, 0
  %v7309 = vsel %vm7293, 1, 0
  %v7310 = vsel %vm7294, 1, 0
  %v7311 = vsel %vm7295, 1, 0
  %v7312 = vsel %vm7296, 1, 0
  %v7313 = vsel %vm7297, 1, 0
  %v7314 = vsel %vm7298, 1, 0
  %v7315 = vsel %vm7299, 1, 0
  %v7316 = vsel %vm7300, 1, 0
  %v7317 = vsel %vm7301, 1, 0
  %v7318 = vsel %vm7302, 1, 0
  %v7319 = vsel %vm7303, 1, 0
  %v7320 = vsel %vm7304, 1, 0
  %v7321 = vsel %vm7305, 1, 0
  %v7322 = vsel %vm7306, 1, 0
  %v7323 = vcvt.s32.f32 %v7307
  %v7324 = vcvt.s32.f32 %v7308
  %v7325 = vcvt.s32.f32 %v7309
  %v7326 = vcvt.s32.f32 %v7310
  %v7327 = vcvt.s32.f32 %v7311
  %v7328 = vcvt.s32.f32 %v7312
  %v7329 = vcvt.s32.f32 %v7313
  %v7330 = vcvt.s32.f32 %v7314
  %v7331 = vcvt.s32.f32 %v7315
  %v7332 = vcvt.s32.f32 %v7316
  %v7333 = vcvt.s32.f32 %v7317
  %v7334 = vcvt.s32.f32 %v7318
  %v7335 = vcvt.s32.f32 %v7319
  %v7336 = vcvt.s32.f32 %v7320
  %v7337 = vcvt.s32.f32 %v7321
  %v7338 = vcvt.s32.f32 %v7322
  %v7339 = vmul.f32 %v7323, %v6706
  %v7340 = vmul.f32 %v7324, %v6709
  %v7341 = vmul.f32 %v7325, %v6712
  %v7342 = vmul.f32 %v7326, %v6715
  %v7343 = vmul.f32 %v7327, %v6718
  %v7344 = vmul.f32 %v7328, %v6721
  %v7345 = vmul.f32 %v7329, %v6724
  %v7346 = vmul.f32 %v7330, %v6727
  %v7347 = vmul.f32 %v7331, %v6730
  %v7348 = vmul.f32 %v7332, %v6733
  %v7349 = vmul.f32 %v7333, %v6736
  %v7350 = vmul.f32 %v7334, %v6739
  %v7351 = vmul.f32 %v7335, %v6742
  %v7352 = vmul.f32 %v7336, %v6745
  %v7353 = vmul.f32 %v7337, %v6748
  %v7354 = vmul.f32 %v7338, %v6751
  %v7355 = vmul.f32 %v7323, %v6771
  %v7356 = vmul.f32 %v7324, %v6774
  %v7357 = vmul.f32 %v7325, %v6777
  %v7358 = vmul.f32 %v7326, %v6780
  %v7359 = vmul.f32 %v7327, %v6783
  %v7360 = vmul.f32 %v7328, %v6786
  %v7361 = vmul.f32 %v7329, %v6789
  %v7362 = vmul.f32 %v7330, %v6792
  %v7363 = vmul.f32 %v7331, %v6795
  %v7364 = vmul.f32 %v7332, %v6798
  %v7365 = vmul.f32 %v7333, %v6801
  %v7366 = vmul.f32 %v7334, %v6804
  %v7367 = vmul.f32 %v7335, %v6807
  %v7368 = vmul.f32 %v7336, %v6810
  %v7369 = vmul.f32 %v7337, %v6813
  %v7370 = vmul.f32 %v7338, %v6816
  %v7371 = vmul.f32 %v7323, %v6836
  %v7372 = vmul.f32 %v7324, %v6839
  %v7373 = vmul.f32 %v7325, %v6842
  %v7374 = vmul.f32 %v7326, %v6845
  %v7375 = vmul.f32 %v7327, %v6848
  %v7376 = vmul.f32 %v7328, %v6851
  %v7377 = vmul.f32 %v7329, %v6854
  %v7378 = vmul.f32 %v7330, %v6857
  %v7379 = vmul.f32 %v7331, %v6860
  %v7380 = vmul.f32 %v7332, %v6863
  %v7381 = vmul.f32 %v7333, %v6866
  %v7382 = vmul.f32 %v7334, %v6869
  %v7383 = vmul.f32 %v7335, %v6872
  %v7384 = vmul.f32 %v7336, %v6875
  %v7385 = vmul.f32 %v7337, %v6878
  %v7386 = vmul.f32 %v7338, %v6881
  %v7387 = vmul.f32 %v7323, %v6901
  %v7388 = vmul.f32 %v7324, %v6904
  %v7389 = vmul.f32 %v7325, %v6907
  %v7390 = vmul.f32 %v7326, %v6910
  %v7391 = vmul.f32 %v7327, %v6913
  %v7392 = vmul.f32 %v7328, %v6916
  %v7393 = vmul.f32 %v7329, %v6919
  %v7394 = vmul.f32 %v7330, %v6922
  %v7395 = vmul.f32 %v7331, %v6925
  %v7396 = vmul.f32 %v7332, %v6928
  %v7397 = vmul.f32 %v7333, %v6931
  %v7398 = vmul.f32 %v7334, %v6934
  %v7399 = vmul.f32 %v7335, %v6937
  %v7400 = vmul.f32 %v7336, %v6940
  %v7401 = vmul.f32 %v7337, %v6943
  %v7402 = vmul.f32 %v7338, %v6946
  %v7403 = vmul.f32 %v7323, %v6966
  %v7404 = vmul.f32 %v7324, %v6969
  %v7405 = vmul.f32 %v7325, %v6972
  %v7406 = vmul.f32 %v7326, %v6975
  %v7407 = vmul.f32 %v7327, %v6978
  %v7408 = vmul.f32 %v7328, %v6981
  %v7409 = vmul.f32 %v7329, %v6984
  %v7410 = vmul.f32 %v7330, %v6987
  %v7411 = vmul.f32 %v7331, %v6990
  %v7412 = vmul.f32 %v7332, %v6993
  %v7413 = vmul.f32 %v7333, %v6996
  %v7414 = vmul.f32 %v7334, %v6999
  %v7415 = vmul.f32 %v7335, %v7002
  %v7416 = vmul.f32 %v7336, %v7005
  %v7417 = vmul.f32 %v7337, %v7008
  %v7418 = vmul.f32 %v7338, %v7011
  %v7419 = vmul.f32 %v7323, %v7031
  %v7420 = vmul.f32 %v7324, %v7034
  %v7421 = vmul.f32 %v7325, %v7037
  %v7422 = vmul.f32 %v7326, %v7040
  %v7423 = vmul.f32 %v7327, %v7043
  %v7424 = vmul.f32 %v7328, %v7046
  %v7425 = vmul.f32 %v7329, %v7049
  %v7426 = vmul.f32 %v7330, %v7052
  %v7427 = vmul.f32 %v7331, %v7055
  %v7428 = vmul.f32 %v7332, %v7058
  %v7429 = vmul.f32 %v7333, %v7061
  %v7430 = vmul.f32 %v7334, %v7064
  %v7431 = vmul.f32 %v7335, %v7067
  %v7432 = vmul.f32 %v7336, %v7070
  %v7433 = vmul.f32 %v7337, %v7073
  %v7434 = vmul.f32 %v7338, %v7076
  %v7435 = vmul.f32 %v7323, %v7096
  %v7436 = vmul.f32 %v7324, %v7099
  %v7437 = vmul.f32 %v7325, %v7102
  %v7438 = vmul.f32 %v7326, %v7105
  %v7439 = vmul.f32 %v7327, %v7108
  %v7440 = vmul.f32 %v7328, %v7111
  %v7441 = vmul.f32 %v7329, %v7114
  %v7442 = vmul.f32 %v7330, %v7117
  %v7443 = vmul.f32 %v7331, %v7120
  %v7444 = vmul.f32 %v7332, %v7123
  %v7445 = vmul.f32 %v7333, %v7126
  %v7446 = vmul.f32 %v7334, %v7129
  %v7447 = vmul.f32 %v7335, %v7132
  %v7448 = vmul.f32 %v7336, %v7135
  %v7449 = vmul.f32 %v7337, %v7138
  %v7450 = vmul.f32 %v7338, %v7141
  %v7451 = vmul.f32 %v7323, %v7161
  %v7452 = vmul.f32 %v7324, %v7164
  %v7453 = vmul.f32 %v7325, %v7167
  %v7454 = vmul.f32 %v7326, %v7170
  %v7455 = vmul.f32 %v7327, %v7173
  %v7456 = vmul.f32 %v7328, %v7176
  %v7457 = vmul.f32 %v7329, %v7179
  %v7458 = vmul.f32 %v7330, %v7182
  %v7459 = vmul.f32 %v7331, %v7185
  %v7460 = vmul.f32 %v7332, %v7188
  %v7461 = vmul.f32 %v7333, %v7191
  %v7462 = vmul.f32 %v7334, %v7194
  %v7463 = vmul.f32 %v7335, %v7197
  %v7464 = vmul.f32 %v7336, %v7200
  %v7465 = vmul.f32 %v7337, %v7203
  %v7466 = vmul.f32 %v7338, %v7206
  %v7467 = vadd.f32 %v7339, %v7340
  %v7468 = vadd.f32 %v7467, %v7341
  %v7469 = vadd.f32 %v7468, %v7342
  %v7470 = vadd.f32 %v7469, %v7343
  %v7471 = vadd.f32 %v7470, %v7344
  %v7472 = vadd.f32 %v7471, %v7345
  %v7473 = vadd.f32 %v7472, %v7346
  %v7474 = vadd.f32 %v7473, %v7347
  %v7475 = vadd.f32 %v7474, %v7348
  %v7476 = vadd.f32 %v7475, %v7349
  %v7477 = vadd.f32 %v7476, %v7350
  %v7478 = vadd.f32 %v7477, %v7351
  %v7479 = vadd.f32 %v7478, %v7352
  %v7480 = vadd.f32 %v7479, %v7353
  %v7481 = vadd.f32 %v7480, %v7354
  %v7482 = vrot.slane %v7481, 4
  %v7483 = vadd.f32 %v7481, %v7482
  %v7484 = vrot.slane %v7483, 2
  %v7485 = vadd.f32 %v7483, %v7484
  %v7486 = vrot.slane %v7485, 1
  %v7487 = vadd.f32 %v7485, %v7486
  %v7488 = vadd.f32 %v7355, %v7356
  %v7489 = vadd.f32 %v7488, %v7357
  %v7490 = vadd.f32 %v7489, %v7358
  %v7491 = vadd.f32 %v7490, %v7359
  %v7492 = vadd.f32 %v7491, %v7360
  %v7493 = vadd.f32 %v7492, %v7361
  %v7494 = vadd.f32 %v7493, %v7362
  %v7495 = vadd.f32 %v7494, %v7363
  %v7496 = vadd.f32 %v7495, %v7364
  %v7497 = vadd.f32 %v7496, %v7365
  %v7498 = vadd.f32 %v7497, %v7366
  %v7499 = vadd.f32 %v7498, %v7367
  %v7500 = vadd.f32 %v7499, %v7368
  %v7501 = vadd.f32 %v7500, %v7369
  %v7502 = vadd.f32 %v7501, %v7370
  %v7503 = vrot.slane %v7502, 4
  %v7504 = vadd.f32 %v7502, %v7503
  %v7505 = vrot.slane %v7504, 2
  %v7506 = vadd.f32 %v7504, %v7505
  %v7507 = vrot.slane %v7506, 1
  %v7508 = vadd.f32 %v7506, %v7507
  %v7509 = vadd.f32 %v7371, %v7372
  %v7510 = vadd.f32 %v7509, %v7373
  %v7511 = vadd.f32 %v7510, %v7374
  %v7512 = vadd.f32 %v7511, %v7375
  %v7513 = vadd.f32 %v7512, %v7376
  %v7514 = vadd.f32 %v7513, %v7377
  %v7515 = vadd.f32 %v7514, %v7378
  %v7516 = vadd.f32 %v7515, %v7379
  %v7517 = vadd.f32 %v7516, %v7380
  %v7518 = vadd.f32 %v7517, %v7381
  %v7519 = vadd.f32 %v7518, %v7382
  %v7520 = vadd.f32 %v7519, %v7383
  %v7521 = vadd.f32 %v7520, %v7384
  %v7522 = vadd.f32 %v7521, %v7385
  %v7523 = vadd.f32 %v7522, %v7386
  %v7524 = vrot.slane %v7523, 4
  %v7525 = vadd.f32 %v7523, %v7524
  %v7526 = vrot.slane %v7525, 2
  %v7527 = vadd.f32 %v7525, %v7526
  %v7528 = vrot.slane %v7527, 1
  %v7529 = vadd.f32 %v7527, %v7528
  %v7530 = vadd.f32 %v7387, %v7388
  %v7531 = vadd.f32 %v7530, %v7389
  %v7532 = vadd.f32 %v7531, %v7390
  %v7533 = vadd.f32 %v7532, %v7391
  %v7534 = vadd.f32 %v7533, %v7392
  %v7535 = vadd.f32 %v7534, %v7393
  %v7536 = vadd.f32 %v7535, %v7394
  %v7537 = vadd.f32 %v7536, %v7395
  %v7538 = vadd.f32 %v7537, %v7396
  %v7539 = vadd.f32 %v7538, %v7397
  %v7540 = vadd.f32 %v7539, %v7398
  %v7541 = vadd.f32 %v7540, %v7399
  %v7542 = vadd.f32 %v7541, %v7400
  %v7543 = vadd.f32 %v7542, %v7401
  %v7544 = vadd.f32 %v7543, %v7402
  %v7545 = vrot.slane %v7544, 4
  %v7546 = vadd.f32 %v7544, %v7545
  %v7547 = vrot.slane %v7546, 2
  %v7548 = vadd.f32 %v7546, %v7547
  %v7549 = vrot.slane %v7548, 1
  %v7550 = vadd.f32 %v7548, %v7549
  %v7551 = vadd.f32 %v7403, %v7404
  %v7552 = vadd.f32 %v7551, %v7405
  %v7553 = vadd.f32 %v7552, %v7406
  %v7554 = vadd.f32 %v7553, %v7407
  %v7555 = vadd.f32 %v7554, %v7408
  %v7556 = vadd.f32 %v7555, %v7409
  %v7557 = vadd.f32 %v7556, %v7410
  %v7558 = vadd.f32 %v7557, %v7411
  %v7559 = vadd.f32 %v7558, %v7412
  %v7560 = vadd.f32 %v7559, %v7413
  %v7561 = vadd.f32 %v7560, %v7414
  %v7562 = vadd.f32 %v7561, %v7415
  %v7563 = vadd.f32 %v7562, %v7416
  %v7564 = vadd.f32 %v7563, %v7417
  %v7565 = vadd.f32 %v7564, %v7418
  %v7566 = vrot.slane %v7565, 4
  %v7567 = vadd.f32 %v7565, %v7566
  %v7568 = vrot.slane %v7567, 2
  %v7569 = vadd.f32 %v7567, %v7568
  %v7570 = vrot.slane %v7569, 1
  %v7571 = vadd.f32 %v7569, %v7570
  %v7572 = vadd.f32 %v7419, %v7420
  %v7573 = vadd.f32 %v7572, %v7421
  %v7574 = vadd.f32 %v7573, %v7422
  %v7575 = vadd.f32 %v7574, %v7423
  %v7576 = vadd.f32 %v7575, %v7424
  %v7577 = vadd.f32 %v7576, %v7425
  %v7578 = vadd.f32 %v7577, %v7426
  %v7579 = vadd.f32 %v7578, %v7427
  %v7580 = vadd.f32 %v7579, %v7428
  %v7581 = vadd.f32 %v7580, %v7429
  %v7582 = vadd.f32 %v7581, %v7430
  %v7583 = vadd.f32 %v7582, %v7431
  %v7584 = vadd.f32 %v7583, %v7432
  %v7585 = vadd.f32 %v7584, %v7433
  %v7586 = vadd.f32 %v7585, %v7434
  %v7587 = vrot.slane %v7586, 4
  %v7588 = vadd.f32 %v7586, %v7587
  %v7589 = vrot.slane %v7588, 2
  %v7590 = vadd.f32 %v7588, %v7589
  %v7591 = vrot.slane %v7590, 1
  %v7592 = vadd.f32 %v7590, %v7591
  %v7593 = vadd.f32 %v7435, %v7436
  %v7594 = vadd.f32 %v7593, %v7437
  %v7595 = vadd.f32 %v7594, %v7438
  %v7596 = vadd.f32 %v7595, %v7439
  %v7597 = vadd.f32 %v7596, %v7440
  %v7598 = vadd.f32 %v7597, %v7441
  %v7599 = vadd.f32 %v7598, %v7442
  %v7600 = vadd.f32 %v7599, %v7443
  %v7601 = vadd.f32 %v7600, %v7444
  %v7602 = vadd.f32 %v7601, %v7445
  %v7603 = vadd.f32 %v7602, %v7446
  %v7604 = vadd.f32 %v7603, %v7447
  %v7605 = vadd.f32 %v7604, %v7448
  %v7606 = vadd.f32 %v7605, %v7449
  %v7607 = vadd.f32 %v7606, %v7450
  %v7608 = vrot.slane %v7607, 4
  %v7609 = vadd.f32 %v7607, %v7608
  %v7610 = vrot.slane %v7609, 2
  %v7611 = vadd.f32 %v7609, %v7610
  %v7612 = vrot.slane %v7611, 1
  %v7613 = vadd.f32 %v7611, %v7612
  %v7614 = vadd.f32 %v7451, %v7452
  %v7615 = vadd.f32 %v7614, %v7453
  %v7616 = vadd.f32 %v7615, %v7454
  %v7617 = vadd.f32 %v7616, %v7455
  %v7618 = vadd.f32 %v7617, %v7456
  %v7619 = vadd.f32 %v7618, %v7457
  %v7620 = vadd.f32 %v7619, %v7458
  %v7621 = vadd.f32 %v7620, %v7459
  %v7622 = vadd.f32 %v7621, %v7460
  %v7623 = vadd.f32 %v7622, %v7461
  %v7624 = vadd.f32 %v7623, %v7462
  %v7625 = vadd.f32 %v7624, %v7463
  %v7626 = vadd.f32 %v7625, %v7464
  %v7627 = vadd.f32 %v7626, %v7465
  %v7628 = vadd.f32 %v7627, %v7466
  %v7629 = vrot.slane %v7628, 4
  %v7630 = vadd.f32 %v7628, %v7629
  %v7631 = vrot.slane %v7630, 2
  %v7632 = vadd.f32 %v7630, %v7631
  %v7633 = vrot.slane %v7632, 1
  %v7634 = vadd.f32 %v7632, %v7633
  %v7635 = vmul.f32 %v7487, 5.0
  %v7636 = vmul.f32 %v7508, 5.0
  %v7637 = vmul.f32 %v7529, 5.0
  %v7638 = vmul.f32 %v7550, 5.0
  %v7639 = vmul.f32 %v7571, 5.0
  %v7640 = vmul.f32 %v7592, 5.0
  %v7641 = vmul.f32 %v7613, 5.0
  %v7642 = vmul.f32 %v7634, 5.0
  %v7643 = vtanh.pop %v7635
  %v7644 = vtanh.pop %v7636
  %v7645 = vtanh.pop %v7637
  %v7646 = vtanh.pop %v7638
  %v7647 = vtanh.pop %v7639
  %v7648 = vtanh.pop %v7640
  %v7649 = vtanh.pop %v7641
  %v7650 = vtanh.pop %v7642
  %v7651 = vlaneseq
  %v7652 = vshrl.u32 %v7651, 7
  %7654 = vset.pattern.permute.xlu0 %v7652
  %7655 = vperm.xlu0 %7654, %v7643
  %v7656 = vpop.permute.xlu0 %7655
  %v7657 = vlaneseq
  %v7658 = vshrl.u32 %v7657, 7
  %v7659 = vadd.s32 %v7658, 8
  %7660 = vset.pattern.permute.xlu0 %v7659
  %7661 = vperm.xlu0 %7660, %v7643
  %v7662 = vpop.permute.xlu0 %7661
  %v7663 = vlaneseq
  %v7664 = vshrl.u32 %v7663, 7
  %v7665 = vadd.s32 %v7664, 16
  %7666 = vset.pattern.permute.xlu0 %v7665
  %7667 = vperm.xlu0 %7666, %v7643
  %v7668 = vpop.permute.xlu0 %7667
  %v7669 = vlaneseq
  %v7670 = vshrl.u32 %v7669, 7
  %v7671 = vadd.s32 %v7670, 24
  %7672 = vset.pattern.permute.xlu0 %v7671
  %7673 = vperm.xlu0 %7672, %v7643
  %v7674 = vpop.permute.xlu0 %7673
  %v7675 = vlaneseq
  %v7676 = vshrl.u32 %v7675, 7
  %v7677 = vadd.s32 %v7676, 32
  %7678 = vset.pattern.permute.xlu0 %v7677
  %7679 = vperm.xlu0 %7678, %v7643
  %v7680 = vpop.permute.xlu0 %7679
  %v7681 = vlaneseq
  %v7682 = vshrl.u32 %v7681, 7
  %v7683 = vadd.s32 %v7682, 40
  %7684 = vset.pattern.permute.xlu0 %v7683
  %7685 = vperm.xlu0 %7684, %v7643
  %v7686 = vpop.permute.xlu0 %7685
  %v7687 = vlaneseq
  %v7688 = vshrl.u32 %v7687, 7
  %v7689 = vadd.s32 %v7688, 48
  %7690 = vset.pattern.permute.xlu0 %v7689
  %7691 = vperm.xlu0 %7690, %v7643
  %v7692 = vpop.permute.xlu0 %7691
  %v7693 = vlaneseq
  %v7694 = vshrl.u32 %v7693, 7
  %v7695 = vadd.s32 %v7694, 56
  %7696 = vset.pattern.permute.xlu0 %v7695
  %7697 = vperm.xlu0 %7696, %v7643
  %v7698 = vpop.permute.xlu0 %7697
  %v7699 = vlaneseq
  %v7700 = vshrl.u32 %v7699, 7
  %v7701 = vadd.s32 %v7700, 64
  %7702 = vset.pattern.permute.xlu0 %v7701
  %7703 = vperm.xlu0 %7702, %v7643
  %v7704 = vpop.permute.xlu0 %7703
  %v7705 = vlaneseq
  %v7706 = vshrl.u32 %v7705, 7
  %v7707 = vadd.s32 %v7706, 72
  %7708 = vset.pattern.permute.xlu0 %v7707
  %7709 = vperm.xlu0 %7708, %v7643
  %v7710 = vpop.permute.xlu0 %7709
  %v7711 = vlaneseq
  %v7712 = vshrl.u32 %v7711, 7
  %v7713 = vadd.s32 %v7712, 80
  %7714 = vset.pattern.permute.xlu0 %v7713
  %7715 = vperm.xlu0 %7714, %v7643
  %v7716 = vpop.permute.xlu0 %7715
  %v7717 = vlaneseq
  %v7718 = vshrl.u32 %v7717, 7
  %v7719 = vadd.s32 %v7718, 88
  %7720 = vset.pattern.permute.xlu0 %v7719
  %7721 = vperm.xlu0 %7720, %v7643
  %v7722 = vpop.permute.xlu0 %7721
  %v7723 = vlaneseq
  %v7724 = vshrl.u32 %v7723, 7
  %v7725 = vadd.s32 %v7724, 96
  %7726 = vset.pattern.permute.xlu0 %v7725
  %7727 = vperm.xlu0 %7726, %v7643
  %v7728 = vpop.permute.xlu0 %7727
  %v7729 = vlaneseq
  %v7730 = vshrl.u32 %v7729, 7
  %v7731 = vadd.s32 %v7730, 104
  %7732 = vset.pattern.permute.xlu0 %v7731
  %7733 = vperm.xlu0 %7732, %v7643
  %v7734 = vpop.permute.xlu0 %7733
  %v7735 = vlaneseq
  %v7736 = vshrl.u32 %v7735, 7
  %v7737 = vadd.s32 %v7736, 112
  %7738 = vset.pattern.permute.xlu0 %v7737
  %7739 = vperm.xlu0 %7738, %v7643
  %v7740 = vpop.permute.xlu0 %7739
  %v7741 = vlaneseq
  %v7742 = vshrl.u32 %v7741, 7
  %v7743 = vadd.s32 %v7742, 120
  %7744 = vset.pattern.permute.xlu0 %v7743
  %7745 = vperm.xlu0 %7744, %v7643
  %v7746 = vpop.permute.xlu0 %7745
  %v7747 = vlaneseq
  %v7748 = vshrl.u32 %v7747, 7
  %7750 = vset.pattern.permute.xlu0 %v7748
  %7751 = vperm.xlu0 %7750, %v7644
  %v7752 = vpop.permute.xlu0 %7751
  %v7753 = vlaneseq
  %v7754 = vshrl.u32 %v7753, 7
  %v7755 = vadd.s32 %v7754, 8
  %7756 = vset.pattern.permute.xlu0 %v7755
  %7757 = vperm.xlu0 %7756, %v7644
  %v7758 = vpop.permute.xlu0 %7757
  %v7759 = vlaneseq
  %v7760 = vshrl.u32 %v7759, 7
  %v7761 = vadd.s32 %v7760, 16
  %7762 = vset.pattern.permute.xlu0 %v7761
  %7763 = vperm.xlu0 %7762, %v7644
  %v7764 = vpop.permute.xlu0 %7763
  %v7765 = vlaneseq
  %v7766 = vshrl.u32 %v7765, 7
  %v7767 = vadd.s32 %v7766, 24
  %7768 = vset.pattern.permute.xlu0 %v7767
  %7769 = vperm.xlu0 %7768, %v7644
  %v7770 = vpop.permute.xlu0 %7769
  %v7771 = vlaneseq
  %v7772 = vshrl.u32 %v7771, 7
  %v7773 = vadd.s32 %v7772, 32
  %7774 = vset.pattern.permute.xlu0 %v7773
  %7775 = vperm.xlu0 %7774, %v7644
  %v7776 = vpop.permute.xlu0 %7775
  %v7777 = vlaneseq
  %v7778 = vshrl.u32 %v7777, 7
  %v7779 = vadd.s32 %v7778, 40
  %7780 = vset.pattern.permute.xlu0 %v7779
  %7781 = vperm.xlu0 %7780, %v7644
  %v7782 = vpop.permute.xlu0 %7781
  %v7783 = vlaneseq
  %v7784 = vshrl.u32 %v7783, 7
  %v7785 = vadd.s32 %v7784, 48
  %7786 = vset.pattern.permute.xlu0 %v7785
  %7787 = vperm.xlu0 %7786, %v7644
  %v7788 = vpop.permute.xlu0 %7787
  %v7789 = vlaneseq
  %v7790 = vshrl.u32 %v7789, 7
  %v7791 = vadd.s32 %v7790, 56
  %7792 = vset.pattern.permute.xlu0 %v7791
  %7793 = vperm.xlu0 %7792, %v7644
  %v7794 = vpop.permute.xlu0 %7793
  %v7795 = vlaneseq
  %v7796 = vshrl.u32 %v7795, 7
  %v7797 = vadd.s32 %v7796, 64
  %7798 = vset.pattern.permute.xlu0 %v7797
  %7799 = vperm.xlu0 %7798, %v7644
  %v7800 = vpop.permute.xlu0 %7799
  %v7801 = vlaneseq
  %v7802 = vshrl.u32 %v7801, 7
  %v7803 = vadd.s32 %v7802, 72
  %7804 = vset.pattern.permute.xlu0 %v7803
  %7805 = vperm.xlu0 %7804, %v7644
  %v7806 = vpop.permute.xlu0 %7805
  %v7807 = vlaneseq
  %v7808 = vshrl.u32 %v7807, 7
  %v7809 = vadd.s32 %v7808, 80
  %7810 = vset.pattern.permute.xlu0 %v7809
  %7811 = vperm.xlu0 %7810, %v7644
  %v7812 = vpop.permute.xlu0 %7811
  %v7813 = vlaneseq
  %v7814 = vshrl.u32 %v7813, 7
  %v7815 = vadd.s32 %v7814, 88
  %7816 = vset.pattern.permute.xlu0 %v7815
  %7817 = vperm.xlu0 %7816, %v7644
  %v7818 = vpop.permute.xlu0 %7817
  %v7819 = vlaneseq
  %v7820 = vshrl.u32 %v7819, 7
  %v7821 = vadd.s32 %v7820, 96
  %7822 = vset.pattern.permute.xlu0 %v7821
  %7823 = vperm.xlu0 %7822, %v7644
  %v7824 = vpop.permute.xlu0 %7823
  %v7825 = vlaneseq
  %v7826 = vshrl.u32 %v7825, 7
  %v7827 = vadd.s32 %v7826, 104
  %7828 = vset.pattern.permute.xlu0 %v7827
  %7829 = vperm.xlu0 %7828, %v7644
  %v7830 = vpop.permute.xlu0 %7829
  %v7831 = vlaneseq
  %v7832 = vshrl.u32 %v7831, 7
  %v7833 = vadd.s32 %v7832, 112
  %7834 = vset.pattern.permute.xlu0 %v7833
  %7835 = vperm.xlu0 %7834, %v7644
  %v7836 = vpop.permute.xlu0 %7835
  %v7837 = vlaneseq
  %v7838 = vshrl.u32 %v7837, 7
  %v7839 = vadd.s32 %v7838, 120
  %7840 = vset.pattern.permute.xlu0 %v7839
  %7841 = vperm.xlu0 %7840, %v7644
  %v7842 = vpop.permute.xlu0 %7841
  %v7843 = vlaneseq
  %v7844 = vshrl.u32 %v7843, 7
  %7846 = vset.pattern.permute.xlu0 %v7844
  %7847 = vperm.xlu0 %7846, %v7645
  %v7848 = vpop.permute.xlu0 %7847
  %v7849 = vlaneseq
  %v7850 = vshrl.u32 %v7849, 7
  %v7851 = vadd.s32 %v7850, 8
  %7852 = vset.pattern.permute.xlu0 %v7851
  %7853 = vperm.xlu0 %7852, %v7645
  %v7854 = vpop.permute.xlu0 %7853
  %v7855 = vlaneseq
  %v7856 = vshrl.u32 %v7855, 7
  %v7857 = vadd.s32 %v7856, 16
  %7858 = vset.pattern.permute.xlu0 %v7857
  %7859 = vperm.xlu0 %7858, %v7645
  %v7860 = vpop.permute.xlu0 %7859
  %v7861 = vlaneseq
  %v7862 = vshrl.u32 %v7861, 7
  %v7863 = vadd.s32 %v7862, 24
  %7864 = vset.pattern.permute.xlu0 %v7863
  %7865 = vperm.xlu0 %7864, %v7645
  %v7866 = vpop.permute.xlu0 %7865
  %v7867 = vlaneseq
  %v7868 = vshrl.u32 %v7867, 7
  %v7869 = vadd.s32 %v7868, 32
  %7870 = vset.pattern.permute.xlu0 %v7869
  %7871 = vperm.xlu0 %7870, %v7645
  %v7872 = vpop.permute.xlu0 %7871
  %v7873 = vlaneseq
  %v7874 = vshrl.u32 %v7873, 7
  %v7875 = vadd.s32 %v7874, 40
  %7876 = vset.pattern.permute.xlu0 %v7875
  %7877 = vperm.xlu0 %7876, %v7645
  %v7878 = vpop.permute.xlu0 %7877
  %v7879 = vlaneseq
  %v7880 = vshrl.u32 %v7879, 7
  %v7881 = vadd.s32 %v7880, 48
  %7882 = vset.pattern.permute.xlu0 %v7881
  %7883 = vperm.xlu0 %7882, %v7645
  %v7884 = vpop.permute.xlu0 %7883
  %v7885 = vlaneseq
  %v7886 = vshrl.u32 %v7885, 7
  %v7887 = vadd.s32 %v7886, 56
  %7888 = vset.pattern.permute.xlu0 %v7887
  %7889 = vperm.xlu0 %7888, %v7645
  %v7890 = vpop.permute.xlu0 %7889
  %v7891 = vlaneseq
  %v7892 = vshrl.u32 %v7891, 7
  %v7893 = vadd.s32 %v7892, 64
  %7894 = vset.pattern.permute.xlu0 %v7893
  %7895 = vperm.xlu0 %7894, %v7645
  %v7896 = vpop.permute.xlu0 %7895
  %v7897 = vlaneseq
  %v7898 = vshrl.u32 %v7897, 7
  %v7899 = vadd.s32 %v7898, 72
  %7900 = vset.pattern.permute.xlu0 %v7899
  %7901 = vperm.xlu0 %7900, %v7645
  %v7902 = vpop.permute.xlu0 %7901
  %v7903 = vlaneseq
  %v7904 = vshrl.u32 %v7903, 7
  %v7905 = vadd.s32 %v7904, 80
  %7906 = vset.pattern.permute.xlu0 %v7905
  %7907 = vperm.xlu0 %7906, %v7645
  %v7908 = vpop.permute.xlu0 %7907
  %v7909 = vlaneseq
  %v7910 = vshrl.u32 %v7909, 7
  %v7911 = vadd.s32 %v7910, 88
  %7912 = vset.pattern.permute.xlu0 %v7911
  %7913 = vperm.xlu0 %7912, %v7645
  %v7914 = vpop.permute.xlu0 %7913
  %v7915 = vlaneseq
  %v7916 = vshrl.u32 %v7915, 7
  %v7917 = vadd.s32 %v7916, 96
  %7918 = vset.pattern.permute.xlu0 %v7917
  %7919 = vperm.xlu0 %7918, %v7645
  %v7920 = vpop.permute.xlu0 %7919
  %v7921 = vlaneseq
  %v7922 = vshrl.u32 %v7921, 7
  %v7923 = vadd.s32 %v7922, 104
  %7924 = vset.pattern.permute.xlu0 %v7923
  %7925 = vperm.xlu0 %7924, %v7645
  %v7926 = vpop.permute.xlu0 %7925
  %v7927 = vlaneseq
  %v7928 = vshrl.u32 %v7927, 7
  %v7929 = vadd.s32 %v7928, 112
  %7930 = vset.pattern.permute.xlu0 %v7929
  %7931 = vperm.xlu0 %7930, %v7645
  %v7932 = vpop.permute.xlu0 %7931
  %v7933 = vlaneseq
  %v7934 = vshrl.u32 %v7933, 7
  %v7935 = vadd.s32 %v7934, 120
  %7936 = vset.pattern.permute.xlu0 %v7935
  %7937 = vperm.xlu0 %7936, %v7645
  %v7938 = vpop.permute.xlu0 %7937
  %v7939 = vlaneseq
  %v7940 = vshrl.u32 %v7939, 7
  %7942 = vset.pattern.permute.xlu0 %v7940
  %7943 = vperm.xlu0 %7942, %v7646
  %v7944 = vpop.permute.xlu0 %7943
  %v7945 = vlaneseq
  %v7946 = vshrl.u32 %v7945, 7
  %v7947 = vadd.s32 %v7946, 8
  %7948 = vset.pattern.permute.xlu0 %v7947
  %7949 = vperm.xlu0 %7948, %v7646
  %v7950 = vpop.permute.xlu0 %7949
  %v7951 = vlaneseq
  %v7952 = vshrl.u32 %v7951, 7
  %v7953 = vadd.s32 %v7952, 16
  %7954 = vset.pattern.permute.xlu0 %v7953
  %7955 = vperm.xlu0 %7954, %v7646
  %v7956 = vpop.permute.xlu0 %7955
  %v7957 = vlaneseq
  %v7958 = vshrl.u32 %v7957, 7
  %v7959 = vadd.s32 %v7958, 24
  %7960 = vset.pattern.permute.xlu0 %v7959
  %7961 = vperm.xlu0 %7960, %v7646
  %v7962 = vpop.permute.xlu0 %7961
  %v7963 = vlaneseq
  %v7964 = vshrl.u32 %v7963, 7
  %v7965 = vadd.s32 %v7964, 32
  %7966 = vset.pattern.permute.xlu0 %v7965
  %7967 = vperm.xlu0 %7966, %v7646
  %v7968 = vpop.permute.xlu0 %7967
  %v7969 = vlaneseq
  %v7970 = vshrl.u32 %v7969, 7
  %v7971 = vadd.s32 %v7970, 40
  %7972 = vset.pattern.permute.xlu0 %v7971
  %7973 = vperm.xlu0 %7972, %v7646
  %v7974 = vpop.permute.xlu0 %7973
  %v7975 = vlaneseq
  %v7976 = vshrl.u32 %v7975, 7
  %v7977 = vadd.s32 %v7976, 48
  %7978 = vset.pattern.permute.xlu0 %v7977
  %7979 = vperm.xlu0 %7978, %v7646
  %v7980 = vpop.permute.xlu0 %7979
  %v7981 = vlaneseq
  %v7982 = vshrl.u32 %v7981, 7
  %v7983 = vadd.s32 %v7982, 56
  %7984 = vset.pattern.permute.xlu0 %v7983
  %7985 = vperm.xlu0 %7984, %v7646
  %v7986 = vpop.permute.xlu0 %7985
  %v7987 = vlaneseq
  %v7988 = vshrl.u32 %v7987, 7
  %v7989 = vadd.s32 %v7988, 64
  %7990 = vset.pattern.permute.xlu0 %v7989
  %7991 = vperm.xlu0 %7990, %v7646
  %v7992 = vpop.permute.xlu0 %7991
  %v7993 = vlaneseq
  %v7994 = vshrl.u32 %v7993, 7
  %v7995 = vadd.s32 %v7994, 72
  %7996 = vset.pattern.permute.xlu0 %v7995
  %7997 = vperm.xlu0 %7996, %v7646
  %v7998 = vpop.permute.xlu0 %7997
  %v7999 = vlaneseq
  %v8000 = vshrl.u32 %v7999, 7
  %v8001 = vadd.s32 %v8000, 80
  %8002 = vset.pattern.permute.xlu0 %v8001
  %8003 = vperm.xlu0 %8002, %v7646
  %v8004 = vpop.permute.xlu0 %8003
  %v8005 = vlaneseq
  %v8006 = vshrl.u32 %v8005, 7
  %v8007 = vadd.s32 %v8006, 88
  %8008 = vset.pattern.permute.xlu0 %v8007
  %8009 = vperm.xlu0 %8008, %v7646
  %v8010 = vpop.permute.xlu0 %8009
  %v8011 = vlaneseq
  %v8012 = vshrl.u32 %v8011, 7
  %v8013 = vadd.s32 %v8012, 96
  %8014 = vset.pattern.permute.xlu0 %v8013
  %8015 = vperm.xlu0 %8014, %v7646
  %v8016 = vpop.permute.xlu0 %8015
  %v8017 = vlaneseq
  %v8018 = vshrl.u32 %v8017, 7
  %v8019 = vadd.s32 %v8018, 104
  %8020 = vset.pattern.permute.xlu0 %v8019
  %8021 = vperm.xlu0 %8020, %v7646
  %v8022 = vpop.permute.xlu0 %8021
  %v8023 = vlaneseq
  %v8024 = vshrl.u32 %v8023, 7
  %v8025 = vadd.s32 %v8024, 112
  %8026 = vset.pattern.permute.xlu0 %v8025
  %8027 = vperm.xlu0 %8026, %v7646
  %v8028 = vpop.permute.xlu0 %8027
  %v8029 = vlaneseq
  %v8030 = vshrl.u32 %v8029, 7
  %v8031 = vadd.s32 %v8030, 120
  %8032 = vset.pattern.permute.xlu0 %v8031
  %8033 = vperm.xlu0 %8032, %v7646
  %v8034 = vpop.permute.xlu0 %8033
  %v8035 = vlaneseq
  %v8036 = vshrl.u32 %v8035, 7
  %8038 = vset.pattern.permute.xlu0 %v8036
  %8039 = vperm.xlu0 %8038, %v7647
  %v8040 = vpop.permute.xlu0 %8039
  %v8041 = vlaneseq
  %v8042 = vshrl.u32 %v8041, 7
  %v8043 = vadd.s32 %v8042, 8
  %8044 = vset.pattern.permute.xlu0 %v8043
  %8045 = vperm.xlu0 %8044, %v7647
  %v8046 = vpop.permute.xlu0 %8045
  %v8047 = vlaneseq
  %v8048 = vshrl.u32 %v8047, 7
  %v8049 = vadd.s32 %v8048, 16
  %8050 = vset.pattern.permute.xlu0 %v8049
  %8051 = vperm.xlu0 %8050, %v7647
  %v8052 = vpop.permute.xlu0 %8051
  %v8053 = vlaneseq
  %v8054 = vshrl.u32 %v8053, 7
  %v8055 = vadd.s32 %v8054, 24
  %8056 = vset.pattern.permute.xlu0 %v8055
  %8057 = vperm.xlu0 %8056, %v7647
  %v8058 = vpop.permute.xlu0 %8057
  %v8059 = vlaneseq
  %v8060 = vshrl.u32 %v8059, 7
  %v8061 = vadd.s32 %v8060, 32
  %8062 = vset.pattern.permute.xlu0 %v8061
  %8063 = vperm.xlu0 %8062, %v7647
  %v8064 = vpop.permute.xlu0 %8063
  %v8065 = vlaneseq
  %v8066 = vshrl.u32 %v8065, 7
  %v8067 = vadd.s32 %v8066, 40
  %8068 = vset.pattern.permute.xlu0 %v8067
  %8069 = vperm.xlu0 %8068, %v7647
  %v8070 = vpop.permute.xlu0 %8069
  %v8071 = vlaneseq
  %v8072 = vshrl.u32 %v8071, 7
  %v8073 = vadd.s32 %v8072, 48
  %8074 = vset.pattern.permute.xlu0 %v8073
  %8075 = vperm.xlu0 %8074, %v7647
  %v8076 = vpop.permute.xlu0 %8075
  %v8077 = vlaneseq
  %v8078 = vshrl.u32 %v8077, 7
  %v8079 = vadd.s32 %v8078, 56
  %8080 = vset.pattern.permute.xlu0 %v8079
  %8081 = vperm.xlu0 %8080, %v7647
  %v8082 = vpop.permute.xlu0 %8081
  %v8083 = vlaneseq
  %v8084 = vshrl.u32 %v8083, 7
  %v8085 = vadd.s32 %v8084, 64
  %8086 = vset.pattern.permute.xlu0 %v8085
  %8087 = vperm.xlu0 %8086, %v7647
  %v8088 = vpop.permute.xlu0 %8087
  %v8089 = vlaneseq
  %v8090 = vshrl.u32 %v8089, 7
  %v8091 = vadd.s32 %v8090, 72
  %8092 = vset.pattern.permute.xlu0 %v8091
  %8093 = vperm.xlu0 %8092, %v7647
  %v8094 = vpop.permute.xlu0 %8093
  %v8095 = vlaneseq
  %v8096 = vshrl.u32 %v8095, 7
  %v8097 = vadd.s32 %v8096, 80
  %8098 = vset.pattern.permute.xlu0 %v8097
  %8099 = vperm.xlu0 %8098, %v7647
  %v8100 = vpop.permute.xlu0 %8099
  %v8101 = vlaneseq
  %v8102 = vshrl.u32 %v8101, 7
  %v8103 = vadd.s32 %v8102, 88
  %8104 = vset.pattern.permute.xlu0 %v8103
  %8105 = vperm.xlu0 %8104, %v7647
  %v8106 = vpop.permute.xlu0 %8105
  %v8107 = vlaneseq
  %v8108 = vshrl.u32 %v8107, 7
  %v8109 = vadd.s32 %v8108, 96
  %8110 = vset.pattern.permute.xlu0 %v8109
  %8111 = vperm.xlu0 %8110, %v7647
  %v8112 = vpop.permute.xlu0 %8111
  %v8113 = vlaneseq
  %v8114 = vshrl.u32 %v8113, 7
  %v8115 = vadd.s32 %v8114, 104
  %8116 = vset.pattern.permute.xlu0 %v8115
  %8117 = vperm.xlu0 %8116, %v7647
  %v8118 = vpop.permute.xlu0 %8117
  %v8119 = vlaneseq
  %v8120 = vshrl.u32 %v8119, 7
  %v8121 = vadd.s32 %v8120, 112
  %8122 = vset.pattern.permute.xlu0 %v8121
  %8123 = vperm.xlu0 %8122, %v7647
  %v8124 = vpop.permute.xlu0 %8123
  %v8125 = vlaneseq
  %v8126 = vshrl.u32 %v8125, 7
  %v8127 = vadd.s32 %v8126, 120
  %8128 = vset.pattern.permute.xlu0 %v8127
  %8129 = vperm.xlu0 %8128, %v7647
  %v8130 = vpop.permute.xlu0 %8129
  %v8131 = vlaneseq
  %v8132 = vshrl.u32 %v8131, 7
  %8134 = vset.pattern.permute.xlu0 %v8132
  %8135 = vperm.xlu0 %8134, %v7648
  %v8136 = vpop.permute.xlu0 %8135
  %v8137 = vlaneseq
  %v8138 = vshrl.u32 %v8137, 7
  %v8139 = vadd.s32 %v8138, 8
  %8140 = vset.pattern.permute.xlu0 %v8139
  %8141 = vperm.xlu0 %8140, %v7648
  %v8142 = vpop.permute.xlu0 %8141
  %v8143 = vlaneseq
  %v8144 = vshrl.u32 %v8143, 7
  %v8145 = vadd.s32 %v8144, 16
  %8146 = vset.pattern.permute.xlu0 %v8145
  %8147 = vperm.xlu0 %8146, %v7648
  %v8148 = vpop.permute.xlu0 %8147
  %v8149 = vlaneseq
  %v8150 = vshrl.u32 %v8149, 7
  %v8151 = vadd.s32 %v8150, 24
  %8152 = vset.pattern.permute.xlu0 %v8151
  %8153 = vperm.xlu0 %8152, %v7648
  %v8154 = vpop.permute.xlu0 %8153
  %v8155 = vlaneseq
  %v8156 = vshrl.u32 %v8155, 7
  %v8157 = vadd.s32 %v8156, 32
  %8158 = vset.pattern.permute.xlu0 %v8157
  %8159 = vperm.xlu0 %8158, %v7648
  %v8160 = vpop.permute.xlu0 %8159
  %v8161 = vlaneseq
  %v8162 = vshrl.u32 %v8161, 7
  %v8163 = vadd.s32 %v8162, 40
  %8164 = vset.pattern.permute.xlu0 %v8163
  %8165 = vperm.xlu0 %8164, %v7648
  %v8166 = vpop.permute.xlu0 %8165
  %v8167 = vlaneseq
  %v8168 = vshrl.u32 %v8167, 7
  %v8169 = vadd.s32 %v8168, 48
  %8170 = vset.pattern.permute.xlu0 %v8169
  %8171 = vperm.xlu0 %8170, %v7648
  %v8172 = vpop.permute.xlu0 %8171
  %v8173 = vlaneseq
  %v8174 = vshrl.u32 %v8173, 7
  %v8175 = vadd.s32 %v8174, 56
  %8176 = vset.pattern.permute.xlu0 %v8175
  %8177 = vperm.xlu0 %8176, %v7648
  %v8178 = vpop.permute.xlu0 %8177
  %v8179 = vlaneseq
  %v8180 = vshrl.u32 %v8179, 7
  %v8181 = vadd.s32 %v8180, 64
  %8182 = vset.pattern.permute.xlu0 %v8181
  %8183 = vperm.xlu0 %8182, %v7648
  %v8184 = vpop.permute.xlu0 %8183
  %v8185 = vlaneseq
  %v8186 = vshrl.u32 %v8185, 7
  %v8187 = vadd.s32 %v8186, 72
  %8188 = vset.pattern.permute.xlu0 %v8187
  %8189 = vperm.xlu0 %8188, %v7648
  %v8190 = vpop.permute.xlu0 %8189
  %v8191 = vlaneseq
  %v8192 = vshrl.u32 %v8191, 7
  %v8193 = vadd.s32 %v8192, 80
  %8194 = vset.pattern.permute.xlu0 %v8193
  %8195 = vperm.xlu0 %8194, %v7648
  %v8196 = vpop.permute.xlu0 %8195
  %v8197 = vlaneseq
  %v8198 = vshrl.u32 %v8197, 7
  %v8199 = vadd.s32 %v8198, 88
  %8200 = vset.pattern.permute.xlu0 %v8199
  %8201 = vperm.xlu0 %8200, %v7648
  %v8202 = vpop.permute.xlu0 %8201
  %v8203 = vlaneseq
  %v8204 = vshrl.u32 %v8203, 7
  %v8205 = vadd.s32 %v8204, 96
  %8206 = vset.pattern.permute.xlu0 %v8205
  %8207 = vperm.xlu0 %8206, %v7648
  %v8208 = vpop.permute.xlu0 %8207
  %v8209 = vlaneseq
  %v8210 = vshrl.u32 %v8209, 7
  %v8211 = vadd.s32 %v8210, 104
  %8212 = vset.pattern.permute.xlu0 %v8211
  %8213 = vperm.xlu0 %8212, %v7648
  %v8214 = vpop.permute.xlu0 %8213
  %v8215 = vlaneseq
  %v8216 = vshrl.u32 %v8215, 7
  %v8217 = vadd.s32 %v8216, 112
  %8218 = vset.pattern.permute.xlu0 %v8217
  %8219 = vperm.xlu0 %8218, %v7648
  %v8220 = vpop.permute.xlu0 %8219
  %v8221 = vlaneseq
  %v8222 = vshrl.u32 %v8221, 7
  %v8223 = vadd.s32 %v8222, 120
  %8224 = vset.pattern.permute.xlu0 %v8223
  %8225 = vperm.xlu0 %8224, %v7648
  %v8226 = vpop.permute.xlu0 %8225
  %v8227 = vlaneseq
  %v8228 = vshrl.u32 %v8227, 7
  %8230 = vset.pattern.permute.xlu0 %v8228
  %8231 = vperm.xlu0 %8230, %v7649
  %v8232 = vpop.permute.xlu0 %8231
  %v8233 = vlaneseq
  %v8234 = vshrl.u32 %v8233, 7
  %v8235 = vadd.s32 %v8234, 8
  %8236 = vset.pattern.permute.xlu0 %v8235
  %8237 = vperm.xlu0 %8236, %v7649
  %v8238 = vpop.permute.xlu0 %8237
  %v8239 = vlaneseq
  %v8240 = vshrl.u32 %v8239, 7
  %v8241 = vadd.s32 %v8240, 16
  %8242 = vset.pattern.permute.xlu0 %v8241
  %8243 = vperm.xlu0 %8242, %v7649
  %v8244 = vpop.permute.xlu0 %8243
  %v8245 = vlaneseq
  %v8246 = vshrl.u32 %v8245, 7
  %v8247 = vadd.s32 %v8246, 24
  %8248 = vset.pattern.permute.xlu0 %v8247
  %8249 = vperm.xlu0 %8248, %v7649
  %v8250 = vpop.permute.xlu0 %8249
  %v8251 = vlaneseq
  %v8252 = vshrl.u32 %v8251, 7
  %v8253 = vadd.s32 %v8252, 32
  %8254 = vset.pattern.permute.xlu0 %v8253
  %8255 = vperm.xlu0 %8254, %v7649
  %v8256 = vpop.permute.xlu0 %8255
  %v8257 = vlaneseq
  %v8258 = vshrl.u32 %v8257, 7
  %v8259 = vadd.s32 %v8258, 40
  %8260 = vset.pattern.permute.xlu0 %v8259
  %8261 = vperm.xlu0 %8260, %v7649
  %v8262 = vpop.permute.xlu0 %8261
  %v8263 = vlaneseq
  %v8264 = vshrl.u32 %v8263, 7
  %v8265 = vadd.s32 %v8264, 48
  %8266 = vset.pattern.permute.xlu0 %v8265
  %8267 = vperm.xlu0 %8266, %v7649
  %v8268 = vpop.permute.xlu0 %8267
  %v8269 = vlaneseq
  %v8270 = vshrl.u32 %v8269, 7
  %v8271 = vadd.s32 %v8270, 56
  %8272 = vset.pattern.permute.xlu0 %v8271
  %8273 = vperm.xlu0 %8272, %v7649
  %v8274 = vpop.permute.xlu0 %8273
  %v8275 = vlaneseq
  %v8276 = vshrl.u32 %v8275, 7
  %v8277 = vadd.s32 %v8276, 64
  %8278 = vset.pattern.permute.xlu0 %v8277
  %8279 = vperm.xlu0 %8278, %v7649
  %v8280 = vpop.permute.xlu0 %8279
  %v8281 = vlaneseq
  %v8282 = vshrl.u32 %v8281, 7
  %v8283 = vadd.s32 %v8282, 72
  %8284 = vset.pattern.permute.xlu0 %v8283
  %8285 = vperm.xlu0 %8284, %v7649
  %v8286 = vpop.permute.xlu0 %8285
  %v8287 = vlaneseq
  %v8288 = vshrl.u32 %v8287, 7
  %v8289 = vadd.s32 %v8288, 80
  %8290 = vset.pattern.permute.xlu0 %v8289
  %8291 = vperm.xlu0 %8290, %v7649
  %v8292 = vpop.permute.xlu0 %8291
  %v8293 = vlaneseq
  %v8294 = vshrl.u32 %v8293, 7
  %v8295 = vadd.s32 %v8294, 88
  %8296 = vset.pattern.permute.xlu0 %v8295
  %8297 = vperm.xlu0 %8296, %v7649
  %v8298 = vpop.permute.xlu0 %8297
  %v8299 = vlaneseq
  %v8300 = vshrl.u32 %v8299, 7
  %v8301 = vadd.s32 %v8300, 96
  %8302 = vset.pattern.permute.xlu0 %v8301
  %8303 = vperm.xlu0 %8302, %v7649
  %v8304 = vpop.permute.xlu0 %8303
  %v8305 = vlaneseq
  %v8306 = vshrl.u32 %v8305, 7
  %v8307 = vadd.s32 %v8306, 104
  %8308 = vset.pattern.permute.xlu0 %v8307
  %8309 = vperm.xlu0 %8308, %v7649
  %v8310 = vpop.permute.xlu0 %8309
  %v8311 = vlaneseq
  %v8312 = vshrl.u32 %v8311, 7
  %v8313 = vadd.s32 %v8312, 112
  %8314 = vset.pattern.permute.xlu0 %v8313
  %8315 = vperm.xlu0 %8314, %v7649
  %v8316 = vpop.permute.xlu0 %8315
  %v8317 = vlaneseq
  %v8318 = vshrl.u32 %v8317, 7
  %v8319 = vadd.s32 %v8318, 120
  %8320 = vset.pattern.permute.xlu0 %v8319
  %8321 = vperm.xlu0 %8320, %v7649
  %v8322 = vpop.permute.xlu0 %8321
  %v8323 = vlaneseq
  %v8324 = vshrl.u32 %v8323, 7
  %8326 = vset.pattern.permute.xlu0 %v8324
  %8327 = vperm.xlu0 %8326, %v7650
  %v8328 = vpop.permute.xlu0 %8327
  %v8329 = vlaneseq
  %v8330 = vshrl.u32 %v8329, 7
  %v8331 = vadd.s32 %v8330, 8
  %8332 = vset.pattern.permute.xlu0 %v8331
  %8333 = vperm.xlu0 %8332, %v7650
  %v8334 = vpop.permute.xlu0 %8333
  %v8335 = vlaneseq
  %v8336 = vshrl.u32 %v8335, 7
  %v8337 = vadd.s32 %v8336, 16
  %8338 = vset.pattern.permute.xlu0 %v8337
  %8339 = vperm.xlu0 %8338, %v7650
  %v8340 = vpop.permute.xlu0 %8339
  %v8341 = vlaneseq
  %v8342 = vshrl.u32 %v8341, 7
  %v8343 = vadd.s32 %v8342, 24
  %8344 = vset.pattern.permute.xlu0 %v8343
  %8345 = vperm.xlu0 %8344, %v7650
  %v8346 = vpop.permute.xlu0 %8345
  %v8347 = vlaneseq
  %v8348 = vshrl.u32 %v8347, 7
  %v8349 = vadd.s32 %v8348, 32
  %8350 = vset.pattern.permute.xlu0 %v8349
  %8351 = vperm.xlu0 %8350, %v7650
  %v8352 = vpop.permute.xlu0 %8351
  %v8353 = vlaneseq
  %v8354 = vshrl.u32 %v8353, 7
  %v8355 = vadd.s32 %v8354, 40
  %8356 = vset.pattern.permute.xlu0 %v8355
  %8357 = vperm.xlu0 %8356, %v7650
  %v8358 = vpop.permute.xlu0 %8357
  %v8359 = vlaneseq
  %v8360 = vshrl.u32 %v8359, 7
  %v8361 = vadd.s32 %v8360, 48
  %8362 = vset.pattern.permute.xlu0 %v8361
  %8363 = vperm.xlu0 %8362, %v7650
  %v8364 = vpop.permute.xlu0 %8363
  %v8365 = vlaneseq
  %v8366 = vshrl.u32 %v8365, 7
  %v8367 = vadd.s32 %v8366, 56
  %8368 = vset.pattern.permute.xlu0 %v8367
  %8369 = vperm.xlu0 %8368, %v7650
  %v8370 = vpop.permute.xlu0 %8369
  %v8371 = vlaneseq
  %v8372 = vshrl.u32 %v8371, 7
  %v8373 = vadd.s32 %v8372, 64
  %8374 = vset.pattern.permute.xlu0 %v8373
  %8375 = vperm.xlu0 %8374, %v7650
  %v8376 = vpop.permute.xlu0 %8375
  %v8377 = vlaneseq
  %v8378 = vshrl.u32 %v8377, 7
  %v8379 = vadd.s32 %v8378, 72
  %8380 = vset.pattern.permute.xlu0 %v8379
  %8381 = vperm.xlu0 %8380, %v7650
  %v8382 = vpop.permute.xlu0 %8381
  %v8383 = vlaneseq
  %v8384 = vshrl.u32 %v8383, 7
  %v8385 = vadd.s32 %v8384, 80
  %8386 = vset.pattern.permute.xlu0 %v8385
  %8387 = vperm.xlu0 %8386, %v7650
  %v8388 = vpop.permute.xlu0 %8387
  %v8389 = vlaneseq
  %v8390 = vshrl.u32 %v8389, 7
  %v8391 = vadd.s32 %v8390, 88
  %8392 = vset.pattern.permute.xlu0 %v8391
  %8393 = vperm.xlu0 %8392, %v7650
  %v8394 = vpop.permute.xlu0 %8393
  %v8395 = vlaneseq
  %v8396 = vshrl.u32 %v8395, 7
  %v8397 = vadd.s32 %v8396, 96
  %8398 = vset.pattern.permute.xlu0 %v8397
  %8399 = vperm.xlu0 %8398, %v7650
  %v8400 = vpop.permute.xlu0 %8399
  %v8401 = vlaneseq
  %v8402 = vshrl.u32 %v8401, 7
  %v8403 = vadd.s32 %v8402, 104
  %8404 = vset.pattern.permute.xlu0 %v8403
  %8405 = vperm.xlu0 %8404, %v7650
  %v8406 = vpop.permute.xlu0 %8405
  %v8407 = vlaneseq
  %v8408 = vshrl.u32 %v8407, 7
  %v8409 = vadd.s32 %v8408, 112
  %8410 = vset.pattern.permute.xlu0 %v8409
  %8411 = vperm.xlu0 %8410, %v7650
  %v8412 = vpop.permute.xlu0 %8411
  %v8413 = vlaneseq
  %v8414 = vshrl.u32 %v8413, 7
  %v8415 = vadd.s32 %v8414, 120
  %8416 = vset.pattern.permute.xlu0 %v8415
  %8417 = vperm.xlu0 %8416, %v7650
  %v8418 = vpop.permute.xlu0 %8417
  %v8419 = vsel %vm2496, %v7656, %v7848
  %v8420 = vsel %vm2496, %v7662, %v7854
  %v8421 = vsel %vm2496, %v7668, %v7860
  %v8422 = vsel %vm2496, %v7674, %v7866
  %v8423 = vsel %vm2496, %v7680, %v7872
  %v8424 = vsel %vm2496, %v7686, %v7878
  %v8425 = vsel %vm2496, %v7692, %v7884
  %v8426 = vsel %vm2496, %v7698, %v7890
  %v8427 = vsel %vm2496, %v7704, %v7896
  %v8428 = vsel %vm2496, %v7710, %v7902
  %v8429 = vsel %vm2496, %v7716, %v7908
  %v8430 = vsel %vm2496, %v7722, %v7914
  %v8431 = vsel %vm2496, %v7728, %v7920
  %v8432 = vsel %vm2496, %v7734, %v7926
  %v8433 = vsel %vm2496, %v7740, %v7932
  %v8434 = vsel %vm2496, %v7746, %v7938
  %v8435 = vsel %vm2496, %v7752, %v7944
  %v8436 = vsel %vm2496, %v7758, %v7950
  %v8437 = vsel %vm2496, %v7764, %v7956
  %v8438 = vsel %vm2496, %v7770, %v7962
  %v8439 = vsel %vm2496, %v7776, %v7968
  %v8440 = vsel %vm2496, %v7782, %v7974
  %v8441 = vsel %vm2496, %v7788, %v7980
  %v8442 = vsel %vm2496, %v7794, %v7986
  %v8443 = vsel %vm2496, %v7800, %v7992
  %v8444 = vsel %vm2496, %v7806, %v7998
  %v8445 = vsel %vm2496, %v7812, %v8004
  %v8446 = vsel %vm2496, %v7818, %v8010
  %v8447 = vsel %vm2496, %v7824, %v8016
  %v8448 = vsel %vm2496, %v7830, %v8022
  %v8449 = vsel %vm2496, %v7836, %v8028
  %v8450 = vsel %vm2496, %v7842, %v8034
  %v8451 = vsel %vm6193, %v8419, %v8040
  %v8452 = vsel %vm6193, %v8420, %v8046
  %v8453 = vsel %vm6193, %v8421, %v8052
  %v8454 = vsel %vm6193, %v8422, %v8058
  %v8455 = vsel %vm6193, %v8423, %v8064
  %v8456 = vsel %vm6193, %v8424, %v8070
  %v8457 = vsel %vm6193, %v8425, %v8076
  %v8458 = vsel %vm6193, %v8426, %v8082
  %v8459 = vsel %vm6193, %v8427, %v8088
  %v8460 = vsel %vm6193, %v8428, %v8094
  %v8461 = vsel %vm6193, %v8429, %v8100
  %v8462 = vsel %vm6193, %v8430, %v8106
  %v8463 = vsel %vm6193, %v8431, %v8112
  %v8464 = vsel %vm6193, %v8432, %v8118
  %v8465 = vsel %vm6193, %v8433, %v8124
  %v8466 = vsel %vm6193, %v8434, %v8130
  %v8467 = vsel %vm6193, %v8435, %v8136
  %v8468 = vsel %vm6193, %v8436, %v8142
  %v8469 = vsel %vm6193, %v8437, %v8148
  %v8470 = vsel %vm6193, %v8438, %v8154
  %v8471 = vsel %vm6193, %v8439, %v8160
  %v8472 = vsel %vm6193, %v8440, %v8166
  %v8473 = vsel %vm6193, %v8441, %v8172
  %v8474 = vsel %vm6193, %v8442, %v8178
  %v8475 = vsel %vm6193, %v8443, %v8184
  %v8476 = vsel %vm6193, %v8444, %v8190
  %v8477 = vsel %vm6193, %v8445, %v8196
  %v8478 = vsel %vm6193, %v8446, %v8202
  %v8479 = vsel %vm6193, %v8447, %v8208
  %v8480 = vsel %vm6193, %v8448, %v8214
  %v8481 = vsel %vm6193, %v8449, %v8220
  %v8482 = vsel %vm6193, %v8450, %v8226
  %v8483 = vsel %vm6226, %v8451, %v8232
  %v8484 = vsel %vm6226, %v8452, %v8238
  %v8485 = vsel %vm6226, %v8453, %v8244
  %v8486 = vsel %vm6226, %v8454, %v8250
  %v8487 = vsel %vm6226, %v8455, %v8256
  %v8488 = vsel %vm6226, %v8456, %v8262
  %v8489 = vsel %vm6226, %v8457, %v8268
  %v8490 = vsel %vm6226, %v8458, %v8274
  %v8491 = vsel %vm6226, %v8459, %v8280
  %v8492 = vsel %vm6226, %v8460, %v8286
  %v8493 = vsel %vm6226, %v8461, %v8292
  %v8494 = vsel %vm6226, %v8462, %v8298
  %v8495 = vsel %vm6226, %v8463, %v8304
  %v8496 = vsel %vm6226, %v8464, %v8310
  %v8497 = vsel %vm6226, %v8465, %v8316
  %v8498 = vsel %vm6226, %v8466, %v8322
  %v8499 = vsel %vm6226, %v8467, %v8328
  %v8500 = vsel %vm6226, %v8468, %v8334
  %v8501 = vsel %vm6226, %v8469, %v8340
  %v8502 = vsel %vm6226, %v8470, %v8346
  %v8503 = vsel %vm6226, %v8471, %v8352
  %v8504 = vsel %vm6226, %v8472, %v8358
  %v8505 = vsel %vm6226, %v8473, %v8364
  %v8506 = vsel %vm6226, %v8474, %v8370
  %v8507 = vsel %vm6226, %v8475, %v8376
  %v8508 = vsel %vm6226, %v8476, %v8382
  %v8509 = vsel %vm6226, %v8477, %v8388
  %v8510 = vsel %vm6226, %v8478, %v8394
  %v8511 = vsel %vm6226, %v8479, %v8400
  %v8512 = vsel %vm6226, %v8480, %v8406
  %v8513 = vsel %vm6226, %v8481, %v8412
  %v8514 = vsel %vm6226, %v8482, %v8418
  %v8515 = vadd.f32 %v54, %v1606
  %v8516 = vadd.f32 %v55, %v1607
  %v8517 = vadd.f32 %v56, %v1608
  %v8518 = vadd.f32 %v57, %v1609
  %v8519 = vadd.f32 %v58, %v1610
  %v8520 = vadd.f32 %v59, %v1611
  %v8521 = vadd.f32 %v60, %v1612
  %v8522 = vadd.f32 %v61, %v1613
  %v8523 = vadd.f32 %v62, %v1614
  %v8524 = vadd.f32 %v63, %v1615
  %v8525 = vadd.f32 %v64, %v1616
  %v8526 = vadd.f32 %v65, %v1617
  %v8527 = vadd.f32 %v66, %v1618
  %v8528 = vadd.f32 %v67, %v1619
  %v8529 = vadd.f32 %v68, %v1620
  %v8530 = vadd.f32 %v69, %v1621
  %v8531 = vadd.f32 %v70, %v1622
  %v8532 = vadd.f32 %v71, %v1623
  %v8533 = vadd.f32 %v72, %v1624
  %v8534 = vadd.f32 %v73, %v1625
  %v8535 = vadd.f32 %v74, %v1626
  %v8536 = vadd.f32 %v75, %v1627
  %v8537 = vadd.f32 %v76, %v1628
  %v8538 = vadd.f32 %v77, %v1629
  %v8539 = vadd.f32 %v78, %v1630
  %v8540 = vadd.f32 %v79, %v1631
  %v8541 = vadd.f32 %v80, %v1632
  %v8542 = vadd.f32 %v81, %v1633
  %v8543 = vadd.f32 %v82, %v1634
  %v8544 = vadd.f32 %v83, %v1635
  %v8545 = vadd.f32 %v84, %v1636
  %v8546 = vadd.f32 %v85, %v1637
  %v8547 = vsub.f32 %v6353, %v1606
  %v8548 = vsub.f32 %v6355, %v1607
  %v8549 = vsub.f32 %v6358, %v1608
  %v8550 = vsub.f32 %v6360, %v1609
  %v8551 = vsub.f32 %v6363, %v1610
  %v8552 = vsub.f32 %v6365, %v1611
  %v8553 = vsub.f32 %v6368, %v1612
  %v8554 = vsub.f32 %v6370, %v1613
  %v8555 = vsub.f32 %v6373, %v1614
  %v8556 = vsub.f32 %v6375, %v1615
  %v8557 = vsub.f32 %v6378, %v1616
  %v8558 = vsub.f32 %v6380, %v1617
  %v8559 = vsub.f32 %v6383, %v1618
  %v8560 = vsub.f32 %v6385, %v1619
  %v8561 = vsub.f32 %v6388, %v1620
  %v8562 = vsub.f32 %v6390, %v1621
  %v8563 = vsub.f32 %v6393, %v1622
  %v8564 = vsub.f32 %v6395, %v1623
  %v8565 = vsub.f32 %v6398, %v1624
  %v8566 = vsub.f32 %v6400, %v1625
  %v8567 = vsub.f32 %v6403, %v1626
  %v8568 = vsub.f32 %v6405, %v1627
  %v8569 = vsub.f32 %v6408, %v1628
  %v8570 = vsub.f32 %v6410, %v1629
  %v8571 = vsub.f32 %v6413, %v1630
  %v8572 = vsub.f32 %v6415, %v1631
  %v8573 = vsub.f32 %v6418, %v1632
  %v8574 = vsub.f32 %v6420, %v1633
  %v8575 = vsub.f32 %v6423, %v1634
  %v8576 = vsub.f32 %v6425, %v1635
  %v8577 = vsub.f32 %v6428, %v1636
  %v8578 = vsub.f32 %v6430, %v1637
  %v8579 = vmul.f32 %v8547, %v8483
  %v8580 = vmul.f32 %v8548, %v8484
  %v8581 = vmul.f32 %v8549, %v8485
  %v8582 = vmul.f32 %v8550, %v8486
  %v8583 = vmul.f32 %v8551, %v8487
  %v8584 = vmul.f32 %v8552, %v8488
  %v8585 = vmul.f32 %v8553, %v8489
  %v8586 = vmul.f32 %v8554, %v8490
  %v8587 = vmul.f32 %v8555, %v8491
  %v8588 = vmul.f32 %v8556, %v8492
  %v8589 = vmul.f32 %v8557, %v8493
  %v8590 = vmul.f32 %v8558, %v8494
  %v8591 = vmul.f32 %v8559, %v8495
  %v8592 = vmul.f32 %v8560, %v8496
  %v8593 = vmul.f32 %v8561, %v8497
  %v8594 = vmul.f32 %v8562, %v8498
  %v8595 = vmul.f32 %v8563, %v8499
  %v8596 = vmul.f32 %v8564, %v8500
  %v8597 = vmul.f32 %v8565, %v8501
  %v8598 = vmul.f32 %v8566, %v8502
  %v8599 = vmul.f32 %v8567, %v8503
  %v8600 = vmul.f32 %v8568, %v8504
  %v8601 = vmul.f32 %v8569, %v8505
  %v8602 = vmul.f32 %v8570, %v8506
  %v8603 = vmul.f32 %v8571, %v8507
  %v8604 = vmul.f32 %v8572, %v8508
  %v8605 = vmul.f32 %v8573, %v8509
  %v8606 = vmul.f32 %v8574, %v8510
  %v8607 = vmul.f32 %v8575, %v8511
  %v8608 = vmul.f32 %v8576, %v8512
  %v8609 = vmul.f32 %v8577, %v8513
  %v8610 = vmul.f32 %v8578, %v8514
  %v8611 = vadd.f32 %v8515, %v8579
  %v8612 = vadd.f32 %v8516, %v8580
  %v8613 = vadd.f32 %v8517, %v8581
  %v8614 = vadd.f32 %v8518, %v8582
  %v8615 = vadd.f32 %v8519, %v8583
  %v8616 = vadd.f32 %v8520, %v8584
  %v8617 = vadd.f32 %v8521, %v8585
  %v8618 = vadd.f32 %v8522, %v8586
  %v8619 = vadd.f32 %v8523, %v8587
  %v8620 = vadd.f32 %v8524, %v8588
  %v8621 = vadd.f32 %v8525, %v8589
  %v8622 = vadd.f32 %v8526, %v8590
  %v8623 = vadd.f32 %v8527, %v8591
  %v8624 = vadd.f32 %v8528, %v8592
  %v8625 = vadd.f32 %v8529, %v8593
  %v8626 = vadd.f32 %v8530, %v8594
  %v8627 = vadd.f32 %v8531, %v8595
  %v8628 = vadd.f32 %v8532, %v8596
  %v8629 = vadd.f32 %v8533, %v8597
  %v8630 = vadd.f32 %v8534, %v8598
  %v8631 = vadd.f32 %v8535, %v8599
  %v8632 = vadd.f32 %v8536, %v8600
  %v8633 = vadd.f32 %v8537, %v8601
  %v8634 = vadd.f32 %v8538, %v8602
  %v8635 = vadd.f32 %v8539, %v8603
  %v8636 = vadd.f32 %v8540, %v8604
  %v8637 = vadd.f32 %v8541, %v8605
  %v8638 = vadd.f32 %v8542, %v8606
  %v8639 = vadd.f32 %v8543, %v8607
  %v8640 = vadd.f32 %v8544, %v8608
  %v8641 = vadd.f32 %v8545, %v8609
  %v8642 = vadd.f32 %v8546, %v8610
  %v8643 = vld [vmem:[%s10] sm:$0x1]
  %v8644 = vld [vmem:[%s11] sm:$0x1]
  %v8645 = vsel %vm120, %v8611, 0.0
  %8646 = vadd.xlane.f32.xlu0 %v8645
  %v8647 = vpop.xlane.xlu0 %8646
  %v8648 = vsel %vm120, %v8612, 0.0
  %8649 = vadd.xlane.f32.xlu0 %v8648
  %v8650 = vpop.xlane.xlu0 %8649
  %v8651 = vsel %vm120, %v8613, 0.0
  %8652 = vadd.xlane.f32.xlu0 %v8651
  %v8653 = vpop.xlane.xlu0 %8652
  %v8654 = vsel %vm120, %v8614, 0.0
  %8655 = vadd.xlane.f32.xlu0 %v8654
  %v8656 = vpop.xlane.xlu0 %8655
  %v8657 = vsel %vm120, %v8615, 0.0
  %8658 = vadd.xlane.f32.xlu0 %v8657
  %v8659 = vpop.xlane.xlu0 %8658
  %v8660 = vsel %vm120, %v8616, 0.0
  %8661 = vadd.xlane.f32.xlu0 %v8660
  %v8662 = vpop.xlane.xlu0 %8661
  %v8663 = vsel %vm120, %v8617, 0.0
  %8664 = vadd.xlane.f32.xlu0 %v8663
  %v8665 = vpop.xlane.xlu0 %8664
  %v8666 = vsel %vm120, %v8618, 0.0
  %8667 = vadd.xlane.f32.xlu0 %v8666
  %v8668 = vpop.xlane.xlu0 %8667
  %v8669 = vsel %vm120, %v8619, 0.0
  %8670 = vadd.xlane.f32.xlu0 %v8669
  %v8671 = vpop.xlane.xlu0 %8670
  %v8672 = vsel %vm120, %v8620, 0.0
  %8673 = vadd.xlane.f32.xlu0 %v8672
  %v8674 = vpop.xlane.xlu0 %8673
  %v8675 = vsel %vm120, %v8621, 0.0
  %8676 = vadd.xlane.f32.xlu0 %v8675
  %v8677 = vpop.xlane.xlu0 %8676
  %v8678 = vsel %vm120, %v8622, 0.0
  %8679 = vadd.xlane.f32.xlu0 %v8678
  %v8680 = vpop.xlane.xlu0 %8679
  %v8681 = vsel %vm120, %v8623, 0.0
  %8682 = vadd.xlane.f32.xlu0 %v8681
  %v8683 = vpop.xlane.xlu0 %8682
  %v8684 = vsel %vm120, %v8624, 0.0
  %8685 = vadd.xlane.f32.xlu0 %v8684
  %v8686 = vpop.xlane.xlu0 %8685
  %v8687 = vsel %vm120, %v8625, 0.0
  %8688 = vadd.xlane.f32.xlu0 %v8687
  %v8689 = vpop.xlane.xlu0 %8688
  %v8690 = vsel %vm120, %v8626, 0.0
  %8691 = vadd.xlane.f32.xlu0 %v8690
  %v8692 = vpop.xlane.xlu0 %8691
  %v8693 = vsel %vm120, %v8627, 0.0
  %8694 = vadd.xlane.f32.xlu0 %v8693
  %v8695 = vpop.xlane.xlu0 %8694
  %v8696 = vsel %vm120, %v8628, 0.0
  %8697 = vadd.xlane.f32.xlu0 %v8696
  %v8698 = vpop.xlane.xlu0 %8697
  %v8699 = vsel %vm120, %v8629, 0.0
  %8700 = vadd.xlane.f32.xlu0 %v8699
  %v8701 = vpop.xlane.xlu0 %8700
  %v8702 = vsel %vm120, %v8630, 0.0
  %8703 = vadd.xlane.f32.xlu0 %v8702
  %v8704 = vpop.xlane.xlu0 %8703
  %v8705 = vsel %vm120, %v8631, 0.0
  %8706 = vadd.xlane.f32.xlu0 %v8705
  %v8707 = vpop.xlane.xlu0 %8706
  %v8708 = vsel %vm120, %v8632, 0.0
  %8709 = vadd.xlane.f32.xlu0 %v8708
  %v8710 = vpop.xlane.xlu0 %8709
  %v8711 = vsel %vm120, %v8633, 0.0
  %8712 = vadd.xlane.f32.xlu0 %v8711
  %v8713 = vpop.xlane.xlu0 %8712
  %v8714 = vsel %vm120, %v8634, 0.0
  %8715 = vadd.xlane.f32.xlu0 %v8714
  %v8716 = vpop.xlane.xlu0 %8715
  %v8717 = vsel %vm120, %v8635, 0.0
  %8718 = vadd.xlane.f32.xlu0 %v8717
  %v8719 = vpop.xlane.xlu0 %8718
  %v8720 = vsel %vm120, %v8636, 0.0
  %8721 = vadd.xlane.f32.xlu0 %v8720
  %v8722 = vpop.xlane.xlu0 %8721
  %v8723 = vsel %vm120, %v8637, 0.0
  %8724 = vadd.xlane.f32.xlu0 %v8723
  %v8725 = vpop.xlane.xlu0 %8724
  %v8726 = vsel %vm120, %v8638, 0.0
  %8727 = vadd.xlane.f32.xlu0 %v8726
  %v8728 = vpop.xlane.xlu0 %8727
  %v8729 = vsel %vm120, %v8639, 0.0
  %8730 = vadd.xlane.f32.xlu0 %v8729
  %v8731 = vpop.xlane.xlu0 %8730
  %v8732 = vsel %vm120, %v8640, 0.0
  %8733 = vadd.xlane.f32.xlu0 %v8732
  %v8734 = vpop.xlane.xlu0 %8733
  %v8735 = vsel %vm120, %v8641, 0.0
  %8736 = vadd.xlane.f32.xlu0 %v8735
  %v8737 = vpop.xlane.xlu0 %8736
  %v8738 = vsel %vm120, %v8642, 0.0
  %8739 = vadd.xlane.f32.xlu0 %v8738
  %v8740 = vpop.xlane.xlu0 %8739
  %v8741 = vmul.f32 %v8647, %v319
  %v8742 = vmul.f32 %v8650, %v319
  %v8743 = vmul.f32 %v8653, %v319
  %v8744 = vmul.f32 %v8656, %v319
  %v8745 = vmul.f32 %v8659, %v319
  %v8746 = vmul.f32 %v8662, %v319
  %v8747 = vmul.f32 %v8665, %v319
  %v8748 = vmul.f32 %v8668, %v319
  %v8749 = vmul.f32 %v8671, %v319
  %v8750 = vmul.f32 %v8674, %v319
  %v8751 = vmul.f32 %v8677, %v319
  %v8752 = vmul.f32 %v8680, %v319
  %v8753 = vmul.f32 %v8683, %v319
  %v8754 = vmul.f32 %v8686, %v319
  %v8755 = vmul.f32 %v8689, %v319
  %v8756 = vmul.f32 %v8692, %v319
  %v8757 = vmul.f32 %v8695, %v319
  %v8758 = vmul.f32 %v8698, %v319
  %v8759 = vmul.f32 %v8701, %v319
  %v8760 = vmul.f32 %v8704, %v319
  %v8761 = vmul.f32 %v8707, %v319
  %v8762 = vmul.f32 %v8710, %v319
  %v8763 = vmul.f32 %v8713, %v319
  %v8764 = vmul.f32 %v8716, %v319
  %v8765 = vmul.f32 %v8719, %v319
  %v8766 = vmul.f32 %v8722, %v319
  %v8767 = vmul.f32 %v8725, %v319
  %v8768 = vmul.f32 %v8728, %v319
  %v8769 = vmul.f32 %v8731, %v319
  %v8770 = vmul.f32 %v8734, %v319
  %v8771 = vmul.f32 %v8737, %v319
  %v8772 = vmul.f32 %v8740, %v319
  %v8773 = vsub.f32 %v8611, %v8741
  %v8774 = vsub.f32 %v8612, %v8742
  %v8775 = vsub.f32 %v8613, %v8743
  %v8776 = vsub.f32 %v8614, %v8744
  %v8777 = vsub.f32 %v8615, %v8745
  %v8778 = vsub.f32 %v8616, %v8746
  %v8779 = vsub.f32 %v8617, %v8747
  %v8780 = vsub.f32 %v8618, %v8748
  %v8781 = vsub.f32 %v8619, %v8749
  %v8782 = vsub.f32 %v8620, %v8750
  %v8783 = vsub.f32 %v8621, %v8751
  %v8784 = vsub.f32 %v8622, %v8752
  %v8785 = vsub.f32 %v8623, %v8753
  %v8786 = vsub.f32 %v8624, %v8754
  %v8787 = vsub.f32 %v8625, %v8755
  %v8788 = vsub.f32 %v8626, %v8756
  %v8789 = vsub.f32 %v8627, %v8757
  %v8790 = vsub.f32 %v8628, %v8758
  %v8791 = vsub.f32 %v8629, %v8759
  %v8792 = vsub.f32 %v8630, %v8760
  %v8793 = vsub.f32 %v8631, %v8761
  %v8794 = vsub.f32 %v8632, %v8762
  %v8795 = vsub.f32 %v8633, %v8763
  %v8796 = vsub.f32 %v8634, %v8764
  %v8797 = vsub.f32 %v8635, %v8765
  %v8798 = vsub.f32 %v8636, %v8766
  %v8799 = vsub.f32 %v8637, %v8767
  %v8800 = vsub.f32 %v8638, %v8768
  %v8801 = vsub.f32 %v8639, %v8769
  %v8802 = vsub.f32 %v8640, %v8770
  %v8803 = vsub.f32 %v8641, %v8771
  %v8804 = vsub.f32 %v8642, %v8772
  %v8805 = vmul.f32 %v8773, %v8773
  %v8806 = vmul.f32 %v8774, %v8774
  %v8807 = vmul.f32 %v8775, %v8775
  %v8808 = vmul.f32 %v8776, %v8776
  %v8809 = vmul.f32 %v8777, %v8777
  %v8810 = vmul.f32 %v8778, %v8778
  %v8811 = vmul.f32 %v8779, %v8779
  %v8812 = vmul.f32 %v8780, %v8780
  %v8813 = vmul.f32 %v8781, %v8781
  %v8814 = vmul.f32 %v8782, %v8782
  %v8815 = vmul.f32 %v8783, %v8783
  %v8816 = vmul.f32 %v8784, %v8784
  %v8817 = vmul.f32 %v8785, %v8785
  %v8818 = vmul.f32 %v8786, %v8786
  %v8819 = vmul.f32 %v8787, %v8787
  %v8820 = vmul.f32 %v8788, %v8788
  %v8821 = vmul.f32 %v8789, %v8789
  %v8822 = vmul.f32 %v8790, %v8790
  %v8823 = vmul.f32 %v8791, %v8791
  %v8824 = vmul.f32 %v8792, %v8792
  %v8825 = vmul.f32 %v8793, %v8793
  %v8826 = vmul.f32 %v8794, %v8794
  %v8827 = vmul.f32 %v8795, %v8795
  %v8828 = vmul.f32 %v8796, %v8796
  %v8829 = vmul.f32 %v8797, %v8797
  %v8830 = vmul.f32 %v8798, %v8798
  %v8831 = vmul.f32 %v8799, %v8799
  %v8832 = vmul.f32 %v8800, %v8800
  %v8833 = vmul.f32 %v8801, %v8801
  %v8834 = vmul.f32 %v8802, %v8802
  %v8835 = vmul.f32 %v8803, %v8803
  %v8836 = vmul.f32 %v8804, %v8804
  %v8837 = vsel %vm120, %v8805, 0.0
  %8838 = vadd.xlane.f32.xlu0 %v8837
  %v8839 = vpop.xlane.xlu0 %8838
  %v8840 = vsel %vm120, %v8806, 0.0
  %8841 = vadd.xlane.f32.xlu0 %v8840
  %v8842 = vpop.xlane.xlu0 %8841
  %v8843 = vsel %vm120, %v8807, 0.0
  %8844 = vadd.xlane.f32.xlu0 %v8843
  %v8845 = vpop.xlane.xlu0 %8844
  %v8846 = vsel %vm120, %v8808, 0.0
  %8847 = vadd.xlane.f32.xlu0 %v8846
  %v8848 = vpop.xlane.xlu0 %8847
  %v8849 = vsel %vm120, %v8809, 0.0
  %8850 = vadd.xlane.f32.xlu0 %v8849
  %v8851 = vpop.xlane.xlu0 %8850
  %v8852 = vsel %vm120, %v8810, 0.0
  %8853 = vadd.xlane.f32.xlu0 %v8852
  %v8854 = vpop.xlane.xlu0 %8853
  %v8855 = vsel %vm120, %v8811, 0.0
  %8856 = vadd.xlane.f32.xlu0 %v8855
  %v8857 = vpop.xlane.xlu0 %8856
  %v8858 = vsel %vm120, %v8812, 0.0
  %8859 = vadd.xlane.f32.xlu0 %v8858
  %v8860 = vpop.xlane.xlu0 %8859
  %v8861 = vsel %vm120, %v8813, 0.0
  %8862 = vadd.xlane.f32.xlu0 %v8861
  %v8863 = vpop.xlane.xlu0 %8862
  %v8864 = vsel %vm120, %v8814, 0.0
  %8865 = vadd.xlane.f32.xlu0 %v8864
  %v8866 = vpop.xlane.xlu0 %8865
  %v8867 = vsel %vm120, %v8815, 0.0
  %8868 = vadd.xlane.f32.xlu0 %v8867
  %v8869 = vpop.xlane.xlu0 %8868
  %v8870 = vsel %vm120, %v8816, 0.0
  %8871 = vadd.xlane.f32.xlu0 %v8870
  %v8872 = vpop.xlane.xlu0 %8871
  %v8873 = vsel %vm120, %v8817, 0.0
  %8874 = vadd.xlane.f32.xlu0 %v8873
  %v8875 = vpop.xlane.xlu0 %8874
  %v8876 = vsel %vm120, %v8818, 0.0
  %8877 = vadd.xlane.f32.xlu0 %v8876
  %v8878 = vpop.xlane.xlu0 %8877
  %v8879 = vsel %vm120, %v8819, 0.0
  %8880 = vadd.xlane.f32.xlu0 %v8879
  %v8881 = vpop.xlane.xlu0 %8880
  %v8882 = vsel %vm120, %v8820, 0.0
  %8883 = vadd.xlane.f32.xlu0 %v8882
  %v8884 = vpop.xlane.xlu0 %8883
  %v8885 = vsel %vm120, %v8821, 0.0
  %8886 = vadd.xlane.f32.xlu0 %v8885
  %v8887 = vpop.xlane.xlu0 %8886
  %v8888 = vsel %vm120, %v8822, 0.0
  %8889 = vadd.xlane.f32.xlu0 %v8888
  %v8890 = vpop.xlane.xlu0 %8889
  %v8891 = vsel %vm120, %v8823, 0.0
  %8892 = vadd.xlane.f32.xlu0 %v8891
  %v8893 = vpop.xlane.xlu0 %8892
  %v8894 = vsel %vm120, %v8824, 0.0
  %8895 = vadd.xlane.f32.xlu0 %v8894
  %v8896 = vpop.xlane.xlu0 %8895
  %v8897 = vsel %vm120, %v8825, 0.0
  %8898 = vadd.xlane.f32.xlu0 %v8897
  %v8899 = vpop.xlane.xlu0 %8898
  %v8900 = vsel %vm120, %v8826, 0.0
  %8901 = vadd.xlane.f32.xlu0 %v8900
  %v8902 = vpop.xlane.xlu0 %8901
  %v8903 = vsel %vm120, %v8827, 0.0
  %8904 = vadd.xlane.f32.xlu0 %v8903
  %v8905 = vpop.xlane.xlu0 %8904
  %v8906 = vsel %vm120, %v8828, 0.0
  %8907 = vadd.xlane.f32.xlu0 %v8906
  %v8908 = vpop.xlane.xlu0 %8907
  %v8909 = vsel %vm120, %v8829, 0.0
  %8910 = vadd.xlane.f32.xlu0 %v8909
  %v8911 = vpop.xlane.xlu0 %8910
  %v8912 = vsel %vm120, %v8830, 0.0
  %8913 = vadd.xlane.f32.xlu0 %v8912
  %v8914 = vpop.xlane.xlu0 %8913
  %v8915 = vsel %vm120, %v8831, 0.0
  %8916 = vadd.xlane.f32.xlu0 %v8915
  %v8917 = vpop.xlane.xlu0 %8916
  %v8918 = vsel %vm120, %v8832, 0.0
  %8919 = vadd.xlane.f32.xlu0 %v8918
  %v8920 = vpop.xlane.xlu0 %8919
  %v8921 = vsel %vm120, %v8833, 0.0
  %8922 = vadd.xlane.f32.xlu0 %v8921
  %v8923 = vpop.xlane.xlu0 %8922
  %v8924 = vsel %vm120, %v8834, 0.0
  %8925 = vadd.xlane.f32.xlu0 %v8924
  %v8926 = vpop.xlane.xlu0 %8925
  %v8927 = vsel %vm120, %v8835, 0.0
  %8928 = vadd.xlane.f32.xlu0 %v8927
  %v8929 = vpop.xlane.xlu0 %8928
  %v8930 = vsel %vm120, %v8836, 0.0
  %8931 = vadd.xlane.f32.xlu0 %v8930
  %v8932 = vpop.xlane.xlu0 %8931
  %v8933 = vmul.f32 %v8839, %v319
  %v8934 = vmul.f32 %v8842, %v319
  %v8935 = vmul.f32 %v8845, %v319
  %v8936 = vmul.f32 %v8848, %v319
  %v8937 = vmul.f32 %v8851, %v319
  %v8938 = vmul.f32 %v8854, %v319
  %v8939 = vmul.f32 %v8857, %v319
  %v8940 = vmul.f32 %v8860, %v319
  %v8941 = vmul.f32 %v8863, %v319
  %v8942 = vmul.f32 %v8866, %v319
  %v8943 = vmul.f32 %v8869, %v319
  %v8944 = vmul.f32 %v8872, %v319
  %v8945 = vmul.f32 %v8875, %v319
  %v8946 = vmul.f32 %v8878, %v319
  %v8947 = vmul.f32 %v8881, %v319
  %v8948 = vmul.f32 %v8884, %v319
  %v8949 = vmul.f32 %v8887, %v319
  %v8950 = vmul.f32 %v8890, %v319
  %v8951 = vmul.f32 %v8893, %v319
  %v8952 = vmul.f32 %v8896, %v319
  %v8953 = vmul.f32 %v8899, %v319
  %v8954 = vmul.f32 %v8902, %v319
  %v8955 = vmul.f32 %v8905, %v319
  %v8956 = vmul.f32 %v8908, %v319
  %v8957 = vmul.f32 %v8911, %v319
  %v8958 = vmul.f32 %v8914, %v319
  %v8959 = vmul.f32 %v8917, %v319
  %v8960 = vmul.f32 %v8920, %v319
  %v8961 = vmul.f32 %v8923, %v319
  %v8962 = vmul.f32 %v8926, %v319
  %v8963 = vmul.f32 %v8929, %v319
  %v8964 = vmul.f32 %v8932, %v319
  %v8965 = vadd.f32 %v8933, 1e-05
  %v8966 = vadd.f32 %v8934, 1e-05
  %v8967 = vadd.f32 %v8935, 1e-05
  %v8968 = vadd.f32 %v8936, 1e-05
  %v8969 = vadd.f32 %v8937, 1e-05
  %v8970 = vadd.f32 %v8938, 1e-05
  %v8971 = vadd.f32 %v8939, 1e-05
  %v8972 = vadd.f32 %v8940, 1e-05
  %v8973 = vadd.f32 %v8941, 1e-05
  %v8974 = vadd.f32 %v8942, 1e-05
  %v8975 = vadd.f32 %v8943, 1e-05
  %v8976 = vadd.f32 %v8944, 1e-05
  %v8977 = vadd.f32 %v8945, 1e-05
  %v8978 = vadd.f32 %v8946, 1e-05
  %v8979 = vadd.f32 %v8947, 1e-05
  %v8980 = vadd.f32 %v8948, 1e-05
  %v8981 = vadd.f32 %v8949, 1e-05
  %v8982 = vadd.f32 %v8950, 1e-05
  %v8983 = vadd.f32 %v8951, 1e-05
  %v8984 = vadd.f32 %v8952, 1e-05
  %v8985 = vadd.f32 %v8953, 1e-05
  %v8986 = vadd.f32 %v8954, 1e-05
  %v8987 = vadd.f32 %v8955, 1e-05
  %v8988 = vadd.f32 %v8956, 1e-05
  %v8989 = vadd.f32 %v8957, 1e-05
  %v8990 = vadd.f32 %v8958, 1e-05
  %v8991 = vadd.f32 %v8959, 1e-05
  %v8992 = vadd.f32 %v8960, 1e-05
  %v8993 = vadd.f32 %v8961, 1e-05
  %v8994 = vadd.f32 %v8962, 1e-05
  %v8995 = vadd.f32 %v8963, 1e-05
  %v8996 = vadd.f32 %v8964, 1e-05
  %v8997 = vrsqrt.pop %v8965
  %v8998 = vmul.f32 %v8997, %v8965
  %v8999 = vmul.f32 %v8998, %v8997
  %v9000 = vmul.f32 0.5, %v8999
  %v9001 = vsub.f32 1.5, %v9000
  %v9002 = vmul.f32 %v8997, %v9001
  %vm9003 = vweird.f32 %v8965
  %vm9004 = vweird.f32 %v8997
  %vm9005 = vmor %vm9003, %vm9004
  %v9006 = vsel %vm9005, %v8997, %v9002
  %v9007 = vrsqrt.pop %v8966
  %v9008 = vmul.f32 %v9007, %v8966
  %v9009 = vmul.f32 %v9008, %v9007
  %v9010 = vmul.f32 0.5, %v9009
  %v9011 = vsub.f32 1.5, %v9010
  %v9012 = vmul.f32 %v9007, %v9011
  %vm9013 = vweird.f32 %v8966
  %vm9014 = vweird.f32 %v9007
  %vm9015 = vmor %vm9013, %vm9014
  %v9016 = vsel %vm9015, %v9007, %v9012
  %v9017 = vrsqrt.pop %v8967
  %v9018 = vmul.f32 %v9017, %v8967
  %v9019 = vmul.f32 %v9018, %v9017
  %v9020 = vmul.f32 0.5, %v9019
  %v9021 = vsub.f32 1.5, %v9020
  %v9022 = vmul.f32 %v9017, %v9021
  %vm9023 = vweird.f32 %v8967
  %vm9024 = vweird.f32 %v9017
  %vm9025 = vmor %vm9023, %vm9024
  %v9026 = vsel %vm9025, %v9017, %v9022
  %v9027 = vrsqrt.pop %v8968
  %v9028 = vmul.f32 %v9027, %v8968
  %v9029 = vmul.f32 %v9028, %v9027
  %v9030 = vmul.f32 0.5, %v9029
  %v9031 = vsub.f32 1.5, %v9030
  %v9032 = vmul.f32 %v9027, %v9031
  %vm9033 = vweird.f32 %v8968
  %vm9034 = vweird.f32 %v9027
  %vm9035 = vmor %vm9033, %vm9034
  %v9036 = vsel %vm9035, %v9027, %v9032
  %v9037 = vrsqrt.pop %v8969
  %v9038 = vmul.f32 %v9037, %v8969
  %v9039 = vmul.f32 %v9038, %v9037
  %v9040 = vmul.f32 0.5, %v9039
  %v9041 = vsub.f32 1.5, %v9040
  %v9042 = vmul.f32 %v9037, %v9041
  %vm9043 = vweird.f32 %v8969
  %vm9044 = vweird.f32 %v9037
  %vm9045 = vmor %vm9043, %vm9044
  %v9046 = vsel %vm9045, %v9037, %v9042
  %v9047 = vrsqrt.pop %v8970
  %v9048 = vmul.f32 %v9047, %v8970
  %v9049 = vmul.f32 %v9048, %v9047
  %v9050 = vmul.f32 0.5, %v9049
  %v9051 = vsub.f32 1.5, %v9050
  %v9052 = vmul.f32 %v9047, %v9051
  %vm9053 = vweird.f32 %v8970
  %vm9054 = vweird.f32 %v9047
  %vm9055 = vmor %vm9053, %vm9054
  %v9056 = vsel %vm9055, %v9047, %v9052
  %v9057 = vrsqrt.pop %v8971
  %v9058 = vmul.f32 %v9057, %v8971
  %v9059 = vmul.f32 %v9058, %v9057
  %v9060 = vmul.f32 0.5, %v9059
  %v9061 = vsub.f32 1.5, %v9060
  %v9062 = vmul.f32 %v9057, %v9061
  %vm9063 = vweird.f32 %v8971
  %vm9064 = vweird.f32 %v9057
  %vm9065 = vmor %vm9063, %vm9064
  %v9066 = vsel %vm9065, %v9057, %v9062
  %v9067 = vrsqrt.pop %v8972
  %v9068 = vmul.f32 %v9067, %v8972
  %v9069 = vmul.f32 %v9068, %v9067
  %v9070 = vmul.f32 0.5, %v9069
  %v9071 = vsub.f32 1.5, %v9070
  %v9072 = vmul.f32 %v9067, %v9071
  %vm9073 = vweird.f32 %v8972
  %vm9074 = vweird.f32 %v9067
  %vm9075 = vmor %vm9073, %vm9074
  %v9076 = vsel %vm9075, %v9067, %v9072
  %v9077 = vrsqrt.pop %v8973
  %v9078 = vmul.f32 %v9077, %v8973
  %v9079 = vmul.f32 %v9078, %v9077
  %v9080 = vmul.f32 0.5, %v9079
  %v9081 = vsub.f32 1.5, %v9080
  %v9082 = vmul.f32 %v9077, %v9081
  %vm9083 = vweird.f32 %v8973
  %vm9084 = vweird.f32 %v9077
  %vm9085 = vmor %vm9083, %vm9084
  %v9086 = vsel %vm9085, %v9077, %v9082
  %v9087 = vrsqrt.pop %v8974
  %v9088 = vmul.f32 %v9087, %v8974
  %v9089 = vmul.f32 %v9088, %v9087
  %v9090 = vmul.f32 0.5, %v9089
  %v9091 = vsub.f32 1.5, %v9090
  %v9092 = vmul.f32 %v9087, %v9091
  %vm9093 = vweird.f32 %v8974
  %vm9094 = vweird.f32 %v9087
  %vm9095 = vmor %vm9093, %vm9094
  %v9096 = vsel %vm9095, %v9087, %v9092
  %v9097 = vrsqrt.pop %v8975
  %v9098 = vmul.f32 %v9097, %v8975
  %v9099 = vmul.f32 %v9098, %v9097
  %v9100 = vmul.f32 0.5, %v9099
  %v9101 = vsub.f32 1.5, %v9100
  %v9102 = vmul.f32 %v9097, %v9101
  %vm9103 = vweird.f32 %v8975
  %vm9104 = vweird.f32 %v9097
  %vm9105 = vmor %vm9103, %vm9104
  %v9106 = vsel %vm9105, %v9097, %v9102
  %v9107 = vrsqrt.pop %v8976
  %v9108 = vmul.f32 %v9107, %v8976
  %v9109 = vmul.f32 %v9108, %v9107
  %v9110 = vmul.f32 0.5, %v9109
  %v9111 = vsub.f32 1.5, %v9110
  %v9112 = vmul.f32 %v9107, %v9111
  %vm9113 = vweird.f32 %v8976
  %vm9114 = vweird.f32 %v9107
  %vm9115 = vmor %vm9113, %vm9114
  %v9116 = vsel %vm9115, %v9107, %v9112
  %v9117 = vrsqrt.pop %v8977
  %v9118 = vmul.f32 %v9117, %v8977
  %v9119 = vmul.f32 %v9118, %v9117
  %v9120 = vmul.f32 0.5, %v9119
  %v9121 = vsub.f32 1.5, %v9120
  %v9122 = vmul.f32 %v9117, %v9121
  %vm9123 = vweird.f32 %v8977
  %vm9124 = vweird.f32 %v9117
  %vm9125 = vmor %vm9123, %vm9124
  %v9126 = vsel %vm9125, %v9117, %v9122
  %v9127 = vrsqrt.pop %v8978
  %v9128 = vmul.f32 %v9127, %v8978
  %v9129 = vmul.f32 %v9128, %v9127
  %v9130 = vmul.f32 0.5, %v9129
  %v9131 = vsub.f32 1.5, %v9130
  %v9132 = vmul.f32 %v9127, %v9131
  %vm9133 = vweird.f32 %v8978
  %vm9134 = vweird.f32 %v9127
  %vm9135 = vmor %vm9133, %vm9134
  %v9136 = vsel %vm9135, %v9127, %v9132
  %v9137 = vrsqrt.pop %v8979
  %v9138 = vmul.f32 %v9137, %v8979
  %v9139 = vmul.f32 %v9138, %v9137
  %v9140 = vmul.f32 0.5, %v9139
  %v9141 = vsub.f32 1.5, %v9140
  %v9142 = vmul.f32 %v9137, %v9141
  %vm9143 = vweird.f32 %v8979
  %vm9144 = vweird.f32 %v9137
  %vm9145 = vmor %vm9143, %vm9144
  %v9146 = vsel %vm9145, %v9137, %v9142
  %v9147 = vrsqrt.pop %v8980
  %v9148 = vmul.f32 %v9147, %v8980
  %v9149 = vmul.f32 %v9148, %v9147
  %v9150 = vmul.f32 0.5, %v9149
  %v9151 = vsub.f32 1.5, %v9150
  %v9152 = vmul.f32 %v9147, %v9151
  %vm9153 = vweird.f32 %v8980
  %vm9154 = vweird.f32 %v9147
  %vm9155 = vmor %vm9153, %vm9154
  %v9156 = vsel %vm9155, %v9147, %v9152
  %v9157 = vrsqrt.pop %v8981
  %v9158 = vmul.f32 %v9157, %v8981
  %v9159 = vmul.f32 %v9158, %v9157
  %v9160 = vmul.f32 0.5, %v9159
  %v9161 = vsub.f32 1.5, %v9160
  %v9162 = vmul.f32 %v9157, %v9161
  %vm9163 = vweird.f32 %v8981
  %vm9164 = vweird.f32 %v9157
  %vm9165 = vmor %vm9163, %vm9164
  %v9166 = vsel %vm9165, %v9157, %v9162
  %v9167 = vrsqrt.pop %v8982
  %v9168 = vmul.f32 %v9167, %v8982
  %v9169 = vmul.f32 %v9168, %v9167
  %v9170 = vmul.f32 0.5, %v9169
  %v9171 = vsub.f32 1.5, %v9170
  %v9172 = vmul.f32 %v9167, %v9171
  %vm9173 = vweird.f32 %v8982
  %vm9174 = vweird.f32 %v9167
  %vm9175 = vmor %vm9173, %vm9174
  %v9176 = vsel %vm9175, %v9167, %v9172
  %v9177 = vrsqrt.pop %v8983
  %v9178 = vmul.f32 %v9177, %v8983
  %v9179 = vmul.f32 %v9178, %v9177
  %v9180 = vmul.f32 0.5, %v9179
  %v9181 = vsub.f32 1.5, %v9180
  %v9182 = vmul.f32 %v9177, %v9181
  %vm9183 = vweird.f32 %v8983
  %vm9184 = vweird.f32 %v9177
  %vm9185 = vmor %vm9183, %vm9184
  %v9186 = vsel %vm9185, %v9177, %v9182
  %v9187 = vrsqrt.pop %v8984
  %v9188 = vmul.f32 %v9187, %v8984
  %v9189 = vmul.f32 %v9188, %v9187
  %v9190 = vmul.f32 0.5, %v9189
  %v9191 = vsub.f32 1.5, %v9190
  %v9192 = vmul.f32 %v9187, %v9191
  %vm9193 = vweird.f32 %v8984
  %vm9194 = vweird.f32 %v9187
  %vm9195 = vmor %vm9193, %vm9194
  %v9196 = vsel %vm9195, %v9187, %v9192
  %v9197 = vrsqrt.pop %v8985
  %v9198 = vmul.f32 %v9197, %v8985
  %v9199 = vmul.f32 %v9198, %v9197
  %v9200 = vmul.f32 0.5, %v9199
  %v9201 = vsub.f32 1.5, %v9200
  %v9202 = vmul.f32 %v9197, %v9201
  %vm9203 = vweird.f32 %v8985
  %vm9204 = vweird.f32 %v9197
  %vm9205 = vmor %vm9203, %vm9204
  %v9206 = vsel %vm9205, %v9197, %v9202
  %v9207 = vrsqrt.pop %v8986
  %v9208 = vmul.f32 %v9207, %v8986
  %v9209 = vmul.f32 %v9208, %v9207
  %v9210 = vmul.f32 0.5, %v9209
  %v9211 = vsub.f32 1.5, %v9210
  %v9212 = vmul.f32 %v9207, %v9211
  %vm9213 = vweird.f32 %v8986
  %vm9214 = vweird.f32 %v9207
  %vm9215 = vmor %vm9213, %vm9214
  %v9216 = vsel %vm9215, %v9207, %v9212
  %v9217 = vrsqrt.pop %v8987
  %v9218 = vmul.f32 %v9217, %v8987
  %v9219 = vmul.f32 %v9218, %v9217
  %v9220 = vmul.f32 0.5, %v9219
  %v9221 = vsub.f32 1.5, %v9220
  %v9222 = vmul.f32 %v9217, %v9221
  %vm9223 = vweird.f32 %v8987
  %vm9224 = vweird.f32 %v9217
  %vm9225 = vmor %vm9223, %vm9224
  %v9226 = vsel %vm9225, %v9217, %v9222
  %v9227 = vrsqrt.pop %v8988
  %v9228 = vmul.f32 %v9227, %v8988
  %v9229 = vmul.f32 %v9228, %v9227
  %v9230 = vmul.f32 0.5, %v9229
  %v9231 = vsub.f32 1.5, %v9230
  %v9232 = vmul.f32 %v9227, %v9231
  %vm9233 = vweird.f32 %v8988
  %vm9234 = vweird.f32 %v9227
  %vm9235 = vmor %vm9233, %vm9234
  %v9236 = vsel %vm9235, %v9227, %v9232
  %v9237 = vrsqrt.pop %v8989
  %v9238 = vmul.f32 %v9237, %v8989
  %v9239 = vmul.f32 %v9238, %v9237
  %v9240 = vmul.f32 0.5, %v9239
  %v9241 = vsub.f32 1.5, %v9240
  %v9242 = vmul.f32 %v9237, %v9241
  %vm9243 = vweird.f32 %v8989
  %vm9244 = vweird.f32 %v9237
  %vm9245 = vmor %vm9243, %vm9244
  %v9246 = vsel %vm9245, %v9237, %v9242
  %v9247 = vrsqrt.pop %v8990
  %v9248 = vmul.f32 %v9247, %v8990
  %v9249 = vmul.f32 %v9248, %v9247
  %v9250 = vmul.f32 0.5, %v9249
  %v9251 = vsub.f32 1.5, %v9250
  %v9252 = vmul.f32 %v9247, %v9251
  %vm9253 = vweird.f32 %v8990
  %vm9254 = vweird.f32 %v9247
  %vm9255 = vmor %vm9253, %vm9254
  %v9256 = vsel %vm9255, %v9247, %v9252
  %v9257 = vrsqrt.pop %v8991
  %v9258 = vmul.f32 %v9257, %v8991
  %v9259 = vmul.f32 %v9258, %v9257
  %v9260 = vmul.f32 0.5, %v9259
  %v9261 = vsub.f32 1.5, %v9260
  %v9262 = vmul.f32 %v9257, %v9261
  %vm9263 = vweird.f32 %v8991
  %vm9264 = vweird.f32 %v9257
  %vm9265 = vmor %vm9263, %vm9264
  %v9266 = vsel %vm9265, %v9257, %v9262
  %v9267 = vrsqrt.pop %v8992
  %v9268 = vmul.f32 %v9267, %v8992
  %v9269 = vmul.f32 %v9268, %v9267
  %v9270 = vmul.f32 0.5, %v9269
  %v9271 = vsub.f32 1.5, %v9270
  %v9272 = vmul.f32 %v9267, %v9271
  %vm9273 = vweird.f32 %v8992
  %vm9274 = vweird.f32 %v9267
  %vm9275 = vmor %vm9273, %vm9274
  %v9276 = vsel %vm9275, %v9267, %v9272
  %v9277 = vrsqrt.pop %v8993
  %v9278 = vmul.f32 %v9277, %v8993
  %v9279 = vmul.f32 %v9278, %v9277
  %v9280 = vmul.f32 0.5, %v9279
  %v9281 = vsub.f32 1.5, %v9280
  %v9282 = vmul.f32 %v9277, %v9281
  %vm9283 = vweird.f32 %v8993
  %vm9284 = vweird.f32 %v9277
  %vm9285 = vmor %vm9283, %vm9284
  %v9286 = vsel %vm9285, %v9277, %v9282
  %v9287 = vrsqrt.pop %v8994
  %v9288 = vmul.f32 %v9287, %v8994
  %v9289 = vmul.f32 %v9288, %v9287
  %v9290 = vmul.f32 0.5, %v9289
  %v9291 = vsub.f32 1.5, %v9290
  %v9292 = vmul.f32 %v9287, %v9291
  %vm9293 = vweird.f32 %v8994
  %vm9294 = vweird.f32 %v9287
  %vm9295 = vmor %vm9293, %vm9294
  %v9296 = vsel %vm9295, %v9287, %v9292
  %v9297 = vrsqrt.pop %v8995
  %v9298 = vmul.f32 %v9297, %v8995
  %v9299 = vmul.f32 %v9298, %v9297
  %v9300 = vmul.f32 0.5, %v9299
  %v9301 = vsub.f32 1.5, %v9300
  %v9302 = vmul.f32 %v9297, %v9301
  %vm9303 = vweird.f32 %v8995
  %vm9304 = vweird.f32 %v9297
  %vm9305 = vmor %vm9303, %vm9304
  %v9306 = vsel %vm9305, %v9297, %v9302
  %v9307 = vrsqrt.pop %v8996
  %v9308 = vmul.f32 %v9307, %v8996
  %v9309 = vmul.f32 %v9308, %v9307
  %v9310 = vmul.f32 0.5, %v9309
  %v9311 = vsub.f32 1.5, %v9310
  %v9312 = vmul.f32 %v9307, %v9311
  %vm9313 = vweird.f32 %v8996
  %vm9314 = vweird.f32 %v9307
  %vm9315 = vmor %vm9313, %vm9314
  %v9316 = vsel %vm9315, %v9307, %v9312
  %v9317 = vmul.f32 %v8773, %v9006
  %v9318 = vmul.f32 %v8774, %v9016
  %v9319 = vmul.f32 %v8775, %v9026
  %v9320 = vmul.f32 %v8776, %v9036
  %v9321 = vmul.f32 %v8777, %v9046
  %v9322 = vmul.f32 %v8778, %v9056
  %v9323 = vmul.f32 %v8779, %v9066
  %v9324 = vmul.f32 %v8780, %v9076
  %v9325 = vmul.f32 %v8781, %v9086
  %v9326 = vmul.f32 %v8782, %v9096
  %v9327 = vmul.f32 %v8783, %v9106
  %v9328 = vmul.f32 %v8784, %v9116
  %v9329 = vmul.f32 %v8785, %v9126
  %v9330 = vmul.f32 %v8786, %v9136
  %v9331 = vmul.f32 %v8787, %v9146
  %v9332 = vmul.f32 %v8788, %v9156
  %v9333 = vmul.f32 %v8789, %v9166
  %v9334 = vmul.f32 %v8790, %v9176
  %v9335 = vmul.f32 %v8791, %v9186
  %v9336 = vmul.f32 %v8792, %v9196
  %v9337 = vmul.f32 %v8793, %v9206
  %v9338 = vmul.f32 %v8794, %v9216
  %v9339 = vmul.f32 %v8795, %v9226
  %v9340 = vmul.f32 %v8796, %v9236
  %v9341 = vmul.f32 %v8797, %v9246
  %v9342 = vmul.f32 %v8798, %v9256
  %v9343 = vmul.f32 %v8799, %v9266
  %v9344 = vmul.f32 %v8800, %v9276
  %v9345 = vmul.f32 %v8801, %v9286
  %v9346 = vmul.f32 %v8802, %v9296
  %v9347 = vmul.f32 %v8803, %v9306
  %v9348 = vmul.f32 %v8804, %v9316
  %v9350 = vperm.slane %v8643, 0
  %v9352 = vmul.f32 %v9317, %v9350
  %v9353 = vmul.f32 %v9318, %v9350
  %v9354 = vmul.f32 %v9319, %v9350
  %v9355 = vmul.f32 %v9320, %v9350
  %v9356 = vmul.f32 %v9321, %v9350
  %v9357 = vmul.f32 %v9322, %v9350
  %v9358 = vmul.f32 %v9323, %v9350
  %v9359 = vmul.f32 %v9324, %v9350
  %v9360 = vmul.f32 %v9325, %v9350
  %v9361 = vmul.f32 %v9326, %v9350
  %v9362 = vmul.f32 %v9327, %v9350
  %v9363 = vmul.f32 %v9328, %v9350
  %v9364 = vmul.f32 %v9329, %v9350
  %v9365 = vmul.f32 %v9330, %v9350
  %v9366 = vmul.f32 %v9331, %v9350
  %v9367 = vmul.f32 %v9332, %v9350
  %v9368 = vmul.f32 %v9333, %v9350
  %v9369 = vmul.f32 %v9334, %v9350
  %v9370 = vmul.f32 %v9335, %v9350
  %v9371 = vmul.f32 %v9336, %v9350
  %v9372 = vmul.f32 %v9337, %v9350
  %v9373 = vmul.f32 %v9338, %v9350
  %v9374 = vmul.f32 %v9339, %v9350
  %v9375 = vmul.f32 %v9340, %v9350
  %v9376 = vmul.f32 %v9341, %v9350
  %v9377 = vmul.f32 %v9342, %v9350
  %v9378 = vmul.f32 %v9343, %v9350
  %v9379 = vmul.f32 %v9344, %v9350
  %v9380 = vmul.f32 %v9345, %v9350
  %v9381 = vmul.f32 %v9346, %v9350
  %v9382 = vmul.f32 %v9347, %v9350
  %v9383 = vmul.f32 %v9348, %v9350
  %v9385 = vperm.slane %v8644, 0
  %v9387 = vadd.f32 %v9352, %v9385
  %v9388 = vadd.f32 %v9353, %v9385
  %v9389 = vadd.f32 %v9354, %v9385
  %v9390 = vadd.f32 %v9355, %v9385
  %v9391 = vadd.f32 %v9356, %v9385
  %v9392 = vadd.f32 %v9357, %v9385
  %v9393 = vadd.f32 %v9358, %v9385
  %v9394 = vadd.f32 %v9359, %v9385
  %v9395 = vadd.f32 %v9360, %v9385
  %v9396 = vadd.f32 %v9361, %v9385
  %v9397 = vadd.f32 %v9362, %v9385
  %v9398 = vadd.f32 %v9363, %v9385
  %v9399 = vadd.f32 %v9364, %v9385
  %v9400 = vadd.f32 %v9365, %v9385
  %v9401 = vadd.f32 %v9366, %v9385
  %v9402 = vadd.f32 %v9367, %v9385
  %v9403 = vadd.f32 %v9368, %v9385
  %v9404 = vadd.f32 %v9369, %v9385
  %v9405 = vadd.f32 %v9370, %v9385
  %v9406 = vadd.f32 %v9371, %v9385
  %v9407 = vadd.f32 %v9372, %v9385
  %v9408 = vadd.f32 %v9373, %v9385
  %v9409 = vadd.f32 %v9374, %v9385
  %v9410 = vadd.f32 %v9375, %v9385
  %v9411 = vadd.f32 %v9376, %v9385
  %v9412 = vadd.f32 %v9377, %v9385
  %v9413 = vadd.f32 %v9378, %v9385
  %v9414 = vadd.f32 %v9379, %v9385
  %v9415 = vadd.f32 %v9380, %v9385
  %v9416 = vadd.f32 %v9381, %v9385
  %v9417 = vadd.f32 %v9382, %v9385
  %v9418 = vadd.f32 %v9383, %v9385
  %v9419 = vpack.c.bf16 %v9388, %v9387
  %v9420 = vpack.c.bf16 %v9390, %v9389
  %v9421 = vpack.c.bf16 %v9392, %v9391
  %v9422 = vpack.c.bf16 %v9394, %v9393
  %v9423 = vpack.c.bf16 %v9396, %v9395
  %v9424 = vpack.c.bf16 %v9398, %v9397
  %v9425 = vpack.c.bf16 %v9400, %v9399
  %v9426 = vpack.c.bf16 %v9402, %v9401
  %v9427 = vpack.c.bf16 %v9404, %v9403
  %v9428 = vpack.c.bf16 %v9406, %v9405
  %v9429 = vpack.c.bf16 %v9408, %v9407
  %v9430 = vpack.c.bf16 %v9410, %v9409
  %v9431 = vpack.c.bf16 %v9412, %v9411
  %v9432 = vpack.c.bf16 %v9414, %v9413
  %v9433 = vpack.c.bf16 %v9416, %v9415
  %v9434 = vpack.c.bf16 %v9418, %v9417
  %v9435 = vld [vmem:[%s12] sm:$0xf]
  %v9436 = vld [vmem:[%s12 + $0x4] sm:$0xf]
  %v9437 = vld [vmem:[%s12 + $0x8] sm:$0xf]
  %v9438 = vld [vmem:[%s12 + $0xc] sm:$0xf]
  %v9439 = vld [vmem:[%s13] sm:$0x1]
  %v9441 = vperm.slane %v9439, 0
  %v9447 = vunpack.c.l.b16 %v9435
  %v9448 = vunpack.c.l.b16 %v9436
  %v9449 = vunpack.c.l.b16 %v9437
  %v9450 = vunpack.c.l.b16 %v9438
  %v9451 = vpack.c.b16 %v9448, %v9447
  %v9452 = vpack.c.b16 %v9450, %v9449
  %v9456 = vsel %vm120, %v9419, 0
  %v9459 = vsel %vm120, %v9420, 0
  %v9462 = vsel %vm120, %v9421, 0
  %v9465 = vsel %vm120, %v9422, 0
  %v9468 = vsel %vm120, %v9423, 0
  %v9471 = vsel %vm120, %v9424, 0
  %v9474 = vsel %vm120, %v9425, 0
  %v9477 = vsel %vm120, %v9426, 0
  %v9480 = vsel %vm120, %v9427, 0
  %v9483 = vsel %vm120, %v9428, 0
  %v9486 = vsel %vm120, %v9429, 0
  %v9489 = vsel %vm120, %v9430, 0
  %v9492 = vsel %vm120, %v9431, 0
  %v9495 = vsel %vm120, %v9432, 0
  %v9498 = vsel %vm120, %v9433, 0
  %v9501 = vsel %vm120, %v9434, 0
  %9503 = vmatpush.bf16.msra.mxu0 0
  %9504 = vmatpush.bf16.msra.mxu0 0
  %9505 = vmatpush.bf16.msra.mxu0 0
  %9506 = vmatpush.bf16.msra.mxu0 0
  %9507 = vmatpush.bf16.msra.mxu0 0
  %9508 = vmatpush.bf16.msra.mxu0 0
  %9509 = vmatpush.bf16.msra.mxu0 %v9452
  %9510 = vmatpush.bf16.msra.mxu0 %v9451
  %9511 = vmatmul.bf16.gmra.mxu0 %v9456
  %v9512 = vpop.f32.mrf.mxu0
  %v9513 = vadd.f32 %v9441, %v9512
  %v9514 = vpop.f32.mrf.mxu0
  %v9515 = vadd.f32 %v9441, %v9514
  %9516 = vmatmul.bf16.gmra.mxu0 %v9459
  %v9517 = vpop.f32.mrf.mxu0
  %v9518 = vadd.f32 %v9441, %v9517
  %v9519 = vpop.f32.mrf.mxu0
  %v9520 = vadd.f32 %v9441, %v9519
  %9521 = vmatmul.bf16.gmra.mxu0 %v9462
  %v9522 = vpop.f32.mrf.mxu0
  %v9523 = vadd.f32 %v9441, %v9522
  %v9524 = vpop.f32.mrf.mxu0
  %v9525 = vadd.f32 %v9441, %v9524
  %9526 = vmatmul.bf16.gmra.mxu0 %v9465
  %v9527 = vpop.f32.mrf.mxu0
  %v9528 = vadd.f32 %v9441, %v9527
  %v9529 = vpop.f32.mrf.mxu0
  %v9530 = vadd.f32 %v9441, %v9529
  %9531 = vmatmul.bf16.gmra.mxu0 %v9468
  %v9532 = vpop.f32.mrf.mxu0
  %v9533 = vadd.f32 %v9441, %v9532
  %v9534 = vpop.f32.mrf.mxu0
  %v9535 = vadd.f32 %v9441, %v9534
  %9536 = vmatmul.bf16.gmra.mxu0 %v9471
  %v9537 = vpop.f32.mrf.mxu0
  %v9538 = vadd.f32 %v9441, %v9537
  %v9539 = vpop.f32.mrf.mxu0
  %v9540 = vadd.f32 %v9441, %v9539
  %9541 = vmatmul.bf16.gmra.mxu0 %v9474
  %v9542 = vpop.f32.mrf.mxu0
  %v9543 = vadd.f32 %v9441, %v9542
  %v9544 = vpop.f32.mrf.mxu0
  %v9545 = vadd.f32 %v9441, %v9544
  %9546 = vmatmul.bf16.gmra.mxu0 %v9477
  %v9547 = vpop.f32.mrf.mxu0
  %v9548 = vadd.f32 %v9441, %v9547
  %v9549 = vpop.f32.mrf.mxu0
  %v9550 = vadd.f32 %v9441, %v9549
  %9551 = vmatmul.bf16.gmra.mxu0 %v9480
  %v9552 = vpop.f32.mrf.mxu0
  %v9553 = vadd.f32 %v9441, %v9552
  %v9554 = vpop.f32.mrf.mxu0
  %v9555 = vadd.f32 %v9441, %v9554
  %9556 = vmatmul.bf16.gmra.mxu0 %v9483
  %v9557 = vpop.f32.mrf.mxu0
  %v9558 = vadd.f32 %v9441, %v9557
  %v9559 = vpop.f32.mrf.mxu0
  %v9560 = vadd.f32 %v9441, %v9559
  %9561 = vmatmul.bf16.gmra.mxu0 %v9486
  %v9562 = vpop.f32.mrf.mxu0
  %v9563 = vadd.f32 %v9441, %v9562
  %v9564 = vpop.f32.mrf.mxu0
  %v9565 = vadd.f32 %v9441, %v9564
  %9566 = vmatmul.bf16.gmra.mxu0 %v9489
  %v9567 = vpop.f32.mrf.mxu0
  %v9568 = vadd.f32 %v9441, %v9567
  %v9569 = vpop.f32.mrf.mxu0
  %v9570 = vadd.f32 %v9441, %v9569
  %9571 = vmatmul.bf16.gmra.mxu0 %v9492
  %v9572 = vpop.f32.mrf.mxu0
  %v9573 = vadd.f32 %v9441, %v9572
  %v9574 = vpop.f32.mrf.mxu0
  %v9575 = vadd.f32 %v9441, %v9574
  %9576 = vmatmul.bf16.gmra.mxu0 %v9495
  %v9577 = vpop.f32.mrf.mxu0
  %v9578 = vadd.f32 %v9441, %v9577
  %v9579 = vpop.f32.mrf.mxu0
  %v9580 = vadd.f32 %v9441, %v9579
  %9581 = vmatmul.bf16.gmra.mxu0 %v9498
  %v9582 = vpop.f32.mrf.mxu0
  %v9583 = vadd.f32 %v9441, %v9582
  %v9584 = vpop.f32.mrf.mxu0
  %v9585 = vadd.f32 %v9441, %v9584
  %9586 = vmatmul.bf16.gmra.mxu0 %v9501
  %v9587 = vpop.f32.mrf.mxu0
  %v9588 = vadd.f32 %v9441, %v9587
  %v9589 = vpop.f32.mrf.mxu0
  %v9590 = vadd.f32 %v9441, %v9589
  %9591 = vdwg.mxu0
  %v9592 = vmul.f32 %v9513, 0.5
  %v9593 = vmul.f32 %v9515, 0.5
  %v9594 = vmul.f32 %v9518, 0.5
  %v9595 = vmul.f32 %v9520, 0.5
  %v9596 = vmul.f32 %v9523, 0.5
  %v9597 = vmul.f32 %v9525, 0.5
  %v9598 = vmul.f32 %v9528, 0.5
  %v9599 = vmul.f32 %v9530, 0.5
  %v9600 = vmul.f32 %v9533, 0.5
  %v9601 = vmul.f32 %v9535, 0.5
  %v9602 = vmul.f32 %v9538, 0.5
  %v9603 = vmul.f32 %v9540, 0.5
  %v9604 = vmul.f32 %v9543, 0.5
  %v9605 = vmul.f32 %v9545, 0.5
  %v9606 = vmul.f32 %v9548, 0.5
  %v9607 = vmul.f32 %v9550, 0.5
  %v9608 = vmul.f32 %v9553, 0.5
  %v9609 = vmul.f32 %v9555, 0.5
  %v9610 = vmul.f32 %v9558, 0.5
  %v9611 = vmul.f32 %v9560, 0.5
  %v9612 = vmul.f32 %v9563, 0.5
  %v9613 = vmul.f32 %v9565, 0.5
  %v9614 = vmul.f32 %v9568, 0.5
  %v9615 = vmul.f32 %v9570, 0.5
  %v9616 = vmul.f32 %v9573, 0.5
  %v9617 = vmul.f32 %v9575, 0.5
  %v9618 = vmul.f32 %v9578, 0.5
  %v9619 = vmul.f32 %v9580, 0.5
  %v9620 = vmul.f32 %v9583, 0.5
  %v9621 = vmul.f32 %v9585, 0.5
  %v9622 = vmul.f32 %v9588, 0.5
  %v9623 = vmul.f32 %v9590, 0.5
  %v9624 = vmul.f32 %v9513, 0.70710677
  %v9625 = vmul.f32 %v9515, 0.70710677
  %v9626 = vmul.f32 %v9518, 0.70710677
  %v9627 = vmul.f32 %v9520, 0.70710677
  %v9628 = vmul.f32 %v9523, 0.70710677
  %v9629 = vmul.f32 %v9525, 0.70710677
  %v9630 = vmul.f32 %v9528, 0.70710677
  %v9631 = vmul.f32 %v9530, 0.70710677
  %v9632 = vmul.f32 %v9533, 0.70710677
  %v9633 = vmul.f32 %v9535, 0.70710677
  %v9634 = vmul.f32 %v9538, 0.70710677
  %v9635 = vmul.f32 %v9540, 0.70710677
  %v9636 = vmul.f32 %v9543, 0.70710677
  %v9637 = vmul.f32 %v9545, 0.70710677
  %v9638 = vmul.f32 %v9548, 0.70710677
  %v9639 = vmul.f32 %v9550, 0.70710677
  %v9640 = vmul.f32 %v9553, 0.70710677
  %v9641 = vmul.f32 %v9555, 0.70710677
  %v9642 = vmul.f32 %v9558, 0.70710677
  %v9643 = vmul.f32 %v9560, 0.70710677
  %v9644 = vmul.f32 %v9563, 0.70710677
  %v9645 = vmul.f32 %v9565, 0.70710677
  %v9646 = vmul.f32 %v9568, 0.70710677
  %v9647 = vmul.f32 %v9570, 0.70710677
  %v9648 = vmul.f32 %v9573, 0.70710677
  %v9649 = vmul.f32 %v9575, 0.70710677
  %v9650 = vmul.f32 %v9578, 0.70710677
  %v9651 = vmul.f32 %v9580, 0.70710677
  %v9652 = vmul.f32 %v9583, 0.70710677
  %v9653 = vmul.f32 %v9585, 0.70710677
  %v9654 = vmul.f32 %v9588, 0.70710677
  %v9655 = vmul.f32 %v9590, 0.70710677
  %v9656 = vand.u32 2147483647, %v9624
  %v9657 = vand.u32 2147483647, %v9625
  %v9658 = vand.u32 2147483647, %v9626
  %v9659 = vand.u32 2147483647, %v9627
  %v9660 = vand.u32 2147483647, %v9628
  %v9661 = vand.u32 2147483647, %v9629
  %v9662 = vand.u32 2147483647, %v9630
  %v9663 = vand.u32 2147483647, %v9631
  %v9664 = vand.u32 2147483647, %v9632
  %v9665 = vand.u32 2147483647, %v9633
  %v9666 = vand.u32 2147483647, %v9634
  %v9667 = vand.u32 2147483647, %v9635
  %v9668 = vand.u32 2147483647, %v9636
  %v9669 = vand.u32 2147483647, %v9637
  %v9670 = vand.u32 2147483647, %v9638
  %v9671 = vand.u32 2147483647, %v9639
  %v9672 = vand.u32 2147483647, %v9640
  %v9673 = vand.u32 2147483647, %v9641
  %v9674 = vand.u32 2147483647, %v9642
  %v9675 = vand.u32 2147483647, %v9643
  %v9676 = vand.u32 2147483647, %v9644
  %v9677 = vand.u32 2147483647, %v9645
  %v9678 = vand.u32 2147483647, %v9646
  %v9679 = vand.u32 2147483647, %v9647
  %v9680 = vand.u32 2147483647, %v9648
  %v9681 = vand.u32 2147483647, %v9649
  %v9682 = vand.u32 2147483647, %v9650
  %v9683 = vand.u32 2147483647, %v9651
  %v9684 = vand.u32 2147483647, %v9652
  %v9685 = vand.u32 2147483647, %v9653
  %v9686 = vand.u32 2147483647, %v9654
  %v9687 = vand.u32 2147483647, %v9655
  %v9688 = vmul.f32 %v9656, 0.3275911
  %v9689 = vmul.f32 %v9657, 0.3275911
  %v9690 = vmul.f32 %v9658, 0.3275911
  %v9691 = vmul.f32 %v9659, 0.3275911
  %v9692 = vmul.f32 %v9660, 0.3275911
  %v9693 = vmul.f32 %v9661, 0.3275911
  %v9694 = vmul.f32 %v9662, 0.3275911
  %v9695 = vmul.f32 %v9663, 0.3275911
  %v9696 = vmul.f32 %v9664, 0.3275911
  %v9697 = vmul.f32 %v9665, 0.3275911
  %v9698 = vmul.f32 %v9666, 0.3275911
  %v9699 = vmul.f32 %v9667, 0.3275911
  %v9700 = vmul.f32 %v9668, 0.3275911
  %v9701 = vmul.f32 %v9669, 0.3275911
  %v9702 = vmul.f32 %v9670, 0.3275911
  %v9703 = vmul.f32 %v9671, 0.3275911
  %v9704 = vmul.f32 %v9672, 0.3275911
  %v9705 = vmul.f32 %v9673, 0.3275911
  %v9706 = vmul.f32 %v9674, 0.3275911
  %v9707 = vmul.f32 %v9675, 0.3275911
  %v9708 = vmul.f32 %v9676, 0.3275911
  %v9709 = vmul.f32 %v9677, 0.3275911
  %v9710 = vmul.f32 %v9678, 0.3275911
  %v9711 = vmul.f32 %v9679, 0.3275911
  %v9712 = vmul.f32 %v9680, 0.3275911
  %v9713 = vmul.f32 %v9681, 0.3275911
  %v9714 = vmul.f32 %v9682, 0.3275911
  %v9715 = vmul.f32 %v9683, 0.3275911
  %v9716 = vmul.f32 %v9684, 0.3275911
  %v9717 = vmul.f32 %v9685, 0.3275911
  %v9718 = vmul.f32 %v9686, 0.3275911
  %v9719 = vmul.f32 %v9687, 0.3275911
  %v9720 = vadd.f32 %v9688, 1.0
  %v9721 = vadd.f32 %v9689, 1.0
  %v9722 = vadd.f32 %v9690, 1.0
  %v9723 = vadd.f32 %v9691, 1.0
  %v9724 = vadd.f32 %v9692, 1.0
  %v9725 = vadd.f32 %v9693, 1.0
  %v9726 = vadd.f32 %v9694, 1.0
  %v9727 = vadd.f32 %v9695, 1.0
  %v9728 = vadd.f32 %v9696, 1.0
  %v9729 = vadd.f32 %v9697, 1.0
  %v9730 = vadd.f32 %v9698, 1.0
  %v9731 = vadd.f32 %v9699, 1.0
  %v9732 = vadd.f32 %v9700, 1.0
  %v9733 = vadd.f32 %v9701, 1.0
  %v9734 = vadd.f32 %v9702, 1.0
  %v9735 = vadd.f32 %v9703, 1.0
  %v9736 = vadd.f32 %v9704, 1.0
  %v9737 = vadd.f32 %v9705, 1.0
  %v9738 = vadd.f32 %v9706, 1.0
  %v9739 = vadd.f32 %v9707, 1.0
  %v9740 = vadd.f32 %v9708, 1.0
  %v9741 = vadd.f32 %v9709, 1.0
  %v9742 = vadd.f32 %v9710, 1.0
  %v9743 = vadd.f32 %v9711, 1.0
  %v9744 = vadd.f32 %v9712, 1.0
  %v9745 = vadd.f32 %v9713, 1.0
  %v9746 = vadd.f32 %v9714, 1.0
  %v9747 = vadd.f32 %v9715, 1.0
  %v9748 = vadd.f32 %v9716, 1.0
  %v9749 = vadd.f32 %v9717, 1.0
  %v9750 = vadd.f32 %v9718, 1.0
  %v9751 = vadd.f32 %v9719, 1.0
  %v9752 = vrcp.pop %v9720
  %v9753 = vmul.f32 %v9720, %v9752
  %v9754 = vsub.f32 1.0, %v9753
  %v9755 = vmul.f32 %v9752, %v9754
  %v9756 = vadd.f32 %v9752, %v9755
  %vm9757 = vweird.f32 %v9720
  %vm9758 = vweird.f32 %v9752
  %vm9759 = vmor %vm9757, %vm9758
  %v9760 = vsel %vm9759, %v9752, %v9756
  %v9761 = vand.u32 2147483647, %v9720
  %vm9762 = vcmp.eq.f32.partialorder %v9761, 8.507059e+37
  %v9763 = vand.u32 %v9720, 2147483648
  %v9764 = vor.u32 1.1754944e-38, %v9763
  %v9765 = vsel %vm9762, %v9764, %v9760
  %v9766 = vmul.f32 1.0, %v9765
  %v9767 = vrcp.pop %v9721
  %v9768 = vmul.f32 %v9721, %v9767
  %v9769 = vsub.f32 1.0, %v9768
  %v9770 = vmul.f32 %v9767, %v9769
  %v9771 = vadd.f32 %v9767, %v9770
  %vm9772 = vweird.f32 %v9721
  %vm9773 = vweird.f32 %v9767
  %vm9774 = vmor %vm9772, %vm9773
  %v9775 = vsel %vm9774, %v9767, %v9771
  %v9776 = vand.u32 2147483647, %v9721
  %vm9777 = vcmp.eq.f32.partialorder %v9776, 8.507059e+37
  %v9778 = vand.u32 %v9721, 2147483648
  %v9779 = vor.u32 1.1754944e-38, %v9778
  %v9780 = vsel %vm9777, %v9779, %v9775
  %v9781 = vmul.f32 1.0, %v9780
  %v9782 = vrcp.pop %v9722
  %v9783 = vmul.f32 %v9722, %v9782
  %v9784 = vsub.f32 1.0, %v9783
  %v9785 = vmul.f32 %v9782, %v9784
  %v9786 = vadd.f32 %v9782, %v9785
  %vm9787 = vweird.f32 %v9722
  %vm9788 = vweird.f32 %v9782
  %vm9789 = vmor %vm9787, %vm9788
  %v9790 = vsel %vm9789, %v9782, %v9786
  %v9791 = vand.u32 2147483647, %v9722
  %vm9792 = vcmp.eq.f32.partialorder %v9791, 8.507059e+37
  %v9793 = vand.u32 %v9722, 2147483648
  %v9794 = vor.u32 1.1754944e-38, %v9793
  %v9795 = vsel %vm9792, %v9794, %v9790
  %v9796 = vmul.f32 1.0, %v9795
  %v9797 = vrcp.pop %v9723
  %v9798 = vmul.f32 %v9723, %v9797
  %v9799 = vsub.f32 1.0, %v9798
  %v9800 = vmul.f32 %v9797, %v9799
  %v9801 = vadd.f32 %v9797, %v9800
  %vm9802 = vweird.f32 %v9723
  %vm9803 = vweird.f32 %v9797
  %vm9804 = vmor %vm9802, %vm9803
  %v9805 = vsel %vm9804, %v9797, %v9801
  %v9806 = vand.u32 2147483647, %v9723
  %vm9807 = vcmp.eq.f32.partialorder %v9806, 8.507059e+37
  %v9808 = vand.u32 %v9723, 2147483648
  %v9809 = vor.u32 1.1754944e-38, %v9808
  %v9810 = vsel %vm9807, %v9809, %v9805
  %v9811 = vmul.f32 1.0, %v9810
  %v9812 = vrcp.pop %v9724
  %v9813 = vmul.f32 %v9724, %v9812
  %v9814 = vsub.f32 1.0, %v9813
  %v9815 = vmul.f32 %v9812, %v9814
  %v9816 = vadd.f32 %v9812, %v9815
  %vm9817 = vweird.f32 %v9724
  %vm9818 = vweird.f32 %v9812
  %vm9819 = vmor %vm9817, %vm9818
  %v9820 = vsel %vm9819, %v9812, %v9816
  %v9821 = vand.u32 2147483647, %v9724
  %vm9822 = vcmp.eq.f32.partialorder %v9821, 8.507059e+37
  %v9823 = vand.u32 %v9724, 2147483648
  %v9824 = vor.u32 1.1754944e-38, %v9823
  %v9825 = vsel %vm9822, %v9824, %v9820
  %v9826 = vmul.f32 1.0, %v9825
  %v9827 = vrcp.pop %v9725
  %v9828 = vmul.f32 %v9725, %v9827
  %v9829 = vsub.f32 1.0, %v9828
  %v9830 = vmul.f32 %v9827, %v9829
  %v9831 = vadd.f32 %v9827, %v9830
  %vm9832 = vweird.f32 %v9725
  %vm9833 = vweird.f32 %v9827
  %vm9834 = vmor %vm9832, %vm9833
  %v9835 = vsel %vm9834, %v9827, %v9831
  %v9836 = vand.u32 2147483647, %v9725
  %vm9837 = vcmp.eq.f32.partialorder %v9836, 8.507059e+37
  %v9838 = vand.u32 %v9725, 2147483648
  %v9839 = vor.u32 1.1754944e-38, %v9838
  %v9840 = vsel %vm9837, %v9839, %v9835
  %v9841 = vmul.f32 1.0, %v9840
  %v9842 = vrcp.pop %v9726
  %v9843 = vmul.f32 %v9726, %v9842
  %v9844 = vsub.f32 1.0, %v9843
  %v9845 = vmul.f32 %v9842, %v9844
  %v9846 = vadd.f32 %v9842, %v9845
  %vm9847 = vweird.f32 %v9726
  %vm9848 = vweird.f32 %v9842
  %vm9849 = vmor %vm9847, %vm9848
  %v9850 = vsel %vm9849, %v9842, %v9846
  %v9851 = vand.u32 2147483647, %v9726
  %vm9852 = vcmp.eq.f32.partialorder %v9851, 8.507059e+37
  %v9853 = vand.u32 %v9726, 2147483648
  %v9854 = vor.u32 1.1754944e-38, %v9853
  %v9855 = vsel %vm9852, %v9854, %v9850
  %v9856 = vmul.f32 1.0, %v9855
  %v9857 = vrcp.pop %v9727
  %v9858 = vmul.f32 %v9727, %v9857
  %v9859 = vsub.f32 1.0, %v9858
  %v9860 = vmul.f32 %v9857, %v9859
  %v9861 = vadd.f32 %v9857, %v9860
  %vm9862 = vweird.f32 %v9727
  %vm9863 = vweird.f32 %v9857
  %vm9864 = vmor %vm9862, %vm9863
  %v9865 = vsel %vm9864, %v9857, %v9861
  %v9866 = vand.u32 2147483647, %v9727
  %vm9867 = vcmp.eq.f32.partialorder %v9866, 8.507059e+37
  %v9868 = vand.u32 %v9727, 2147483648
  %v9869 = vor.u32 1.1754944e-38, %v9868
  %v9870 = vsel %vm9867, %v9869, %v9865
  %v9871 = vmul.f32 1.0, %v9870
  %v9872 = vrcp.pop %v9728
  %v9873 = vmul.f32 %v9728, %v9872
  %v9874 = vsub.f32 1.0, %v9873
  %v9875 = vmul.f32 %v9872, %v9874
  %v9876 = vadd.f32 %v9872, %v9875
  %vm9877 = vweird.f32 %v9728
  %vm9878 = vweird.f32 %v9872
  %vm9879 = vmor %vm9877, %vm9878
  %v9880 = vsel %vm9879, %v9872, %v9876
  %v9881 = vand.u32 2147483647, %v9728
  %vm9882 = vcmp.eq.f32.partialorder %v9881, 8.507059e+37
  %v9883 = vand.u32 %v9728, 2147483648
  %v9884 = vor.u32 1.1754944e-38, %v9883
  %v9885 = vsel %vm9882, %v9884, %v9880
  %v9886 = vmul.f32 1.0, %v9885
  %v9887 = vrcp.pop %v9729
  %v9888 = vmul.f32 %v9729, %v9887
  %v9889 = vsub.f32 1.0, %v9888
  %v9890 = vmul.f32 %v9887, %v9889
  %v9891 = vadd.f32 %v9887, %v9890
  %vm9892 = vweird.f32 %v9729
  %vm9893 = vweird.f32 %v9887
  %vm9894 = vmor %vm9892, %vm9893
  %v9895 = vsel %vm9894, %v9887, %v9891
  %v9896 = vand.u32 2147483647, %v9729
  %vm9897 = vcmp.eq.f32.partialorder %v9896, 8.507059e+37
  %v9898 = vand.u32 %v9729, 2147483648
  %v9899 = vor.u32 1.1754944e-38, %v9898
  %v9900 = vsel %vm9897, %v9899, %v9895
  %v9901 = vmul.f32 1.0, %v9900
  %v9902 = vrcp.pop %v9730
  %v9903 = vmul.f32 %v9730, %v9902
  %v9904 = vsub.f32 1.0, %v9903
  %v9905 = vmul.f32 %v9902, %v9904
  %v9906 = vadd.f32 %v9902, %v9905
  %vm9907 = vweird.f32 %v9730
  %vm9908 = vweird.f32 %v9902
  %vm9909 = vmor %vm9907, %vm9908
  %v9910 = vsel %vm9909, %v9902, %v9906
  %v9911 = vand.u32 2147483647, %v9730
  %vm9912 = vcmp.eq.f32.partialorder %v9911, 8.507059e+37
  %v9913 = vand.u32 %v9730, 2147483648
  %v9914 = vor.u32 1.1754944e-38, %v9913
  %v9915 = vsel %vm9912, %v9914, %v9910
  %v9916 = vmul.f32 1.0, %v9915
  %v9917 = vrcp.pop %v9731
  %v9918 = vmul.f32 %v9731, %v9917
  %v9919 = vsub.f32 1.0, %v9918
  %v9920 = vmul.f32 %v9917, %v9919
  %v9921 = vadd.f32 %v9917, %v9920
  %vm9922 = vweird.f32 %v9731
  %vm9923 = vweird.f32 %v9917
  %vm9924 = vmor %vm9922, %vm9923
  %v9925 = vsel %vm9924, %v9917, %v9921
  %v9926 = vand.u32 2147483647, %v9731
  %vm9927 = vcmp.eq.f32.partialorder %v9926, 8.507059e+37
  %v9928 = vand.u32 %v9731, 2147483648
  %v9929 = vor.u32 1.1754944e-38, %v9928
  %v9930 = vsel %vm9927, %v9929, %v9925
  %v9931 = vmul.f32 1.0, %v9930
  %v9932 = vrcp.pop %v9732
  %v9933 = vmul.f32 %v9732, %v9932
  %v9934 = vsub.f32 1.0, %v9933
  %v9935 = vmul.f32 %v9932, %v9934
  %v9936 = vadd.f32 %v9932, %v9935
  %vm9937 = vweird.f32 %v9732
  %vm9938 = vweird.f32 %v9932
  %vm9939 = vmor %vm9937, %vm9938
  %v9940 = vsel %vm9939, %v9932, %v9936
  %v9941 = vand.u32 2147483647, %v9732
  %vm9942 = vcmp.eq.f32.partialorder %v9941, 8.507059e+37
  %v9943 = vand.u32 %v9732, 2147483648
  %v9944 = vor.u32 1.1754944e-38, %v9943
  %v9945 = vsel %vm9942, %v9944, %v9940
  %v9946 = vmul.f32 1.0, %v9945
  %v9947 = vrcp.pop %v9733
  %v9948 = vmul.f32 %v9733, %v9947
  %v9949 = vsub.f32 1.0, %v9948
  %v9950 = vmul.f32 %v9947, %v9949
  %v9951 = vadd.f32 %v9947, %v9950
  %vm9952 = vweird.f32 %v9733
  %vm9953 = vweird.f32 %v9947
  %vm9954 = vmor %vm9952, %vm9953
  %v9955 = vsel %vm9954, %v9947, %v9951
  %v9956 = vand.u32 2147483647, %v9733
  %vm9957 = vcmp.eq.f32.partialorder %v9956, 8.507059e+37
  %v9958 = vand.u32 %v9733, 2147483648
  %v9959 = vor.u32 1.1754944e-38, %v9958
  %v9960 = vsel %vm9957, %v9959, %v9955
  %v9961 = vmul.f32 1.0, %v9960
  %v9962 = vrcp.pop %v9734
  %v9963 = vmul.f32 %v9734, %v9962
  %v9964 = vsub.f32 1.0, %v9963
  %v9965 = vmul.f32 %v9962, %v9964
  %v9966 = vadd.f32 %v9962, %v9965
  %vm9967 = vweird.f32 %v9734
  %vm9968 = vweird.f32 %v9962
  %vm9969 = vmor %vm9967, %vm9968
  %v9970 = vsel %vm9969, %v9962, %v9966
  %v9971 = vand.u32 2147483647, %v9734
  %vm9972 = vcmp.eq.f32.partialorder %v9971, 8.507059e+37
  %v9973 = vand.u32 %v9734, 2147483648
  %v9974 = vor.u32 1.1754944e-38, %v9973
  %v9975 = vsel %vm9972, %v9974, %v9970
  %v9976 = vmul.f32 1.0, %v9975
  %v9977 = vrcp.pop %v9735
  %v9978 = vmul.f32 %v9735, %v9977
  %v9979 = vsub.f32 1.0, %v9978
  %v9980 = vmul.f32 %v9977, %v9979
  %v9981 = vadd.f32 %v9977, %v9980
  %vm9982 = vweird.f32 %v9735
  %vm9983 = vweird.f32 %v9977
  %vm9984 = vmor %vm9982, %vm9983
  %v9985 = vsel %vm9984, %v9977, %v9981
  %v9986 = vand.u32 2147483647, %v9735
  %vm9987 = vcmp.eq.f32.partialorder %v9986, 8.507059e+37
  %v9988 = vand.u32 %v9735, 2147483648
  %v9989 = vor.u32 1.1754944e-38, %v9988
  %v9990 = vsel %vm9987, %v9989, %v9985
  %v9991 = vmul.f32 1.0, %v9990
  %v9992 = vrcp.pop %v9736
  %v9993 = vmul.f32 %v9736, %v9992
  %v9994 = vsub.f32 1.0, %v9993
  %v9995 = vmul.f32 %v9992, %v9994
  %v9996 = vadd.f32 %v9992, %v9995
  %vm9997 = vweird.f32 %v9736
  %vm9998 = vweird.f32 %v9992
  %vm9999 = vmor %vm9997, %vm9998
  %v10000 = vsel %vm9999, %v9992, %v9996
  %v10001 = vand.u32 2147483647, %v9736
  %vm10002 = vcmp.eq.f32.partialorder %v10001, 8.507059e+37
  %v10003 = vand.u32 %v9736, 2147483648
  %v10004 = vor.u32 1.1754944e-38, %v10003
  %v10005 = vsel %vm10002, %v10004, %v10000
  %v10006 = vmul.f32 1.0, %v10005
  %v10007 = vrcp.pop %v9737
  %v10008 = vmul.f32 %v9737, %v10007
  %v10009 = vsub.f32 1.0, %v10008
  %v10010 = vmul.f32 %v10007, %v10009
  %v10011 = vadd.f32 %v10007, %v10010
  %vm10012 = vweird.f32 %v9737
  %vm10013 = vweird.f32 %v10007
  %vm10014 = vmor %vm10012, %vm10013
  %v10015 = vsel %vm10014, %v10007, %v10011
  %v10016 = vand.u32 2147483647, %v9737
  %vm10017 = vcmp.eq.f32.partialorder %v10016, 8.507059e+37
  %v10018 = vand.u32 %v9737, 2147483648
  %v10019 = vor.u32 1.1754944e-38, %v10018
  %v10020 = vsel %vm10017, %v10019, %v10015
  %v10021 = vmul.f32 1.0, %v10020
  %v10022 = vrcp.pop %v9738
  %v10023 = vmul.f32 %v9738, %v10022
  %v10024 = vsub.f32 1.0, %v10023
  %v10025 = vmul.f32 %v10022, %v10024
  %v10026 = vadd.f32 %v10022, %v10025
  %vm10027 = vweird.f32 %v9738
  %vm10028 = vweird.f32 %v10022
  %vm10029 = vmor %vm10027, %vm10028
  %v10030 = vsel %vm10029, %v10022, %v10026
  %v10031 = vand.u32 2147483647, %v9738
  %vm10032 = vcmp.eq.f32.partialorder %v10031, 8.507059e+37
  %v10033 = vand.u32 %v9738, 2147483648
  %v10034 = vor.u32 1.1754944e-38, %v10033
  %v10035 = vsel %vm10032, %v10034, %v10030
  %v10036 = vmul.f32 1.0, %v10035
  %v10037 = vrcp.pop %v9739
  %v10038 = vmul.f32 %v9739, %v10037
  %v10039 = vsub.f32 1.0, %v10038
  %v10040 = vmul.f32 %v10037, %v10039
  %v10041 = vadd.f32 %v10037, %v10040
  %vm10042 = vweird.f32 %v9739
  %vm10043 = vweird.f32 %v10037
  %vm10044 = vmor %vm10042, %vm10043
  %v10045 = vsel %vm10044, %v10037, %v10041
  %v10046 = vand.u32 2147483647, %v9739
  %vm10047 = vcmp.eq.f32.partialorder %v10046, 8.507059e+37
  %v10048 = vand.u32 %v9739, 2147483648
  %v10049 = vor.u32 1.1754944e-38, %v10048
  %v10050 = vsel %vm10047, %v10049, %v10045
  %v10051 = vmul.f32 1.0, %v10050
  %v10052 = vrcp.pop %v9740
  %v10053 = vmul.f32 %v9740, %v10052
  %v10054 = vsub.f32 1.0, %v10053
  %v10055 = vmul.f32 %v10052, %v10054
  %v10056 = vadd.f32 %v10052, %v10055
  %vm10057 = vweird.f32 %v9740
  %vm10058 = vweird.f32 %v10052
  %vm10059 = vmor %vm10057, %vm10058
  %v10060 = vsel %vm10059, %v10052, %v10056
  %v10061 = vand.u32 2147483647, %v9740
  %vm10062 = vcmp.eq.f32.partialorder %v10061, 8.507059e+37
  %v10063 = vand.u32 %v9740, 2147483648
  %v10064 = vor.u32 1.1754944e-38, %v10063
  %v10065 = vsel %vm10062, %v10064, %v10060
  %v10066 = vmul.f32 1.0, %v10065
  %v10067 = vrcp.pop %v9741
  %v10068 = vmul.f32 %v9741, %v10067
  %v10069 = vsub.f32 1.0, %v10068
  %v10070 = vmul.f32 %v10067, %v10069
  %v10071 = vadd.f32 %v10067, %v10070
  %vm10072 = vweird.f32 %v9741
  %vm10073 = vweird.f32 %v10067
  %vm10074 = vmor %vm10072, %vm10073
  %v10075 = vsel %vm10074, %v10067, %v10071
  %v10076 = vand.u32 2147483647, %v9741
  %vm10077 = vcmp.eq.f32.partialorder %v10076, 8.507059e+37
  %v10078 = vand.u32 %v9741, 2147483648
  %v10079 = vor.u32 1.1754944e-38, %v10078
  %v10080 = vsel %vm10077, %v10079, %v10075
  %v10081 = vmul.f32 1.0, %v10080
  %v10082 = vrcp.pop %v9742
  %v10083 = vmul.f32 %v9742, %v10082
  %v10084 = vsub.f32 1.0, %v10083
  %v10085 = vmul.f32 %v10082, %v10084
  %v10086 = vadd.f32 %v10082, %v10085
  %vm10087 = vweird.f32 %v9742
  %vm10088 = vweird.f32 %v10082
  %vm10089 = vmor %vm10087, %vm10088
  %v10090 = vsel %vm10089, %v10082, %v10086
  %v10091 = vand.u32 2147483647, %v9742
  %vm10092 = vcmp.eq.f32.partialorder %v10091, 8.507059e+37
  %v10093 = vand.u32 %v9742, 2147483648
  %v10094 = vor.u32 1.1754944e-38, %v10093
  %v10095 = vsel %vm10092, %v10094, %v10090
  %v10096 = vmul.f32 1.0, %v10095
  %v10097 = vrcp.pop %v9743
  %v10098 = vmul.f32 %v9743, %v10097
  %v10099 = vsub.f32 1.0, %v10098
  %v10100 = vmul.f32 %v10097, %v10099
  %v10101 = vadd.f32 %v10097, %v10100
  %vm10102 = vweird.f32 %v9743
  %vm10103 = vweird.f32 %v10097
  %vm10104 = vmor %vm10102, %vm10103
  %v10105 = vsel %vm10104, %v10097, %v10101
  %v10106 = vand.u32 2147483647, %v9743
  %vm10107 = vcmp.eq.f32.partialorder %v10106, 8.507059e+37
  %v10108 = vand.u32 %v9743, 2147483648
  %v10109 = vor.u32 1.1754944e-38, %v10108
  %v10110 = vsel %vm10107, %v10109, %v10105
  %v10111 = vmul.f32 1.0, %v10110
  %v10112 = vrcp.pop %v9744
  %v10113 = vmul.f32 %v9744, %v10112
  %v10114 = vsub.f32 1.0, %v10113
  %v10115 = vmul.f32 %v10112, %v10114
  %v10116 = vadd.f32 %v10112, %v10115
  %vm10117 = vweird.f32 %v9744
  %vm10118 = vweird.f32 %v10112
  %vm10119 = vmor %vm10117, %vm10118
  %v10120 = vsel %vm10119, %v10112, %v10116
  %v10121 = vand.u32 2147483647, %v9744
  %vm10122 = vcmp.eq.f32.partialorder %v10121, 8.507059e+37
  %v10123 = vand.u32 %v9744, 2147483648
  %v10124 = vor.u32 1.1754944e-38, %v10123
  %v10125 = vsel %vm10122, %v10124, %v10120
  %v10126 = vmul.f32 1.0, %v10125
  %v10127 = vrcp.pop %v9745
  %v10128 = vmul.f32 %v9745, %v10127
  %v10129 = vsub.f32 1.0, %v10128
  %v10130 = vmul.f32 %v10127, %v10129
  %v10131 = vadd.f32 %v10127, %v10130
  %vm10132 = vweird.f32 %v9745
  %vm10133 = vweird.f32 %v10127
  %vm10134 = vmor %vm10132, %vm10133
  %v10135 = vsel %vm10134, %v10127, %v10131
  %v10136 = vand.u32 2147483647, %v9745
  %vm10137 = vcmp.eq.f32.partialorder %v10136, 8.507059e+37
  %v10138 = vand.u32 %v9745, 2147483648
  %v10139 = vor.u32 1.1754944e-38, %v10138
  %v10140 = vsel %vm10137, %v10139, %v10135
  %v10141 = vmul.f32 1.0, %v10140
  %v10142 = vrcp.pop %v9746
  %v10143 = vmul.f32 %v9746, %v10142
  %v10144 = vsub.f32 1.0, %v10143
  %v10145 = vmul.f32 %v10142, %v10144
  %v10146 = vadd.f32 %v10142, %v10145
  %vm10147 = vweird.f32 %v9746
  %vm10148 = vweird.f32 %v10142
  %vm10149 = vmor %vm10147, %vm10148
  %v10150 = vsel %vm10149, %v10142, %v10146
  %v10151 = vand.u32 2147483647, %v9746
  %vm10152 = vcmp.eq.f32.partialorder %v10151, 8.507059e+37
  %v10153 = vand.u32 %v9746, 2147483648
  %v10154 = vor.u32 1.1754944e-38, %v10153
  %v10155 = vsel %vm10152, %v10154, %v10150
  %v10156 = vmul.f32 1.0, %v10155
  %v10157 = vrcp.pop %v9747
  %v10158 = vmul.f32 %v9747, %v10157
  %v10159 = vsub.f32 1.0, %v10158
  %v10160 = vmul.f32 %v10157, %v10159
  %v10161 = vadd.f32 %v10157, %v10160
  %vm10162 = vweird.f32 %v9747
  %vm10163 = vweird.f32 %v10157
  %vm10164 = vmor %vm10162, %vm10163
  %v10165 = vsel %vm10164, %v10157, %v10161
  %v10166 = vand.u32 2147483647, %v9747
  %vm10167 = vcmp.eq.f32.partialorder %v10166, 8.507059e+37
  %v10168 = vand.u32 %v9747, 2147483648
  %v10169 = vor.u32 1.1754944e-38, %v10168
  %v10170 = vsel %vm10167, %v10169, %v10165
  %v10171 = vmul.f32 1.0, %v10170
  %v10172 = vrcp.pop %v9748
  %v10173 = vmul.f32 %v9748, %v10172
  %v10174 = vsub.f32 1.0, %v10173
  %v10175 = vmul.f32 %v10172, %v10174
  %v10176 = vadd.f32 %v10172, %v10175
  %vm10177 = vweird.f32 %v9748
  %vm10178 = vweird.f32 %v10172
  %vm10179 = vmor %vm10177, %vm10178
  %v10180 = vsel %vm10179, %v10172, %v10176
  %v10181 = vand.u32 2147483647, %v9748
  %vm10182 = vcmp.eq.f32.partialorder %v10181, 8.507059e+37
  %v10183 = vand.u32 %v9748, 2147483648
  %v10184 = vor.u32 1.1754944e-38, %v10183
  %v10185 = vsel %vm10182, %v10184, %v10180
  %v10186 = vmul.f32 1.0, %v10185
  %v10187 = vrcp.pop %v9749
  %v10188 = vmul.f32 %v9749, %v10187
  %v10189 = vsub.f32 1.0, %v10188
  %v10190 = vmul.f32 %v10187, %v10189
  %v10191 = vadd.f32 %v10187, %v10190
  %vm10192 = vweird.f32 %v9749
  %vm10193 = vweird.f32 %v10187
  %vm10194 = vmor %vm10192, %vm10193
  %v10195 = vsel %vm10194, %v10187, %v10191
  %v10196 = vand.u32 2147483647, %v9749
  %vm10197 = vcmp.eq.f32.partialorder %v10196, 8.507059e+37
  %v10198 = vand.u32 %v9749, 2147483648
  %v10199 = vor.u32 1.1754944e-38, %v10198
  %v10200 = vsel %vm10197, %v10199, %v10195
  %v10201 = vmul.f32 1.0, %v10200
  %v10202 = vrcp.pop %v9750
  %v10203 = vmul.f32 %v9750, %v10202
  %v10204 = vsub.f32 1.0, %v10203
  %v10205 = vmul.f32 %v10202, %v10204
  %v10206 = vadd.f32 %v10202, %v10205
  %vm10207 = vweird.f32 %v9750
  %vm10208 = vweird.f32 %v10202
  %vm10209 = vmor %vm10207, %vm10208
  %v10210 = vsel %vm10209, %v10202, %v10206
  %v10211 = vand.u32 2147483647, %v9750
  %vm10212 = vcmp.eq.f32.partialorder %v10211, 8.507059e+37
  %v10213 = vand.u32 %v9750, 2147483648
  %v10214 = vor.u32 1.1754944e-38, %v10213
  %v10215 = vsel %vm10212, %v10214, %v10210
  %v10216 = vmul.f32 1.0, %v10215
  %v10217 = vrcp.pop %v9751
  %v10218 = vmul.f32 %v9751, %v10217
  %v10219 = vsub.f32 1.0, %v10218
  %v10220 = vmul.f32 %v10217, %v10219
  %v10221 = vadd.f32 %v10217, %v10220
  %vm10222 = vweird.f32 %v9751
  %vm10223 = vweird.f32 %v10217
  %vm10224 = vmor %vm10222, %vm10223
  %v10225 = vsel %vm10224, %v10217, %v10221
  %v10226 = vand.u32 2147483647, %v9751
  %vm10227 = vcmp.eq.f32.partialorder %v10226, 8.507059e+37
  %v10228 = vand.u32 %v9751, 2147483648
  %v10229 = vor.u32 1.1754944e-38, %v10228
  %v10230 = vsel %vm10227, %v10229, %v10225
  %v10231 = vmul.f32 1.0, %v10230
  %v10232 = vmul.f32 %v9766, 1.0614054
  %v10233 = vmul.f32 %v9781, 1.0614054
  %v10234 = vmul.f32 %v9796, 1.0614054
  %v10235 = vmul.f32 %v9811, 1.0614054
  %v10236 = vmul.f32 %v9826, 1.0614054
  %v10237 = vmul.f32 %v9841, 1.0614054
  %v10238 = vmul.f32 %v9856, 1.0614054
  %v10239 = vmul.f32 %v9871, 1.0614054
  %v10240 = vmul.f32 %v9886, 1.0614054
  %v10241 = vmul.f32 %v9901, 1.0614054
  %v10242 = vmul.f32 %v9916, 1.0614054
  %v10243 = vmul.f32 %v9931, 1.0614054
  %v10244 = vmul.f32 %v9946, 1.0614054
  %v10245 = vmul.f32 %v9961, 1.0614054
  %v10246 = vmul.f32 %v9976, 1.0614054
  %v10247 = vmul.f32 %v9991, 1.0614054
  %v10248 = vmul.f32 %v10006, 1.0614054
  %v10249 = vmul.f32 %v10021, 1.0614054
  %v10250 = vmul.f32 %v10036, 1.0614054
  %v10251 = vmul.f32 %v10051, 1.0614054
  %v10252 = vmul.f32 %v10066, 1.0614054
  %v10253 = vmul.f32 %v10081, 1.0614054
  %v10254 = vmul.f32 %v10096, 1.0614054
  %v10255 = vmul.f32 %v10111, 1.0614054
  %v10256 = vmul.f32 %v10126, 1.0614054
  %v10257 = vmul.f32 %v10141, 1.0614054
  %v10258 = vmul.f32 %v10156, 1.0614054
  %v10259 = vmul.f32 %v10171, 1.0614054
  %v10260 = vmul.f32 %v10186, 1.0614054
  %v10261 = vmul.f32 %v10201, 1.0614054
  %v10262 = vmul.f32 %v10216, 1.0614054
  %v10263 = vmul.f32 %v10231, 1.0614054
  %v10264 = vadd.f32 %v10232, -1.4531521
  %v10265 = vadd.f32 %v10233, -1.4531521
  %v10266 = vadd.f32 %v10234, -1.4531521
  %v10267 = vadd.f32 %v10235, -1.4531521
  %v10268 = vadd.f32 %v10236, -1.4531521
  %v10269 = vadd.f32 %v10237, -1.4531521
  %v10270 = vadd.f32 %v10238, -1.4531521
  %v10271 = vadd.f32 %v10239, -1.4531521
  %v10272 = vadd.f32 %v10240, -1.4531521
  %v10273 = vadd.f32 %v10241, -1.4531521
  %v10274 = vadd.f32 %v10242, -1.4531521
  %v10275 = vadd.f32 %v10243, -1.4531521
  %v10276 = vadd.f32 %v10244, -1.4531521
  %v10277 = vadd.f32 %v10245, -1.4531521
  %v10278 = vadd.f32 %v10246, -1.4531521
  %v10279 = vadd.f32 %v10247, -1.4531521
  %v10280 = vadd.f32 %v10248, -1.4531521
  %v10281 = vadd.f32 %v10249, -1.4531521
  %v10282 = vadd.f32 %v10250, -1.4531521
  %v10283 = vadd.f32 %v10251, -1.4531521
  %v10284 = vadd.f32 %v10252, -1.4531521
  %v10285 = vadd.f32 %v10253, -1.4531521
  %v10286 = vadd.f32 %v10254, -1.4531521
  %v10287 = vadd.f32 %v10255, -1.4531521
  %v10288 = vadd.f32 %v10256, -1.4531521
  %v10289 = vadd.f32 %v10257, -1.4531521
  %v10290 = vadd.f32 %v10258, -1.4531521
  %v10291 = vadd.f32 %v10259, -1.4531521
  %v10292 = vadd.f32 %v10260, -1.4531521
  %v10293 = vadd.f32 %v10261, -1.4531521
  %v10294 = vadd.f32 %v10262, -1.4531521
  %v10295 = vadd.f32 %v10263, -1.4531521
  %v10296 = vmul.f32 %v10264, %v9766
  %v10297 = vmul.f32 %v10265, %v9781
  %v10298 = vmul.f32 %v10266, %v9796
  %v10299 = vmul.f32 %v10267, %v9811
  %v10300 = vmul.f32 %v10268, %v9826
  %v10301 = vmul.f32 %v10269, %v9841
  %v10302 = vmul.f32 %v10270, %v9856
  %v10303 = vmul.f32 %v10271, %v9871
  %v10304 = vmul.f32 %v10272, %v9886
  %v10305 = vmul.f32 %v10273, %v9901
  %v10306 = vmul.f32 %v10274, %v9916
  %v10307 = vmul.f32 %v10275, %v9931
  %v10308 = vmul.f32 %v10276, %v9946
  %v10309 = vmul.f32 %v10277, %v9961
  %v10310 = vmul.f32 %v10278, %v9976
  %v10311 = vmul.f32 %v10279, %v9991
  %v10312 = vmul.f32 %v10280, %v10006
  %v10313 = vmul.f32 %v10281, %v10021
  %v10314 = vmul.f32 %v10282, %v10036
  %v10315 = vmul.f32 %v10283, %v10051
  %v10316 = vmul.f32 %v10284, %v10066
  %v10317 = vmul.f32 %v10285, %v10081
  %v10318 = vmul.f32 %v10286, %v10096
  %v10319 = vmul.f32 %v10287, %v10111
  %v10320 = vmul.f32 %v10288, %v10126
  %v10321 = vmul.f32 %v10289, %v10141
  %v10322 = vmul.f32 %v10290, %v10156
  %v10323 = vmul.f32 %v10291, %v10171
  %v10324 = vmul.f32 %v10292, %v10186
  %v10325 = vmul.f32 %v10293, %v10201
  %v10326 = vmul.f32 %v10294, %v10216
  %v10327 = vmul.f32 %v10295, %v10231
  %v10328 = vadd.f32 %v10296, 1.4214138
  %v10329 = vadd.f32 %v10297, 1.4214138
  %v10330 = vadd.f32 %v10298, 1.4214138
  %v10331 = vadd.f32 %v10299, 1.4214138
  %v10332 = vadd.f32 %v10300, 1.4214138
  %v10333 = vadd.f32 %v10301, 1.4214138
  %v10334 = vadd.f32 %v10302, 1.4214138
  %v10335 = vadd.f32 %v10303, 1.4214138
  %v10336 = vadd.f32 %v10304, 1.4214138
  %v10337 = vadd.f32 %v10305, 1.4214138
  %v10338 = vadd.f32 %v10306, 1.4214138
  %v10339 = vadd.f32 %v10307, 1.4214138
  %v10340 = vadd.f32 %v10308, 1.4214138
  %v10341 = vadd.f32 %v10309, 1.4214138
  %v10342 = vadd.f32 %v10310, 1.4214138
  %v10343 = vadd.f32 %v10311, 1.4214138
  %v10344 = vadd.f32 %v10312, 1.4214138
  %v10345 = vadd.f32 %v10313, 1.4214138
  %v10346 = vadd.f32 %v10314, 1.4214138
  %v10347 = vadd.f32 %v10315, 1.4214138
  %v10348 = vadd.f32 %v10316, 1.4214138
  %v10349 = vadd.f32 %v10317, 1.4214138
  %v10350 = vadd.f32 %v10318, 1.4214138
  %v10351 = vadd.f32 %v10319, 1.4214138
  %v10352 = vadd.f32 %v10320, 1.4214138
  %v10353 = vadd.f32 %v10321, 1.4214138
  %v10354 = vadd.f32 %v10322, 1.4214138
  %v10355 = vadd.f32 %v10323, 1.4214138
  %v10356 = vadd.f32 %v10324, 1.4214138
  %v10357 = vadd.f32 %v10325, 1.4214138
  %v10358 = vadd.f32 %v10326, 1.4214138
  %v10359 = vadd.f32 %v10327, 1.4214138
  %v10360 = vmul.f32 %v10328, %v9766
  %v10361 = vmul.f32 %v10329, %v9781
  %v10362 = vmul.f32 %v10330, %v9796
  %v10363 = vmul.f32 %v10331, %v9811
  %v10364 = vmul.f32 %v10332, %v9826
  %v10365 = vmul.f32 %v10333, %v9841
  %v10366 = vmul.f32 %v10334, %v9856
  %v10367 = vmul.f32 %v10335, %v9871
  %v10368 = vmul.f32 %v10336, %v9886
  %v10369 = vmul.f32 %v10337, %v9901
  %v10370 = vmul.f32 %v10338, %v9916
  %v10371 = vmul.f32 %v10339, %v9931
  %v10372 = vmul.f32 %v10340, %v9946
  %v10373 = vmul.f32 %v10341, %v9961
  %v10374 = vmul.f32 %v10342, %v9976
  %v10375 = vmul.f32 %v10343, %v9991
  %v10376 = vmul.f32 %v10344, %v10006
  %v10377 = vmul.f32 %v10345, %v10021
  %v10378 = vmul.f32 %v10346, %v10036
  %v10379 = vmul.f32 %v10347, %v10051
  %v10380 = vmul.f32 %v10348, %v10066
  %v10381 = vmul.f32 %v10349, %v10081
  %v10382 = vmul.f32 %v10350, %v10096
  %v10383 = vmul.f32 %v10351, %v10111
  %v10384 = vmul.f32 %v10352, %v10126
  %v10385 = vmul.f32 %v10353, %v10141
  %v10386 = vmul.f32 %v10354, %v10156
  %v10387 = vmul.f32 %v10355, %v10171
  %v10388 = vmul.f32 %v10356, %v10186
  %v10389 = vmul.f32 %v10357, %v10201
  %v10390 = vmul.f32 %v10358, %v10216
  %v10391 = vmul.f32 %v10359, %v10231
  %v10392 = vadd.f32 %v10360, -0.28449672
  %v10393 = vadd.f32 %v10361, -0.28449672
  %v10394 = vadd.f32 %v10362, -0.28449672
  %v10395 = vadd.f32 %v10363, -0.28449672
  %v10396 = vadd.f32 %v10364, -0.28449672
  %v10397 = vadd.f32 %v10365, -0.28449672
  %v10398 = vadd.f32 %v10366, -0.28449672
  %v10399 = vadd.f32 %v10367, -0.28449672
  %v10400 = vadd.f32 %v10368, -0.28449672
  %v10401 = vadd.f32 %v10369, -0.28449672
  %v10402 = vadd.f32 %v10370, -0.28449672
  %v10403 = vadd.f32 %v10371, -0.28449672
  %v10404 = vadd.f32 %v10372, -0.28449672
  %v10405 = vadd.f32 %v10373, -0.28449672
  %v10406 = vadd.f32 %v10374, -0.28449672
  %v10407 = vadd.f32 %v10375, -0.28449672
  %v10408 = vadd.f32 %v10376, -0.28449672
  %v10409 = vadd.f32 %v10377, -0.28449672
  %v10410 = vadd.f32 %v10378, -0.28449672
  %v10411 = vadd.f32 %v10379, -0.28449672
  %v10412 = vadd.f32 %v10380, -0.28449672
  %v10413 = vadd.f32 %v10381, -0.28449672
  %v10414 = vadd.f32 %v10382, -0.28449672
  %v10415 = vadd.f32 %v10383, -0.28449672
  %v10416 = vadd.f32 %v10384, -0.28449672
  %v10417 = vadd.f32 %v10385, -0.28449672
  %v10418 = vadd.f32 %v10386, -0.28449672
  %v10419 = vadd.f32 %v10387, -0.28449672
  %v10420 = vadd.f32 %v10388, -0.28449672
  %v10421 = vadd.f32 %v10389, -0.28449672
  %v10422 = vadd.f32 %v10390, -0.28449672
  %v10423 = vadd.f32 %v10391, -0.28449672
  %v10424 = vmul.f32 %v10392, %v9766
  %v10425 = vmul.f32 %v10393, %v9781
  %v10426 = vmul.f32 %v10394, %v9796
  %v10427 = vmul.f32 %v10395, %v9811
  %v10428 = vmul.f32 %v10396, %v9826
  %v10429 = vmul.f32 %v10397, %v9841
  %v10430 = vmul.f32 %v10398, %v9856
  %v10431 = vmul.f32 %v10399, %v9871
  %v10432 = vmul.f32 %v10400, %v9886
  %v10433 = vmul.f32 %v10401, %v9901
  %v10434 = vmul.f32 %v10402, %v9916
  %v10435 = vmul.f32 %v10403, %v9931
  %v10436 = vmul.f32 %v10404, %v9946
  %v10437 = vmul.f32 %v10405, %v9961
  %v10438 = vmul.f32 %v10406, %v9976
  %v10439 = vmul.f32 %v10407, %v9991
  %v10440 = vmul.f32 %v10408, %v10006
  %v10441 = vmul.f32 %v10409, %v10021
  %v10442 = vmul.f32 %v10410, %v10036
  %v10443 = vmul.f32 %v10411, %v10051
  %v10444 = vmul.f32 %v10412, %v10066
  %v10445 = vmul.f32 %v10413, %v10081
  %v10446 = vmul.f32 %v10414, %v10096
  %v10447 = vmul.f32 %v10415, %v10111
  %v10448 = vmul.f32 %v10416, %v10126
  %v10449 = vmul.f32 %v10417, %v10141
  %v10450 = vmul.f32 %v10418, %v10156
  %v10451 = vmul.f32 %v10419, %v10171
  %v10452 = vmul.f32 %v10420, %v10186
  %v10453 = vmul.f32 %v10421, %v10201
  %v10454 = vmul.f32 %v10422, %v10216
  %v10455 = vmul.f32 %v10423, %v10231
  %v10456 = vadd.f32 %v10424, 0.2548296
  %v10457 = vadd.f32 %v10425, 0.2548296
  %v10458 = vadd.f32 %v10426, 0.2548296
  %v10459 = vadd.f32 %v10427, 0.2548296
  %v10460 = vadd.f32 %v10428, 0.2548296
  %v10461 = vadd.f32 %v10429, 0.2548296
  %v10462 = vadd.f32 %v10430, 0.2548296
  %v10463 = vadd.f32 %v10431, 0.2548296
  %v10464 = vadd.f32 %v10432, 0.2548296
  %v10465 = vadd.f32 %v10433, 0.2548296
  %v10466 = vadd.f32 %v10434, 0.2548296
  %v10467 = vadd.f32 %v10435, 0.2548296
  %v10468 = vadd.f32 %v10436, 0.2548296
  %v10469 = vadd.f32 %v10437, 0.2548296
  %v10470 = vadd.f32 %v10438, 0.2548296
  %v10471 = vadd.f32 %v10439, 0.2548296
  %v10472 = vadd.f32 %v10440, 0.2548296
  %v10473 = vadd.f32 %v10441, 0.2548296
  %v10474 = vadd.f32 %v10442, 0.2548296
  %v10475 = vadd.f32 %v10443, 0.2548296
  %v10476 = vadd.f32 %v10444, 0.2548296
  %v10477 = vadd.f32 %v10445, 0.2548296
  %v10478 = vadd.f32 %v10446, 0.2548296
  %v10479 = vadd.f32 %v10447, 0.2548296
  %v10480 = vadd.f32 %v10448, 0.2548296
  %v10481 = vadd.f32 %v10449, 0.2548296
  %v10482 = vadd.f32 %v10450, 0.2548296
  %v10483 = vadd.f32 %v10451, 0.2548296
  %v10484 = vadd.f32 %v10452, 0.2548296
  %v10485 = vadd.f32 %v10453, 0.2548296
  %v10486 = vadd.f32 %v10454, 0.2548296
  %v10487 = vadd.f32 %v10455, 0.2548296
  %v10488 = vmul.f32 %v10456, %v9766
  %v10489 = vmul.f32 %v10457, %v9781
  %v10490 = vmul.f32 %v10458, %v9796
  %v10491 = vmul.f32 %v10459, %v9811
  %v10492 = vmul.f32 %v10460, %v9826
  %v10493 = vmul.f32 %v10461, %v9841
  %v10494 = vmul.f32 %v10462, %v9856
  %v10495 = vmul.f32 %v10463, %v9871
  %v10496 = vmul.f32 %v10464, %v9886
  %v10497 = vmul.f32 %v10465, %v9901
  %v10498 = vmul.f32 %v10466, %v9916
  %v10499 = vmul.f32 %v10467, %v9931
  %v10500 = vmul.f32 %v10468, %v9946
  %v10501 = vmul.f32 %v10469, %v9961
  %v10502 = vmul.f32 %v10470, %v9976
  %v10503 = vmul.f32 %v10471, %v9991
  %v10504 = vmul.f32 %v10472, %v10006
  %v10505 = vmul.f32 %v10473, %v10021
  %v10506 = vmul.f32 %v10474, %v10036
  %v10507 = vmul.f32 %v10475, %v10051
  %v10508 = vmul.f32 %v10476, %v10066
  %v10509 = vmul.f32 %v10477, %v10081
  %v10510 = vmul.f32 %v10478, %v10096
  %v10511 = vmul.f32 %v10479, %v10111
  %v10512 = vmul.f32 %v10480, %v10126
  %v10513 = vmul.f32 %v10481, %v10141
  %v10514 = vmul.f32 %v10482, %v10156
  %v10515 = vmul.f32 %v10483, %v10171
  %v10516 = vmul.f32 %v10484, %v10186
  %v10517 = vmul.f32 %v10485, %v10201
  %v10518 = vmul.f32 %v10486, %v10216
  %v10519 = vmul.f32 %v10487, %v10231
  %v10520 = vmul.f32 %v9656, %v9656
  %v10521 = vmul.f32 %v9657, %v9657
  %v10522 = vmul.f32 %v9658, %v9658
  %v10523 = vmul.f32 %v9659, %v9659
  %v10524 = vmul.f32 %v9660, %v9660
  %v10525 = vmul.f32 %v9661, %v9661
  %v10526 = vmul.f32 %v9662, %v9662
  %v10527 = vmul.f32 %v9663, %v9663
  %v10528 = vmul.f32 %v9664, %v9664
  %v10529 = vmul.f32 %v9665, %v9665
  %v10530 = vmul.f32 %v9666, %v9666
  %v10531 = vmul.f32 %v9667, %v9667
  %v10532 = vmul.f32 %v9668, %v9668
  %v10533 = vmul.f32 %v9669, %v9669
  %v10534 = vmul.f32 %v9670, %v9670
  %v10535 = vmul.f32 %v9671, %v9671
  %v10536 = vmul.f32 %v9672, %v9672
  %v10537 = vmul.f32 %v9673, %v9673
  %v10538 = vmul.f32 %v9674, %v9674
  %v10539 = vmul.f32 %v9675, %v9675
  %v10540 = vmul.f32 %v9676, %v9676
  %v10541 = vmul.f32 %v9677, %v9677
  %v10542 = vmul.f32 %v9678, %v9678
  %v10543 = vmul.f32 %v9679, %v9679
  %v10544 = vmul.f32 %v9680, %v9680
  %v10545 = vmul.f32 %v9681, %v9681
  %v10546 = vmul.f32 %v9682, %v9682
  %v10547 = vmul.f32 %v9683, %v9683
  %v10548 = vmul.f32 %v9684, %v9684
  %v10549 = vmul.f32 %v9685, %v9685
  %v10550 = vmul.f32 %v9686, %v9686
  %v10551 = vmul.f32 %v9687, %v9687
  %v10552 = vsub.f32 0.0, %v10520
  %v10553 = vsub.f32 0.0, %v10521
  %v10554 = vsub.f32 0.0, %v10522
  %v10555 = vsub.f32 0.0, %v10523
  %v10556 = vsub.f32 0.0, %v10524
  %v10557 = vsub.f32 0.0, %v10525
  %v10558 = vsub.f32 0.0, %v10526
  %v10559 = vsub.f32 0.0, %v10527
  %v10560 = vsub.f32 0.0, %v10528
  %v10561 = vsub.f32 0.0, %v10529
  %v10562 = vsub.f32 0.0, %v10530
  %v10563 = vsub.f32 0.0, %v10531
  %v10564 = vsub.f32 0.0, %v10532
  %v10565 = vsub.f32 0.0, %v10533
  %v10566 = vsub.f32 0.0, %v10534
  %v10567 = vsub.f32 0.0, %v10535
  %v10568 = vsub.f32 0.0, %v10536
  %v10569 = vsub.f32 0.0, %v10537
  %v10570 = vsub.f32 0.0, %v10538
  %v10571 = vsub.f32 0.0, %v10539
  %v10572 = vsub.f32 0.0, %v10540
  %v10573 = vsub.f32 0.0, %v10541
  %v10574 = vsub.f32 0.0, %v10542
  %v10575 = vsub.f32 0.0, %v10543
  %v10576 = vsub.f32 0.0, %v10544
  %v10577 = vsub.f32 0.0, %v10545
  %v10578 = vsub.f32 0.0, %v10546
  %v10579 = vsub.f32 0.0, %v10547
  %v10580 = vsub.f32 0.0, %v10548
  %v10581 = vsub.f32 0.0, %v10549
  %v10582 = vsub.f32 0.0, %v10550
  %v10583 = vsub.f32 0.0, %v10551
  %v10584 = vmul.f32 %v10552, 1.442695
  %v10585 = vpow.pop %v10584
  %v10586 = vmul.f32 %v10553, 1.442695
  %v10587 = vpow.pop %v10586
  %v10588 = vmul.f32 %v10554, 1.442695
  %v10589 = vpow.pop %v10588
  %v10590 = vmul.f32 %v10555, 1.442695
  %v10591 = vpow.pop %v10590
  %v10592 = vmul.f32 %v10556, 1.442695
  %v10593 = vpow.pop %v10592
  %v10594 = vmul.f32 %v10557, 1.442695
  %v10595 = vpow.pop %v10594
  %v10596 = vmul.f32 %v10558, 1.442695
  %v10597 = vpow.pop %v10596
  %v10598 = vmul.f32 %v10559, 1.442695
  %v10599 = vpow.pop %v10598
  %v10600 = vmul.f32 %v10560, 1.442695
  %v10601 = vpow.pop %v10600
  %v10602 = vmul.f32 %v10561, 1.442695
  %v10603 = vpow.pop %v10602
  %v10604 = vmul.f32 %v10562, 1.442695
  %v10605 = vpow.pop %v10604
  %v10606 = vmul.f32 %v10563, 1.442695
  %v10607 = vpow.pop %v10606
  %v10608 = vmul.f32 %v10564, 1.442695
  %v10609 = vpow.pop %v10608
  %v10610 = vmul.f32 %v10565, 1.442695
  %v10611 = vpow.pop %v10610
  %v10612 = vmul.f32 %v10566, 1.442695
  %v10613 = vpow.pop %v10612
  %v10614 = vmul.f32 %v10567, 1.442695
  %v10615 = vpow.pop %v10614
  %v10616 = vmul.f32 %v10568, 1.442695
  %v10617 = vpow.pop %v10616
  %v10618 = vmul.f32 %v10569, 1.442695
  %v10619 = vpow.pop %v10618
  %v10620 = vmul.f32 %v10570, 1.442695
  %v10621 = vpow.pop %v10620
  %v10622 = vmul.f32 %v10571, 1.442695
  %v10623 = vpow.pop %v10622
  %v10624 = vmul.f32 %v10572, 1.442695
  %v10625 = vpow.pop %v10624
  %v10626 = vmul.f32 %v10573, 1.442695
  %v10627 = vpow.pop %v10626
  %v10628 = vmul.f32 %v10574, 1.442695
  %v10629 = vpow.pop %v10628
  %v10630 = vmul.f32 %v10575, 1.442695
  %v10631 = vpow.pop %v10630
  %v10632 = vmul.f32 %v10576, 1.442695
  %v10633 = vpow.pop %v10632
  %v10634 = vmul.f32 %v10577, 1.442695
  %v10635 = vpow.pop %v10634
  %v10636 = vmul.f32 %v10578, 1.442695
  %v10637 = vpow.pop %v10636
  %v10638 = vmul.f32 %v10579, 1.442695
  %v10639 = vpow.pop %v10638
  %v10640 = vmul.f32 %v10580, 1.442695
  %v10641 = vpow.pop %v10640
  %v10642 = vmul.f32 %v10581, 1.442695
  %v10643 = vpow.pop %v10642
  %v10644 = vmul.f32 %v10582, 1.442695
  %v10645 = vpow.pop %v10644
  %v10646 = vmul.f32 %v10583, 1.442695
  %v10647 = vpow.pop %v10646
  %v10648 = vmul.f32 %v10488, %v10585
  %v10649 = vmul.f32 %v10489, %v10587
  %v10650 = vmul.f32 %v10490, %v10589
  %v10651 = vmul.f32 %v10491, %v10591
  %v10652 = vmul.f32 %v10492, %v10593
  %v10653 = vmul.f32 %v10493, %v10595
  %v10654 = vmul.f32 %v10494, %v10597
  %v10655 = vmul.f32 %v10495, %v10599
  %v10656 = vmul.f32 %v10496, %v10601
  %v10657 = vmul.f32 %v10497, %v10603
  %v10658 = vmul.f32 %v10498, %v10605
  %v10659 = vmul.f32 %v10499, %v10607
  %v10660 = vmul.f32 %v10500, %v10609
  %v10661 = vmul.f32 %v10501, %v10611
  %v10662 = vmul.f32 %v10502, %v10613
  %v10663 = vmul.f32 %v10503, %v10615
  %v10664 = vmul.f32 %v10504, %v10617
  %v10665 = vmul.f32 %v10505, %v10619
  %v10666 = vmul.f32 %v10506, %v10621
  %v10667 = vmul.f32 %v10507, %v10623
  %v10668 = vmul.f32 %v10508, %v10625
  %v10669 = vmul.f32 %v10509, %v10627
  %v10670 = vmul.f32 %v10510, %v10629
  %v10671 = vmul.f32 %v10511, %v10631
  %v10672 = vmul.f32 %v10512, %v10633
  %v10673 = vmul.f32 %v10513, %v10635
  %v10674 = vmul.f32 %v10514, %v10637
  %v10675 = vmul.f32 %v10515, %v10639
  %v10676 = vmul.f32 %v10516, %v10641
  %v10677 = vmul.f32 %v10517, %v10643
  %v10678 = vmul.f32 %v10518, %v10645
  %v10679 = vmul.f32 %v10519, %v10647
  %v10680 = vsub.f32 1.0, %v10648
  %v10681 = vsub.f32 1.0, %v10649
  %v10682 = vsub.f32 1.0, %v10650
  %v10683 = vsub.f32 1.0, %v10651
  %v10684 = vsub.f32 1.0, %v10652
  %v10685 = vsub.f32 1.0, %v10653
  %v10686 = vsub.f32 1.0, %v10654
  %v10687 = vsub.f32 1.0, %v10655
  %v10688 = vsub.f32 1.0, %v10656
  %v10689 = vsub.f32 1.0, %v10657
  %v10690 = vsub.f32 1.0, %v10658
  %v10691 = vsub.f32 1.0, %v10659
  %v10692 = vsub.f32 1.0, %v10660
  %v10693 = vsub.f32 1.0, %v10661
  %v10694 = vsub.f32 1.0, %v10662
  %v10695 = vsub.f32 1.0, %v10663
  %v10696 = vsub.f32 1.0, %v10664
  %v10697 = vsub.f32 1.0, %v10665
  %v10698 = vsub.f32 1.0, %v10666
  %v10699 = vsub.f32 1.0, %v10667
  %v10700 = vsub.f32 1.0, %v10668
  %v10701 = vsub.f32 1.0, %v10669
  %v10702 = vsub.f32 1.0, %v10670
  %v10703 = vsub.f32 1.0, %v10671
  %v10704 = vsub.f32 1.0, %v10672
  %v10705 = vsub.f32 1.0, %v10673
  %v10706 = vsub.f32 1.0, %v10674
  %v10707 = vsub.f32 1.0, %v10675
  %v10708 = vsub.f32 1.0, %v10676
  %v10709 = vsub.f32 1.0, %v10677
  %v10710 = vsub.f32 1.0, %v10678
  %v10711 = vsub.f32 1.0, %v10679
  %vm10712 = vcmp.ge.f32.partialorder %v9624, 0.0
  %vm10713 = vcmp.ge.f32.partialorder %v9625, 0.0
  %vm10714 = vcmp.ge.f32.partialorder %v9626, 0.0
  %vm10715 = vcmp.ge.f32.partialorder %v9627, 0.0
  %vm10716 = vcmp.ge.f32.partialorder %v9628, 0.0
  %vm10717 = vcmp.ge.f32.partialorder %v9629, 0.0
  %vm10718 = vcmp.ge.f32.partialorder %v9630, 0.0
  %vm10719 = vcmp.ge.f32.partialorder %v9631, 0.0
  %vm10720 = vcmp.ge.f32.partialorder %v9632, 0.0
  %vm10721 = vcmp.ge.f32.partialorder %v9633, 0.0
  %vm10722 = vcmp.ge.f32.partialorder %v9634, 0.0
  %vm10723 = vcmp.ge.f32.partialorder %v9635, 0.0
  %vm10724 = vcmp.ge.f32.partialorder %v9636, 0.0
  %vm10725 = vcmp.ge.f32.partialorder %v9637, 0.0
  %vm10726 = vcmp.ge.f32.partialorder %v9638, 0.0
  %vm10727 = vcmp.ge.f32.partialorder %v9639, 0.0
  %vm10728 = vcmp.ge.f32.partialorder %v9640, 0.0
  %vm10729 = vcmp.ge.f32.partialorder %v9641, 0.0
  %vm10730 = vcmp.ge.f32.partialorder %v9642, 0.0
  %vm10731 = vcmp.ge.f32.partialorder %v9643, 0.0
  %vm10732 = vcmp.ge.f32.partialorder %v9644, 0.0
  %vm10733 = vcmp.ge.f32.partialorder %v9645, 0.0
  %vm10734 = vcmp.ge.f32.partialorder %v9646, 0.0
  %vm10735 = vcmp.ge.f32.partialorder %v9647, 0.0
  %vm10736 = vcmp.ge.f32.partialorder %v9648, 0.0
  %vm10737 = vcmp.ge.f32.partialorder %v9649, 0.0
  %vm10738 = vcmp.ge.f32.partialorder %v9650, 0.0
  %vm10739 = vcmp.ge.f32.partialorder %v9651, 0.0
  %vm10740 = vcmp.ge.f32.partialorder %v9652, 0.0
  %vm10741 = vcmp.ge.f32.partialorder %v9653, 0.0
  %vm10742 = vcmp.ge.f32.partialorder %v9654, 0.0
  %vm10743 = vcmp.ge.f32.partialorder %v9655, 0.0
  %v10744 = vsub.f32 0.0, %v10680
  %v10745 = vsub.f32 0.0, %v10681
  %v10746 = vsub.f32 0.0, %v10682
  %v10747 = vsub.f32 0.0, %v10683
  %v10748 = vsub.f32 0.0, %v10684
  %v10749 = vsub.f32 0.0, %v10685
  %v10750 = vsub.f32 0.0, %v10686
  %v10751 = vsub.f32 0.0, %v10687
  %v10752 = vsub.f32 0.0, %v10688
  %v10753 = vsub.f32 0.0, %v10689
  %v10754 = vsub.f32 0.0, %v10690
  %v10755 = vsub.f32 0.0, %v10691
  %v10756 = vsub.f32 0.0, %v10692
  %v10757 = vsub.f32 0.0, %v10693
  %v10758 = vsub.f32 0.0, %v10694
  %v10759 = vsub.f32 0.0, %v10695
  %v10760 = vsub.f32 0.0, %v10696
  %v10761 = vsub.f32 0.0, %v10697
  %v10762 = vsub.f32 0.0, %v10698
  %v10763 = vsub.f32 0.0, %v10699
  %v10764 = vsub.f32 0.0, %v10700
  %v10765 = vsub.f32 0.0, %v10701
  %v10766 = vsub.f32 0.0, %v10702
  %v10767 = vsub.f32 0.0, %v10703
  %v10768 = vsub.f32 0.0, %v10704
  %v10769 = vsub.f32 0.0, %v10705
  %v10770 = vsub.f32 0.0, %v10706
  %v10771 = vsub.f32 0.0, %v10707
  %v10772 = vsub.f32 0.0, %v10708
  %v10773 = vsub.f32 0.0, %v10709
  %v10774 = vsub.f32 0.0, %v10710
  %v10775 = vsub.f32 0.0, %v10711
  %v10776 = vsel %vm10712, %v10680, %v10744
  %v10777 = vsel %vm10713, %v10681, %v10745
  %v10778 = vsel %vm10714, %v10682, %v10746
  %v10779 = vsel %vm10715, %v10683, %v10747
  %v10780 = vsel %vm10716, %v10684, %v10748
  %v10781 = vsel %vm10717, %v10685, %v10749
  %v10782 = vsel %vm10718, %v10686, %v10750
  %v10783 = vsel %vm10719, %v10687, %v10751
  %v10784 = vsel %vm10720, %v10688, %v10752
  %v10785 = vsel %vm10721, %v10689, %v10753
  %v10786 = vsel %vm10722, %v10690, %v10754
  %v10787 = vsel %vm10723, %v10691, %v10755
  %v10788 = vsel %vm10724, %v10692, %v10756
  %v10789 = vsel %vm10725, %v10693, %v10757
  %v10790 = vsel %vm10726, %v10694, %v10758
  %v10791 = vsel %vm10727, %v10695, %v10759
  %v10792 = vsel %vm10728, %v10696, %v10760
  %v10793 = vsel %vm10729, %v10697, %v10761
  %v10794 = vsel %vm10730, %v10698, %v10762
  %v10795 = vsel %vm10731, %v10699, %v10763
  %v10796 = vsel %vm10732, %v10700, %v10764
  %v10797 = vsel %vm10733, %v10701, %v10765
  %v10798 = vsel %vm10734, %v10702, %v10766
  %v10799 = vsel %vm10735, %v10703, %v10767
  %v10800 = vsel %vm10736, %v10704, %v10768
  %v10801 = vsel %vm10737, %v10705, %v10769
  %v10802 = vsel %vm10738, %v10706, %v10770
  %v10803 = vsel %vm10739, %v10707, %v10771
  %v10804 = vsel %vm10740, %v10708, %v10772
  %v10805 = vsel %vm10741, %v10709, %v10773
  %v10806 = vsel %vm10742, %v10710, %v10774
  %v10807 = vsel %vm10743, %v10711, %v10775
  %v10808 = vadd.f32 %v10776, 1.0
  %v10809 = vadd.f32 %v10777, 1.0
  %v10810 = vadd.f32 %v10778, 1.0
  %v10811 = vadd.f32 %v10779, 1.0
  %v10812 = vadd.f32 %v10780, 1.0
  %v10813 = vadd.f32 %v10781, 1.0
  %v10814 = vadd.f32 %v10782, 1.0
  %v10815 = vadd.f32 %v10783, 1.0
  %v10816 = vadd.f32 %v10784, 1.0
  %v10817 = vadd.f32 %v10785, 1.0
  %v10818 = vadd.f32 %v10786, 1.0
  %v10819 = vadd.f32 %v10787, 1.0
  %v10820 = vadd.f32 %v10788, 1.0
  %v10821 = vadd.f32 %v10789, 1.0
  %v10822 = vadd.f32 %v10790, 1.0
  %v10823 = vadd.f32 %v10791, 1.0
  %v10824 = vadd.f32 %v10792, 1.0
  %v10825 = vadd.f32 %v10793, 1.0
  %v10826 = vadd.f32 %v10794, 1.0
  %v10827 = vadd.f32 %v10795, 1.0
  %v10828 = vadd.f32 %v10796, 1.0
  %v10829 = vadd.f32 %v10797, 1.0
  %v10830 = vadd.f32 %v10798, 1.0
  %v10831 = vadd.f32 %v10799, 1.0
  %v10832 = vadd.f32 %v10800, 1.0
  %v10833 = vadd.f32 %v10801, 1.0
  %v10834 = vadd.f32 %v10802, 1.0
  %v10835 = vadd.f32 %v10803, 1.0
  %v10836 = vadd.f32 %v10804, 1.0
  %v10837 = vadd.f32 %v10805, 1.0
  %v10838 = vadd.f32 %v10806, 1.0
  %v10839 = vadd.f32 %v10807, 1.0
  %v10840 = vmul.f32 %v9592, %v10808
  %v10841 = vmul.f32 %v9593, %v10809
  %v10842 = vmul.f32 %v9594, %v10810
  %v10843 = vmul.f32 %v9595, %v10811
  %v10844 = vmul.f32 %v9596, %v10812
  %v10845 = vmul.f32 %v9597, %v10813
  %v10846 = vmul.f32 %v9598, %v10814
  %v10847 = vmul.f32 %v9599, %v10815
  %v10848 = vmul.f32 %v9600, %v10816
  %v10849 = vmul.f32 %v9601, %v10817
  %v10850 = vmul.f32 %v9602, %v10818
  %v10851 = vmul.f32 %v9603, %v10819
  %v10852 = vmul.f32 %v9604, %v10820
  %v10853 = vmul.f32 %v9605, %v10821
  %v10854 = vmul.f32 %v9606, %v10822
  %v10855 = vmul.f32 %v9607, %v10823
  %v10856 = vmul.f32 %v9608, %v10824
  %v10857 = vmul.f32 %v9609, %v10825
  %v10858 = vmul.f32 %v9610, %v10826
  %v10859 = vmul.f32 %v9611, %v10827
  %v10860 = vmul.f32 %v9612, %v10828
  %v10861 = vmul.f32 %v9613, %v10829
  %v10862 = vmul.f32 %v9614, %v10830
  %v10863 = vmul.f32 %v9615, %v10831
  %v10864 = vmul.f32 %v9616, %v10832
  %v10865 = vmul.f32 %v9617, %v10833
  %v10866 = vmul.f32 %v9618, %v10834
  %v10867 = vmul.f32 %v9619, %v10835
  %v10868 = vmul.f32 %v9620, %v10836
  %v10869 = vmul.f32 %v9621, %v10837
  %v10870 = vmul.f32 %v9622, %v10838
  %v10871 = vmul.f32 %v9623, %v10839
  %v10872 = vpack.c.bf16 %v10841, %v10840
  %v10873 = vpack.c.bf16 %v10843, %v10842
  %v10874 = vpack.c.bf16 %v10845, %v10844
  %v10875 = vpack.c.bf16 %v10847, %v10846
  %v10876 = vpack.c.bf16 %v10849, %v10848
  %v10877 = vpack.c.bf16 %v10851, %v10850
  %v10878 = vpack.c.bf16 %v10853, %v10852
  %v10879 = vpack.c.bf16 %v10855, %v10854
  %v10880 = vpack.c.bf16 %v10857, %v10856
  %v10881 = vpack.c.bf16 %v10859, %v10858
  %v10882 = vpack.c.bf16 %v10861, %v10860
  %v10883 = vpack.c.bf16 %v10863, %v10862
  %v10884 = vpack.c.bf16 %v10865, %v10864
  %v10885 = vpack.c.bf16 %v10867, %v10866
  %v10886 = vpack.c.bf16 %v10869, %v10868
  %v10887 = vpack.c.bf16 %v10871, %v10870
  %v10888 = vld [vmem:[%s14] sm:$0xf]
  %v10889 = vld [vmem:[%s14 + $0x4] sm:$0xf]
  %v10890 = vld [vmem:[%s14 + $0x8] sm:$0xf]
  %v10891 = vld [vmem:[%s14 + $0xc] sm:$0xf]
  %v10892 = vld [vmem:[%s14 + $0x10] sm:$0xf]
  %v10893 = vld [vmem:[%s14 + $0x14] sm:$0xf]
  %v10894 = vld [vmem:[%s14 + $0x18] sm:$0xf]
  %v10895 = vld [vmem:[%s14 + $0x1c] sm:$0xf]
  %v10896 = vld [vmem:[%s14 + $0x20] sm:$0xf]
  %v10897 = vld [vmem:[%s14 + $0x24] sm:$0xf]
  %v10898 = vld [vmem:[%s14 + $0x28] sm:$0xf]
  %v10899 = vld [vmem:[%s14 + $0x2c] sm:$0xf]
  %v10900 = vld [vmem:[%s14 + $0x30] sm:$0xf]
  %v10901 = vld [vmem:[%s14 + $0x34] sm:$0xf]
  %v10902 = vld [vmem:[%s14 + $0x38] sm:$0xf]
  %v10903 = vld [vmem:[%s14 + $0x3c] sm:$0xf]
  %v10904 = vld [vmem:[%s15] sm:$0x1]
  %v10906 = vperm.slane %v10904, 0
  %v10924 = vunpack.c.l.b16 %v10888
  %v10925 = vunpack.c.l.b16 %v10889
  %v10926 = vunpack.c.l.b16 %v10890
  %v10927 = vunpack.c.l.b16 %v10891
  %v10928 = vunpack.c.l.b16 %v10892
  %v10929 = vunpack.c.l.b16 %v10893
  %v10930 = vunpack.c.l.b16 %v10894
  %v10931 = vunpack.c.l.b16 %v10895
  %v10932 = vunpack.c.l.b16 %v10896
  %v10933 = vunpack.c.l.b16 %v10897
  %v10934 = vunpack.c.l.b16 %v10898
  %v10935 = vunpack.c.l.b16 %v10899
  %v10936 = vunpack.c.l.b16 %v10900
  %v10937 = vunpack.c.l.b16 %v10901
  %v10938 = vunpack.c.l.b16 %v10902
  %v10939 = vunpack.c.l.b16 %v10903
  %v10940 = vpack.c.b16 %v10925, %v10924
  %v10941 = vpack.c.b16 %v10927, %v10926
  %v10942 = vpack.c.b16 %v10929, %v10928
  %v10943 = vpack.c.b16 %v10931, %v10930
  %v10944 = vpack.c.b16 %v10933, %v10932
  %v10945 = vpack.c.b16 %v10935, %v10934
  %v10946 = vpack.c.b16 %v10937, %v10936
  %v10947 = vpack.c.b16 %v10939, %v10938
  %10956 = vmatpush.bf16.msra.mxu0 %v10947
  %10957 = vmatpush.bf16.msra.mxu0 %v10946
  %10958 = vmatpush.bf16.msra.mxu0 %v10945
  %10959 = vmatpush.bf16.msra.mxu0 %v10944
  %10960 = vmatpush.bf16.msra.mxu0 %v10943
  %10961 = vmatpush.bf16.msra.mxu0 %v10942
  %10962 = vmatpush.bf16.msra.mxu0 %v10941
  %10963 = vmatpush.bf16.msra.mxu0 %v10940
  %10964 = vmatmul.bf16.gmra.mxu0 %v10872
  %v10965 = vpop.f32.mrf.mxu0
  %v10966 = vadd.f32 %v10906, %v10965
  %v10967 = vpop.f32.mrf.mxu0
  %v10968 = vadd.f32 %v10906, %v10967
  %10969 = vmatmul.bf16.gmra.mxu0 %v10873
  %v10970 = vpop.f32.mrf.mxu0
  %v10971 = vadd.f32 %v10906, %v10970
  %v10972 = vpop.f32.mrf.mxu0
  %v10973 = vadd.f32 %v10906, %v10972
  %10974 = vmatmul.bf16.gmra.mxu0 %v10874
  %v10975 = vpop.f32.mrf.mxu0
  %v10976 = vadd.f32 %v10906, %v10975
  %v10977 = vpop.f32.mrf.mxu0
  %v10978 = vadd.f32 %v10906, %v10977
  %10979 = vmatmul.bf16.gmra.mxu0 %v10875
  %v10980 = vpop.f32.mrf.mxu0
  %v10981 = vadd.f32 %v10906, %v10980
  %v10982 = vpop.f32.mrf.mxu0
  %v10983 = vadd.f32 %v10906, %v10982
  %10984 = vmatmul.bf16.gmra.mxu0 %v10876
  %v10985 = vpop.f32.mrf.mxu0
  %v10986 = vadd.f32 %v10906, %v10985
  %v10987 = vpop.f32.mrf.mxu0
  %v10988 = vadd.f32 %v10906, %v10987
  %10989 = vmatmul.bf16.gmra.mxu0 %v10877
  %v10990 = vpop.f32.mrf.mxu0
  %v10991 = vadd.f32 %v10906, %v10990
  %v10992 = vpop.f32.mrf.mxu0
  %v10993 = vadd.f32 %v10906, %v10992
  %10994 = vmatmul.bf16.gmra.mxu0 %v10878
  %v10995 = vpop.f32.mrf.mxu0
  %v10996 = vadd.f32 %v10906, %v10995
  %v10997 = vpop.f32.mrf.mxu0
  %v10998 = vadd.f32 %v10906, %v10997
  %10999 = vmatmul.bf16.gmra.mxu0 %v10879
  %v11000 = vpop.f32.mrf.mxu0
  %v11001 = vadd.f32 %v10906, %v11000
  %v11002 = vpop.f32.mrf.mxu0
  %v11003 = vadd.f32 %v10906, %v11002
  %11004 = vmatmul.bf16.gmra.mxu0 %v10880
  %v11005 = vpop.f32.mrf.mxu0
  %v11006 = vadd.f32 %v10906, %v11005
  %v11007 = vpop.f32.mrf.mxu0
  %v11008 = vadd.f32 %v10906, %v11007
  %11009 = vmatmul.bf16.gmra.mxu0 %v10881
  %v11010 = vpop.f32.mrf.mxu0
  %v11011 = vadd.f32 %v10906, %v11010
  %v11012 = vpop.f32.mrf.mxu0
  %v11013 = vadd.f32 %v10906, %v11012
  %11014 = vmatmul.bf16.gmra.mxu0 %v10882
  %v11015 = vpop.f32.mrf.mxu0
  %v11016 = vadd.f32 %v10906, %v11015
  %v11017 = vpop.f32.mrf.mxu0
  %v11018 = vadd.f32 %v10906, %v11017
  %11019 = vmatmul.bf16.gmra.mxu0 %v10883
  %v11020 = vpop.f32.mrf.mxu0
  %v11021 = vadd.f32 %v10906, %v11020
  %v11022 = vpop.f32.mrf.mxu0
  %v11023 = vadd.f32 %v10906, %v11022
  %11024 = vmatmul.bf16.gmra.mxu0 %v10884
  %v11025 = vpop.f32.mrf.mxu0
  %v11026 = vadd.f32 %v10906, %v11025
  %v11027 = vpop.f32.mrf.mxu0
  %v11028 = vadd.f32 %v10906, %v11027
  %11029 = vmatmul.bf16.gmra.mxu0 %v10885
  %v11030 = vpop.f32.mrf.mxu0
  %v11031 = vadd.f32 %v10906, %v11030
  %v11032 = vpop.f32.mrf.mxu0
  %v11033 = vadd.f32 %v10906, %v11032
  %11034 = vmatmul.bf16.gmra.mxu0 %v10886
  %v11035 = vpop.f32.mrf.mxu0
  %v11036 = vadd.f32 %v10906, %v11035
  %v11037 = vpop.f32.mrf.mxu0
  %v11038 = vadd.f32 %v10906, %v11037
  %11039 = vmatmul.bf16.gmra.mxu0 %v10887
  %v11040 = vpop.f32.mrf.mxu0
  %v11041 = vadd.f32 %v10906, %v11040
  %v11042 = vpop.f32.mrf.mxu0
  %v11043 = vadd.f32 %v10906, %v11042
  %11044 = vdwg.mxu0
  %v11045 = vadd.f32 %v8611, %v10966
  %v11046 = vadd.f32 %v8612, %v10968
  %v11047 = vadd.f32 %v8613, %v10971
  %v11048 = vadd.f32 %v8614, %v10973
  %v11049 = vadd.f32 %v8615, %v10976
  %v11050 = vadd.f32 %v8616, %v10978
  %v11051 = vadd.f32 %v8617, %v10981
  %v11052 = vadd.f32 %v8618, %v10983
  %v11053 = vadd.f32 %v8619, %v10986
  %v11054 = vadd.f32 %v8620, %v10988
  %v11055 = vadd.f32 %v8621, %v10991
  %v11056 = vadd.f32 %v8622, %v10993
  %v11057 = vadd.f32 %v8623, %v10996
  %v11058 = vadd.f32 %v8624, %v10998
  %v11059 = vadd.f32 %v8625, %v11001
  %v11060 = vadd.f32 %v8626, %v11003
  %v11061 = vadd.f32 %v8627, %v11006
  %v11062 = vadd.f32 %v8628, %v11008
  %v11063 = vadd.f32 %v8629, %v11011
  %v11064 = vadd.f32 %v8630, %v11013
  %v11065 = vadd.f32 %v8631, %v11016
  %v11066 = vadd.f32 %v8632, %v11018
  %v11067 = vadd.f32 %v8633, %v11021
  %v11068 = vadd.f32 %v8634, %v11023
  %v11069 = vadd.f32 %v8635, %v11026
  %v11070 = vadd.f32 %v8636, %v11028
  %v11071 = vadd.f32 %v8637, %v11031
  %v11072 = vadd.f32 %v8638, %v11033
  %v11073 = vadd.f32 %v8639, %v11036
  %v11074 = vadd.f32 %v8640, %v11038
  %v11075 = vadd.f32 %v8641, %v11041
  %v11076 = vadd.f32 %v8642, %v11043
  %11077 = vst.msk [vmem:[%s16] sm:$0xff] %vm120, %v11045
  %11078 = vst.msk [vmem:[%s16 + $0x8] sm:$0xff] %vm120, %v11046
  %11079 = vst.msk [vmem:[%s16 + $0x10] sm:$0xff] %vm120, %v11047
  %11080 = vst.msk [vmem:[%s16 + $0x18] sm:$0xff] %vm120, %v11048
  %11081 = vst.msk [vmem:[%s16 + $0x20] sm:$0xff] %vm120, %v11049
  %11082 = vst.msk [vmem:[%s16 + $0x28] sm:$0xff] %vm120, %v11050
  %11083 = vst.msk [vmem:[%s16 + $0x30] sm:$0xff] %vm120, %v11051
  %11084 = vst.msk [vmem:[%s16 + $0x38] sm:$0xff] %vm120, %v11052
  %11085 = vst.msk [vmem:[%s16 + $0x40] sm:$0xff] %vm120, %v11053
  %11086 = vst.msk [vmem:[%s16 + $0x48] sm:$0xff] %vm120, %v11054
  %11087 = vst.msk [vmem:[%s16 + $0x50] sm:$0xff] %vm120, %v11055
  %11088 = vst.msk [vmem:[%s16 + $0x58] sm:$0xff] %vm120, %v11056
  %11089 = vst.msk [vmem:[%s16 + $0x60] sm:$0xff] %vm120, %v11057
  %11090 = vst.msk [vmem:[%s16 + $0x68] sm:$0xff] %vm120, %v11058
  %11091 = vst.msk [vmem:[%s16 + $0x70] sm:$0xff] %vm120, %v11059
  %11092 = vst.msk [vmem:[%s16 + $0x78] sm:$0xff] %vm120, %v11060
  %11093 = vst.msk [vmem:[%s16 + $0x80] sm:$0xff] %vm120, %v11061
  %11094 = vst.msk [vmem:[%s16 + $0x88] sm:$0xff] %vm120, %v11062
  %11095 = vst.msk [vmem:[%s16 + $0x90] sm:$0xff] %vm120, %v11063
  %11096 = vst.msk [vmem:[%s16 + $0x98] sm:$0xff] %vm120, %v11064
  %11097 = vst.msk [vmem:[%s16 + $0xa0] sm:$0xff] %vm120, %v11065
  %11098 = vst.msk [vmem:[%s16 + $0xa8] sm:$0xff] %vm120, %v11066
  %11099 = vst.msk [vmem:[%s16 + $0xb0] sm:$0xff] %vm120, %v11067
  %11100 = vst.msk [vmem:[%s16 + $0xb8] sm:$0xff] %vm120, %v11068
  %11101 = vst.msk [vmem:[%s16 + $0xc0] sm:$0xff] %vm120, %v11069
  %11102 = vst.msk [vmem:[%s16 + $0xc8] sm:$0xff] %vm120, %v11070
  %11103 = vst.msk [vmem:[%s16 + $0xd0] sm:$0xff] %vm120, %v11071
  %11104 = vst.msk [vmem:[%s16 + $0xd8] sm:$0xff] %vm120, %v11072
  %11105 = vst.msk [vmem:[%s16 + $0xe0] sm:$0xff] %vm120, %v11073
  %11106 = vst.msk [vmem:[%s16 + $0xe8] sm:$0xff] %vm120, %v11074
  %11107 = vst.msk [vmem:[%s16 + $0xf0] sm:$0xff] %vm120, %v11075
  %11108 = vst.msk [vmem:[%s16 + $0xf8] sm:$0xff] %vm120, %v11076
  // Predicated region
  $region66: #{coswin_forward.1} parent=0 // pred_check
    _
  $region67: #{coswin_forward.1} parent=0 // pred_check_branch
    %11110 = sbr.rel (0) target = $region69
  $region68: #{coswin_forward.1} parent=0 // pred_region
    _
  $region69: #{coswin_forward.1} parent=0 // pred_fallthru
    _
  // Predicated region
  $region70: #{coswin_forward.1} parent=0 // pred_check
    _
  $region71: #{coswin_forward.1} parent=0 // pred_check_branch
    %11112 = sbr.rel (0) target = $region73
  $region72: #{coswin_forward.1} parent=0 // pred_region
    _
  $region73: #{coswin_forward.1} parent=0 // pred_fallthru
    _

</llo_original>
